<compile_context>
chip_gen: v5e
topology: v5e:2x2
jax: 0.10.0
libtpu: 0.0.40
codegen_flags: <defaults>
</compile_context>

<pallas_src>
import functools

import jax
import jax.numpy as jnp
from jax.experimental import pallas as pl
from jax.experimental.pallas import tpu as pltpu


# ---------------------------------------------------------------------------
# Fused forward kernel (one grid step = one tile of `tb` samples)
# ---------------------------------------------------------------------------

def _fused_actor_kernel(xs_ref, w1_ref, b1_ref, w2_ref, b2_ref,
                        wf_ref, bf_ref, wa_ref, ba_ref,
                        act_ref, lp_ref):
    tb = xs_ref.shape[2]                                  # batch tile (multiple of 8)

    def conv2x2(x, w_ref, b_ref, oh, ow, cin, cout):
        """2x2 stride-1 conv as 4 tap-accumulated MXU matmuls, + bias + ReLU.

        x: (oh+1, ow+1, tb, cin)  ->  (oh, ow, tb, cout)
        """
        acc = None
        for di in range(2):
            for dj in range(2):
                lhs = x[di:di + oh, dj:dj + ow].reshape(oh * ow * tb, cin)
                y = jnp.dot(lhs, w_ref[di, dj],
                            preferred_element_type=jnp.float32)
                acc = y if acc is None else acc + y
        acc = jnp.maximum(acc + b_ref[...], 0.0)
        return acc.reshape(oh, ow, tb, cout)

    def maxpool_k3s2(a, oh, ow):
        """MaxPool2d(kernel=3, stride=2) over leading (H, W) dims.

        Uses pair-reshapes so only unit-stride slices are needed:
          out[i] = max(a[2i], a[2i+1], a[2i+2]).
        """
        h_in, w_in, tb_, c = a.shape
        # pool along H (axis 0): merge row pairs into the W axis
        e = a[0:2 * oh].reshape(oh, 2 * w_in, tb_, c)
        o = a[1:2 * oh + 1].reshape(oh, 2 * w_in, tb_, c)
        a = jnp.maximum(jnp.maximum(e[:, 0:w_in], e[:, w_in:2 * w_in]),
                        o[:, w_in:2 * w_in])              # (oh, w_in, tb, c)
        # pool along W (axis 1): merge column pairs into the sublane (tb) axis
        e = a[:, 0:2 * ow].reshape(oh, ow, 2 * tb_, c)
        o = a[:, 1:2 * ow + 1].reshape(oh, ow, 2 * tb_, c)
        return jnp.maximum(jnp.maximum(e[:, :, 0:tb_], e[:, :, tb_:2 * tb_]),
                           o[:, :, tb_:2 * tb_])          # (oh, ow, tb, c)

    def maxpool_k2s1(a):
        a = jnp.maximum(a[0:-1], a[1:])                   # along H
        return jnp.maximum(a[:, 0:-1], a[:, 1:])          # along W

    # ---- CNN base -------------------------------------------------------
    x = xs_ref[...]                                       # (20, 20, tb, 16) s2d input
    y1 = conv2x2(x, w1_ref, b1_ref, 19, 19, 16, 8)        # Conv(4->8,k4,s2)+ReLU
    z1 = maxpool_k3s2(y1, 9, 9)                           # MaxPool(3,2) -> (9,9,tb,8)
    y2 = conv2x2(z1, w2_ref, b2_ref, 8, 8, 8, 16)         # Conv(8->16,k2,s1)+ReLU
    z2 = maxpool_k2s1(y2)                                 # MaxPool(2,1) -> (7,7,tb,16)

    # ---- Linear(16*7*7 -> 128) + ReLU, as 49 spatial-tap matmuls --------
    feat = jnp.zeros((tb, 128), jnp.float32)
    for h in range(7):
        for w in range(7):
            feat = feat + jnp.dot(z2[h, w], wf_ref[h, w],
                                  preferred_element_type=jnp.float32)
    feat = jnp.maximum(feat + bf_ref[...], 0.0)           # (tb, 128)

    # ---- ACT head (deterministic): argmax + log_softmax at the argmax ---
    logits = jnp.dot(feat, wa_ref[...],
                     preferred_element_type=jnp.float32) + ba_ref[...]   # (tb, A)
    m = jnp.max(logits, axis=-1, keepdims=True)
    lse = jnp.log(jnp.sum(jnp.exp(logits - m), axis=-1, keepdims=True)) + m
    idx = jax.lax.broadcasted_iota(jnp.int32, logits.shape, 1)
    cand = jnp.where(logits == m, idx, jnp.int32(2 ** 31 - 1))
    action = jnp.min(cand, axis=-1, keepdims=True)        # first argmax, (tb, 1)
    act_ref[...] = action
    onehot = (idx == action).astype(jnp.float32)
    lp_ref[...] = jnp.sum(onehot * (logits - lse), axis=-1, keepdims=True)


# ---------------------------------------------------------------------------
# Wrapper: layout prep + single pallas_call
# ---------------------------------------------------------------------------

@functools.partial(jax.jit, static_argnames=("batch_tile",))
def ppo_actor_forward(obs_nchw, rnn_states, masks, kparams, batch_tile=8):
    """obs (N,4,40,40) NCHW -> (actions (N,1) i32, log_probs (N,1) f32, rnn_states)."""
    del masks  # only the recurrent branch uses masks (use_recurrent_policy=False)

    tb = batch_tile
    n = obs_nchw.shape[0]
    n_pad = ((n + tb - 1) // tb) * tb
    a_dim = kparams["wa"].shape[1]

    x = obs_nchw.astype(jnp.float32)
    if n_pad != n:
        x = jnp.pad(x, ((0, n_pad - n), (0, 0), (0, 0), (0, 0)))

    # Space-to-depth + layout (h', w', batch, c_s2d) with c_s2d = (ph, pw, c).
    # Pure layout op over the raw input (25.6 KB/sample); everything else is
    # done inside the fused kernel.
    xs = x.reshape(n_pad, 4, 20, 2, 20, 2)                 # (n, c, h', ph, w', pw)
    xs = jnp.transpose(xs, (2, 4, 0, 3, 5, 1)).reshape(20, 20, n_pad, 16)

    grid = (n_pad // tb,)

    def full(shape):
        return pl.BlockSpec(shape, lambda i, s=shape: (0,) * len(s))

    in_specs = [
        pl.BlockSpec((20, 20, tb, 16), lambda i: (0, 0, i, 0)),   # s2d obs tile
        full((2, 2, 16, 8)), full((1, 8)),                        # conv1' w, b
        full((2, 2, 8, 16)), full((1, 16)),                       # conv2  w, b
        full((7, 7, 16, 128)), full((1, 128)),                    # fc     w, b
        full((128, a_dim)), full((1, a_dim)),                     # act    w, b
    ]
    out_specs = (pl.BlockSpec((tb, 1), lambda i: (i, 0)),
                 pl.BlockSpec((tb, 1), lambda i: (i, 0)))
    out_shape = (jax.ShapeDtypeStruct((n_pad, 1), jnp.int32),
                 jax.ShapeDtypeStruct((n_pad, 1), jnp.float32))

    actions, log_probs = pl.pallas_call(
        _fused_actor_kernel,
        grid=grid,
        in_specs=in_specs,
        out_specs=out_specs,
        out_shape=out_shape,
        compiler_params=pltpu.CompilerParams(
            dimension_semantics=("parallel",),            # shard batch across TCs (v7x)
            vmem_limit_bytes=32 * 1024 * 1024,            # safe on v5e/v6e/v7x
        ),
    )(xs, kparams["w1"], kparams["b1"], kparams["w2"], kparams["b2"],
      kparams["wf"], kparams["bf"], kparams["wa"], kparams["ba"])

    # use_recurrent_policy = False: rnn_states pass through unchanged
    return actions[:n], log_probs[:n], rnn_states


# ---------------------------------------------------------------------------
# Parameters: PyTorch-native layouts + one-time conversion to kernel layouts
# ---------------------------------------------------------------------------

def make_params(key, num_actions=6):
    """Random params in native PyTorch layouts (Conv2d: (Cout,Cin,KH,KW), Linear: (out,in))."""
    ks = jax.random.split(key, 8)
    return dict(
        conv1_w=0.1 * jax.random.normal(ks[0], (8, 4, 4, 4), jnp.float32),
        conv1_b=0.1 * jax.random.normal(ks[1], (8,), jnp.float32),
        conv2_w=0.1 * jax.random.normal(ks[2], (16, 8, 2, 2), jnp.float32),
        conv2_b=0.1 * jax.random.normal(ks[3], (16,), jnp.float32),
        fc_w=0.05 * jax.random.normal(ks[4], (128, 16 * 7 * 7), jnp.float32),
        fc_b=0.05 * jax.random.normal(ks[5], (128,), jnp.float32),
        act_w=0.05 * jax.random.normal(ks[6], (num_actions, 128), jnp.float32),
        act_b=0.05 * jax.random.normal(ks[7], (num_actions,), jnp.float32),
    )


def prepare_params(p):
    """Convert PyTorch-layout weights to the fused kernel's layouts (done once)."""
    # conv1 (Cout=8,Cin=4,KH=4,KW=4) -> space-to-depth 2x2 taps: (di,dj, 16=(ph,pw,c), co)
    w1 = p["conv1_w"].reshape(8, 4, 2, 2, 2, 2)            # (co, c, di, ph, dj, pw)
    w1 = jnp.transpose(w1, (2, 4, 3, 5, 1, 0)).reshape(2, 2, 16, 8)
    # conv2 (Cout=16,Cin=8,KH=2,KW=2) -> (di, dj, cin, cout)
    w2 = jnp.transpose(p["conv2_w"], (2, 3, 1, 0))
    # fc (128, 784) with flat index c*49 + h*7 + w  -> (h, w, c, 128)
    wf = jnp.transpose(p["fc_w"].T.reshape(16, 7, 7, 128), (1, 2, 0, 3))
    return dict(
        w1=w1, b1=p["conv1_b"].reshape(1, 8),
        w2=w2, b2=p["conv2_b"].reshape(1, 16),
        wf=wf, bf=p["fc_b"].reshape(1, 128),
        wa=p["act_w"].T, ba=p["act_b"].reshape(1, -1),
    )


# ---------------------------------------------------------------------------
# Pure-JAX reference (XLA only; used to validate the Pallas kernel)
# ---------------------------------------------------------------------------

def reference_logits(obs, p):
    dn = ("NCHW", "OIHW", "NCHW")
    hp = jax.lax.Precision.HIGHEST
    y = jax.lax.conv_general_dilated(obs.astype(jnp.float32), p["conv1_w"],
                                     (2, 2), "VALID", dimension_numbers=dn,
                                     precision=hp)
    y = jax.nn.relu(y + p["conv1_b"][None, :, None, None])
    y = jax.lax.reduce_window(y, -jnp.inf, jax.lax.max,
                              (1, 1, 3, 3), (1, 1, 2, 2), "VALID")
    y = jax.lax.conv_general_dilated(y, p["conv2_w"], (1, 1), "VALID",
                                     dimension_numbers=dn, precision=hp)
    y = jax.nn.relu(y + p["conv2_b"][None, :, None, None])
    y = jax.lax.reduce_window(y, -jnp.inf, jax.lax.max,
                              (1, 1, 2, 2), (1, 1, 1, 1), "VALID")
    flat = y.reshape(y.shape[0], -1)                       # PyTorch (C,H,W) flatten order
    feat = jax.nn.relu(jnp.dot(flat, p["fc_w"].T, precision=hp) + p["fc_b"])
    return jnp.dot(feat, p["act_w"].T, precision=hp) + p["act_b"]


# ---------------------------------------------------------------------------
# Example run
# ---------------------------------------------------------------------------

if __name__ == "__main__":
    key = jax.random.PRNGKey(0)
    k_obs, k_params = jax.random.split(key)

    batch = 2
    num_actions = 6
    obs = jax.random.normal(k_obs, (batch, 4, 40, 40), jnp.float32)   # NCHW
    rnn_states = jnp.zeros((batch, 1, 64), jnp.float32)
    masks = jnp.ones((batch, 1), jnp.float32)

    params = make_params(k_params, num_actions)
    kparams = prepare_params(params)

    actions, action_log_probs, rnn_out = ppo_actor_forward(
        obs, rnn_states, masks, kparams, batch_tile=8)
    jax.block_until_ready((actions, action_log_probs, rnn_out))

    assert actions.shape == (batch, 1) and actions.dtype == jnp.int32
    assert action_log_probs.shape == (batch, 1)
    assert rnn_out.shape == rnn_states.shape

    # Validate against a pure-JAX/XLA reference.
    ref_logits = reference_logits(obs, params)
    ref_logp = jax.nn.log_softmax(ref_logits, axis=-1)
    ref_act = jnp.argmax(ref_logits, axis=-1)[:, None].astype(jnp.int32)
    lp_at_kernel_act = jnp.take_along_axis(ref_logp, actions, axis=-1)
    assert jnp.allclose(action_log_probs, lp_at_kernel_act, atol=5e-2, rtol=5e-2), (
        action_log_probs, lp_at_kernel_act)
    gap = jnp.abs(jnp.take_along_axis(ref_logits, actions, axis=-1)
                  - jnp.take_along_axis(ref_logits, ref_act, axis=-1))
    assert bool(jnp.all((actions == ref_act) | (gap < 5e-2)))

    print("KERNEL_OK")
</pallas_src>

<mosaic_0001>
module attributes {stable_mosaic.version = 11 : i64} {
  func.func @_fused_actor_kernel(%arg0: i32, %arg1: memref<20x20x8x16xf32, #tpu.memory_space<vmem>>, %arg2: memref<2x2x16x8xf32, #tpu.memory_space<vmem>>, %arg3: memref<1x8xf32, #tpu.memory_space<vmem>>, %arg4: memref<2x2x8x16xf32, #tpu.memory_space<vmem>>, %arg5: memref<1x16xf32, #tpu.memory_space<vmem>>, %arg6: memref<7x7x16x128xf32, #tpu.memory_space<vmem>>, %arg7: memref<1x128xf32, #tpu.memory_space<vmem>>, %arg8: memref<128x6xf32, #tpu.memory_space<vmem>>, %arg9: memref<1x6xf32, #tpu.memory_space<vmem>>, %arg10: memref<8x1xi32, #tpu.memory_space<vmem>>, %arg11: memref<8x1xf32, #tpu.memory_space<vmem>>) attributes {dimension_semantics = [#tpu.dimension_semantics<parallel>], iteration_bounds = array<i64: 1>, scalar_prefetch = 0 : i64, scratch_operands = 0 : i64, tpu.core_type = #tpu.core_type<tc>, window_params = [{transform_indices = @transform_0, window_bounds = array<i64: 20, 20, 8, 16>}, {pipeline_mode = #tpu.pipeline_mode<synchronous>, transform_indices = @transform_1, window_bounds = array<i64: 2, 2, 16, 8>}, {pipeline_mode = #tpu.pipeline_mode<synchronous>, transform_indices = @transform_2, window_bounds = array<i64: 1, 8>}, {pipeline_mode = #tpu.pipeline_mode<synchronous>, transform_indices = @transform_3, window_bounds = array<i64: 2, 2, 8, 16>}, {pipeline_mode = #tpu.pipeline_mode<synchronous>, transform_indices = @transform_4, window_bounds = array<i64: 1, 16>}, {pipeline_mode = #tpu.pipeline_mode<synchronous>, transform_indices = @transform_5, window_bounds = array<i64: 7, 7, 16, 128>}, {pipeline_mode = #tpu.pipeline_mode<synchronous>, transform_indices = @transform_6, window_bounds = array<i64: 1, 128>}, {pipeline_mode = #tpu.pipeline_mode<synchronous>, transform_indices = @transform_7, window_bounds = array<i64: 128, 6>}, {pipeline_mode = #tpu.pipeline_mode<synchronous>, transform_indices = @transform_8, window_bounds = array<i64: 1, 6>}, {transform_indices = @transform_9, window_bounds = array<i64: 8, 1>}, {transform_indices = @transform_10, window_bounds = array<i64: 8, 1>}]} {
    %c0 = arith.constant 0 : index
    %c0_0 = arith.constant 0 : index
    %c0_1 = arith.constant 0 : index
    %c0_2 = arith.constant 0 : index
    %0 = vector.load %arg1[%c0, %c0_0, %c0_1, %c0_2] : memref<20x20x8x16xf32, #tpu.memory_space<vmem>>, vector<20x20x8x16xf32>
    %1 = vector.extract_strided_slice %0 {offsets = [0, 0, 0, 0], sizes = [19, 19, 8, 16], strides = [1, 1, 1, 1]} : vector<20x20x8x16xf32> to vector<19x19x8x16xf32>
    %2 = vector.shape_cast %1 : vector<19x19x8x16xf32> to vector<2888x16xf32>
    %c0_3 = arith.constant 0 : index
    %c0_4 = arith.constant 0 : index
    %c0_5 = arith.constant 0 : index
    %c0_6 = arith.constant 0 : index
    %3 = vector.load %arg2[%c0_3, %c0_4, %c0_5, %c0_6] : memref<2x2x16x8xf32, #tpu.memory_space<vmem>>, vector<1x1x16x8xf32>
    %4 = vector.shape_cast %3 : vector<1x1x16x8xf32> to vector<16x8xf32>
    %cst = arith.constant dense<0.000000e+00> : vector<2888x8xf32>
    %5 = tpu.matmul %2, %4, %cst {dimension_numbers = #tpu.dot_dimension_numbers<[1], [0], [0], [1], [0, 0, 1, 1], [], []>} : vector<2888x16xf32>, vector<16x8xf32>, vector<2888x8xf32> -> vector<2888x8xf32>
    %6 = vector.extract_strided_slice %0 {offsets = [0, 1, 0, 0], sizes = [19, 19, 8, 16], strides = [1, 1, 1, 1]} : vector<20x20x8x16xf32> to vector<19x19x8x16xf32>
    %7 = vector.shape_cast %6 : vector<19x19x8x16xf32> to vector<2888x16xf32>
    %c0_7 = arith.constant 0 : index
    %c1 = arith.constant 1 : index
    %c0_8 = arith.constant 0 : index
    %c0_9 = arith.constant 0 : index
    %8 = vector.load %arg2[%c0_7, %c1, %c0_8, %c0_9] : memref<2x2x16x8xf32, #tpu.memory_space<vmem>>, vector<1x1x16x8xf32>
    %9 = vector.shape_cast %8 : vector<1x1x16x8xf32> to vector<16x8xf32>
    %cst_10 = arith.constant dense<0.000000e+00> : vector<2888x8xf32>
    %10 = tpu.matmul %7, %9, %cst_10 {dimension_numbers = #tpu.dot_dimension_numbers<[1], [0], [0], [1], [0, 0, 1, 1], [], []>} : vector<2888x16xf32>, vector<16x8xf32>, vector<2888x8xf32> -> vector<2888x8xf32>
    %11 = arith.addf %5, %10 : vector<2888x8xf32>
    %12 = vector.extract_strided_slice %0 {offsets = [1, 0, 0, 0], sizes = [19, 19, 8, 16], strides = [1, 1, 1, 1]} : vector<20x20x8x16xf32> to vector<19x19x8x16xf32>
    %13 = vector.shape_cast %12 : vector<19x19x8x16xf32> to vector<2888x16xf32>
    %c1_11 = arith.constant 1 : index
    %c0_12 = arith.constant 0 : index
    %c0_13 = arith.constant 0 : index
    %c0_14 = arith.constant 0 : index
    %14 = vector.load %arg2[%c1_11, %c0_12, %c0_13, %c0_14] : memref<2x2x16x8xf32, #tpu.memory_space<vmem>>, vector<1x1x16x8xf32>
    %15 = vector.shape_cast %14 : vector<1x1x16x8xf32> to vector<16x8xf32>
    %cst_15 = arith.constant dense<0.000000e+00> : vector<2888x8xf32>
    %16 = tpu.matmul %13, %15, %cst_15 {dimension_numbers = #tpu.dot_dimension_numbers<[1], [0], [0], [1], [0, 0, 1, 1], [], []>} : vector<2888x16xf32>, vector<16x8xf32>, vector<2888x8xf32> -> vector<2888x8xf32>
    %17 = arith.addf %11, %16 : vector<2888x8xf32>
    %18 = vector.extract_strided_slice %0 {offsets = [1, 1, 0, 0], sizes = [19, 19, 8, 16], strides = [1, 1, 1, 1]} : vector<20x20x8x16xf32> to vector<19x19x8x16xf32>
    %19 = vector.shape_cast %18 : vector<19x19x8x16xf32> to vector<2888x16xf32>
    %c1_16 = arith.constant 1 : index
    %c1_17 = arith.constant 1 : index
    %c0_18 = arith.constant 0 : index
    %c0_19 = arith.constant 0 : index
    %20 = vector.load %arg2[%c1_16, %c1_17, %c0_18, %c0_19] : memref<2x2x16x8xf32, #tpu.memory_space<vmem>>, vector<1x1x16x8xf32>
    %21 = vector.shape_cast %20 : vector<1x1x16x8xf32> to vector<16x8xf32>
    %cst_20 = arith.constant dense<0.000000e+00> : vector<2888x8xf32>
    %22 = tpu.matmul %19, %21, %cst_20 {dimension_numbers = #tpu.dot_dimension_numbers<[1], [0], [0], [1], [0, 0, 1, 1], [], []>} : vector<2888x16xf32>, vector<16x8xf32>, vector<2888x8xf32> -> vector<2888x8xf32>
    %23 = arith.addf %17, %22 : vector<2888x8xf32>
    %c0_21 = arith.constant 0 : index
    %c0_22 = arith.constant 0 : index
    %24 = vector.load %arg3[%c0_21, %c0_22] : memref<1x8xf32, #tpu.memory_space<vmem>>, vector<1x8xf32>
    %25 = vector.broadcast %24 : vector<1x8xf32> to vector<2888x8xf32>
    %26 = arith.addf %23, %25 : vector<2888x8xf32>
    %cst_23 = arith.constant 0.000000e+00 : f32
    %27 = vector.broadcast %cst_23 : f32 to vector<2888x8xf32>
    %28 = arith.maximumf %26, %27 : vector<2888x8xf32>
    %29 = vector.shape_cast %28 : vector<2888x8xf32> to vector<19x19x8x8xf32>
    %30 = vector.extract_strided_slice %29 {offsets = [0, 0, 0, 0], sizes = [18, 19, 8, 8], strides = [1, 1, 1, 1]} : vector<19x19x8x8xf32> to vector<18x19x8x8xf32>
    %31 = vector.shape_cast %30 : vector<18x19x8x8xf32> to vector<9x38x8x8xf32>
    %32 = vector.extract_strided_slice %29 {offsets = [1, 0, 0, 0], sizes = [18, 19, 8, 8], strides = [1, 1, 1, 1]} : vector<19x19x8x8xf32> to vector<18x19x8x8xf32>
    %33 = vector.shape_cast %32 : vector<18x19x8x8xf32> to vector<9x38x8x8xf32>
    %34 = vector.extract_strided_slice %31 {offsets = [0, 0, 0, 0], sizes = [9, 19, 8, 8], strides = [1, 1, 1, 1]} : vector<9x38x8x8xf32> to vector<9x19x8x8xf32>
    %35 = vector.extract_strided_slice %31 {offsets = [0, 19, 0, 0], sizes = [9, 19, 8, 8], strides = [1, 1, 1, 1]} : vector<9x38x8x8xf32> to vector<9x19x8x8xf32>
    %36 = arith.maximumf %34, %35 : vector<9x19x8x8xf32>
    %37 = vector.extract_strided_slice %33 {offsets = [0, 19, 0, 0], sizes = [9, 19, 8, 8], strides = [1, 1, 1, 1]} : vector<9x38x8x8xf32> to vector<9x19x8x8xf32>
    %38 = arith.maximumf %36, %37 : vector<9x19x8x8xf32>
    %39 = vector.extract_strided_slice %38 {offsets = [0, 0, 0, 0], sizes = [9, 18, 8, 8], strides = [1, 1, 1, 1]} : vector<9x19x8x8xf32> to vector<9x18x8x8xf32>
    %40 = vector.shape_cast %39 : vector<9x18x8x8xf32> to vector<9x9x16x8xf32>
    %41 = vector.extract_strided_slice %38 {offsets = [0, 1, 0, 0], sizes = [9, 18, 8, 8], strides = [1, 1, 1, 1]} : vector<9x19x8x8xf32> to vector<9x18x8x8xf32>
    %42 = vector.shape_cast %41 : vector<9x18x8x8xf32> to vector<9x9x16x8xf32>
    %43 = vector.extract_strided_slice %40 {offsets = [0, 0, 0, 0], sizes = [9, 9, 8, 8], strides = [1, 1, 1, 1]} : vector<9x9x16x8xf32> to vector<9x9x8x8xf32>
    %44 = vector.extract_strided_slice %40 {offsets = [0, 0, 8, 0], sizes = [9, 9, 8, 8], strides = [1, 1, 1, 1]} : vector<9x9x16x8xf32> to vector<9x9x8x8xf32>
    %45 = arith.maximumf %43, %44 : vector<9x9x8x8xf32>
    %46 = vector.extract_strided_slice %42 {offsets = [0, 0, 8, 0], sizes = [9, 9, 8, 8], strides = [1, 1, 1, 1]} : vector<9x9x16x8xf32> to vector<9x9x8x8xf32>
    %47 = arith.maximumf %45, %46 : vector<9x9x8x8xf32>
    %48 = vector.extract_strided_slice %47 {offsets = [0, 0, 0, 0], sizes = [8, 8, 8, 8], strides = [1, 1, 1, 1]} : vector<9x9x8x8xf32> to vector<8x8x8x8xf32>
    %49 = vector.shape_cast %48 : vector<8x8x8x8xf32> to vector<512x8xf32>
    %c0_24 = arith.constant 0 : index
    %c0_25 = arith.constant 0 : index
    %c0_26 = arith.constant 0 : index
    %c0_27 = arith.constant 0 : index
    %50 = vector.load %arg4[%c0_24, %c0_25, %c0_26, %c0_27] : memref<2x2x8x16xf32, #tpu.memory_space<vmem>>, vector<1x1x8x16xf32>
    %51 = vector.shape_cast %50 : vector<1x1x8x16xf32> to vector<8x16xf32>
    %cst_28 = arith.constant dense<0.000000e+00> : vector<512x16xf32>
    %52 = tpu.matmul %49, %51, %cst_28 {dimension_numbers = #tpu.dot_dimension_numbers<[1], [0], [0], [1], [0, 0, 1, 1], [], []>} : vector<512x8xf32>, vector<8x16xf32>, vector<512x16xf32> -> vector<512x16xf32>
    %53 = vector.extract_strided_slice %47 {offsets = [0, 1, 0, 0], sizes = [8, 8, 8, 8], strides = [1, 1, 1, 1]} : vector<9x9x8x8xf32> to vector<8x8x8x8xf32>
    %54 = vector.shape_cast %53 : vector<8x8x8x8xf32> to vector<512x8xf32>
    %c0_29 = arith.constant 0 : index
    %c1_30 = arith.constant 1 : index
    %c0_31 = arith.constant 0 : index
    %c0_32 = arith.constant 0 : index
    %55 = vector.load %arg4[%c0_29, %c1_30, %c0_31, %c0_32] : memref<2x2x8x16xf32, #tpu.memory_space<vmem>>, vector<1x1x8x16xf32>
    %56 = vector.shape_cast %55 : vector<1x1x8x16xf32> to vector<8x16xf32>
    %cst_33 = arith.constant dense<0.000000e+00> : vector<512x16xf32>
    %57 = tpu.matmul %54, %56, %cst_33 {dimension_numbers = #tpu.dot_dimension_numbers<[1], [0], [0], [1], [0, 0, 1, 1], [], []>} : vector<512x8xf32>, vector<8x16xf32>, vector<512x16xf32> -> vector<512x16xf32>
    %58 = arith.addf %52, %57 : vector<512x16xf32>
    %59 = vector.extract_strided_slice %47 {offsets = [1, 0, 0, 0], sizes = [8, 8, 8, 8], strides = [1, 1, 1, 1]} : vector<9x9x8x8xf32> to vector<8x8x8x8xf32>
    %60 = vector.shape_cast %59 : vector<8x8x8x8xf32> to vector<512x8xf32>
    %c1_34 = arith.constant 1 : index
    %c0_35 = arith.constant 0 : index
    %c0_36 = arith.constant 0 : index
    %c0_37 = arith.constant 0 : index
    %61 = vector.load %arg4[%c1_34, %c0_35, %c0_36, %c0_37] : memref<2x2x8x16xf32, #tpu.memory_space<vmem>>, vector<1x1x8x16xf32>
    %62 = vector.shape_cast %61 : vector<1x1x8x16xf32> to vector<8x16xf32>
    %cst_38 = arith.constant dense<0.000000e+00> : vector<512x16xf32>
    %63 = tpu.matmul %60, %62, %cst_38 {dimension_numbers = #tpu.dot_dimension_numbers<[1], [0], [0], [1], [0, 0, 1, 1], [], []>} : vector<512x8xf32>, vector<8x16xf32>, vector<512x16xf32> -> vector<512x16xf32>
    %64 = arith.addf %58, %63 : vector<512x16xf32>
    %65 = vector.extract_strided_slice %47 {offsets = [1, 1, 0, 0], sizes = [8, 8, 8, 8], strides = [1, 1, 1, 1]} : vector<9x9x8x8xf32> to vector<8x8x8x8xf32>
    %66 = vector.shape_cast %65 : vector<8x8x8x8xf32> to vector<512x8xf32>
    %c1_39 = arith.constant 1 : index
    %c1_40 = arith.constant 1 : index
    %c0_41 = arith.constant 0 : index
    %c0_42 = arith.constant 0 : index
    %67 = vector.load %arg4[%c1_39, %c1_40, %c0_41, %c0_42] : memref<2x2x8x16xf32, #tpu.memory_space<vmem>>, vector<1x1x8x16xf32>
    %68 = vector.shape_cast %67 : vector<1x1x8x16xf32> to vector<8x16xf32>
    %cst_43 = arith.constant dense<0.000000e+00> : vector<512x16xf32>
    %69 = tpu.matmul %66, %68, %cst_43 {dimension_numbers = #tpu.dot_dimension_numbers<[1], [0], [0], [1], [0, 0, 1, 1], [], []>} : vector<512x8xf32>, vector<8x16xf32>, vector<512x16xf32> -> vector<512x16xf32>
    %70 = arith.addf %64, %69 : vector<512x16xf32>
    %c0_44 = arith.constant 0 : index
    %c0_45 = arith.constant 0 : index
    %71 = vector.load %arg5[%c0_44, %c0_45] : memref<1x16xf32, #tpu.memory_space<vmem>>, vector<1x16xf32>
    %72 = vector.broadcast %71 : vector<1x16xf32> to vector<512x16xf32>
    %73 = arith.addf %70, %72 : vector<512x16xf32>
    %cst_46 = arith.constant 0.000000e+00 : f32
    %74 = vector.broadcast %cst_46 : f32 to vector<512x16xf32>
    %75 = arith.maximumf %73, %74 : vector<512x16xf32>
    %76 = vector.shape_cast %75 : vector<512x16xf32> to vector<8x8x8x16xf32>
    %77 = vector.extract_strided_slice %76 {offsets = [0, 0, 0, 0], sizes = [7, 8, 8, 16], strides = [1, 1, 1, 1]} : vector<8x8x8x16xf32> to vector<7x8x8x16xf32>
    %78 = vector.extract_strided_slice %76 {offsets = [1, 0, 0, 0], sizes = [7, 8, 8, 16], strides = [1, 1, 1, 1]} : vector<8x8x8x16xf32> to vector<7x8x8x16xf32>
    %79 = arith.maximumf %77, %78 : vector<7x8x8x16xf32>
    %80 = vector.extract_strided_slice %79 {offsets = [0, 0, 0, 0], sizes = [7, 7, 8, 16], strides = [1, 1, 1, 1]} : vector<7x8x8x16xf32> to vector<7x7x8x16xf32>
    %81 = vector.extract_strided_slice %79 {offsets = [0, 1, 0, 0], sizes = [7, 7, 8, 16], strides = [1, 1, 1, 1]} : vector<7x8x8x16xf32> to vector<7x7x8x16xf32>
    %82 = arith.maximumf %80, %81 : vector<7x7x8x16xf32>
    %cst_47 = arith.constant 0.000000e+00 : f32
    %83 = vector.broadcast %cst_47 : f32 to vector<8x128xf32>
    %84 = vector.extract_strided_slice %82 {offsets = [0, 0, 0, 0], sizes = [1, 1, 8, 16], strides = [1, 1, 1, 1]} : vector<7x7x8x16xf32> to vector<1x1x8x16xf32>
    %85 = vector.shape_cast %84 : vector<1x1x8x16xf32> to vector<8x16xf32>
    %c0_48 = arith.constant 0 : index
    %c0_49 = arith.constant 0 : index
    %c0_50 = arith.constant 0 : index
    %c0_51 = arith.constant 0 : index
    %86 = vector.load %arg6[%c0_48, %c0_49, %c0_50, %c0_51] : memref<7x7x16x128xf32, #tpu.memory_space<vmem>>, vector<1x1x16x128xf32>
    %87 = vector.shape_cast %86 : vector<1x1x16x128xf32> to vector<16x128xf32>
    %cst_52 = arith.constant dense<0.000000e+00> : vector<8x128xf32>
    %88 = tpu.matmul %85, %87, %cst_52 {dimension_numbers = #tpu.dot_dimension_numbers<[1], [0], [0], [1], [0, 0, 1, 1], [], []>} : vector<8x16xf32>, vector<16x128xf32>, vector<8x128xf32> -> vector<8x128xf32>
    %89 = arith.addf %83, %88 : vector<8x128xf32>
    %90 = vector.extract_strided_slice %82 {offsets = [0, 1, 0, 0], sizes = [1, 1, 8, 16], strides = [1, 1, 1, 1]} : vector<7x7x8x16xf32> to vector<1x1x8x16xf32>
    %91 = vector.shape_cast %90 : vector<1x1x8x16xf32> to vector<8x16xf32>
    %c0_53 = arith.constant 0 : index
    %c1_54 = arith.constant 1 : index
    %c0_55 = arith.constant 0 : index
    %c0_56 = arith.constant 0 : index
    %92 = vector.load %arg6[%c0_53, %c1_54, %c0_55, %c0_56] : memref<7x7x16x128xf32, #tpu.memory_space<vmem>>, vector<1x1x16x128xf32>
    %93 = vector.shape_cast %92 : vector<1x1x16x128xf32> to vector<16x128xf32>
    %cst_57 = arith.constant dense<0.000000e+00> : vector<8x128xf32>
    %94 = tpu.matmul %91, %93, %cst_57 {dimension_numbers = #tpu.dot_dimension_numbers<[1], [0], [0], [1], [0, 0, 1, 1], [], []>} : vector<8x16xf32>, vector<16x128xf32>, vector<8x128xf32> -> vector<8x128xf32>
    %95 = arith.addf %89, %94 : vector<8x128xf32>
    %96 = vector.extract_strided_slice %82 {offsets = [0, 2, 0, 0], sizes = [1, 1, 8, 16], strides = [1, 1, 1, 1]} : vector<7x7x8x16xf32> to vector<1x1x8x16xf32>
    %97 = vector.shape_cast %96 : vector<1x1x8x16xf32> to vector<8x16xf32>
    %c0_58 = arith.constant 0 : index
    %c2 = arith.constant 2 : index
    %c0_59 = arith.constant 0 : index
    %c0_60 = arith.constant 0 : index
    %98 = vector.load %arg6[%c0_58, %c2, %c0_59, %c0_60] : memref<7x7x16x128xf32, #tpu.memory_space<vmem>>, vector<1x1x16x128xf32>
    %99 = vector.shape_cast %98 : vector<1x1x16x128xf32> to vector<16x128xf32>
    %cst_61 = arith.constant dense<0.000000e+00> : vector<8x128xf32>
    %100 = tpu.matmul %97, %99, %cst_61 {dimension_numbers = #tpu.dot_dimension_numbers<[1], [0], [0], [1], [0, 0, 1, 1], [], []>} : vector<8x16xf32>, vector<16x128xf32>, vector<8x128xf32> -> vector<8x128xf32>
    %101 = arith.addf %95, %100 : vector<8x128xf32>
    %102 = vector.extract_strided_slice %82 {offsets = [0, 3, 0, 0], sizes = [1, 1, 8, 16], strides = [1, 1, 1, 1]} : vector<7x7x8x16xf32> to vector<1x1x8x16xf32>
    %103 = vector.shape_cast %102 : vector<1x1x8x16xf32> to vector<8x16xf32>
    %c0_62 = arith.constant 0 : index
    %c3 = arith.constant 3 : index
    %c0_63 = arith.constant 0 : index
    %c0_64 = arith.constant 0 : index
    %104 = vector.load %arg6[%c0_62, %c3, %c0_63, %c0_64] : memref<7x7x16x128xf32, #tpu.memory_space<vmem>>, vector<1x1x16x128xf32>
    %105 = vector.shape_cast %104 : vector<1x1x16x128xf32> to vector<16x128xf32>
    %cst_65 = arith.constant dense<0.000000e+00> : vector<8x128xf32>
    %106 = tpu.matmul %103, %105, %cst_65 {dimension_numbers = #tpu.dot_dimension_numbers<[1], [0], [0], [1], [0, 0, 1, 1], [], []>} : vector<8x16xf32>, vector<16x128xf32>, vector<8x128xf32> -> vector<8x128xf32>
    %107 = arith.addf %101, %106 : vector<8x128xf32>
    %108 = vector.extract_strided_slice %82 {offsets = [0, 4, 0, 0], sizes = [1, 1, 8, 16], strides = [1, 1, 1, 1]} : vector<7x7x8x16xf32> to vector<1x1x8x16xf32>
    %109 = vector.shape_cast %108 : vector<1x1x8x16xf32> to vector<8x16xf32>
    %c0_66 = arith.constant 0 : index
    %c4 = arith.constant 4 : index
    %c0_67 = arith.constant 0 : index
    %c0_68 = arith.constant 0 : index
    %110 = vector.load %arg6[%c0_66, %c4, %c0_67, %c0_68] : memref<7x7x16x128xf32, #tpu.memory_space<vmem>>, vector<1x1x16x128xf32>
    %111 = vector.shape_cast %110 : vector<1x1x16x128xf32> to vector<16x128xf32>
    %cst_69 = arith.constant dense<0.000000e+00> : vector<8x128xf32>
    %112 = tpu.matmul %109, %111, %cst_69 {dimension_numbers = #tpu.dot_dimension_numbers<[1], [0], [0], [1], [0, 0, 1, 1], [], []>} : vector<8x16xf32>, vector<16x128xf32>, vector<8x128xf32> -> vector<8x128xf32>
    %113 = arith.addf %107, %112 : vector<8x128xf32>
    %114 = vector.extract_strided_slice %82 {offsets = [0, 5, 0, 0], sizes = [1, 1, 8, 16], strides = [1, 1, 1, 1]} : vector<7x7x8x16xf32> to vector<1x1x8x16xf32>
    %115 = vector.shape_cast %114 : vector<1x1x8x16xf32> to vector<8x16xf32>
    %c0_70 = arith.constant 0 : index
    %c5 = arith.constant 5 : index
    %c0_71 = arith.constant 0 : index
    %c0_72 = arith.constant 0 : index
    %116 = vector.load %arg6[%c0_70, %c5, %c0_71, %c0_72] : memref<7x7x16x128xf32, #tpu.memory_space<vmem>>, vector<1x1x16x128xf32>
    %117 = vector.shape_cast %116 : vector<1x1x16x128xf32> to vector<16x128xf32>
    %cst_73 = arith.constant dense<0.000000e+00> : vector<8x128xf32>
    %118 = tpu.matmul %115, %117, %cst_73 {dimension_numbers = #tpu.dot_dimension_numbers<[1], [0], [0], [1], [0, 0, 1, 1], [], []>} : vector<8x16xf32>, vector<16x128xf32>, vector<8x128xf32> -> vector<8x128xf32>
    %119 = arith.addf %113, %118 : vector<8x128xf32>
    %120 = vector.extract_strided_slice %82 {offsets = [0, 6, 0, 0], sizes = [1, 1, 8, 16], strides = [1, 1, 1, 1]} : vector<7x7x8x16xf32> to vector<1x1x8x16xf32>
    %121 = vector.shape_cast %120 : vector<1x1x8x16xf32> to vector<8x16xf32>
    %c0_74 = arith.constant 0 : index
    %c6 = arith.constant 6 : index
    %c0_75 = arith.constant 0 : index
    %c0_76 = arith.constant 0 : index
    %122 = vector.load %arg6[%c0_74, %c6, %c0_75, %c0_76] : memref<7x7x16x128xf32, #tpu.memory_space<vmem>>, vector<1x1x16x128xf32>
    %123 = vector.shape_cast %122 : vector<1x1x16x128xf32> to vector<16x128xf32>
    %cst_77 = arith.constant dense<0.000000e+00> : vector<8x128xf32>
    %124 = tpu.matmul %121, %123, %cst_77 {dimension_numbers = #tpu.dot_dimension_numbers<[1], [0], [0], [1], [0, 0, 1, 1], [], []>} : vector<8x16xf32>, vector<16x128xf32>, vector<8x128xf32> -> vector<8x128xf32>
    %125 = arith.addf %119, %124 : vector<8x128xf32>
    %126 = vector.extract_strided_slice %82 {offsets = [1, 0, 0, 0], sizes = [1, 1, 8, 16], strides = [1, 1, 1, 1]} : vector<7x7x8x16xf32> to vector<1x1x8x16xf32>
    %127 = vector.shape_cast %126 : vector<1x1x8x16xf32> to vector<8x16xf32>
    %c1_78 = arith.constant 1 : index
    %c0_79 = arith.constant 0 : index
    %c0_80 = arith.constant 0 : index
    %c0_81 = arith.constant 0 : index
    %128 = vector.load %arg6[%c1_78, %c0_79, %c0_80, %c0_81] : memref<7x7x16x128xf32, #tpu.memory_space<vmem>>, vector<1x1x16x128xf32>
    %129 = vector.shape_cast %128 : vector<1x1x16x128xf32> to vector<16x128xf32>
    %cst_82 = arith.constant dense<0.000000e+00> : vector<8x128xf32>
    %130 = tpu.matmul %127, %129, %cst_82 {dimension_numbers = #tpu.dot_dimension_numbers<[1], [0], [0], [1], [0, 0, 1, 1], [], []>} : vector<8x16xf32>, vector<16x128xf32>, vector<8x128xf32> -> vector<8x128xf32>
    %131 = arith.addf %125, %130 : vector<8x128xf32>
    %132 = vector.extract_strided_slice %82 {offsets = [1, 1, 0, 0], sizes = [1, 1, 8, 16], strides = [1, 1, 1, 1]} : vector<7x7x8x16xf32> to vector<1x1x8x16xf32>
    %133 = vector.shape_cast %132 : vector<1x1x8x16xf32> to vector<8x16xf32>
    %c1_83 = arith.constant 1 : index
    %c1_84 = arith.constant 1 : index
    %c0_85 = arith.constant 0 : index
    %c0_86 = arith.constant 0 : index
    %134 = vector.load %arg6[%c1_83, %c1_84, %c0_85, %c0_86] : memref<7x7x16x128xf32, #tpu.memory_space<vmem>>, vector<1x1x16x128xf32>
    %135 = vector.shape_cast %134 : vector<1x1x16x128xf32> to vector<16x128xf32>
    %cst_87 = arith.constant dense<0.000000e+00> : vector<8x128xf32>
    %136 = tpu.matmul %133, %135, %cst_87 {dimension_numbers = #tpu.dot_dimension_numbers<[1], [0], [0], [1], [0, 0, 1, 1], [], []>} : vector<8x16xf32>, vector<16x128xf32>, vector<8x128xf32> -> vector<8x128xf32>
    %137 = arith.addf %131, %136 : vector<8x128xf32>
    %138 = vector.extract_strided_slice %82 {offsets = [1, 2, 0, 0], sizes = [1, 1, 8, 16], strides = [1, 1, 1, 1]} : vector<7x7x8x16xf32> to vector<1x1x8x16xf32>
    %139 = vector.shape_cast %138 : vector<1x1x8x16xf32> to vector<8x16xf32>
    %c1_88 = arith.constant 1 : index
    %c2_89 = arith.constant 2 : index
    %c0_90 = arith.constant 0 : index
    %c0_91 = arith.constant 0 : index
    %140 = vector.load %arg6[%c1_88, %c2_89, %c0_90, %c0_91] : memref<7x7x16x128xf32, #tpu.memory_space<vmem>>, vector<1x1x16x128xf32>
    %141 = vector.shape_cast %140 : vector<1x1x16x128xf32> to vector<16x128xf32>
    %cst_92 = arith.constant dense<0.000000e+00> : vector<8x128xf32>
    %142 = tpu.matmul %139, %141, %cst_92 {dimension_numbers = #tpu.dot_dimension_numbers<[1], [0], [0], [1], [0, 0, 1, 1], [], []>} : vector<8x16xf32>, vector<16x128xf32>, vector<8x128xf32> -> vector<8x128xf32>
    %143 = arith.addf %137, %142 : vector<8x128xf32>
    %144 = vector.extract_strided_slice %82 {offsets = [1, 3, 0, 0], sizes = [1, 1, 8, 16], strides = [1, 1, 1, 1]} : vector<7x7x8x16xf32> to vector<1x1x8x16xf32>
    %145 = vector.shape_cast %144 : vector<1x1x8x16xf32> to vector<8x16xf32>
    %c1_93 = arith.constant 1 : index
    %c3_94 = arith.constant 3 : index
    %c0_95 = arith.constant 0 : index
    %c0_96 = arith.constant 0 : index
    %146 = vector.load %arg6[%c1_93, %c3_94, %c0_95, %c0_96] : memref<7x7x16x128xf32, #tpu.memory_space<vmem>>, vector<1x1x16x128xf32>
    %147 = vector.shape_cast %146 : vector<1x1x16x128xf32> to vector<16x128xf32>
    %cst_97 = arith.constant dense<0.000000e+00> : vector<8x128xf32>
    %148 = tpu.matmul %145, %147, %cst_97 {dimension_numbers = #tpu.dot_dimension_numbers<[1], [0], [0], [1], [0, 0, 1, 1], [], []>} : vector<8x16xf32>, vector<16x128xf32>, vector<8x128xf32> -> vector<8x128xf32>
    %149 = arith.addf %143, %148 : vector<8x128xf32>
    %150 = vector.extract_strided_slice %82 {offsets = [1, 4, 0, 0], sizes = [1, 1, 8, 16], strides = [1, 1, 1, 1]} : vector<7x7x8x16xf32> to vector<1x1x8x16xf32>
    %151 = vector.shape_cast %150 : vector<1x1x8x16xf32> to vector<8x16xf32>
    %c1_98 = arith.constant 1 : index
    %c4_99 = arith.constant 4 : index
    %c0_100 = arith.constant 0 : index
    %c0_101 = arith.constant 0 : index
    %152 = vector.load %arg6[%c1_98, %c4_99, %c0_100, %c0_101] : memref<7x7x16x128xf32, #tpu.memory_space<vmem>>, vector<1x1x16x128xf32>
    %153 = vector.shape_cast %152 : vector<1x1x16x128xf32> to vector<16x128xf32>
    %cst_102 = arith.constant dense<0.000000e+00> : vector<8x128xf32>
    %154 = tpu.matmul %151, %153, %cst_102 {dimension_numbers = #tpu.dot_dimension_numbers<[1], [0], [0], [1], [0, 0, 1, 1], [], []>} : vector<8x16xf32>, vector<16x128xf32>, vector<8x128xf32> -> vector<8x128xf32>
    %155 = arith.addf %149, %154 : vector<8x128xf32>
    %156 = vector.extract_strided_slice %82 {offsets = [1, 5, 0, 0], sizes = [1, 1, 8, 16], strides = [1, 1, 1, 1]} : vector<7x7x8x16xf32> to vector<1x1x8x16xf32>
    %157 = vector.shape_cast %156 : vector<1x1x8x16xf32> to vector<8x16xf32>
    %c1_103 = arith.constant 1 : index
    %c5_104 = arith.constant 5 : index
    %c0_105 = arith.constant 0 : index
    %c0_106 = arith.constant 0 : index
    %158 = vector.load %arg6[%c1_103, %c5_104, %c0_105, %c0_106] : memref<7x7x16x128xf32, #tpu.memory_space<vmem>>, vector<1x1x16x128xf32>
    %159 = vector.shape_cast %158 : vector<1x1x16x128xf32> to vector<16x128xf32>
    %cst_107 = arith.constant dense<0.000000e+00> : vector<8x128xf32>
    %160 = tpu.matmul %157, %159, %cst_107 {dimension_numbers = #tpu.dot_dimension_numbers<[1], [0], [0], [1], [0, 0, 1, 1], [], []>} : vector<8x16xf32>, vector<16x128xf32>, vector<8x128xf32> -> vector<8x128xf32>
    %161 = arith.addf %155, %160 : vector<8x128xf32>
    %162 = vector.extract_strided_slice %82 {offsets = [1, 6, 0, 0], sizes = [1, 1, 8, 16], strides = [1, 1, 1, 1]} : vector<7x7x8x16xf32> to vector<1x1x8x16xf32>
    %163 = vector.shape_cast %162 : vector<1x1x8x16xf32> to vector<8x16xf32>
    %c1_108 = arith.constant 1 : index
    %c6_109 = arith.constant 6 : index
    %c0_110 = arith.constant 0 : index
    %c0_111 = arith.constant 0 : index
    %164 = vector.load %arg6[%c1_108, %c6_109, %c0_110, %c0_111] : memref<7x7x16x128xf32, #tpu.memory_space<vmem>>, vector<1x1x16x128xf32>
    %165 = vector.shape_cast %164 : vector<1x1x16x128xf32> to vector<16x128xf32>
    %cst_112 = arith.constant dense<0.000000e+00> : vector<8x128xf32>
    %166 = tpu.matmul %163, %165, %cst_112 {dimension_numbers = #tpu.dot_dimension_numbers<[1], [0], [0], [1], [0, 0, 1, 1], [], []>} : vector<8x16xf32>, vector<16x128xf32>, vector<8x128xf32> -> vector<8x128xf32>
    %167 = arith.addf %161, %166 : vector<8x128xf32>
    %168 = vector.extract_strided_slice %82 {offsets = [2, 0, 0, 0], sizes = [1, 1, 8, 16], strides = [1, 1, 1, 1]} : vector<7x7x8x16xf32> to vector<1x1x8x16xf32>
    %169 = vector.shape_cast %168 : vector<1x1x8x16xf32> to vector<8x16xf32>
    %c2_113 = arith.constant 2 : index
    %c0_114 = arith.constant 0 : index
    %c0_115 = arith.constant 0 : index
    %c0_116 = arith.constant 0 : index
    %170 = vector.load %arg6[%c2_113, %c0_114, %c0_115, %c0_116] : memref<7x7x16x128xf32, #tpu.memory_space<vmem>>, vector<1x1x16x128xf32>
    %171 = vector.shape_cast %170 : vector<1x1x16x128xf32> to vector<16x128xf32>
    %cst_117 = arith.constant dense<0.000000e+00> : vector<8x128xf32>
    %172 = tpu.matmul %169, %171, %cst_117 {dimension_numbers = #tpu.dot_dimension_numbers<[1], [0], [0], [1], [0, 0, 1, 1], [], []>} : vector<8x16xf32>, vector<16x128xf32>, vector<8x128xf32> -> vector<8x128xf32>
    %173 = arith.addf %167, %172 : vector<8x128xf32>
    %174 = vector.extract_strided_slice %82 {offsets = [2, 1, 0, 0], sizes = [1, 1, 8, 16], strides = [1, 1, 1, 1]} : vector<7x7x8x16xf32> to vector<1x1x8x16xf32>
    %175 = vector.shape_cast %174 : vector<1x1x8x16xf32> to vector<8x16xf32>
    %c2_118 = arith.constant 2 : index
    %c1_119 = arith.constant 1 : index
    %c0_120 = arith.constant 0 : index
    %c0_121 = arith.constant 0 : index
    %176 = vector.load %arg6[%c2_118, %c1_119, %c0_120, %c0_121] : memref<7x7x16x128xf32, #tpu.memory_space<vmem>>, vector<1x1x16x128xf32>
    %177 = vector.shape_cast %176 : vector<1x1x16x128xf32> to vector<16x128xf32>
    %cst_122 = arith.constant dense<0.000000e+00> : vector<8x128xf32>
    %178 = tpu.matmul %175, %177, %cst_122 {dimension_numbers = #tpu.dot_dimension_numbers<[1], [0], [0], [1], [0, 0, 1, 1], [], []>} : vector<8x16xf32>, vector<16x128xf32>, vector<8x128xf32> -> vector<8x128xf32>
    %179 = arith.addf %173, %178 : vector<8x128xf32>
    %180 = vector.extract_strided_slice %82 {offsets = [2, 2, 0, 0], sizes = [1, 1, 8, 16], strides = [1, 1, 1, 1]} : vector<7x7x8x16xf32> to vector<1x1x8x16xf32>
    %181 = vector.shape_cast %180 : vector<1x1x8x16xf32> to vector<8x16xf32>
    %c2_123 = arith.constant 2 : index
    %c2_124 = arith.constant 2 : index
    %c0_125 = arith.constant 0 : index
    %c0_126 = arith.constant 0 : index
    %182 = vector.load %arg6[%c2_123, %c2_124, %c0_125, %c0_126] : memref<7x7x16x128xf32, #tpu.memory_space<vmem>>, vector<1x1x16x128xf32>
    %183 = vector.shape_cast %182 : vector<1x1x16x128xf32> to vector<16x128xf32>
    %cst_127 = arith.constant dense<0.000000e+00> : vector<8x128xf32>
    %184 = tpu.matmul %181, %183, %cst_127 {dimension_numbers = #tpu.dot_dimension_numbers<[1], [0], [0], [1], [0, 0, 1, 1], [], []>} : vector<8x16xf32>, vector<16x128xf32>, vector<8x128xf32> -> vector<8x128xf32>
    %185 = arith.addf %179, %184 : vector<8x128xf32>
    %186 = vector.extract_strided_slice %82 {offsets = [2, 3, 0, 0], sizes = [1, 1, 8, 16], strides = [1, 1, 1, 1]} : vector<7x7x8x16xf32> to vector<1x1x8x16xf32>
    %187 = vector.shape_cast %186 : vector<1x1x8x16xf32> to vector<8x16xf32>
    %c2_128 = arith.constant 2 : index
    %c3_129 = arith.constant 3 : index
    %c0_130 = arith.constant 0 : index
    %c0_131 = arith.constant 0 : index
    %188 = vector.load %arg6[%c2_128, %c3_129, %c0_130, %c0_131] : memref<7x7x16x128xf32, #tpu.memory_space<vmem>>, vector<1x1x16x128xf32>
    %189 = vector.shape_cast %188 : vector<1x1x16x128xf32> to vector<16x128xf32>
    %cst_132 = arith.constant dense<0.000000e+00> : vector<8x128xf32>
    %190 = tpu.matmul %187, %189, %cst_132 {dimension_numbers = #tpu.dot_dimension_numbers<[1], [0], [0], [1], [0, 0, 1, 1], [], []>} : vector<8x16xf32>, vector<16x128xf32>, vector<8x128xf32> -> vector<8x128xf32>
    %191 = arith.addf %185, %190 : vector<8x128xf32>
    %192 = vector.extract_strided_slice %82 {offsets = [2, 4, 0, 0], sizes = [1, 1, 8, 16], strides = [1, 1, 1, 1]} : vector<7x7x8x16xf32> to vector<1x1x8x16xf32>
    %193 = vector.shape_cast %192 : vector<1x1x8x16xf32> to vector<8x16xf32>
    %c2_133 = arith.constant 2 : index
    %c4_134 = arith.constant 4 : index
    %c0_135 = arith.constant 0 : index
    %c0_136 = arith.constant 0 : index
    %194 = vector.load %arg6[%c2_133, %c4_134, %c0_135, %c0_136] : memref<7x7x16x128xf32, #tpu.memory_space<vmem>>, vector<1x1x16x128xf32>
    %195 = vector.shape_cast %194 : vector<1x1x16x128xf32> to vector<16x128xf32>
    %cst_137 = arith.constant dense<0.000000e+00> : vector<8x128xf32>
    %196 = tpu.matmul %193, %195, %cst_137 {dimension_numbers = #tpu.dot_dimension_numbers<[1], [0], [0], [1], [0, 0, 1, 1], [], []>} : vector<8x16xf32>, vector<16x128xf32>, vector<8x128xf32> -> vector<8x128xf32>
    %197 = arith.addf %191, %196 : vector<8x128xf32>
    %198 = vector.extract_strided_slice %82 {offsets = [2, 5, 0, 0], sizes = [1, 1, 8, 16], strides = [1, 1, 1, 1]} : vector<7x7x8x16xf32> to vector<1x1x8x16xf32>
    %199 = vector.shape_cast %198 : vector<1x1x8x16xf32> to vector<8x16xf32>
    %c2_138 = arith.constant 2 : index
    %c5_139 = arith.constant 5 : index
    %c0_140 = arith.constant 0 : index
    %c0_141 = arith.constant 0 : index
    %200 = vector.load %arg6[%c2_138, %c5_139, %c0_140, %c0_141] : memref<7x7x16x128xf32, #tpu.memory_space<vmem>>, vector<1x1x16x128xf32>
    %201 = vector.shape_cast %200 : vector<1x1x16x128xf32> to vector<16x128xf32>
    %cst_142 = arith.constant dense<0.000000e+00> : vector<8x128xf32>
    %202 = tpu.matmul %199, %201, %cst_142 {dimension_numbers = #tpu.dot_dimension_numbers<[1], [0], [0], [1], [0, 0, 1, 1], [], []>} : vector<8x16xf32>, vector<16x128xf32>, vector<8x128xf32> -> vector<8x128xf32>
    %203 = arith.addf %197, %202 : vector<8x128xf32>
    %204 = vector.extract_strided_slice %82 {offsets = [2, 6, 0, 0], sizes = [1, 1, 8, 16], strides = [1, 1, 1, 1]} : vector<7x7x8x16xf32> to vector<1x1x8x16xf32>
    %205 = vector.shape_cast %204 : vector<1x1x8x16xf32> to vector<8x16xf32>
    %c2_143 = arith.constant 2 : index
    %c6_144 = arith.constant 6 : index
    %c0_145 = arith.constant 0 : index
    %c0_146 = arith.constant 0 : index
    %206 = vector.load %arg6[%c2_143, %c6_144, %c0_145, %c0_146] : memref<7x7x16x128xf32, #tpu.memory_space<vmem>>, vector<1x1x16x128xf32>
    %207 = vector.shape_cast %206 : vector<1x1x16x128xf32> to vector<16x128xf32>
    %cst_147 = arith.constant dense<0.000000e+00> : vector<8x128xf32>
    %208 = tpu.matmul %205, %207, %cst_147 {dimension_numbers = #tpu.dot_dimension_numbers<[1], [0], [0], [1], [0, 0, 1, 1], [], []>} : vector<8x16xf32>, vector<16x128xf32>, vector<8x128xf32> -> vector<8x128xf32>
    %209 = arith.addf %203, %208 : vector<8x128xf32>
    %210 = vector.extract_strided_slice %82 {offsets = [3, 0, 0, 0], sizes = [1, 1, 8, 16], strides = [1, 1, 1, 1]} : vector<7x7x8x16xf32> to vector<1x1x8x16xf32>
    %211 = vector.shape_cast %210 : vector<1x1x8x16xf32> to vector<8x16xf32>
    %c3_148 = arith.constant 3 : index
    %c0_149 = arith.constant 0 : index
    %c0_150 = arith.constant 0 : index
    %c0_151 = arith.constant 0 : index
    %212 = vector.load %arg6[%c3_148, %c0_149, %c0_150, %c0_151] : memref<7x7x16x128xf32, #tpu.memory_space<vmem>>, vector<1x1x16x128xf32>
    %213 = vector.shape_cast %212 : vector<1x1x16x128xf32> to vector<16x128xf32>
    %cst_152 = arith.constant dense<0.000000e+00> : vector<8x128xf32>
    %214 = tpu.matmul %211, %213, %cst_152 {dimension_numbers = #tpu.dot_dimension_numbers<[1], [0], [0], [1], [0, 0, 1, 1], [], []>} : vector<8x16xf32>, vector<16x128xf32>, vector<8x128xf32> -> vector<8x128xf32>
    %215 = arith.addf %209, %214 : vector<8x128xf32>
    %216 = vector.extract_strided_slice %82 {offsets = [3, 1, 0, 0], sizes = [1, 1, 8, 16], strides = [1, 1, 1, 1]} : vector<7x7x8x16xf32> to vector<1x1x8x16xf32>
    %217 = vector.shape_cast %216 : vector<1x1x8x16xf32> to vector<8x16xf32>
    %c3_153 = arith.constant 3 : index
    %c1_154 = arith.constant 1 : index
    %c0_155 = arith.constant 0 : index
    %c0_156 = arith.constant 0 : index
    %218 = vector.load %arg6[%c3_153, %c1_154, %c0_155, %c0_156] : memref<7x7x16x128xf32, #tpu.memory_space<vmem>>, vector<1x1x16x128xf32>
    %219 = vector.shape_cast %218 : vector<1x1x16x128xf32> to vector<16x128xf32>
    %cst_157 = arith.constant dense<0.000000e+00> : vector<8x128xf32>
    %220 = tpu.matmul %217, %219, %cst_157 {dimension_numbers = #tpu.dot_dimension_numbers<[1], [0], [0], [1], [0, 0, 1, 1], [], []>} : vector<8x16xf32>, vector<16x128xf32>, vector<8x128xf32> -> vector<8x128xf32>
    %221 = arith.addf %215, %220 : vector<8x128xf32>
    %222 = vector.extract_strided_slice %82 {offsets = [3, 2, 0, 0], sizes = [1, 1, 8, 16], strides = [1, 1, 1, 1]} : vector<7x7x8x16xf32> to vector<1x1x8x16xf32>
    %223 = vector.shape_cast %222 : vector<1x1x8x16xf32> to vector<8x16xf32>
    %c3_158 = arith.constant 3 : index
    %c2_159 = arith.constant 2 : index
    %c0_160 = arith.constant 0 : index
    %c0_161 = arith.constant 0 : index
    %224 = vector.load %arg6[%c3_158, %c2_159, %c0_160, %c0_161] : memref<7x7x16x128xf32, #tpu.memory_space<vmem>>, vector<1x1x16x128xf32>
    %225 = vector.shape_cast %224 : vector<1x1x16x128xf32> to vector<16x128xf32>
    %cst_162 = arith.constant dense<0.000000e+00> : vector<8x128xf32>
    %226 = tpu.matmul %223, %225, %cst_162 {dimension_numbers = #tpu.dot_dimension_numbers<[1], [0], [0], [1], [0, 0, 1, 1], [], []>} : vector<8x16xf32>, vector<16x128xf32>, vector<8x128xf32> -> vector<8x128xf32>
    %227 = arith.addf %221, %226 : vector<8x128xf32>
    %228 = vector.extract_strided_slice %82 {offsets = [3, 3, 0, 0], sizes = [1, 1, 8, 16], strides = [1, 1, 1, 1]} : vector<7x7x8x16xf32> to vector<1x1x8x16xf32>
    %229 = vector.shape_cast %228 : vector<1x1x8x16xf32> to vector<8x16xf32>
    %c3_163 = arith.constant 3 : index
    %c3_164 = arith.constant 3 : index
    %c0_165 = arith.constant 0 : index
    %c0_166 = arith.constant 0 : index
    %230 = vector.load %arg6[%c3_163, %c3_164, %c0_165, %c0_166] : memref<7x7x16x128xf32, #tpu.memory_space<vmem>>, vector<1x1x16x128xf32>
    %231 = vector.shape_cast %230 : vector<1x1x16x128xf32> to vector<16x128xf32>
    %cst_167 = arith.constant dense<0.000000e+00> : vector<8x128xf32>
    %232 = tpu.matmul %229, %231, %cst_167 {dimension_numbers = #tpu.dot_dimension_numbers<[1], [0], [0], [1], [0, 0, 1, 1], [], []>} : vector<8x16xf32>, vector<16x128xf32>, vector<8x128xf32> -> vector<8x128xf32>
    %233 = arith.addf %227, %232 : vector<8x128xf32>
    %234 = vector.extract_strided_slice %82 {offsets = [3, 4, 0, 0], sizes = [1, 1, 8, 16], strides = [1, 1, 1, 1]} : vector<7x7x8x16xf32> to vector<1x1x8x16xf32>
    %235 = vector.shape_cast %234 : vector<1x1x8x16xf32> to vector<8x16xf32>
    %c3_168 = arith.constant 3 : index
    %c4_169 = arith.constant 4 : index
    %c0_170 = arith.constant 0 : index
    %c0_171 = arith.constant 0 : index
    %236 = vector.load %arg6[%c3_168, %c4_169, %c0_170, %c0_171] : memref<7x7x16x128xf32, #tpu.memory_space<vmem>>, vector<1x1x16x128xf32>
    %237 = vector.shape_cast %236 : vector<1x1x16x128xf32> to vector<16x128xf32>
    %cst_172 = arith.constant dense<0.000000e+00> : vector<8x128xf32>
    %238 = tpu.matmul %235, %237, %cst_172 {dimension_numbers = #tpu.dot_dimension_numbers<[1], [0], [0], [1], [0, 0, 1, 1], [], []>} : vector<8x16xf32>, vector<16x128xf32>, vector<8x128xf32> -> vector<8x128xf32>
    %239 = arith.addf %233, %238 : vector<8x128xf32>
    %240 = vector.extract_strided_slice %82 {offsets = [3, 5, 0, 0], sizes = [1, 1, 8, 16], strides = [1, 1, 1, 1]} : vector<7x7x8x16xf32> to vector<1x1x8x16xf32>
    %241 = vector.shape_cast %240 : vector<1x1x8x16xf32> to vector<8x16xf32>
    %c3_173 = arith.constant 3 : index
    %c5_174 = arith.constant 5 : index
    %c0_175 = arith.constant 0 : index
    %c0_176 = arith.constant 0 : index
    %242 = vector.load %arg6[%c3_173, %c5_174, %c0_175, %c0_176] : memref<7x7x16x128xf32, #tpu.memory_space<vmem>>, vector<1x1x16x128xf32>
    %243 = vector.shape_cast %242 : vector<1x1x16x128xf32> to vector<16x128xf32>
    %cst_177 = arith.constant dense<0.000000e+00> : vector<8x128xf32>
    %244 = tpu.matmul %241, %243, %cst_177 {dimension_numbers = #tpu.dot_dimension_numbers<[1], [0], [0], [1], [0, 0, 1, 1], [], []>} : vector<8x16xf32>, vector<16x128xf32>, vector<8x128xf32> -> vector<8x128xf32>
    %245 = arith.addf %239, %244 : vector<8x128xf32>
    %246 = vector.extract_strided_slice %82 {offsets = [3, 6, 0, 0], sizes = [1, 1, 8, 16], strides = [1, 1, 1, 1]} : vector<7x7x8x16xf32> to vector<1x1x8x16xf32>
    %247 = vector.shape_cast %246 : vector<1x1x8x16xf32> to vector<8x16xf32>
    %c3_178 = arith.constant 3 : index
    %c6_179 = arith.constant 6 : index
    %c0_180 = arith.constant 0 : index
    %c0_181 = arith.constant 0 : index
    %248 = vector.load %arg6[%c3_178, %c6_179, %c0_180, %c0_181] : memref<7x7x16x128xf32, #tpu.memory_space<vmem>>, vector<1x1x16x128xf32>
    %249 = vector.shape_cast %248 : vector<1x1x16x128xf32> to vector<16x128xf32>
    %cst_182 = arith.constant dense<0.000000e+00> : vector<8x128xf32>
    %250 = tpu.matmul %247, %249, %cst_182 {dimension_numbers = #tpu.dot_dimension_numbers<[1], [0], [0], [1], [0, 0, 1, 1], [], []>} : vector<8x16xf32>, vector<16x128xf32>, vector<8x128xf32> -> vector<8x128xf32>
    %251 = arith.addf %245, %250 : vector<8x128xf32>
    %252 = vector.extract_strided_slice %82 {offsets = [4, 0, 0, 0], sizes = [1, 1, 8, 16], strides = [1, 1, 1, 1]} : vector<7x7x8x16xf32> to vector<1x1x8x16xf32>
    %253 = vector.shape_cast %252 : vector<1x1x8x16xf32> to vector<8x16xf32>
    %c4_183 = arith.constant 4 : index
    %c0_184 = arith.constant 0 : index
    %c0_185 = arith.constant 0 : index
    %c0_186 = arith.constant 0 : index
    %254 = vector.load %arg6[%c4_183, %c0_184, %c0_185, %c0_186] : memref<7x7x16x128xf32, #tpu.memory_space<vmem>>, vector<1x1x16x128xf32>
    %255 = vector.shape_cast %254 : vector<1x1x16x128xf32> to vector<16x128xf32>
    %cst_187 = arith.constant dense<0.000000e+00> : vector<8x128xf32>
    %256 = tpu.matmul %253, %255, %cst_187 {dimension_numbers = #tpu.dot_dimension_numbers<[1], [0], [0], [1], [0, 0, 1, 1], [], []>} : vector<8x16xf32>, vector<16x128xf32>, vector<8x128xf32> -> vector<8x128xf32>
    %257 = arith.addf %251, %256 : vector<8x128xf32>
    %258 = vector.extract_strided_slice %82 {offsets = [4, 1, 0, 0], sizes = [1, 1, 8, 16], strides = [1, 1, 1, 1]} : vector<7x7x8x16xf32> to vector<1x1x8x16xf32>
    %259 = vector.shape_cast %258 : vector<1x1x8x16xf32> to vector<8x16xf32>
    %c4_188 = arith.constant 4 : index
    %c1_189 = arith.constant 1 : index
    %c0_190 = arith.constant 0 : index
    %c0_191 = arith.constant 0 : index
    %260 = vector.load %arg6[%c4_188, %c1_189, %c0_190, %c0_191] : memref<7x7x16x128xf32, #tpu.memory_space<vmem>>, vector<1x1x16x128xf32>
    %261 = vector.shape_cast %260 : vector<1x1x16x128xf32> to vector<16x128xf32>
    %cst_192 = arith.constant dense<0.000000e+00> : vector<8x128xf32>
    %262 = tpu.matmul %259, %261, %cst_192 {dimension_numbers = #tpu.dot_dimension_numbers<[1], [0], [0], [1], [0, 0, 1, 1], [], []>} : vector<8x16xf32>, vector<16x128xf32>, vector<8x128xf32> -> vector<8x128xf32>
    %263 = arith.addf %257, %262 : vector<8x128xf32>
    %264 = vector.extract_strided_slice %82 {offsets = [4, 2, 0, 0], sizes = [1, 1, 8, 16], strides = [1, 1, 1, 1]} : vector<7x7x8x16xf32> to vector<1x1x8x16xf32>
    %265 = vector.shape_cast %264 : vector<1x1x8x16xf32> to vector<8x16xf32>
    %c4_193 = arith.constant 4 : index
    %c2_194 = arith.constant 2 : index
    %c0_195 = arith.constant 0 : index
    %c0_196 = arith.constant 0 : index
    %266 = vector.load %arg6[%c4_193, %c2_194, %c0_195, %c0_196] : memref<7x7x16x128xf32, #tpu.memory_space<vmem>>, vector<1x1x16x128xf32>
    %267 = vector.shape_cast %266 : vector<1x1x16x128xf32> to vector<16x128xf32>
    %cst_197 = arith.constant dense<0.000000e+00> : vector<8x128xf32>
    %268 = tpu.matmul %265, %267, %cst_197 {dimension_numbers = #tpu.dot_dimension_numbers<[1], [0], [0], [1], [0, 0, 1, 1], [], []>} : vector<8x16xf32>, vector<16x128xf32>, vector<8x128xf32> -> vector<8x128xf32>
    %269 = arith.addf %263, %268 : vector<8x128xf32>
    %270 = vector.extract_strided_slice %82 {offsets = [4, 3, 0, 0], sizes = [1, 1, 8, 16], strides = [1, 1, 1, 1]} : vector<7x7x8x16xf32> to vector<1x1x8x16xf32>
    %271 = vector.shape_cast %270 : vector<1x1x8x16xf32> to vector<8x16xf32>
    %c4_198 = arith.constant 4 : index
    %c3_199 = arith.constant 3 : index
    %c0_200 = arith.constant 0 : index
    %c0_201 = arith.constant 0 : index
    %272 = vector.load %arg6[%c4_198, %c3_199, %c0_200, %c0_201] : memref<7x7x16x128xf32, #tpu.memory_space<vmem>>, vector<1x1x16x128xf32>
    %273 = vector.shape_cast %272 : vector<1x1x16x128xf32> to vector<16x128xf32>
    %cst_202 = arith.constant dense<0.000000e+00> : vector<8x128xf32>
    %274 = tpu.matmul %271, %273, %cst_202 {dimension_numbers = #tpu.dot_dimension_numbers<[1], [0], [0], [1], [0, 0, 1, 1], [], []>} : vector<8x16xf32>, vector<16x128xf32>, vector<8x128xf32> -> vector<8x128xf32>
    %275 = arith.addf %269, %274 : vector<8x128xf32>
    %276 = vector.extract_strided_slice %82 {offsets = [4, 4, 0, 0], sizes = [1, 1, 8, 16], strides = [1, 1, 1, 1]} : vector<7x7x8x16xf32> to vector<1x1x8x16xf32>
    %277 = vector.shape_cast %276 : vector<1x1x8x16xf32> to vector<8x16xf32>
    %c4_203 = arith.constant 4 : index
    %c4_204 = arith.constant 4 : index
    %c0_205 = arith.constant 0 : index
    %c0_206 = arith.constant 0 : index
    %278 = vector.load %arg6[%c4_203, %c4_204, %c0_205, %c0_206] : memref<7x7x16x128xf32, #tpu.memory_space<vmem>>, vector<1x1x16x128xf32>
    %279 = vector.shape_cast %278 : vector<1x1x16x128xf32> to vector<16x128xf32>
    %cst_207 = arith.constant dense<0.000000e+00> : vector<8x128xf32>
    %280 = tpu.matmul %277, %279, %cst_207 {dimension_numbers = #tpu.dot_dimension_numbers<[1], [0], [0], [1], [0, 0, 1, 1], [], []>} : vector<8x16xf32>, vector<16x128xf32>, vector<8x128xf32> -> vector<8x128xf32>
    %281 = arith.addf %275, %280 : vector<8x128xf32>
    %282 = vector.extract_strided_slice %82 {offsets = [4, 5, 0, 0], sizes = [1, 1, 8, 16], strides = [1, 1, 1, 1]} : vector<7x7x8x16xf32> to vector<1x1x8x16xf32>
    %283 = vector.shape_cast %282 : vector<1x1x8x16xf32> to vector<8x16xf32>
    %c4_208 = arith.constant 4 : index
    %c5_209 = arith.constant 5 : index
    %c0_210 = arith.constant 0 : index
    %c0_211 = arith.constant 0 : index
    %284 = vector.load %arg6[%c4_208, %c5_209, %c0_210, %c0_211] : memref<7x7x16x128xf32, #tpu.memory_space<vmem>>, vector<1x1x16x128xf32>
    %285 = vector.shape_cast %284 : vector<1x1x16x128xf32> to vector<16x128xf32>
    %cst_212 = arith.constant dense<0.000000e+00> : vector<8x128xf32>
    %286 = tpu.matmul %283, %285, %cst_212 {dimension_numbers = #tpu.dot_dimension_numbers<[1], [0], [0], [1], [0, 0, 1, 1], [], []>} : vector<8x16xf32>, vector<16x128xf32>, vector<8x128xf32> -> vector<8x128xf32>
    %287 = arith.addf %281, %286 : vector<8x128xf32>
    %288 = vector.extract_strided_slice %82 {offsets = [4, 6, 0, 0], sizes = [1, 1, 8, 16], strides = [1, 1, 1, 1]} : vector<7x7x8x16xf32> to vector<1x1x8x16xf32>
    %289 = vector.shape_cast %288 : vector<1x1x8x16xf32> to vector<8x16xf32>
    %c4_213 = arith.constant 4 : index
    %c6_214 = arith.constant 6 : index
    %c0_215 = arith.constant 0 : index
    %c0_216 = arith.constant 0 : index
    %290 = vector.load %arg6[%c4_213, %c6_214, %c0_215, %c0_216] : memref<7x7x16x128xf32, #tpu.memory_space<vmem>>, vector<1x1x16x128xf32>
    %291 = vector.shape_cast %290 : vector<1x1x16x128xf32> to vector<16x128xf32>
    %cst_217 = arith.constant dense<0.000000e+00> : vector<8x128xf32>
    %292 = tpu.matmul %289, %291, %cst_217 {dimension_numbers = #tpu.dot_dimension_numbers<[1], [0], [0], [1], [0, 0, 1, 1], [], []>} : vector<8x16xf32>, vector<16x128xf32>, vector<8x128xf32> -> vector<8x128xf32>
    %293 = arith.addf %287, %292 : vector<8x128xf32>
    %294 = vector.extract_strided_slice %82 {offsets = [5, 0, 0, 0], sizes = [1, 1, 8, 16], strides = [1, 1, 1, 1]} : vector<7x7x8x16xf32> to vector<1x1x8x16xf32>
    %295 = vector.shape_cast %294 : vector<1x1x8x16xf32> to vector<8x16xf32>
    %c5_218 = arith.constant 5 : index
    %c0_219 = arith.constant 0 : index
    %c0_220 = arith.constant 0 : index
    %c0_221 = arith.constant 0 : index
    %296 = vector.load %arg6[%c5_218, %c0_219, %c0_220, %c0_221] : memref<7x7x16x128xf32, #tpu.memory_space<vmem>>, vector<1x1x16x128xf32>
    %297 = vector.shape_cast %296 : vector<1x1x16x128xf32> to vector<16x128xf32>
    %cst_222 = arith.constant dense<0.000000e+00> : vector<8x128xf32>
    %298 = tpu.matmul %295, %297, %cst_222 {dimension_numbers = #tpu.dot_dimension_numbers<[1], [0], [0], [1], [0, 0, 1, 1], [], []>} : vector<8x16xf32>, vector<16x128xf32>, vector<8x128xf32> -> vector<8x128xf32>
    %299 = arith.addf %293, %298 : vector<8x128xf32>
    %300 = vector.extract_strided_slice %82 {offsets = [5, 1, 0, 0], sizes = [1, 1, 8, 16], strides = [1, 1, 1, 1]} : vector<7x7x8x16xf32> to vector<1x1x8x16xf32>
    %301 = vector.shape_cast %300 : vector<1x1x8x16xf32> to vector<8x16xf32>
    %c5_223 = arith.constant 5 : index
    %c1_224 = arith.constant 1 : index
    %c0_225 = arith.constant 0 : index
    %c0_226 = arith.constant 0 : index
    %302 = vector.load %arg6[%c5_223, %c1_224, %c0_225, %c0_226] : memref<7x7x16x128xf32, #tpu.memory_space<vmem>>, vector<1x1x16x128xf32>
    %303 = vector.shape_cast %302 : vector<1x1x16x128xf32> to vector<16x128xf32>
    %cst_227 = arith.constant dense<0.000000e+00> : vector<8x128xf32>
    %304 = tpu.matmul %301, %303, %cst_227 {dimension_numbers = #tpu.dot_dimension_numbers<[1], [0], [0], [1], [0, 0, 1, 1], [], []>} : vector<8x16xf32>, vector<16x128xf32>, vector<8x128xf32> -> vector<8x128xf32>
    %305 = arith.addf %299, %304 : vector<8x128xf32>
    %306 = vector.extract_strided_slice %82 {offsets = [5, 2, 0, 0], sizes = [1, 1, 8, 16], strides = [1, 1, 1, 1]} : vector<7x7x8x16xf32> to vector<1x1x8x16xf32>
    %307 = vector.shape_cast %306 : vector<1x1x8x16xf32> to vector<8x16xf32>
    %c5_228 = arith.constant 5 : index
    %c2_229 = arith.constant 2 : index
    %c0_230 = arith.constant 0 : index
    %c0_231 = arith.constant 0 : index
    %308 = vector.load %arg6[%c5_228, %c2_229, %c0_230, %c0_231] : memref<7x7x16x128xf32, #tpu.memory_space<vmem>>, vector<1x1x16x128xf32>
    %309 = vector.shape_cast %308 : vector<1x1x16x128xf32> to vector<16x128xf32>
    %cst_232 = arith.constant dense<0.000000e+00> : vector<8x128xf32>
    %310 = tpu.matmul %307, %309, %cst_232 {dimension_numbers = #tpu.dot_dimension_numbers<[1], [0], [0], [1], [0, 0, 1, 1], [], []>} : vector<8x16xf32>, vector<16x128xf32>, vector<8x128xf32> -> vector<8x128xf32>
    %311 = arith.addf %305, %310 : vector<8x128xf32>
    %312 = vector.extract_strided_slice %82 {offsets = [5, 3, 0, 0], sizes = [1, 1, 8, 16], strides = [1, 1, 1, 1]} : vector<7x7x8x16xf32> to vector<1x1x8x16xf32>
    %313 = vector.shape_cast %312 : vector<1x1x8x16xf32> to vector<8x16xf32>
    %c5_233 = arith.constant 5 : index
    %c3_234 = arith.constant 3 : index
    %c0_235 = arith.constant 0 : index
    %c0_236 = arith.constant 0 : index
    %314 = vector.load %arg6[%c5_233, %c3_234, %c0_235, %c0_236] : memref<7x7x16x128xf32, #tpu.memory_space<vmem>>, vector<1x1x16x128xf32>
    %315 = vector.shape_cast %314 : vector<1x1x16x128xf32> to vector<16x128xf32>
    %cst_237 = arith.constant dense<0.000000e+00> : vector<8x128xf32>
    %316 = tpu.matmul %313, %315, %cst_237 {dimension_numbers = #tpu.dot_dimension_numbers<[1], [0], [0], [1], [0, 0, 1, 1], [], []>} : vector<8x16xf32>, vector<16x128xf32>, vector<8x128xf32> -> vector<8x128xf32>
    %317 = arith.addf %311, %316 : vector<8x128xf32>
    %318 = vector.extract_strided_slice %82 {offsets = [5, 4, 0, 0], sizes = [1, 1, 8, 16], strides = [1, 1, 1, 1]} : vector<7x7x8x16xf32> to vector<1x1x8x16xf32>
    %319 = vector.shape_cast %318 : vector<1x1x8x16xf32> to vector<8x16xf32>
    %c5_238 = arith.constant 5 : index
    %c4_239 = arith.constant 4 : index
    %c0_240 = arith.constant 0 : index
    %c0_241 = arith.constant 0 : index
    %320 = vector.load %arg6[%c5_238, %c4_239, %c0_240, %c0_241] : memref<7x7x16x128xf32, #tpu.memory_space<vmem>>, vector<1x1x16x128xf32>
    %321 = vector.shape_cast %320 : vector<1x1x16x128xf32> to vector<16x128xf32>
    %cst_242 = arith.constant dense<0.000000e+00> : vector<8x128xf32>
    %322 = tpu.matmul %319, %321, %cst_242 {dimension_numbers = #tpu.dot_dimension_numbers<[1], [0], [0], [1], [0, 0, 1, 1], [], []>} : vector<8x16xf32>, vector<16x128xf32>, vector<8x128xf32> -> vector<8x128xf32>
    %323 = arith.addf %317, %322 : vector<8x128xf32>
    %324 = vector.extract_strided_slice %82 {offsets = [5, 5, 0, 0], sizes = [1, 1, 8, 16], strides = [1, 1, 1, 1]} : vector<7x7x8x16xf32> to vector<1x1x8x16xf32>
    %325 = vector.shape_cast %324 : vector<1x1x8x16xf32> to vector<8x16xf32>
    %c5_243 = arith.constant 5 : index
    %c5_244 = arith.constant 5 : index
    %c0_245 = arith.constant 0 : index
    %c0_246 = arith.constant 0 : index
    %326 = vector.load %arg6[%c5_243, %c5_244, %c0_245, %c0_246] : memref<7x7x16x128xf32, #tpu.memory_space<vmem>>, vector<1x1x16x128xf32>
    %327 = vector.shape_cast %326 : vector<1x1x16x128xf32> to vector<16x128xf32>
    %cst_247 = arith.constant dense<0.000000e+00> : vector<8x128xf32>
    %328 = tpu.matmul %325, %327, %cst_247 {dimension_numbers = #tpu.dot_dimension_numbers<[1], [0], [0], [1], [0, 0, 1, 1], [], []>} : vector<8x16xf32>, vector<16x128xf32>, vector<8x128xf32> -> vector<8x128xf32>
    %329 = arith.addf %323, %328 : vector<8x128xf32>
    %330 = vector.extract_strided_slice %82 {offsets = [5, 6, 0, 0], sizes = [1, 1, 8, 16], strides = [1, 1, 1, 1]} : vector<7x7x8x16xf32> to vector<1x1x8x16xf32>
    %331 = vector.shape_cast %330 : vector<1x1x8x16xf32> to vector<8x16xf32>
    %c5_248 = arith.constant 5 : index
    %c6_249 = arith.constant 6 : index
    %c0_250 = arith.constant 0 : index
    %c0_251 = arith.constant 0 : index
    %332 = vector.load %arg6[%c5_248, %c6_249, %c0_250, %c0_251] : memref<7x7x16x128xf32, #tpu.memory_space<vmem>>, vector<1x1x16x128xf32>
    %333 = vector.shape_cast %332 : vector<1x1x16x128xf32> to vector<16x128xf32>
    %cst_252 = arith.constant dense<0.000000e+00> : vector<8x128xf32>
    %334 = tpu.matmul %331, %333, %cst_252 {dimension_numbers = #tpu.dot_dimension_numbers<[1], [0], [0], [1], [0, 0, 1, 1], [], []>} : vector<8x16xf32>, vector<16x128xf32>, vector<8x128xf32> -> vector<8x128xf32>
    %335 = arith.addf %329, %334 : vector<8x128xf32>
    %336 = vector.extract_strided_slice %82 {offsets = [6, 0, 0, 0], sizes = [1, 1, 8, 16], strides = [1, 1, 1, 1]} : vector<7x7x8x16xf32> to vector<1x1x8x16xf32>
    %337 = vector.shape_cast %336 : vector<1x1x8x16xf32> to vector<8x16xf32>
    %c6_253 = arith.constant 6 : index
    %c0_254 = arith.constant 0 : index
    %c0_255 = arith.constant 0 : index
    %c0_256 = arith.constant 0 : index
    %338 = vector.load %arg6[%c6_253, %c0_254, %c0_255, %c0_256] : memref<7x7x16x128xf32, #tpu.memory_space<vmem>>, vector<1x1x16x128xf32>
    %339 = vector.shape_cast %338 : vector<1x1x16x128xf32> to vector<16x128xf32>
    %cst_257 = arith.constant dense<0.000000e+00> : vector<8x128xf32>
    %340 = tpu.matmul %337, %339, %cst_257 {dimension_numbers = #tpu.dot_dimension_numbers<[1], [0], [0], [1], [0, 0, 1, 1], [], []>} : vector<8x16xf32>, vector<16x128xf32>, vector<8x128xf32> -> vector<8x128xf32>
    %341 = arith.addf %335, %340 : vector<8x128xf32>
    %342 = vector.extract_strided_slice %82 {offsets = [6, 1, 0, 0], sizes = [1, 1, 8, 16], strides = [1, 1, 1, 1]} : vector<7x7x8x16xf32> to vector<1x1x8x16xf32>
    %343 = vector.shape_cast %342 : vector<1x1x8x16xf32> to vector<8x16xf32>
    %c6_258 = arith.constant 6 : index
    %c1_259 = arith.constant 1 : index
    %c0_260 = arith.constant 0 : index
    %c0_261 = arith.constant 0 : index
    %344 = vector.load %arg6[%c6_258, %c1_259, %c0_260, %c0_261] : memref<7x7x16x128xf32, #tpu.memory_space<vmem>>, vector<1x1x16x128xf32>
    %345 = vector.shape_cast %344 : vector<1x1x16x128xf32> to vector<16x128xf32>
    %cst_262 = arith.constant dense<0.000000e+00> : vector<8x128xf32>
    %346 = tpu.matmul %343, %345, %cst_262 {dimension_numbers = #tpu.dot_dimension_numbers<[1], [0], [0], [1], [0, 0, 1, 1], [], []>} : vector<8x16xf32>, vector<16x128xf32>, vector<8x128xf32> -> vector<8x128xf32>
    %347 = arith.addf %341, %346 : vector<8x128xf32>
    %348 = vector.extract_strided_slice %82 {offsets = [6, 2, 0, 0], sizes = [1, 1, 8, 16], strides = [1, 1, 1, 1]} : vector<7x7x8x16xf32> to vector<1x1x8x16xf32>
    %349 = vector.shape_cast %348 : vector<1x1x8x16xf32> to vector<8x16xf32>
    %c6_263 = arith.constant 6 : index
    %c2_264 = arith.constant 2 : index
    %c0_265 = arith.constant 0 : index
    %c0_266 = arith.constant 0 : index
    %350 = vector.load %arg6[%c6_263, %c2_264, %c0_265, %c0_266] : memref<7x7x16x128xf32, #tpu.memory_space<vmem>>, vector<1x1x16x128xf32>
    %351 = vector.shape_cast %350 : vector<1x1x16x128xf32> to vector<16x128xf32>
    %cst_267 = arith.constant dense<0.000000e+00> : vector<8x128xf32>
    %352 = tpu.matmul %349, %351, %cst_267 {dimension_numbers = #tpu.dot_dimension_numbers<[1], [0], [0], [1], [0, 0, 1, 1], [], []>} : vector<8x16xf32>, vector<16x128xf32>, vector<8x128xf32> -> vector<8x128xf32>
    %353 = arith.addf %347, %352 : vector<8x128xf32>
    %354 = vector.extract_strided_slice %82 {offsets = [6, 3, 0, 0], sizes = [1, 1, 8, 16], strides = [1, 1, 1, 1]} : vector<7x7x8x16xf32> to vector<1x1x8x16xf32>
    %355 = vector.shape_cast %354 : vector<1x1x8x16xf32> to vector<8x16xf32>
    %c6_268 = arith.constant 6 : index
    %c3_269 = arith.constant 3 : index
    %c0_270 = arith.constant 0 : index
    %c0_271 = arith.constant 0 : index
    %356 = vector.load %arg6[%c6_268, %c3_269, %c0_270, %c0_271] : memref<7x7x16x128xf32, #tpu.memory_space<vmem>>, vector<1x1x16x128xf32>
    %357 = vector.shape_cast %356 : vector<1x1x16x128xf32> to vector<16x128xf32>
    %cst_272 = arith.constant dense<0.000000e+00> : vector<8x128xf32>
    %358 = tpu.matmul %355, %357, %cst_272 {dimension_numbers = #tpu.dot_dimension_numbers<[1], [0], [0], [1], [0, 0, 1, 1], [], []>} : vector<8x16xf32>, vector<16x128xf32>, vector<8x128xf32> -> vector<8x128xf32>
    %359 = arith.addf %353, %358 : vector<8x128xf32>
    %360 = vector.extract_strided_slice %82 {offsets = [6, 4, 0, 0], sizes = [1, 1, 8, 16], strides = [1, 1, 1, 1]} : vector<7x7x8x16xf32> to vector<1x1x8x16xf32>
    %361 = vector.shape_cast %360 : vector<1x1x8x16xf32> to vector<8x16xf32>
    %c6_273 = arith.constant 6 : index
    %c4_274 = arith.constant 4 : index
    %c0_275 = arith.constant 0 : index
    %c0_276 = arith.constant 0 : index
    %362 = vector.load %arg6[%c6_273, %c4_274, %c0_275, %c0_276] : memref<7x7x16x128xf32, #tpu.memory_space<vmem>>, vector<1x1x16x128xf32>
    %363 = vector.shape_cast %362 : vector<1x1x16x128xf32> to vector<16x128xf32>
    %cst_277 = arith.constant dense<0.000000e+00> : vector<8x128xf32>
    %364 = tpu.matmul %361, %363, %cst_277 {dimension_numbers = #tpu.dot_dimension_numbers<[1], [0], [0], [1], [0, 0, 1, 1], [], []>} : vector<8x16xf32>, vector<16x128xf32>, vector<8x128xf32> -> vector<8x128xf32>
    %365 = arith.addf %359, %364 : vector<8x128xf32>
    %366 = vector.extract_strided_slice %82 {offsets = [6, 5, 0, 0], sizes = [1, 1, 8, 16], strides = [1, 1, 1, 1]} : vector<7x7x8x16xf32> to vector<1x1x8x16xf32>
    %367 = vector.shape_cast %366 : vector<1x1x8x16xf32> to vector<8x16xf32>
    %c6_278 = arith.constant 6 : index
    %c5_279 = arith.constant 5 : index
    %c0_280 = arith.constant 0 : index
    %c0_281 = arith.constant 0 : index
    %368 = vector.load %arg6[%c6_278, %c5_279, %c0_280, %c0_281] : memref<7x7x16x128xf32, #tpu.memory_space<vmem>>, vector<1x1x16x128xf32>
    %369 = vector.shape_cast %368 : vector<1x1x16x128xf32> to vector<16x128xf32>
    %cst_282 = arith.constant dense<0.000000e+00> : vector<8x128xf32>
    %370 = tpu.matmul %367, %369, %cst_282 {dimension_numbers = #tpu.dot_dimension_numbers<[1], [0], [0], [1], [0, 0, 1, 1], [], []>} : vector<8x16xf32>, vector<16x128xf32>, vector<8x128xf32> -> vector<8x128xf32>
    %371 = arith.addf %365, %370 : vector<8x128xf32>
    %372 = vector.extract_strided_slice %82 {offsets = [6, 6, 0, 0], sizes = [1, 1, 8, 16], strides = [1, 1, 1, 1]} : vector<7x7x8x16xf32> to vector<1x1x8x16xf32>
    %373 = vector.shape_cast %372 : vector<1x1x8x16xf32> to vector<8x16xf32>
    %c6_283 = arith.constant 6 : index
    %c6_284 = arith.constant 6 : index
    %c0_285 = arith.constant 0 : index
    %c0_286 = arith.constant 0 : index
    %374 = vector.load %arg6[%c6_283, %c6_284, %c0_285, %c0_286] : memref<7x7x16x128xf32, #tpu.memory_space<vmem>>, vector<1x1x16x128xf32>
    %375 = vector.shape_cast %374 : vector<1x1x16x128xf32> to vector<16x128xf32>
    %cst_287 = arith.constant dense<0.000000e+00> : vector<8x128xf32>
    %376 = tpu.matmul %373, %375, %cst_287 {dimension_numbers = #tpu.dot_dimension_numbers<[1], [0], [0], [1], [0, 0, 1, 1], [], []>} : vector<8x16xf32>, vector<16x128xf32>, vector<8x128xf32> -> vector<8x128xf32>
    %377 = arith.addf %371, %376 : vector<8x128xf32>
    %c0_288 = arith.constant 0 : index
    %c0_289 = arith.constant 0 : index
    %378 = vector.load %arg7[%c0_288, %c0_289] : memref<1x128xf32, #tpu.memory_space<vmem>>, vector<1x128xf32>
    %379 = vector.broadcast %378 : vector<1x128xf32> to vector<8x128xf32>
    %380 = arith.addf %377, %379 : vector<8x128xf32>
    %cst_290 = arith.constant 0.000000e+00 : f32
    %381 = vector.broadcast %cst_290 : f32 to vector<8x128xf32>
    %382 = arith.maximumf %380, %381 : vector<8x128xf32>
    %c0_291 = arith.constant 0 : index
    %c0_292 = arith.constant 0 : index
    %383 = vector.load %arg8[%c0_291, %c0_292] : memref<128x6xf32, #tpu.memory_space<vmem>>, vector<128x6xf32>
    %cst_293 = arith.constant dense<0.000000e+00> : vector<8x6xf32>
    %384 = tpu.matmul %382, %383, %cst_293 {dimension_numbers = #tpu.dot_dimension_numbers<[1], [0], [0], [1], [0, 0, 1, 1], [], []>} : vector<8x128xf32>, vector<128x6xf32>, vector<8x6xf32> -> vector<8x6xf32>
    %c0_294 = arith.constant 0 : index
    %c0_295 = arith.constant 0 : index
    %385 = vector.load %arg9[%c0_294, %c0_295] : memref<1x6xf32, #tpu.memory_space<vmem>>, vector<1x6xf32>
    %386 = vector.broadcast %385 : vector<1x6xf32> to vector<8x6xf32>
    %387 = arith.addf %384, %386 : vector<8x6xf32>
    %cst_296 = arith.constant dense<0xFF800000> : vector<8xf32>
    %388 = vector.multi_reduction <maximumf>, %387, %cst_296 [1] : vector<8x6xf32> to vector<8xf32>
    %389 = vector.shape_cast %388 : vector<8xf32> to vector<8x1xf32>
    %390 = vector.broadcast %389 : vector<8x1xf32> to vector<8x6xf32>
    %391 = arith.subf %387, %390 : vector<8x6xf32>
    %392 = math.exp %391 : vector<8x6xf32>
    %cst_297 = arith.constant dense<0.000000e+00> : vector<8xf32>
    %393 = vector.multi_reduction <add>, %392, %cst_297 [1] : vector<8x6xf32> to vector<8xf32>
    %394 = vector.shape_cast %393 : vector<8xf32> to vector<8x1xf32>
    %395 = math.log %394 : vector<8x1xf32>
    %396 = arith.addf %395, %389 : vector<8x1xf32>
    %397 = tpu.iota {dimensions = array<i32: 1>} : vector<8x6xi32>
    %398 = vector.broadcast %389 : vector<8x1xf32> to vector<8x6xf32>
    %399 = arith.cmpf oeq, %387, %398 : vector<8x6xf32>
    %c2147483647_i32 = arith.constant 2147483647 : i32
    %400 = vector.broadcast %c2147483647_i32 : i32 to vector<8x6xi32>
    %401 = arith.select %399, %397, %400 : vector<8x6xi1>, vector<8x6xi32>
    %cst_298 = arith.constant dense<2147483647> : vector<8xi32>
    %402 = vector.multi_reduction <minsi>, %401, %cst_298 [1] : vector<8x6xi32> to vector<8xi32>
    %403 = vector.shape_cast %402 : vector<8xi32> to vector<8x1xi32>
    %c0_299 = arith.constant 0 : index
    %c0_300 = arith.constant 0 : index
    %404 = vector.load %arg10[%c0_299, %c0_300] : memref<8x1xi32, #tpu.memory_space<vmem>>, vector<8x1xi32>
    tpu.vector_store %arg10[%c0_299, %c0_300], %403 {strides = array<i32>} : memref<8x1xi32, #tpu.memory_space<vmem>>, vector<8x1xi32>,
    %405 = vector.broadcast %403 : vector<8x1xi32> to vector<8x6xi32>
    %406 = arith.cmpi eq, %397, %405 : vector<8x6xi32>
    %407 = arith.extui %406 : vector<8x6xi1> to vector<8x6xi32>
    %408 = arith.sitofp %407 : vector<8x6xi32> to vector<8x6xf32>
    %409 = vector.broadcast %396 : vector<8x1xf32> to vector<8x6xf32>
    %410 = arith.subf %387, %409 : vector<8x6xf32>
    %411 = arith.mulf %408, %410 : vector<8x6xf32>
    %cst_301 = arith.constant dense<0.000000e+00> : vector<8xf32>
    %412 = vector.multi_reduction <add>, %411, %cst_301 [1] : vector<8x6xf32> to vector<8xf32>
    %413 = vector.shape_cast %412 : vector<8xf32> to vector<8x1xf32>
    %c0_302 = arith.constant 0 : index
    %c0_303 = arith.constant 0 : index
    %414 = vector.load %arg11[%c0_302, %c0_303] : memref<8x1xf32, #tpu.memory_space<vmem>>, vector<8x1xf32>
    tpu.vector_store %arg11[%c0_302, %c0_303], %413 {strides = array<i32>} : memref<8x1xf32, #tpu.memory_space<vmem>>, vector<8x1xf32>,
    return
  }
  func.func @transform_0(%arg0: i32) -> (i32, i32, i32, i32) {
    %c0_i32 = arith.constant 0 : i32
    %c0_i32_0 = arith.constant 0 : i32
    %c0_i32_1 = arith.constant 0 : i32
    %c0_i32_2 = arith.constant 0 : i32
    return %c0_i32, %c0_i32_0, %arg0, %c0_i32_1 : i32, i32, i32, i32
  }
  func.func @transform_1(%arg0: i32) -> (i32, i32, i32, i32) {
    %c0_i32 = arith.constant 0 : i32
    %c0_i32_0 = arith.constant 0 : i32
    %c0_i32_1 = arith.constant 0 : i32
    %c0_i32_2 = arith.constant 0 : i32
    %c0_i32_3 = arith.constant 0 : i32
    return %c0_i32, %c0_i32_0, %c0_i32_1, %c0_i32_2 : i32, i32, i32, i32
  }
  func.func @transform_2(%arg0: i32) -> (i32, i32) {
    %c0_i32 = arith.constant 0 : i32
    %c0_i32_0 = arith.constant 0 : i32
    %c0_i32_1 = arith.constant 0 : i32
    return %c0_i32, %c0_i32_0 : i32, i32
  }
  func.func @transform_3(%arg0: i32) -> (i32, i32, i32, i32) {
    %c0_i32 = arith.constant 0 : i32
    %c0_i32_0 = arith.constant 0 : i32
    %c0_i32_1 = arith.constant 0 : i32
    %c0_i32_2 = arith.constant 0 : i32
    %c0_i32_3 = arith.constant 0 : i32
    return %c0_i32, %c0_i32_0, %c0_i32_1, %c0_i32_2 : i32, i32, i32, i32
  }
  func.func @transform_4(%arg0: i32) -> (i32, i32) {
    %c0_i32 = arith.constant 0 : i32
    %c0_i32_0 = arith.constant 0 : i32
    %c0_i32_1 = arith.constant 0 : i32
    return %c0_i32, %c0_i32_0 : i32, i32
  }
  func.func @transform_5(%arg0: i32) -> (i32, i32, i32, i32) {
    %c0_i32 = arith.constant 0 : i32
    %c0_i32_0 = arith.constant 0 : i32
    %c0_i32_1 = arith.constant 0 : i32
    %c0_i32_2 = arith.constant 0 : i32
    %c0_i32_3 = arith.constant 0 : i32
    return %c0_i32, %c0_i32_0, %c0_i32_1, %c0_i32_2 : i32, i32, i32, i32
  }
  func.func @transform_6(%arg0: i32) -> (i32, i32) {
    %c0_i32 = arith.constant 0 : i32
    %c0_i32_0 = arith.constant 0 : i32
    %c0_i32_1 = arith.constant 0 : i32
    return %c0_i32, %c0_i32_0 : i32, i32
  }
  func.func @transform_7(%arg0: i32) -> (i32, i32) {
    %c0_i32 = arith.constant 0 : i32
    %c0_i32_0 = arith.constant 0 : i32
    %c0_i32_1 = arith.constant 0 : i32
    return %c0_i32, %c0_i32_0 : i32, i32
  }
  func.func @transform_8(%arg0: i32) -> (i32, i32) {
    %c0_i32 = arith.constant 0 : i32
    %c0_i32_0 = arith.constant 0 : i32
    %c0_i32_1 = arith.constant 0 : i32
    return %c0_i32, %c0_i32_0 : i32, i32
  }
  func.func @transform_9(%arg0: i32) -> (i32, i32) {
    %c0_i32 = arith.constant 0 : i32
    %c0_i32_0 = arith.constant 0 : i32
    return %arg0, %c0_i32 : i32, i32
  }
  func.func @transform_10(%arg0: i32) -> (i32, i32) {
    %c0_i32 = arith.constant 0 : i32
    %c0_i32_0 = arith.constant 0 : i32
    return %arg0, %c0_i32 : i32, i32
  }
}

</mosaic_0001>

<llo_original>
// kernel: ppo_actor_forward.1
$region0: #{ppo_actor_forward.1}
  #allocation0 [shape = 'u32[]', space=smem, size = 0x4, offset = 0x4, fixed_abs, tag = 'smem constant byte address 0x4 - core index']
  #allocation1 [shape = 'u32[72,128]{1,0:T(1,128)}', space=vmem, size = 0x9000, scoped, tag = 'internal scratch']
  %s0 = inlined_call_operand.vmem [shape: f32[20,20,8,16], index: 0, kind: input, shape index: {}]
  %s1 = inlined_call_operand.vmem [shape: f32[2,2,16,8], index: 1, kind: input, shape index: {}]
  %s2 = inlined_call_operand.vmem [shape: f32[1,8], index: 2, kind: input, shape index: {}]
  %s3 = inlined_call_operand.vmem [shape: f32[2,2,8,16], index: 3, kind: input, shape index: {}]
  %s4 = inlined_call_operand.vmem [shape: f32[1,16], index: 4, kind: input, shape index: {}]
  %s5 = inlined_call_operand.vmem [shape: f32[7,7,16,128], index: 5, kind: input, shape index: {}]
  %s6 = inlined_call_operand.vmem [shape: f32[1,128], index: 6, kind: input, shape index: {}]
  %s7 = inlined_call_operand.vmem [shape: f32[128,6], index: 7, kind: input, shape index: {}]
  %s8 = inlined_call_operand.vmem [shape: f32[1,6], index: 8, kind: input, shape index: {}]
  %s9 = inlined_call_operand.vmem [shape: s32[8,1], index: 9, kind: output, shape index: {0}]
  %s10 = inlined_call_operand.vmem [shape: f32[8,1], index: 10, kind: output, shape index: {1}]
  %11 = xla_tuple %s9, %s10
  %s12 = sld [smem:[#allocation0]]
  $region54: #{ppo_actor_forward.1} parent=0
    _
  %s14 = ssub.s32 1, %s12
  %s15 = scalar_select 0, %s14, %s12
  // Predicated region
  $region2: #{ppo_actor_forward.1} parent=0 // pred_check
    _
  $region3: #{ppo_actor_forward.1} parent=0 // pred_check_branch
    %17 = sbr.rel (0) target = $region5
  $region4: #{ppo_actor_forward.1} parent=0 // pred_region
    _
  $region5: #{ppo_actor_forward.1} parent=0 // pred_fallthru
    _
  // Predicated region
  $region6: #{ppo_actor_forward.1} parent=0 // pred_check
    _
  $region7: #{ppo_actor_forward.1} parent=0 // pred_check_branch
    %19 = sbr.rel (0) target = $region9
  $region8: #{ppo_actor_forward.1} parent=0 // pred_region
    _
  $region9: #{ppo_actor_forward.1} parent=0 // pred_fallthru
    _
  // Predicated region
  $region10: #{ppo_actor_forward.1} parent=0 // pred_check
    _
  $region11: #{ppo_actor_forward.1} parent=0 // pred_check_branch
    %21 = sbr.rel (0) target = $region13
  $region12: #{ppo_actor_forward.1} parent=0 // pred_region
    _
  $region13: #{ppo_actor_forward.1} parent=0 // pred_fallthru
    _
  // Predicated region
  $region14: #{ppo_actor_forward.1} parent=0 // pred_check
    _
  $region15: #{ppo_actor_forward.1} parent=0 // pred_check_branch
    %23 = sbr.rel (0) target = $region17
  $region16: #{ppo_actor_forward.1} parent=0 // pred_region
    _
  $region17: #{ppo_actor_forward.1} parent=0 // pred_fallthru
    _
  // Predicated region
  $region18: #{ppo_actor_forward.1} parent=0 // pred_check
    _
  $region19: #{ppo_actor_forward.1} parent=0 // pred_check_branch
    %25 = sbr.rel (0) target = $region21
  $region20: #{ppo_actor_forward.1} parent=0 // pred_region
    _
  $region21: #{ppo_actor_forward.1} parent=0 // pred_fallthru
    _
  // Predicated region
  $region22: #{ppo_actor_forward.1} parent=0 // pred_check
    _
  $region23: #{ppo_actor_forward.1} parent=0 // pred_check_branch
    %27 = sbr.rel (0) target = $region25
  $region24: #{ppo_actor_forward.1} parent=0 // pred_region
    _
  $region25: #{ppo_actor_forward.1} parent=0 // pred_fallthru
    _
  // Predicated region
  $region26: #{ppo_actor_forward.1} parent=0 // pred_check
    _
  $region27: #{ppo_actor_forward.1} parent=0 // pred_check_branch
    %29 = sbr.rel (0) target = $region29
  $region28: #{ppo_actor_forward.1} parent=0 // pred_region
    _
  $region29: #{ppo_actor_forward.1} parent=0 // pred_fallthru
    _
  // Predicated region
  $region30: #{ppo_actor_forward.1} parent=0 // pred_check
    _
  $region31: #{ppo_actor_forward.1} parent=0 // pred_check_branch
    %31 = sbr.rel (0) target = $region33
  $region32: #{ppo_actor_forward.1} parent=0 // pred_region
    _
  $region33: #{ppo_actor_forward.1} parent=0 // pred_fallthru
    _
  // Predicated region
  $region34: #{ppo_actor_forward.1} parent=0 // pred_check
    _
  $region35: #{ppo_actor_forward.1} parent=0 // pred_check_branch
    %33 = sbr.rel (0) target = $region37
  $region36: #{ppo_actor_forward.1} parent=0 // pred_region
    _
  $region37: #{ppo_actor_forward.1} parent=0 // pred_fallthru
    _
  %v34 = vld [vmem:[%s0] sm:$0xff]
  %v35 = vld [vmem:[%s0 + $0x8] sm:$0xff]
  %v36 = vld [vmem:[%s0 + $0x10] sm:$0xff]
  %v37 = vld [vmem:[%s0 + $0x18] sm:$0xff]
  %v38 = vld [vmem:[%s0 + $0x20] sm:$0xff]
  %v39 = vld [vmem:[%s0 + $0x28] sm:$0xff]
  %v40 = vld [vmem:[%s0 + $0x30] sm:$0xff]
  %v41 = vld [vmem:[%s0 + $0x38] sm:$0xff]
  %v42 = vld [vmem:[%s0 + $0x40] sm:$0xff]
  %v43 = vld [vmem:[%s0 + $0x48] sm:$0xff]
  %v44 = vld [vmem:[%s0 + $0x50] sm:$0xff]
  %v45 = vld [vmem:[%s0 + $0x58] sm:$0xff]
  %v46 = vld [vmem:[%s0 + $0x60] sm:$0xff]
  %v47 = vld [vmem:[%s0 + $0x68] sm:$0xff]
  %v48 = vld [vmem:[%s0 + $0x70] sm:$0xff]
  %v49 = vld [vmem:[%s0 + $0x78] sm:$0xff]
  %v50 = vld [vmem:[%s0 + $0x80] sm:$0xff]
  %v51 = vld [vmem:[%s0 + $0x88] sm:$0xff]
  %v52 = vld [vmem:[%s0 + $0x90] sm:$0xff]
  %v53 = vld [vmem:[%s0 + $0x98] sm:$0xff]
  %v54 = vld [vmem:[%s0 + $0xa0] sm:$0xff]
  %v55 = vld [vmem:[%s0 + $0xa8] sm:$0xff]
  %v56 = vld [vmem:[%s0 + $0xb0] sm:$0xff]
  %v57 = vld [vmem:[%s0 + $0xb8] sm:$0xff]
  %v58 = vld [vmem:[%s0 + $0xc0] sm:$0xff]
  %v59 = vld [vmem:[%s0 + $0xc8] sm:$0xff]
  %v60 = vld [vmem:[%s0 + $0xd0] sm:$0xff]
  %v61 = vld [vmem:[%s0 + $0xd8] sm:$0xff]
  %v62 = vld [vmem:[%s0 + $0xe0] sm:$0xff]
  %v63 = vld [vmem:[%s0 + $0xe8] sm:$0xff]
  %v64 = vld [vmem:[%s0 + $0xf0] sm:$0xff]
  %v65 = vld [vmem:[%s0 + $0xf8] sm:$0xff]
  %v66 = vld [vmem:[%s0 + $0x100] sm:$0xff]
  %v67 = vld [vmem:[%s0 + $0x108] sm:$0xff]
  %v68 = vld [vmem:[%s0 + $0x110] sm:$0xff]
  %v69 = vld [vmem:[%s0 + $0x118] sm:$0xff]
  %v70 = vld [vmem:[%s0 + $0x120] sm:$0xff]
  %v71 = vld [vmem:[%s0 + $0x128] sm:$0xff]
  %v72 = vld [vmem:[%s0 + $0x130] sm:$0xff]
  %v73 = vld [vmem:[%s0 + $0x138] sm:$0xff]
  %v74 = vld [vmem:[%s0 + $0x140] sm:$0xff]
  %v75 = vld [vmem:[%s0 + $0x148] sm:$0xff]
  %v76 = vld [vmem:[%s0 + $0x150] sm:$0xff]
  %v77 = vld [vmem:[%s0 + $0x158] sm:$0xff]
  %v78 = vld [vmem:[%s0 + $0x160] sm:$0xff]
  %v79 = vld [vmem:[%s0 + $0x168] sm:$0xff]
  %v80 = vld [vmem:[%s0 + $0x170] sm:$0xff]
  %v81 = vld [vmem:[%s0 + $0x178] sm:$0xff]
  %v82 = vld [vmem:[%s0 + $0x180] sm:$0xff]
  %v83 = vld [vmem:[%s0 + $0x188] sm:$0xff]
  %v84 = vld [vmem:[%s0 + $0x190] sm:$0xff]
  %v85 = vld [vmem:[%s0 + $0x198] sm:$0xff]
  %v86 = vld [vmem:[%s0 + $0x1a0] sm:$0xff]
  %v87 = vld [vmem:[%s0 + $0x1a8] sm:$0xff]
  %v88 = vld [vmem:[%s0 + $0x1b0] sm:$0xff]
  %v89 = vld [vmem:[%s0 + $0x1b8] sm:$0xff]
  %v90 = vld [vmem:[%s0 + $0x1c0] sm:$0xff]
  %v91 = vld [vmem:[%s0 + $0x1c8] sm:$0xff]
  %v92 = vld [vmem:[%s0 + $0x1d0] sm:$0xff]
  %v93 = vld [vmem:[%s0 + $0x1d8] sm:$0xff]
  %v94 = vld [vmem:[%s0 + $0x1e0] sm:$0xff]
  %v95 = vld [vmem:[%s0 + $0x1e8] sm:$0xff]
  %v96 = vld [vmem:[%s0 + $0x1f0] sm:$0xff]
  %v97 = vld [vmem:[%s0 + $0x1f8] sm:$0xff]
  %v98 = vld [vmem:[%s0 + $0x200] sm:$0xff]
  %v99 = vld [vmem:[%s0 + $0x208] sm:$0xff]
  %v100 = vld [vmem:[%s0 + $0x210] sm:$0xff]
  %v101 = vld [vmem:[%s0 + $0x218] sm:$0xff]
  %v102 = vld [vmem:[%s0 + $0x220] sm:$0xff]
  %v103 = vld [vmem:[%s0 + $0x228] sm:$0xff]
  %v104 = vld [vmem:[%s0 + $0x230] sm:$0xff]
  %v105 = vld [vmem:[%s0 + $0x238] sm:$0xff]
  %v106 = vld [vmem:[%s0 + $0x240] sm:$0xff]
  %v107 = vld [vmem:[%s0 + $0x248] sm:$0xff]
  %v108 = vld [vmem:[%s0 + $0x250] sm:$0xff]
  %v109 = vld [vmem:[%s0 + $0x258] sm:$0xff]
  %v110 = vld [vmem:[%s0 + $0x260] sm:$0xff]
  %v111 = vld [vmem:[%s0 + $0x268] sm:$0xff]
  %v112 = vld [vmem:[%s0 + $0x270] sm:$0xff]
  %v113 = vld [vmem:[%s0 + $0x278] sm:$0xff]
  %v114 = vld [vmem:[%s0 + $0x280] sm:$0xff]
  %v115 = vld [vmem:[%s0 + $0x288] sm:$0xff]
  %v116 = vld [vmem:[%s0 + $0x290] sm:$0xff]
  %v117 = vld [vmem:[%s0 + $0x298] sm:$0xff]
  %v118 = vld [vmem:[%s0 + $0x2a0] sm:$0xff]
  %v119 = vld [vmem:[%s0 + $0x2a8] sm:$0xff]
  %v120 = vld [vmem:[%s0 + $0x2b0] sm:$0xff]
  %v121 = vld [vmem:[%s0 + $0x2b8] sm:$0xff]
  %v122 = vld [vmem:[%s0 + $0x2c0] sm:$0xff]
  %v123 = vld [vmem:[%s0 + $0x2c8] sm:$0xff]
  %v124 = vld [vmem:[%s0 + $0x2d0] sm:$0xff]
  %v125 = vld [vmem:[%s0 + $0x2d8] sm:$0xff]
  %v126 = vld [vmem:[%s0 + $0x2e0] sm:$0xff]
  %v127 = vld [vmem:[%s0 + $0x2e8] sm:$0xff]
  %v128 = vld [vmem:[%s0 + $0x2f0] sm:$0xff]
  %v129 = vld [vmem:[%s0 + $0x2f8] sm:$0xff]
  %v130 = vld [vmem:[%s0 + $0x300] sm:$0xff]
  %v131 = vld [vmem:[%s0 + $0x308] sm:$0xff]
  %v132 = vld [vmem:[%s0 + $0x310] sm:$0xff]
  %v133 = vld [vmem:[%s0 + $0x318] sm:$0xff]
  %v134 = vld [vmem:[%s0 + $0x320] sm:$0xff]
  %v135 = vld [vmem:[%s0 + $0x328] sm:$0xff]
  %v136 = vld [vmem:[%s0 + $0x330] sm:$0xff]
  %v137 = vld [vmem:[%s0 + $0x338] sm:$0xff]
  %v138 = vld [vmem:[%s0 + $0x340] sm:$0xff]
  %v139 = vld [vmem:[%s0 + $0x348] sm:$0xff]
  %v140 = vld [vmem:[%s0 + $0x350] sm:$0xff]
  %v141 = vld [vmem:[%s0 + $0x358] sm:$0xff]
  %v142 = vld [vmem:[%s0 + $0x360] sm:$0xff]
  %v143 = vld [vmem:[%s0 + $0x368] sm:$0xff]
  %v144 = vld [vmem:[%s0 + $0x370] sm:$0xff]
  %v145 = vld [vmem:[%s0 + $0x378] sm:$0xff]
  %v146 = vld [vmem:[%s0 + $0x380] sm:$0xff]
  %v147 = vld [vmem:[%s0 + $0x388] sm:$0xff]
  %v148 = vld [vmem:[%s0 + $0x390] sm:$0xff]
  %v149 = vld [vmem:[%s0 + $0x398] sm:$0xff]
  %v150 = vld [vmem:[%s0 + $0x3a0] sm:$0xff]
  %v151 = vld [vmem:[%s0 + $0x3a8] sm:$0xff]
  %v152 = vld [vmem:[%s0 + $0x3b0] sm:$0xff]
  %v153 = vld [vmem:[%s0 + $0x3b8] sm:$0xff]
  %v154 = vld [vmem:[%s0 + $0x3c0] sm:$0xff]
  %v155 = vld [vmem:[%s0 + $0x3c8] sm:$0xff]
  %v156 = vld [vmem:[%s0 + $0x3d0] sm:$0xff]
  %v157 = vld [vmem:[%s0 + $0x3d8] sm:$0xff]
  %v158 = vld [vmem:[%s0 + $0x3e0] sm:$0xff]
  %v159 = vld [vmem:[%s0 + $0x3e8] sm:$0xff]
  %v160 = vld [vmem:[%s0 + $0x3f0] sm:$0xff]
  %v161 = vld [vmem:[%s0 + $0x3f8] sm:$0xff]
  %v162 = vld [vmem:[%s0 + $0x400] sm:$0xff]
  %v163 = vld [vmem:[%s0 + $0x408] sm:$0xff]
  %v164 = vld [vmem:[%s0 + $0x410] sm:$0xff]
  %v165 = vld [vmem:[%s0 + $0x418] sm:$0xff]
  %v166 = vld [vmem:[%s0 + $0x420] sm:$0xff]
  %v167 = vld [vmem:[%s0 + $0x428] sm:$0xff]
  %v168 = vld [vmem:[%s0 + $0x430] sm:$0xff]
  %v169 = vld [vmem:[%s0 + $0x438] sm:$0xff]
  %v170 = vld [vmem:[%s0 + $0x440] sm:$0xff]
  %v171 = vld [vmem:[%s0 + $0x448] sm:$0xff]
  %v172 = vld [vmem:[%s0 + $0x450] sm:$0xff]
  %v173 = vld [vmem:[%s0 + $0x458] sm:$0xff]
  %v174 = vld [vmem:[%s0 + $0x460] sm:$0xff]
  %v175 = vld [vmem:[%s0 + $0x468] sm:$0xff]
  %v176 = vld [vmem:[%s0 + $0x470] sm:$0xff]
  %v177 = vld [vmem:[%s0 + $0x478] sm:$0xff]
  %v178 = vld [vmem:[%s0 + $0x480] sm:$0xff]
  %v179 = vld [vmem:[%s0 + $0x488] sm:$0xff]
  %v180 = vld [vmem:[%s0 + $0x490] sm:$0xff]
  %v181 = vld [vmem:[%s0 + $0x498] sm:$0xff]
  %v182 = vld [vmem:[%s0 + $0x4a0] sm:$0xff]
  %v183 = vld [vmem:[%s0 + $0x4a8] sm:$0xff]
  %v184 = vld [vmem:[%s0 + $0x4b0] sm:$0xff]
  %v185 = vld [vmem:[%s0 + $0x4b8] sm:$0xff]
  %v186 = vld [vmem:[%s0 + $0x4c0] sm:$0xff]
  %v187 = vld [vmem:[%s0 + $0x4c8] sm:$0xff]
  %v188 = vld [vmem:[%s0 + $0x4d0] sm:$0xff]
  %v189 = vld [vmem:[%s0 + $0x4d8] sm:$0xff]
  %v190 = vld [vmem:[%s0 + $0x4e0] sm:$0xff]
  %v191 = vld [vmem:[%s0 + $0x4e8] sm:$0xff]
  %v192 = vld [vmem:[%s0 + $0x4f0] sm:$0xff]
  %v193 = vld [vmem:[%s0 + $0x4f8] sm:$0xff]
  %v194 = vld [vmem:[%s0 + $0x500] sm:$0xff]
  %v195 = vld [vmem:[%s0 + $0x508] sm:$0xff]
  %v196 = vld [vmem:[%s0 + $0x510] sm:$0xff]
  %v197 = vld [vmem:[%s0 + $0x518] sm:$0xff]
  %v198 = vld [vmem:[%s0 + $0x520] sm:$0xff]
  %v199 = vld [vmem:[%s0 + $0x528] sm:$0xff]
  %v200 = vld [vmem:[%s0 + $0x530] sm:$0xff]
  %v201 = vld [vmem:[%s0 + $0x538] sm:$0xff]
  %v202 = vld [vmem:[%s0 + $0x540] sm:$0xff]
  %v203 = vld [vmem:[%s0 + $0x548] sm:$0xff]
  %v204 = vld [vmem:[%s0 + $0x550] sm:$0xff]
  %v205 = vld [vmem:[%s0 + $0x558] sm:$0xff]
  %v206 = vld [vmem:[%s0 + $0x560] sm:$0xff]
  %v207 = vld [vmem:[%s0 + $0x568] sm:$0xff]
  %v208 = vld [vmem:[%s0 + $0x570] sm:$0xff]
  %v209 = vld [vmem:[%s0 + $0x578] sm:$0xff]
  %v210 = vld [vmem:[%s0 + $0x580] sm:$0xff]
  %v211 = vld [vmem:[%s0 + $0x588] sm:$0xff]
  %v212 = vld [vmem:[%s0 + $0x590] sm:$0xff]
  %v213 = vld [vmem:[%s0 + $0x598] sm:$0xff]
  %v214 = vld [vmem:[%s0 + $0x5a0] sm:$0xff]
  %v215 = vld [vmem:[%s0 + $0x5a8] sm:$0xff]
  %v216 = vld [vmem:[%s0 + $0x5b0] sm:$0xff]
  %v217 = vld [vmem:[%s0 + $0x5b8] sm:$0xff]
  %v218 = vld [vmem:[%s0 + $0x5c0] sm:$0xff]
  %v219 = vld [vmem:[%s0 + $0x5c8] sm:$0xff]
  %v220 = vld [vmem:[%s0 + $0x5d0] sm:$0xff]
  %v221 = vld [vmem:[%s0 + $0x5d8] sm:$0xff]
  %v222 = vld [vmem:[%s0 + $0x5e0] sm:$0xff]
  %v223 = vld [vmem:[%s0 + $0x5e8] sm:$0xff]
  %v224 = vld [vmem:[%s0 + $0x5f0] sm:$0xff]
  %v225 = vld [vmem:[%s0 + $0x5f8] sm:$0xff]
  %v226 = vld [vmem:[%s0 + $0x600] sm:$0xff]
  %v227 = vld [vmem:[%s0 + $0x608] sm:$0xff]
  %v228 = vld [vmem:[%s0 + $0x610] sm:$0xff]
  %v229 = vld [vmem:[%s0 + $0x618] sm:$0xff]
  %v230 = vld [vmem:[%s0 + $0x620] sm:$0xff]
  %v231 = vld [vmem:[%s0 + $0x628] sm:$0xff]
  %v232 = vld [vmem:[%s0 + $0x630] sm:$0xff]
  %v233 = vld [vmem:[%s0 + $0x638] sm:$0xff]
  %v234 = vld [vmem:[%s0 + $0x640] sm:$0xff]
  %v235 = vld [vmem:[%s0 + $0x648] sm:$0xff]
  %v236 = vld [vmem:[%s0 + $0x650] sm:$0xff]
  %v237 = vld [vmem:[%s0 + $0x658] sm:$0xff]
  %v238 = vld [vmem:[%s0 + $0x660] sm:$0xff]
  %v239 = vld [vmem:[%s0 + $0x668] sm:$0xff]
  %v240 = vld [vmem:[%s0 + $0x670] sm:$0xff]
  %v241 = vld [vmem:[%s0 + $0x678] sm:$0xff]
  %v242 = vld [vmem:[%s0 + $0x680] sm:$0xff]
  %v243 = vld [vmem:[%s0 + $0x688] sm:$0xff]
  %v244 = vld [vmem:[%s0 + $0x690] sm:$0xff]
  %v245 = vld [vmem:[%s0 + $0x698] sm:$0xff]
  %v246 = vld [vmem:[%s0 + $0x6a0] sm:$0xff]
  %v247 = vld [vmem:[%s0 + $0x6a8] sm:$0xff]
  %v248 = vld [vmem:[%s0 + $0x6b0] sm:$0xff]
  %v249 = vld [vmem:[%s0 + $0x6b8] sm:$0xff]
  %v250 = vld [vmem:[%s0 + $0x6c0] sm:$0xff]
  %v251 = vld [vmem:[%s0 + $0x6c8] sm:$0xff]
  %v252 = vld [vmem:[%s0 + $0x6d0] sm:$0xff]
  %v253 = vld [vmem:[%s0 + $0x6d8] sm:$0xff]
  %v254 = vld [vmem:[%s0 + $0x6e0] sm:$0xff]
  %v255 = vld [vmem:[%s0 + $0x6e8] sm:$0xff]
  %v256 = vld [vmem:[%s0 + $0x6f0] sm:$0xff]
  %v257 = vld [vmem:[%s0 + $0x6f8] sm:$0xff]
  %v258 = vld [vmem:[%s0 + $0x700] sm:$0xff]
  %v259 = vld [vmem:[%s0 + $0x708] sm:$0xff]
  %v260 = vld [vmem:[%s0 + $0x710] sm:$0xff]
  %v261 = vld [vmem:[%s0 + $0x718] sm:$0xff]
  %v262 = vld [vmem:[%s0 + $0x720] sm:$0xff]
  %v263 = vld [vmem:[%s0 + $0x728] sm:$0xff]
  %v264 = vld [vmem:[%s0 + $0x730] sm:$0xff]
  %v265 = vld [vmem:[%s0 + $0x738] sm:$0xff]
  %v266 = vld [vmem:[%s0 + $0x740] sm:$0xff]
  %v267 = vld [vmem:[%s0 + $0x748] sm:$0xff]
  %v268 = vld [vmem:[%s0 + $0x750] sm:$0xff]
  %v269 = vld [vmem:[%s0 + $0x758] sm:$0xff]
  %v270 = vld [vmem:[%s0 + $0x760] sm:$0xff]
  %v271 = vld [vmem:[%s0 + $0x768] sm:$0xff]
  %v272 = vld [vmem:[%s0 + $0x770] sm:$0xff]
  %v273 = vld [vmem:[%s0 + $0x778] sm:$0xff]
  %v274 = vld [vmem:[%s0 + $0x780] sm:$0xff]
  %v275 = vld [vmem:[%s0 + $0x788] sm:$0xff]
  %v276 = vld [vmem:[%s0 + $0x790] sm:$0xff]
  %v277 = vld [vmem:[%s0 + $0x798] sm:$0xff]
  %v278 = vld [vmem:[%s0 + $0x7a0] sm:$0xff]
  %v279 = vld [vmem:[%s0 + $0x7a8] sm:$0xff]
  %v280 = vld [vmem:[%s0 + $0x7b0] sm:$0xff]
  %v281 = vld [vmem:[%s0 + $0x7b8] sm:$0xff]
  %v282 = vld [vmem:[%s0 + $0x7c0] sm:$0xff]
  %v283 = vld [vmem:[%s0 + $0x7c8] sm:$0xff]
  %v284 = vld [vmem:[%s0 + $0x7d0] sm:$0xff]
  %v285 = vld [vmem:[%s0 + $0x7d8] sm:$0xff]
  %v286 = vld [vmem:[%s0 + $0x7e0] sm:$0xff]
  %v287 = vld [vmem:[%s0 + $0x7e8] sm:$0xff]
  %v288 = vld [vmem:[%s0 + $0x7f0] sm:$0xff]
  %v289 = vld [vmem:[%s0 + $0x7f8] sm:$0xff]
  %v290 = vld [vmem:[%s0 + $0x800] sm:$0xff]
  %v291 = vld [vmem:[%s0 + $0x808] sm:$0xff]
  %v292 = vld [vmem:[%s0 + $0x810] sm:$0xff]
  %v293 = vld [vmem:[%s0 + $0x818] sm:$0xff]
  %v294 = vld [vmem:[%s0 + $0x820] sm:$0xff]
  %v295 = vld [vmem:[%s0 + $0x828] sm:$0xff]
  %v296 = vld [vmem:[%s0 + $0x830] sm:$0xff]
  %v297 = vld [vmem:[%s0 + $0x838] sm:$0xff]
  %v298 = vld [vmem:[%s0 + $0x840] sm:$0xff]
  %v299 = vld [vmem:[%s0 + $0x848] sm:$0xff]
  %v300 = vld [vmem:[%s0 + $0x850] sm:$0xff]
  %v301 = vld [vmem:[%s0 + $0x858] sm:$0xff]
  %v302 = vld [vmem:[%s0 + $0x860] sm:$0xff]
  %v303 = vld [vmem:[%s0 + $0x868] sm:$0xff]
  %v304 = vld [vmem:[%s0 + $0x870] sm:$0xff]
  %v305 = vld [vmem:[%s0 + $0x878] sm:$0xff]
  %v306 = vld [vmem:[%s0 + $0x880] sm:$0xff]
  %v307 = vld [vmem:[%s0 + $0x888] sm:$0xff]
  %v308 = vld [vmem:[%s0 + $0x890] sm:$0xff]
  %v309 = vld [vmem:[%s0 + $0x898] sm:$0xff]
  %v310 = vld [vmem:[%s0 + $0x8a0] sm:$0xff]
  %v311 = vld [vmem:[%s0 + $0x8a8] sm:$0xff]
  %v312 = vld [vmem:[%s0 + $0x8b0] sm:$0xff]
  %v313 = vld [vmem:[%s0 + $0x8b8] sm:$0xff]
  %v314 = vld [vmem:[%s0 + $0x8c0] sm:$0xff]
  %v315 = vld [vmem:[%s0 + $0x8c8] sm:$0xff]
  %v316 = vld [vmem:[%s0 + $0x8d0] sm:$0xff]
  %v317 = vld [vmem:[%s0 + $0x8d8] sm:$0xff]
  %v318 = vld [vmem:[%s0 + $0x8e0] sm:$0xff]
  %v319 = vld [vmem:[%s0 + $0x8e8] sm:$0xff]
  %v320 = vld [vmem:[%s0 + $0x8f0] sm:$0xff]
  %v321 = vld [vmem:[%s0 + $0x8f8] sm:$0xff]
  %v322 = vld [vmem:[%s0 + $0x900] sm:$0xff]
  %v323 = vld [vmem:[%s0 + $0x908] sm:$0xff]
  %v324 = vld [vmem:[%s0 + $0x910] sm:$0xff]
  %v325 = vld [vmem:[%s0 + $0x918] sm:$0xff]
  %v326 = vld [vmem:[%s0 + $0x920] sm:$0xff]
  %v327 = vld [vmem:[%s0 + $0x928] sm:$0xff]
  %v328 = vld [vmem:[%s0 + $0x930] sm:$0xff]
  %v329 = vld [vmem:[%s0 + $0x938] sm:$0xff]
  %v330 = vld [vmem:[%s0 + $0x940] sm:$0xff]
  %v331 = vld [vmem:[%s0 + $0x948] sm:$0xff]
  %v332 = vld [vmem:[%s0 + $0x950] sm:$0xff]
  %v333 = vld [vmem:[%s0 + $0x958] sm:$0xff]
  %v334 = vld [vmem:[%s0 + $0x960] sm:$0xff]
  %v335 = vld [vmem:[%s0 + $0x968] sm:$0xff]
  %v336 = vld [vmem:[%s0 + $0x970] sm:$0xff]
  %v337 = vld [vmem:[%s0 + $0x978] sm:$0xff]
  %v338 = vld [vmem:[%s0 + $0x980] sm:$0xff]
  %v339 = vld [vmem:[%s0 + $0x988] sm:$0xff]
  %v340 = vld [vmem:[%s0 + $0x990] sm:$0xff]
  %v341 = vld [vmem:[%s0 + $0x998] sm:$0xff]
  %v342 = vld [vmem:[%s0 + $0x9a0] sm:$0xff]
  %v343 = vld [vmem:[%s0 + $0x9a8] sm:$0xff]
  %v344 = vld [vmem:[%s0 + $0x9b0] sm:$0xff]
  %v345 = vld [vmem:[%s0 + $0x9b8] sm:$0xff]
  %v346 = vld [vmem:[%s0 + $0x9c0] sm:$0xff]
  %v347 = vld [vmem:[%s0 + $0x9c8] sm:$0xff]
  %v348 = vld [vmem:[%s0 + $0x9d0] sm:$0xff]
  %v349 = vld [vmem:[%s0 + $0x9d8] sm:$0xff]
  %v350 = vld [vmem:[%s0 + $0x9e0] sm:$0xff]
  %v351 = vld [vmem:[%s0 + $0x9e8] sm:$0xff]
  %v352 = vld [vmem:[%s0 + $0x9f0] sm:$0xff]
  %v353 = vld [vmem:[%s0 + $0x9f8] sm:$0xff]
  %v354 = vld [vmem:[%s0 + $0xa00] sm:$0xff]
  %v355 = vld [vmem:[%s0 + $0xa08] sm:$0xff]
  %v356 = vld [vmem:[%s0 + $0xa10] sm:$0xff]
  %v357 = vld [vmem:[%s0 + $0xa18] sm:$0xff]
  %v358 = vld [vmem:[%s0 + $0xa20] sm:$0xff]
  %v359 = vld [vmem:[%s0 + $0xa28] sm:$0xff]
  %v360 = vld [vmem:[%s0 + $0xa30] sm:$0xff]
  %v361 = vld [vmem:[%s0 + $0xa38] sm:$0xff]
  %v362 = vld [vmem:[%s0 + $0xa40] sm:$0xff]
  %v363 = vld [vmem:[%s0 + $0xa48] sm:$0xff]
  %v364 = vld [vmem:[%s0 + $0xa50] sm:$0xff]
  %v365 = vld [vmem:[%s0 + $0xa58] sm:$0xff]
  %v366 = vld [vmem:[%s0 + $0xa60] sm:$0xff]
  %v367 = vld [vmem:[%s0 + $0xa68] sm:$0xff]
  %v368 = vld [vmem:[%s0 + $0xa70] sm:$0xff]
  %v369 = vld [vmem:[%s0 + $0xa78] sm:$0xff]
  %v370 = vld [vmem:[%s0 + $0xa80] sm:$0xff]
  %v371 = vld [vmem:[%s0 + $0xa88] sm:$0xff]
  %v372 = vld [vmem:[%s0 + $0xa90] sm:$0xff]
  %v373 = vld [vmem:[%s0 + $0xa98] sm:$0xff]
  %v374 = vld [vmem:[%s0 + $0xaa0] sm:$0xff]
  %v375 = vld [vmem:[%s0 + $0xaa8] sm:$0xff]
  %v376 = vld [vmem:[%s0 + $0xab0] sm:$0xff]
  %v377 = vld [vmem:[%s0 + $0xab8] sm:$0xff]
  %v378 = vld [vmem:[%s0 + $0xac0] sm:$0xff]
  %v379 = vld [vmem:[%s0 + $0xac8] sm:$0xff]
  %v380 = vld [vmem:[%s0 + $0xad0] sm:$0xff]
  %v381 = vld [vmem:[%s0 + $0xad8] sm:$0xff]
  %v382 = vld [vmem:[%s0 + $0xae0] sm:$0xff]
  %v383 = vld [vmem:[%s0 + $0xae8] sm:$0xff]
  %v384 = vld [vmem:[%s0 + $0xaf0] sm:$0xff]
  %v385 = vld [vmem:[%s0 + $0xaf8] sm:$0xff]
  %v386 = vld [vmem:[%s0 + $0xb00] sm:$0xff]
  %v387 = vld [vmem:[%s0 + $0xb08] sm:$0xff]
  %v388 = vld [vmem:[%s0 + $0xb10] sm:$0xff]
  %v389 = vld [vmem:[%s0 + $0xb18] sm:$0xff]
  %v390 = vld [vmem:[%s0 + $0xb20] sm:$0xff]
  %v391 = vld [vmem:[%s0 + $0xb28] sm:$0xff]
  %v392 = vld [vmem:[%s0 + $0xb30] sm:$0xff]
  %v393 = vld [vmem:[%s0 + $0xb38] sm:$0xff]
  %v394 = vld [vmem:[%s0 + $0xb40] sm:$0xff]
  %v395 = vld [vmem:[%s0 + $0xb48] sm:$0xff]
  %v396 = vld [vmem:[%s0 + $0xb50] sm:$0xff]
  %v397 = vld [vmem:[%s0 + $0xb58] sm:$0xff]
  %v398 = vld [vmem:[%s0 + $0xb60] sm:$0xff]
  %v399 = vld [vmem:[%s0 + $0xb68] sm:$0xff]
  %v400 = vld [vmem:[%s0 + $0xb70] sm:$0xff]
  %v401 = vld [vmem:[%s0 + $0xb78] sm:$0xff]
  %v402 = vld [vmem:[%s0 + $0xb80] sm:$0xff]
  %v403 = vld [vmem:[%s0 + $0xb88] sm:$0xff]
  %v404 = vld [vmem:[%s0 + $0xb90] sm:$0xff]
  %v405 = vld [vmem:[%s0 + $0xb98] sm:$0xff]
  %v406 = vld [vmem:[%s0 + $0xba0] sm:$0xff]
  %v407 = vld [vmem:[%s0 + $0xba8] sm:$0xff]
  %v408 = vld [vmem:[%s0 + $0xbb0] sm:$0xff]
  %v409 = vld [vmem:[%s0 + $0xbb8] sm:$0xff]
  %v410 = vld [vmem:[%s0 + $0xbc0] sm:$0xff]
  %v411 = vld [vmem:[%s0 + $0xbc8] sm:$0xff]
  %v412 = vld [vmem:[%s0 + $0xbd0] sm:$0xff]
  %v413 = vld [vmem:[%s0 + $0xbd8] sm:$0xff]
  %v414 = vld [vmem:[%s0 + $0xbe0] sm:$0xff]
  %v415 = vld [vmem:[%s0 + $0xbe8] sm:$0xff]
  %v416 = vld [vmem:[%s0 + $0xbf0] sm:$0xff]
  %v417 = vld [vmem:[%s0 + $0xbf8] sm:$0xff]
  %v418 = vld [vmem:[%s0 + $0xc00] sm:$0xff]
  %v419 = vld [vmem:[%s0 + $0xc08] sm:$0xff]
  %v420 = vld [vmem:[%s0 + $0xc10] sm:$0xff]
  %v421 = vld [vmem:[%s0 + $0xc18] sm:$0xff]
  %v422 = vld [vmem:[%s0 + $0xc20] sm:$0xff]
  %v423 = vld [vmem:[%s0 + $0xc28] sm:$0xff]
  %v424 = vld [vmem:[%s0 + $0xc30] sm:$0xff]
  %v425 = vld [vmem:[%s0 + $0xc38] sm:$0xff]
  %v426 = vld [vmem:[%s0 + $0xc40] sm:$0xff]
  %v427 = vld [vmem:[%s0 + $0xc48] sm:$0xff]
  %v428 = vld [vmem:[%s0 + $0xc50] sm:$0xff]
  %v429 = vld [vmem:[%s0 + $0xc58] sm:$0xff]
  %v430 = vld [vmem:[%s0 + $0xc60] sm:$0xff]
  %v431 = vld [vmem:[%s0 + $0xc68] sm:$0xff]
  %v432 = vld [vmem:[%s0 + $0xc70] sm:$0xff]
  %v433 = vld [vmem:[%s0 + $0xc78] sm:$0xff]
  %v434 = vld [vmem:[%s1] sm:$0xff]
  %v435 = vld [vmem:[%s1 + $0x8] sm:$0xff]
  %s436 = scalar_lea.vmem %s1, 16
  %v437 = vld [vmem:[%s436] sm:$0xff]
  %v438 = vld [vmem:[%s436 + $0x8] sm:$0xff]
  %vm439 = vcmask 130048
  %v441 = vsel %vm439, %v35, 0
  %v444 = vsel %vm439, %v36, 0
  %v447 = vsel %vm439, %v37, 0
  %v450 = vsel %vm439, %v38, 0
  %v453 = vsel %vm439, %v39, 0
  %v456 = vsel %vm439, %v40, 0
  %v459 = vsel %vm439, %v41, 0
  %v462 = vsel %vm439, %v42, 0
  %v465 = vsel %vm439, %v43, 0
  %v468 = vsel %vm439, %v44, 0
  %v471 = vsel %vm439, %v45, 0
  %v474 = vsel %vm439, %v46, 0
  %v477 = vsel %vm439, %v47, 0
  %v480 = vsel %vm439, %v48, 0
  %v483 = vsel %vm439, %v49, 0
  %v486 = vsel %vm439, %v50, 0
  %v489 = vsel %vm439, %v51, 0
  %v492 = vsel %vm439, %v52, 0
  %v495 = vsel %vm439, %v53, 0
  %v498 = vsel %vm439, %v55, 0
  %v501 = vsel %vm439, %v56, 0
  %v504 = vsel %vm439, %v57, 0
  %v507 = vsel %vm439, %v58, 0
  %v510 = vsel %vm439, %v59, 0
  %v513 = vsel %vm439, %v60, 0
  %v516 = vsel %vm439, %v61, 0
  %v519 = vsel %vm439, %v62, 0
  %v522 = vsel %vm439, %v63, 0
  %v525 = vsel %vm439, %v64, 0
  %v528 = vsel %vm439, %v65, 0
  %v531 = vsel %vm439, %v66, 0
  %v534 = vsel %vm439, %v67, 0
  %v537 = vsel %vm439, %v68, 0
  %v540 = vsel %vm439, %v69, 0
  %v543 = vsel %vm439, %v70, 0
  %v546 = vsel %vm439, %v71, 0
  %v549 = vsel %vm439, %v72, 0
  %v552 = vsel %vm439, %v73, 0
  %v555 = vsel %vm439, %v75, 0
  %v558 = vsel %vm439, %v76, 0
  %v561 = vsel %vm439, %v77, 0
  %v564 = vsel %vm439, %v78, 0
  %v567 = vsel %vm439, %v79, 0
  %v570 = vsel %vm439, %v80, 0
  %v573 = vsel %vm439, %v81, 0
  %v576 = vsel %vm439, %v82, 0
  %v579 = vsel %vm439, %v83, 0
  %v582 = vsel %vm439, %v84, 0
  %v585 = vsel %vm439, %v85, 0
  %v588 = vsel %vm439, %v86, 0
  %v591 = vsel %vm439, %v87, 0
  %v594 = vsel %vm439, %v88, 0
  %v597 = vsel %vm439, %v89, 0
  %v600 = vsel %vm439, %v90, 0
  %v603 = vsel %vm439, %v91, 0
  %v606 = vsel %vm439, %v92, 0
  %v609 = vsel %vm439, %v93, 0
  %v612 = vsel %vm439, %v95, 0
  %v615 = vsel %vm439, %v96, 0
  %v618 = vsel %vm439, %v97, 0
  %v621 = vsel %vm439, %v98, 0
  %v624 = vsel %vm439, %v99, 0
  %v627 = vsel %vm439, %v100, 0
  %v630 = vsel %vm439, %v101, 0
  %v633 = vsel %vm439, %v102, 0
  %v636 = vsel %vm439, %v103, 0
  %v639 = vsel %vm439, %v104, 0
  %v642 = vsel %vm439, %v105, 0
  %v645 = vsel %vm439, %v106, 0
  %v648 = vsel %vm439, %v107, 0
  %v651 = vsel %vm439, %v108, 0
  %v654 = vsel %vm439, %v109, 0
  %v657 = vsel %vm439, %v110, 0
  %v660 = vsel %vm439, %v111, 0
  %v663 = vsel %vm439, %v112, 0
  %v666 = vsel %vm439, %v113, 0
  %v669 = vsel %vm439, %v115, 0
  %v672 = vsel %vm439, %v116, 0
  %v675 = vsel %vm439, %v117, 0
  %v678 = vsel %vm439, %v118, 0
  %v681 = vsel %vm439, %v119, 0
  %v684 = vsel %vm439, %v120, 0
  %v687 = vsel %vm439, %v121, 0
  %v690 = vsel %vm439, %v122, 0
  %v693 = vsel %vm439, %v123, 0
  %v696 = vsel %vm439, %v124, 0
  %v699 = vsel %vm439, %v125, 0
  %v702 = vsel %vm439, %v126, 0
  %v705 = vsel %vm439, %v127, 0
  %v708 = vsel %vm439, %v128, 0
  %v711 = vsel %vm439, %v129, 0
  %v714 = vsel %vm439, %v130, 0
  %v717 = vsel %vm439, %v131, 0
  %v720 = vsel %vm439, %v132, 0
  %v723 = vsel %vm439, %v133, 0
  %v726 = vsel %vm439, %v135, 0
  %v729 = vsel %vm439, %v136, 0
  %v732 = vsel %vm439, %v137, 0
  %v735 = vsel %vm439, %v138, 0
  %v738 = vsel %vm439, %v139, 0
  %v741 = vsel %vm439, %v140, 0
  %v744 = vsel %vm439, %v141, 0
  %v747 = vsel %vm439, %v142, 0
  %v750 = vsel %vm439, %v143, 0
  %v753 = vsel %vm439, %v144, 0
  %v756 = vsel %vm439, %v145, 0
  %v759 = vsel %vm439, %v146, 0
  %v762 = vsel %vm439, %v147, 0
  %v765 = vsel %vm439, %v148, 0
  %v768 = vsel %vm439, %v149, 0
  %v771 = vsel %vm439, %v150, 0
  %v774 = vsel %vm439, %v151, 0
  %v777 = vsel %vm439, %v152, 0
  %v780 = vsel %vm439, %v153, 0
  %v783 = vsel %vm439, %v155, 0
  %v786 = vsel %vm439, %v156, 0
  %v789 = vsel %vm439, %v157, 0
  %v792 = vsel %vm439, %v158, 0
  %v795 = vsel %vm439, %v159, 0
  %v798 = vsel %vm439, %v160, 0
  %v801 = vsel %vm439, %v161, 0
  %v804 = vsel %vm439, %v162, 0
  %v807 = vsel %vm439, %v163, 0
  %v810 = vsel %vm439, %v164, 0
  %v813 = vsel %vm439, %v165, 0
  %v816 = vsel %vm439, %v166, 0
  %v819 = vsel %vm439, %v167, 0
  %v822 = vsel %vm439, %v168, 0
  %v825 = vsel %vm439, %v169, 0
  %v828 = vsel %vm439, %v170, 0
  %v831 = vsel %vm439, %v171, 0
  %v834 = vsel %vm439, %v172, 0
  %v837 = vsel %vm439, %v173, 0
  %v840 = vsel %vm439, %v175, 0
  %v843 = vsel %vm439, %v176, 0
  %v846 = vsel %vm439, %v177, 0
  %v849 = vsel %vm439, %v178, 0
  %v852 = vsel %vm439, %v179, 0
  %v855 = vsel %vm439, %v180, 0
  %v858 = vsel %vm439, %v181, 0
  %v861 = vsel %vm439, %v182, 0
  %v864 = vsel %vm439, %v183, 0
  %v867 = vsel %vm439, %v184, 0
  %v870 = vsel %vm439, %v185, 0
  %v873 = vsel %vm439, %v186, 0
  %v876 = vsel %vm439, %v187, 0
  %v879 = vsel %vm439, %v188, 0
  %v882 = vsel %vm439, %v189, 0
  %v885 = vsel %vm439, %v190, 0
  %v888 = vsel %vm439, %v191, 0
  %v891 = vsel %vm439, %v192, 0
  %v894 = vsel %vm439, %v193, 0
  %v897 = vsel %vm439, %v195, 0
  %v900 = vsel %vm439, %v196, 0
  %v903 = vsel %vm439, %v197, 0
  %v906 = vsel %vm439, %v198, 0
  %v909 = vsel %vm439, %v199, 0
  %v912 = vsel %vm439, %v200, 0
  %v915 = vsel %vm439, %v201, 0
  %v918 = vsel %vm439, %v202, 0
  %v921 = vsel %vm439, %v203, 0
  %v924 = vsel %vm439, %v204, 0
  %v927 = vsel %vm439, %v205, 0
  %v930 = vsel %vm439, %v206, 0
  %v933 = vsel %vm439, %v207, 0
  %v936 = vsel %vm439, %v208, 0
  %v939 = vsel %vm439, %v209, 0
  %v942 = vsel %vm439, %v210, 0
  %v945 = vsel %vm439, %v211, 0
  %v948 = vsel %vm439, %v212, 0
  %v951 = vsel %vm439, %v213, 0
  %v954 = vsel %vm439, %v215, 0
  %v957 = vsel %vm439, %v216, 0
  %v960 = vsel %vm439, %v217, 0
  %v963 = vsel %vm439, %v218, 0
  %v966 = vsel %vm439, %v219, 0
  %v969 = vsel %vm439, %v220, 0
  %v972 = vsel %vm439, %v221, 0
  %v975 = vsel %vm439, %v222, 0
  %v978 = vsel %vm439, %v223, 0
  %v981 = vsel %vm439, %v224, 0
  %v984 = vsel %vm439, %v225, 0
  %v987 = vsel %vm439, %v226, 0
  %v990 = vsel %vm439, %v227, 0
  %v993 = vsel %vm439, %v228, 0
  %v996 = vsel %vm439, %v229, 0
  %v999 = vsel %vm439, %v230, 0
  %v1002 = vsel %vm439, %v231, 0
  %v1005 = vsel %vm439, %v232, 0
  %v1008 = vsel %vm439, %v233, 0
  %v1011 = vsel %vm439, %v235, 0
  %v1014 = vsel %vm439, %v236, 0
  %v1017 = vsel %vm439, %v237, 0
  %v1020 = vsel %vm439, %v238, 0
  %v1023 = vsel %vm439, %v239, 0
  %v1026 = vsel %vm439, %v240, 0
  %v1029 = vsel %vm439, %v241, 0
  %v1032 = vsel %vm439, %v242, 0
  %v1035 = vsel %vm439, %v243, 0
  %v1038 = vsel %vm439, %v244, 0
  %v1041 = vsel %vm439, %v245, 0
  %v1044 = vsel %vm439, %v246, 0
  %v1047 = vsel %vm439, %v247, 0
  %v1050 = vsel %vm439, %v248, 0
  %v1053 = vsel %vm439, %v249, 0
  %v1056 = vsel %vm439, %v250, 0
  %v1059 = vsel %vm439, %v251, 0
  %v1062 = vsel %vm439, %v252, 0
  %v1065 = vsel %vm439, %v253, 0
  %v1068 = vsel %vm439, %v255, 0
  %v1071 = vsel %vm439, %v256, 0
  %v1074 = vsel %vm439, %v257, 0
  %v1077 = vsel %vm439, %v258, 0
  %v1080 = vsel %vm439, %v259, 0
  %v1083 = vsel %vm439, %v260, 0
  %v1086 = vsel %vm439, %v261, 0
  %v1089 = vsel %vm439, %v262, 0
  %v1092 = vsel %vm439, %v263, 0
  %v1095 = vsel %vm439, %v264, 0
  %v1098 = vsel %vm439, %v265, 0
  %v1101 = vsel %vm439, %v266, 0
  %v1104 = vsel %vm439, %v267, 0
  %v1107 = vsel %vm439, %v268, 0
  %v1110 = vsel %vm439, %v269, 0
  %v1113 = vsel %vm439, %v270, 0
  %v1116 = vsel %vm439, %v271, 0
  %v1119 = vsel %vm439, %v272, 0
  %v1122 = vsel %vm439, %v273, 0
  %v1125 = vsel %vm439, %v275, 0
  %v1128 = vsel %vm439, %v276, 0
  %v1131 = vsel %vm439, %v277, 0
  %v1134 = vsel %vm439, %v278, 0
  %v1137 = vsel %vm439, %v279, 0
  %v1140 = vsel %vm439, %v280, 0
  %v1143 = vsel %vm439, %v281, 0
  %v1146 = vsel %vm439, %v282, 0
  %v1149 = vsel %vm439, %v283, 0
  %v1152 = vsel %vm439, %v284, 0
  %v1155 = vsel %vm439, %v285, 0
  %v1158 = vsel %vm439, %v286, 0
  %v1161 = vsel %vm439, %v287, 0
  %v1164 = vsel %vm439, %v288, 0
  %v1167 = vsel %vm439, %v289, 0
  %v1170 = vsel %vm439, %v290, 0
  %v1173 = vsel %vm439, %v291, 0
  %v1176 = vsel %vm439, %v292, 0
  %v1179 = vsel %vm439, %v293, 0
  %v1182 = vsel %vm439, %v295, 0
  %v1185 = vsel %vm439, %v296, 0
  %v1188 = vsel %vm439, %v297, 0
  %v1191 = vsel %vm439, %v298, 0
  %v1194 = vsel %vm439, %v299, 0
  %v1197 = vsel %vm439, %v300, 0
  %v1200 = vsel %vm439, %v301, 0
  %v1203 = vsel %vm439, %v302, 0
  %v1206 = vsel %vm439, %v303, 0
  %v1209 = vsel %vm439, %v304, 0
  %v1212 = vsel %vm439, %v305, 0
  %v1215 = vsel %vm439, %v306, 0
  %v1218 = vsel %vm439, %v307, 0
  %v1221 = vsel %vm439, %v308, 0
  %v1224 = vsel %vm439, %v309, 0
  %v1227 = vsel %vm439, %v310, 0
  %v1230 = vsel %vm439, %v311, 0
  %v1233 = vsel %vm439, %v312, 0
  %v1236 = vsel %vm439, %v313, 0
  %v1239 = vsel %vm439, %v315, 0
  %v1242 = vsel %vm439, %v316, 0
  %v1245 = vsel %vm439, %v317, 0
  %v1248 = vsel %vm439, %v318, 0
  %v1251 = vsel %vm439, %v319, 0
  %v1254 = vsel %vm439, %v320, 0
  %v1257 = vsel %vm439, %v321, 0
  %v1260 = vsel %vm439, %v322, 0
  %v1263 = vsel %vm439, %v323, 0
  %v1266 = vsel %vm439, %v324, 0
  %v1269 = vsel %vm439, %v325, 0
  %v1272 = vsel %vm439, %v326, 0
  %v1275 = vsel %vm439, %v327, 0
  %v1278 = vsel %vm439, %v328, 0
  %v1281 = vsel %vm439, %v329, 0
  %v1284 = vsel %vm439, %v330, 0
  %v1287 = vsel %vm439, %v331, 0
  %v1290 = vsel %vm439, %v332, 0
  %v1293 = vsel %vm439, %v333, 0
  %v1296 = vsel %vm439, %v335, 0
  %v1299 = vsel %vm439, %v336, 0
  %v1302 = vsel %vm439, %v337, 0
  %v1305 = vsel %vm439, %v338, 0
  %v1308 = vsel %vm439, %v339, 0
  %v1311 = vsel %vm439, %v340, 0
  %v1314 = vsel %vm439, %v341, 0
  %v1317 = vsel %vm439, %v342, 0
  %v1320 = vsel %vm439, %v343, 0
  %v1323 = vsel %vm439, %v344, 0
  %v1326 = vsel %vm439, %v345, 0
  %v1329 = vsel %vm439, %v346, 0
  %v1332 = vsel %vm439, %v347, 0
  %v1335 = vsel %vm439, %v348, 0
  %v1338 = vsel %vm439, %v349, 0
  %v1341 = vsel %vm439, %v350, 0
  %v1344 = vsel %vm439, %v351, 0
  %v1347 = vsel %vm439, %v352, 0
  %v1350 = vsel %vm439, %v353, 0
  %v1353 = vsel %vm439, %v355, 0
  %v1356 = vsel %vm439, %v356, 0
  %v1359 = vsel %vm439, %v357, 0
  %v1362 = vsel %vm439, %v358, 0
  %v1365 = vsel %vm439, %v359, 0
  %v1368 = vsel %vm439, %v360, 0
  %v1371 = vsel %vm439, %v361, 0
  %v1374 = vsel %vm439, %v362, 0
  %v1377 = vsel %vm439, %v363, 0
  %v1380 = vsel %vm439, %v364, 0
  %v1383 = vsel %vm439, %v365, 0
  %v1386 = vsel %vm439, %v366, 0
  %v1389 = vsel %vm439, %v367, 0
  %v1392 = vsel %vm439, %v368, 0
  %v1395 = vsel %vm439, %v369, 0
  %v1398 = vsel %vm439, %v370, 0
  %v1401 = vsel %vm439, %v371, 0
  %v1404 = vsel %vm439, %v372, 0
  %v1407 = vsel %vm439, %v373, 0
  %v1410 = vsel %vm439, %v375, 0
  %v1413 = vsel %vm439, %v376, 0
  %v1416 = vsel %vm439, %v377, 0
  %v1419 = vsel %vm439, %v378, 0
  %v1422 = vsel %vm439, %v379, 0
  %v1425 = vsel %vm439, %v380, 0
  %v1428 = vsel %vm439, %v381, 0
  %v1431 = vsel %vm439, %v382, 0
  %v1434 = vsel %vm439, %v383, 0
  %v1437 = vsel %vm439, %v384, 0
  %v1440 = vsel %vm439, %v385, 0
  %v1443 = vsel %vm439, %v386, 0
  %v1446 = vsel %vm439, %v387, 0
  %v1449 = vsel %vm439, %v388, 0
  %v1452 = vsel %vm439, %v389, 0
  %v1455 = vsel %vm439, %v390, 0
  %v1458 = vsel %vm439, %v391, 0
  %v1461 = vsel %vm439, %v392, 0
  %v1464 = vsel %vm439, %v393, 0
  %v1467 = vsel %vm439, %v395, 0
  %v1470 = vsel %vm439, %v396, 0
  %v1473 = vsel %vm439, %v397, 0
  %v1476 = vsel %vm439, %v398, 0
  %v1479 = vsel %vm439, %v399, 0
  %v1482 = vsel %vm439, %v400, 0
  %v1485 = vsel %vm439, %v401, 0
  %v1488 = vsel %vm439, %v402, 0
  %v1491 = vsel %vm439, %v403, 0
  %v1494 = vsel %vm439, %v404, 0
  %v1497 = vsel %vm439, %v405, 0
  %v1500 = vsel %vm439, %v406, 0
  %v1503 = vsel %vm439, %v407, 0
  %v1506 = vsel %vm439, %v408, 0
  %v1509 = vsel %vm439, %v409, 0
  %v1512 = vsel %vm439, %v410, 0
  %v1515 = vsel %vm439, %v411, 0
  %v1518 = vsel %vm439, %v412, 0
  %v1521 = vsel %vm439, %v413, 0
  %1523 = vmatpush.msra.mxu0 0.0
  %1524 = vmatpush.msra.mxu0 0.0
  %1525 = vmatpush.msra.mxu0 0.0
  %1526 = vmatpush.msra.mxu0 0.0
  %1527 = vmatpush.msra.mxu0 0.0
  %1528 = vmatpush.msra.mxu0 0.0
  %1529 = vmatpush.msra.mxu0 0.0
  %1530 = vmatpush.msra.mxu0 0.0
  %1531 = vmatpush.msra.mxu0 0.0
  %1532 = vmatpush.msra.mxu0 0.0
  %1533 = vmatpush.msra.mxu0 0.0
  %1534 = vmatpush.msra.mxu0 0.0
  %1535 = vmatpush.msra.mxu0 0.0
  %1536 = vmatpush.msra.mxu0 0.0
  %1537 = vmatpush.msra.mxu0 %v438
  %1538 = vmatpush.msra.mxu0 %v437
  %1539 = vmatmul.f32.gmra.mxu0 %v441
  %v1540 = vpop.f32.mrf.mxu0
  %v1541 = vadd.f32 0.0, %v1540
  %1542 = vmatmul.f32.gmra.mxu0 %v444
  %v1543 = vpop.f32.mrf.mxu0
  %v1544 = vadd.f32 0.0, %v1543
  %1545 = vmatmul.f32.gmra.mxu0 %v447
  %v1546 = vpop.f32.mrf.mxu0
  %v1547 = vadd.f32 0.0, %v1546
  %1548 = vmatmul.f32.gmra.mxu0 %v450
  %v1549 = vpop.f32.mrf.mxu0
  %v1550 = vadd.f32 0.0, %v1549
  %1551 = vmatmul.f32.gmra.mxu0 %v453
  %v1552 = vpop.f32.mrf.mxu0
  %v1553 = vadd.f32 0.0, %v1552
  %1554 = vmatmul.f32.gmra.mxu0 %v456
  %v1555 = vpop.f32.mrf.mxu0
  %v1556 = vadd.f32 0.0, %v1555
  %1557 = vmatmul.f32.gmra.mxu0 %v459
  %v1558 = vpop.f32.mrf.mxu0
  %v1559 = vadd.f32 0.0, %v1558
  %1560 = vmatmul.f32.gmra.mxu0 %v462
  %v1561 = vpop.f32.mrf.mxu0
  %v1562 = vadd.f32 0.0, %v1561
  %1563 = vmatmul.f32.gmra.mxu0 %v465
  %v1564 = vpop.f32.mrf.mxu0
  %v1565 = vadd.f32 0.0, %v1564
  %1566 = vmatmul.f32.gmra.mxu0 %v468
  %v1567 = vpop.f32.mrf.mxu0
  %v1568 = vadd.f32 0.0, %v1567
  %1569 = vmatmul.f32.gmra.mxu0 %v471
  %v1570 = vpop.f32.mrf.mxu0
  %v1571 = vadd.f32 0.0, %v1570
  %1572 = vmatmul.f32.gmra.mxu0 %v474
  %v1573 = vpop.f32.mrf.mxu0
  %v1574 = vadd.f32 0.0, %v1573
  %1575 = vmatmul.f32.gmra.mxu0 %v477
  %v1576 = vpop.f32.mrf.mxu0
  %v1577 = vadd.f32 0.0, %v1576
  %1578 = vmatmul.f32.gmra.mxu0 %v480
  %v1579 = vpop.f32.mrf.mxu0
  %v1580 = vadd.f32 0.0, %v1579
  %1581 = vmatmul.f32.gmra.mxu0 %v483
  %v1582 = vpop.f32.mrf.mxu0
  %v1583 = vadd.f32 0.0, %v1582
  %1584 = vmatmul.f32.gmra.mxu0 %v486
  %v1585 = vpop.f32.mrf.mxu0
  %v1586 = vadd.f32 0.0, %v1585
  %1587 = vmatmul.f32.gmra.mxu0 %v489
  %v1588 = vpop.f32.mrf.mxu0
  %v1589 = vadd.f32 0.0, %v1588
  %1590 = vmatmul.f32.gmra.mxu0 %v492
  %v1591 = vpop.f32.mrf.mxu0
  %v1592 = vadd.f32 0.0, %v1591
  %1593 = vmatmul.f32.gmra.mxu0 %v495
  %v1594 = vpop.f32.mrf.mxu0
  %v1595 = vadd.f32 0.0, %v1594
  %1596 = vmatmul.f32.gmra.mxu0 %v498
  %v1597 = vpop.f32.mrf.mxu0
  %v1598 = vadd.f32 0.0, %v1597
  %1599 = vmatmul.f32.gmra.mxu0 %v501
  %v1600 = vpop.f32.mrf.mxu0
  %v1601 = vadd.f32 0.0, %v1600
  %1602 = vmatmul.f32.gmra.mxu0 %v504
  %v1603 = vpop.f32.mrf.mxu0
  %v1604 = vadd.f32 0.0, %v1603
  %1605 = vmatmul.f32.gmra.mxu0 %v507
  %v1606 = vpop.f32.mrf.mxu0
  %v1607 = vadd.f32 0.0, %v1606
  %1608 = vmatmul.f32.gmra.mxu0 %v510
  %v1609 = vpop.f32.mrf.mxu0
  %v1610 = vadd.f32 0.0, %v1609
  %1611 = vmatmul.f32.gmra.mxu0 %v513
  %v1612 = vpop.f32.mrf.mxu0
  %v1613 = vadd.f32 0.0, %v1612
  %1614 = vmatmul.f32.gmra.mxu0 %v516
  %v1615 = vpop.f32.mrf.mxu0
  %v1616 = vadd.f32 0.0, %v1615
  %1617 = vmatmul.f32.gmra.mxu0 %v519
  %v1618 = vpop.f32.mrf.mxu0
  %v1619 = vadd.f32 0.0, %v1618
  %1620 = vmatmul.f32.gmra.mxu0 %v522
  %v1621 = vpop.f32.mrf.mxu0
  %v1622 = vadd.f32 0.0, %v1621
  %1623 = vmatmul.f32.gmra.mxu0 %v525
  %v1624 = vpop.f32.mrf.mxu0
  %v1625 = vadd.f32 0.0, %v1624
  %1626 = vmatmul.f32.gmra.mxu0 %v528
  %v1627 = vpop.f32.mrf.mxu0
  %v1628 = vadd.f32 0.0, %v1627
  %1629 = vmatmul.f32.gmra.mxu0 %v531
  %v1630 = vpop.f32.mrf.mxu0
  %v1631 = vadd.f32 0.0, %v1630
  %1632 = vmatmul.f32.gmra.mxu0 %v534
  %v1633 = vpop.f32.mrf.mxu0
  %v1634 = vadd.f32 0.0, %v1633
  %1635 = vmatmul.f32.gmra.mxu0 %v537
  %v1636 = vpop.f32.mrf.mxu0
  %v1637 = vadd.f32 0.0, %v1636
  %1638 = vmatmul.f32.gmra.mxu0 %v540
  %v1639 = vpop.f32.mrf.mxu0
  %v1640 = vadd.f32 0.0, %v1639
  %1641 = vmatmul.f32.gmra.mxu0 %v543
  %v1642 = vpop.f32.mrf.mxu0
  %v1643 = vadd.f32 0.0, %v1642
  %1644 = vmatmul.f32.gmra.mxu0 %v546
  %v1645 = vpop.f32.mrf.mxu0
  %v1646 = vadd.f32 0.0, %v1645
  %1647 = vmatmul.f32.gmra.mxu0 %v549
  %v1648 = vpop.f32.mrf.mxu0
  %v1649 = vadd.f32 0.0, %v1648
  %1650 = vmatmul.f32.gmra.mxu0 %v552
  %v1651 = vpop.f32.mrf.mxu0
  %v1652 = vadd.f32 0.0, %v1651
  %1653 = vmatmul.f32.gmra.mxu0 %v555
  %v1654 = vpop.f32.mrf.mxu0
  %v1655 = vadd.f32 0.0, %v1654
  %1656 = vmatmul.f32.gmra.mxu0 %v558
  %v1657 = vpop.f32.mrf.mxu0
  %v1658 = vadd.f32 0.0, %v1657
  %1659 = vmatmul.f32.gmra.mxu0 %v561
  %v1660 = vpop.f32.mrf.mxu0
  %v1661 = vadd.f32 0.0, %v1660
  %1662 = vmatmul.f32.gmra.mxu0 %v564
  %v1663 = vpop.f32.mrf.mxu0
  %v1664 = vadd.f32 0.0, %v1663
  %1665 = vmatmul.f32.gmra.mxu0 %v567
  %v1666 = vpop.f32.mrf.mxu0
  %v1667 = vadd.f32 0.0, %v1666
  %1668 = vmatmul.f32.gmra.mxu0 %v570
  %v1669 = vpop.f32.mrf.mxu0
  %v1670 = vadd.f32 0.0, %v1669
  %1671 = vmatmul.f32.gmra.mxu0 %v573
  %v1672 = vpop.f32.mrf.mxu0
  %v1673 = vadd.f32 0.0, %v1672
  %1674 = vmatmul.f32.gmra.mxu0 %v576
  %v1675 = vpop.f32.mrf.mxu0
  %v1676 = vadd.f32 0.0, %v1675
  %1677 = vmatmul.f32.gmra.mxu0 %v579
  %v1678 = vpop.f32.mrf.mxu0
  %v1679 = vadd.f32 0.0, %v1678
  %1680 = vmatmul.f32.gmra.mxu0 %v582
  %v1681 = vpop.f32.mrf.mxu0
  %v1682 = vadd.f32 0.0, %v1681
  %1683 = vmatmul.f32.gmra.mxu0 %v585
  %v1684 = vpop.f32.mrf.mxu0
  %v1685 = vadd.f32 0.0, %v1684
  %1686 = vmatmul.f32.gmra.mxu0 %v588
  %v1687 = vpop.f32.mrf.mxu0
  %v1688 = vadd.f32 0.0, %v1687
  %1689 = vmatmul.f32.gmra.mxu0 %v591
  %v1690 = vpop.f32.mrf.mxu0
  %v1691 = vadd.f32 0.0, %v1690
  %1692 = vmatmul.f32.gmra.mxu0 %v594
  %v1693 = vpop.f32.mrf.mxu0
  %v1694 = vadd.f32 0.0, %v1693
  %1695 = vmatmul.f32.gmra.mxu0 %v597
  %v1696 = vpop.f32.mrf.mxu0
  %v1697 = vadd.f32 0.0, %v1696
  %1698 = vmatmul.f32.gmra.mxu0 %v600
  %v1699 = vpop.f32.mrf.mxu0
  %v1700 = vadd.f32 0.0, %v1699
  %1701 = vmatmul.f32.gmra.mxu0 %v603
  %v1702 = vpop.f32.mrf.mxu0
  %v1703 = vadd.f32 0.0, %v1702
  %1704 = vmatmul.f32.gmra.mxu0 %v606
  %v1705 = vpop.f32.mrf.mxu0
  %v1706 = vadd.f32 0.0, %v1705
  %1707 = vmatmul.f32.gmra.mxu0 %v609
  %v1708 = vpop.f32.mrf.mxu0
  %v1709 = vadd.f32 0.0, %v1708
  %1710 = vmatmul.f32.gmra.mxu0 %v612
  %v1711 = vpop.f32.mrf.mxu0
  %v1712 = vadd.f32 0.0, %v1711
  %1713 = vmatmul.f32.gmra.mxu0 %v615
  %v1714 = vpop.f32.mrf.mxu0
  %v1715 = vadd.f32 0.0, %v1714
  %1716 = vmatmul.f32.gmra.mxu0 %v618
  %v1717 = vpop.f32.mrf.mxu0
  %v1718 = vadd.f32 0.0, %v1717
  %1719 = vmatmul.f32.gmra.mxu0 %v621
  %v1720 = vpop.f32.mrf.mxu0
  %v1721 = vadd.f32 0.0, %v1720
  %1722 = vmatmul.f32.gmra.mxu0 %v624
  %v1723 = vpop.f32.mrf.mxu0
  %v1724 = vadd.f32 0.0, %v1723
  %1725 = vmatmul.f32.gmra.mxu0 %v627
  %v1726 = vpop.f32.mrf.mxu0
  %v1727 = vadd.f32 0.0, %v1726
  %1728 = vmatmul.f32.gmra.mxu0 %v630
  %v1729 = vpop.f32.mrf.mxu0
  %v1730 = vadd.f32 0.0, %v1729
  %1731 = vmatmul.f32.gmra.mxu0 %v633
  %v1732 = vpop.f32.mrf.mxu0
  %v1733 = vadd.f32 0.0, %v1732
  %1734 = vmatmul.f32.gmra.mxu0 %v636
  %v1735 = vpop.f32.mrf.mxu0
  %v1736 = vadd.f32 0.0, %v1735
  %1737 = vmatmul.f32.gmra.mxu0 %v639
  %v1738 = vpop.f32.mrf.mxu0
  %v1739 = vadd.f32 0.0, %v1738
  %1740 = vmatmul.f32.gmra.mxu0 %v642
  %v1741 = vpop.f32.mrf.mxu0
  %v1742 = vadd.f32 0.0, %v1741
  %1743 = vmatmul.f32.gmra.mxu0 %v645
  %v1744 = vpop.f32.mrf.mxu0
  %v1745 = vadd.f32 0.0, %v1744
  %1746 = vmatmul.f32.gmra.mxu0 %v648
  %v1747 = vpop.f32.mrf.mxu0
  %v1748 = vadd.f32 0.0, %v1747
  %1749 = vmatmul.f32.gmra.mxu0 %v651
  %v1750 = vpop.f32.mrf.mxu0
  %v1751 = vadd.f32 0.0, %v1750
  %1752 = vmatmul.f32.gmra.mxu0 %v654
  %v1753 = vpop.f32.mrf.mxu0
  %v1754 = vadd.f32 0.0, %v1753
  %1755 = vmatmul.f32.gmra.mxu0 %v657
  %v1756 = vpop.f32.mrf.mxu0
  %v1757 = vadd.f32 0.0, %v1756
  %1758 = vmatmul.f32.gmra.mxu0 %v660
  %v1759 = vpop.f32.mrf.mxu0
  %v1760 = vadd.f32 0.0, %v1759
  %1761 = vmatmul.f32.gmra.mxu0 %v663
  %v1762 = vpop.f32.mrf.mxu0
  %v1763 = vadd.f32 0.0, %v1762
  %1764 = vmatmul.f32.gmra.mxu0 %v666
  %v1765 = vpop.f32.mrf.mxu0
  %v1766 = vadd.f32 0.0, %v1765
  %1767 = vmatmul.f32.gmra.mxu0 %v669
  %v1768 = vpop.f32.mrf.mxu0
  %v1769 = vadd.f32 0.0, %v1768
  %1770 = vmatmul.f32.gmra.mxu0 %v672
  %v1771 = vpop.f32.mrf.mxu0
  %v1772 = vadd.f32 0.0, %v1771
  %1773 = vmatmul.f32.gmra.mxu0 %v675
  %v1774 = vpop.f32.mrf.mxu0
  %v1775 = vadd.f32 0.0, %v1774
  %1776 = vmatmul.f32.gmra.mxu0 %v678
  %v1777 = vpop.f32.mrf.mxu0
  %v1778 = vadd.f32 0.0, %v1777
  %1779 = vmatmul.f32.gmra.mxu0 %v681
  %v1780 = vpop.f32.mrf.mxu0
  %v1781 = vadd.f32 0.0, %v1780
  %1782 = vmatmul.f32.gmra.mxu0 %v684
  %v1783 = vpop.f32.mrf.mxu0
  %v1784 = vadd.f32 0.0, %v1783
  %1785 = vmatmul.f32.gmra.mxu0 %v687
  %v1786 = vpop.f32.mrf.mxu0
  %v1787 = vadd.f32 0.0, %v1786
  %1788 = vmatmul.f32.gmra.mxu0 %v690
  %v1789 = vpop.f32.mrf.mxu0
  %v1790 = vadd.f32 0.0, %v1789
  %1791 = vmatmul.f32.gmra.mxu0 %v693
  %v1792 = vpop.f32.mrf.mxu0
  %v1793 = vadd.f32 0.0, %v1792
  %1794 = vmatmul.f32.gmra.mxu0 %v696
  %v1795 = vpop.f32.mrf.mxu0
  %v1796 = vadd.f32 0.0, %v1795
  %1797 = vmatmul.f32.gmra.mxu0 %v699
  %v1798 = vpop.f32.mrf.mxu0
  %v1799 = vadd.f32 0.0, %v1798
  %1800 = vmatmul.f32.gmra.mxu0 %v702
  %v1801 = vpop.f32.mrf.mxu0
  %v1802 = vadd.f32 0.0, %v1801
  %1803 = vmatmul.f32.gmra.mxu0 %v705
  %v1804 = vpop.f32.mrf.mxu0
  %v1805 = vadd.f32 0.0, %v1804
  %1806 = vmatmul.f32.gmra.mxu0 %v708
  %v1807 = vpop.f32.mrf.mxu0
  %v1808 = vadd.f32 0.0, %v1807
  %1809 = vmatmul.f32.gmra.mxu0 %v711
  %v1810 = vpop.f32.mrf.mxu0
  %v1811 = vadd.f32 0.0, %v1810
  %1812 = vmatmul.f32.gmra.mxu0 %v714
  %v1813 = vpop.f32.mrf.mxu0
  %v1814 = vadd.f32 0.0, %v1813
  %1815 = vmatmul.f32.gmra.mxu0 %v717
  %v1816 = vpop.f32.mrf.mxu0
  %v1817 = vadd.f32 0.0, %v1816
  %1818 = vmatmul.f32.gmra.mxu0 %v720
  %v1819 = vpop.f32.mrf.mxu0
  %v1820 = vadd.f32 0.0, %v1819
  %1821 = vmatmul.f32.gmra.mxu0 %v723
  %v1822 = vpop.f32.mrf.mxu0
  %v1823 = vadd.f32 0.0, %v1822
  %1824 = vmatmul.f32.gmra.mxu0 %v726
  %v1825 = vpop.f32.mrf.mxu0
  %v1826 = vadd.f32 0.0, %v1825
  %1827 = vmatmul.f32.gmra.mxu0 %v729
  %v1828 = vpop.f32.mrf.mxu0
  %v1829 = vadd.f32 0.0, %v1828
  %1830 = vmatmul.f32.gmra.mxu0 %v732
  %v1831 = vpop.f32.mrf.mxu0
  %v1832 = vadd.f32 0.0, %v1831
  %1833 = vmatmul.f32.gmra.mxu0 %v735
  %v1834 = vpop.f32.mrf.mxu0
  %v1835 = vadd.f32 0.0, %v1834
  %1836 = vmatmul.f32.gmra.mxu0 %v738
  %v1837 = vpop.f32.mrf.mxu0
  %v1838 = vadd.f32 0.0, %v1837
  %1839 = vmatmul.f32.gmra.mxu0 %v741
  %v1840 = vpop.f32.mrf.mxu0
  %v1841 = vadd.f32 0.0, %v1840
  %1842 = vmatmul.f32.gmra.mxu0 %v744
  %v1843 = vpop.f32.mrf.mxu0
  %v1844 = vadd.f32 0.0, %v1843
  %1845 = vmatmul.f32.gmra.mxu0 %v747
  %v1846 = vpop.f32.mrf.mxu0
  %v1847 = vadd.f32 0.0, %v1846
  %1848 = vmatmul.f32.gmra.mxu0 %v750
  %v1849 = vpop.f32.mrf.mxu0
  %v1850 = vadd.f32 0.0, %v1849
  %1851 = vmatmul.f32.gmra.mxu0 %v753
  %v1852 = vpop.f32.mrf.mxu0
  %v1853 = vadd.f32 0.0, %v1852
  %1854 = vmatmul.f32.gmra.mxu0 %v756
  %v1855 = vpop.f32.mrf.mxu0
  %v1856 = vadd.f32 0.0, %v1855
  %1857 = vmatmul.f32.gmra.mxu0 %v759
  %v1858 = vpop.f32.mrf.mxu0
  %v1859 = vadd.f32 0.0, %v1858
  %1860 = vmatmul.f32.gmra.mxu0 %v762
  %v1861 = vpop.f32.mrf.mxu0
  %v1862 = vadd.f32 0.0, %v1861
  %1863 = vmatmul.f32.gmra.mxu0 %v765
  %v1864 = vpop.f32.mrf.mxu0
  %v1865 = vadd.f32 0.0, %v1864
  %1866 = vmatmul.f32.gmra.mxu0 %v768
  %v1867 = vpop.f32.mrf.mxu0
  %v1868 = vadd.f32 0.0, %v1867
  %1869 = vmatmul.f32.gmra.mxu0 %v771
  %v1870 = vpop.f32.mrf.mxu0
  %v1871 = vadd.f32 0.0, %v1870
  %1872 = vmatmul.f32.gmra.mxu0 %v774
  %v1873 = vpop.f32.mrf.mxu0
  %v1874 = vadd.f32 0.0, %v1873
  %1875 = vmatmul.f32.gmra.mxu0 %v777
  %v1876 = vpop.f32.mrf.mxu0
  %v1877 = vadd.f32 0.0, %v1876
  %1878 = vmatmul.f32.gmra.mxu0 %v780
  %v1879 = vpop.f32.mrf.mxu0
  %v1880 = vadd.f32 0.0, %v1879
  %1881 = vmatmul.f32.gmra.mxu0 %v783
  %v1882 = vpop.f32.mrf.mxu0
  %v1883 = vadd.f32 0.0, %v1882
  %1884 = vmatmul.f32.gmra.mxu0 %v786
  %v1885 = vpop.f32.mrf.mxu0
  %v1886 = vadd.f32 0.0, %v1885
  %1887 = vmatmul.f32.gmra.mxu0 %v789
  %v1888 = vpop.f32.mrf.mxu0
  %v1889 = vadd.f32 0.0, %v1888
  %1890 = vmatmul.f32.gmra.mxu0 %v792
  %v1891 = vpop.f32.mrf.mxu0
  %v1892 = vadd.f32 0.0, %v1891
  %1893 = vmatmul.f32.gmra.mxu0 %v795
  %v1894 = vpop.f32.mrf.mxu0
  %v1895 = vadd.f32 0.0, %v1894
  %1896 = vmatmul.f32.gmra.mxu0 %v798
  %v1897 = vpop.f32.mrf.mxu0
  %v1898 = vadd.f32 0.0, %v1897
  %1899 = vmatmul.f32.gmra.mxu0 %v801
  %v1900 = vpop.f32.mrf.mxu0
  %v1901 = vadd.f32 0.0, %v1900
  %1902 = vmatmul.f32.gmra.mxu0 %v804
  %v1903 = vpop.f32.mrf.mxu0
  %v1904 = vadd.f32 0.0, %v1903
  %1905 = vmatmul.f32.gmra.mxu0 %v807
  %v1906 = vpop.f32.mrf.mxu0
  %v1907 = vadd.f32 0.0, %v1906
  %1908 = vmatmul.f32.gmra.mxu0 %v810
  %v1909 = vpop.f32.mrf.mxu0
  %v1910 = vadd.f32 0.0, %v1909
  %1911 = vmatmul.f32.gmra.mxu0 %v813
  %v1912 = vpop.f32.mrf.mxu0
  %v1913 = vadd.f32 0.0, %v1912
  %1914 = vmatmul.f32.gmra.mxu0 %v816
  %v1915 = vpop.f32.mrf.mxu0
  %v1916 = vadd.f32 0.0, %v1915
  %1917 = vmatmul.f32.gmra.mxu0 %v819
  %v1918 = vpop.f32.mrf.mxu0
  %v1919 = vadd.f32 0.0, %v1918
  %1920 = vmatmul.f32.gmra.mxu0 %v822
  %v1921 = vpop.f32.mrf.mxu0
  %v1922 = vadd.f32 0.0, %v1921
  %1923 = vmatmul.f32.gmra.mxu0 %v825
  %v1924 = vpop.f32.mrf.mxu0
  %v1925 = vadd.f32 0.0, %v1924
  %1926 = vmatmul.f32.gmra.mxu0 %v828
  %v1927 = vpop.f32.mrf.mxu0
  %v1928 = vadd.f32 0.0, %v1927
  %1929 = vmatmul.f32.gmra.mxu0 %v831
  %v1930 = vpop.f32.mrf.mxu0
  %v1931 = vadd.f32 0.0, %v1930
  %1932 = vmatmul.f32.gmra.mxu0 %v834
  %v1933 = vpop.f32.mrf.mxu0
  %v1934 = vadd.f32 0.0, %v1933
  %1935 = vmatmul.f32.gmra.mxu0 %v837
  %v1936 = vpop.f32.mrf.mxu0
  %v1937 = vadd.f32 0.0, %v1936
  %1938 = vmatmul.f32.gmra.mxu0 %v840
  %v1939 = vpop.f32.mrf.mxu0
  %v1940 = vadd.f32 0.0, %v1939
  %1941 = vmatmul.f32.gmra.mxu0 %v843
  %v1942 = vpop.f32.mrf.mxu0
  %v1943 = vadd.f32 0.0, %v1942
  %1944 = vmatmul.f32.gmra.mxu0 %v846
  %v1945 = vpop.f32.mrf.mxu0
  %v1946 = vadd.f32 0.0, %v1945
  %1947 = vmatmul.f32.gmra.mxu0 %v849
  %v1948 = vpop.f32.mrf.mxu0
  %v1949 = vadd.f32 0.0, %v1948
  %1950 = vmatmul.f32.gmra.mxu0 %v852
  %v1951 = vpop.f32.mrf.mxu0
  %v1952 = vadd.f32 0.0, %v1951
  %1953 = vmatmul.f32.gmra.mxu0 %v855
  %v1954 = vpop.f32.mrf.mxu0
  %v1955 = vadd.f32 0.0, %v1954
  %1956 = vmatmul.f32.gmra.mxu0 %v858
  %v1957 = vpop.f32.mrf.mxu0
  %v1958 = vadd.f32 0.0, %v1957
  %1959 = vmatmul.f32.gmra.mxu0 %v861
  %v1960 = vpop.f32.mrf.mxu0
  %v1961 = vadd.f32 0.0, %v1960
  %1962 = vmatmul.f32.gmra.mxu0 %v864
  %v1963 = vpop.f32.mrf.mxu0
  %v1964 = vadd.f32 0.0, %v1963
  %1965 = vmatmul.f32.gmra.mxu0 %v867
  %v1966 = vpop.f32.mrf.mxu0
  %v1967 = vadd.f32 0.0, %v1966
  %1968 = vmatmul.f32.gmra.mxu0 %v870
  %v1969 = vpop.f32.mrf.mxu0
  %v1970 = vadd.f32 0.0, %v1969
  %1971 = vmatmul.f32.gmra.mxu0 %v873
  %v1972 = vpop.f32.mrf.mxu0
  %v1973 = vadd.f32 0.0, %v1972
  %1974 = vmatmul.f32.gmra.mxu0 %v876
  %v1975 = vpop.f32.mrf.mxu0
  %v1976 = vadd.f32 0.0, %v1975
  %1977 = vmatmul.f32.gmra.mxu0 %v879
  %v1978 = vpop.f32.mrf.mxu0
  %v1979 = vadd.f32 0.0, %v1978
  %1980 = vmatmul.f32.gmra.mxu0 %v882
  %v1981 = vpop.f32.mrf.mxu0
  %v1982 = vadd.f32 0.0, %v1981
  %1983 = vmatmul.f32.gmra.mxu0 %v885
  %v1984 = vpop.f32.mrf.mxu0
  %v1985 = vadd.f32 0.0, %v1984
  %1986 = vmatmul.f32.gmra.mxu0 %v888
  %v1987 = vpop.f32.mrf.mxu0
  %v1988 = vadd.f32 0.0, %v1987
  %1989 = vmatmul.f32.gmra.mxu0 %v891
  %v1990 = vpop.f32.mrf.mxu0
  %v1991 = vadd.f32 0.0, %v1990
  %1992 = vmatmul.f32.gmra.mxu0 %v894
  %v1993 = vpop.f32.mrf.mxu0
  %v1994 = vadd.f32 0.0, %v1993
  %1995 = vmatmul.f32.gmra.mxu0 %v897
  %v1996 = vpop.f32.mrf.mxu0
  %v1997 = vadd.f32 0.0, %v1996
  %1998 = vmatmul.f32.gmra.mxu0 %v900
  %v1999 = vpop.f32.mrf.mxu0
  %v2000 = vadd.f32 0.0, %v1999
  %2001 = vmatmul.f32.gmra.mxu0 %v903
  %v2002 = vpop.f32.mrf.mxu0
  %v2003 = vadd.f32 0.0, %v2002
  %2004 = vmatmul.f32.gmra.mxu0 %v906
  %v2005 = vpop.f32.mrf.mxu0
  %v2006 = vadd.f32 0.0, %v2005
  %2007 = vmatmul.f32.gmra.mxu0 %v909
  %v2008 = vpop.f32.mrf.mxu0
  %v2009 = vadd.f32 0.0, %v2008
  %2010 = vmatmul.f32.gmra.mxu0 %v912
  %v2011 = vpop.f32.mrf.mxu0
  %v2012 = vadd.f32 0.0, %v2011
  %2013 = vmatmul.f32.gmra.mxu0 %v915
  %v2014 = vpop.f32.mrf.mxu0
  %v2015 = vadd.f32 0.0, %v2014
  %2016 = vmatmul.f32.gmra.mxu0 %v918
  %v2017 = vpop.f32.mrf.mxu0
  %v2018 = vadd.f32 0.0, %v2017
  %2019 = vmatmul.f32.gmra.mxu0 %v921
  %v2020 = vpop.f32.mrf.mxu0
  %v2021 = vadd.f32 0.0, %v2020
  %2022 = vmatmul.f32.gmra.mxu0 %v924
  %v2023 = vpop.f32.mrf.mxu0
  %v2024 = vadd.f32 0.0, %v2023
  %2025 = vmatmul.f32.gmra.mxu0 %v927
  %v2026 = vpop.f32.mrf.mxu0
  %v2027 = vadd.f32 0.0, %v2026
  %2028 = vmatmul.f32.gmra.mxu0 %v930
  %v2029 = vpop.f32.mrf.mxu0
  %v2030 = vadd.f32 0.0, %v2029
  %2031 = vmatmul.f32.gmra.mxu0 %v933
  %v2032 = vpop.f32.mrf.mxu0
  %v2033 = vadd.f32 0.0, %v2032
  %2034 = vmatmul.f32.gmra.mxu0 %v936
  %v2035 = vpop.f32.mrf.mxu0
  %v2036 = vadd.f32 0.0, %v2035
  %2037 = vmatmul.f32.gmra.mxu0 %v939
  %v2038 = vpop.f32.mrf.mxu0
  %v2039 = vadd.f32 0.0, %v2038
  %2040 = vmatmul.f32.gmra.mxu0 %v942
  %v2041 = vpop.f32.mrf.mxu0
  %v2042 = vadd.f32 0.0, %v2041
  %2043 = vmatmul.f32.gmra.mxu0 %v945
  %v2044 = vpop.f32.mrf.mxu0
  %v2045 = vadd.f32 0.0, %v2044
  %2046 = vmatmul.f32.gmra.mxu0 %v948
  %v2047 = vpop.f32.mrf.mxu0
  %v2048 = vadd.f32 0.0, %v2047
  %2049 = vmatmul.f32.gmra.mxu0 %v951
  %v2050 = vpop.f32.mrf.mxu0
  %v2051 = vadd.f32 0.0, %v2050
  %2052 = vmatmul.f32.gmra.mxu0 %v954
  %v2053 = vpop.f32.mrf.mxu0
  %v2054 = vadd.f32 0.0, %v2053
  %2055 = vmatmul.f32.gmra.mxu0 %v957
  %v2056 = vpop.f32.mrf.mxu0
  %v2057 = vadd.f32 0.0, %v2056
  %2058 = vmatmul.f32.gmra.mxu0 %v960
  %v2059 = vpop.f32.mrf.mxu0
  %v2060 = vadd.f32 0.0, %v2059
  %2061 = vmatmul.f32.gmra.mxu0 %v963
  %v2062 = vpop.f32.mrf.mxu0
  %v2063 = vadd.f32 0.0, %v2062
  %2064 = vmatmul.f32.gmra.mxu0 %v966
  %v2065 = vpop.f32.mrf.mxu0
  %v2066 = vadd.f32 0.0, %v2065
  %2067 = vmatmul.f32.gmra.mxu0 %v969
  %v2068 = vpop.f32.mrf.mxu0
  %v2069 = vadd.f32 0.0, %v2068
  %2070 = vmatmul.f32.gmra.mxu0 %v972
  %v2071 = vpop.f32.mrf.mxu0
  %v2072 = vadd.f32 0.0, %v2071
  %2073 = vmatmul.f32.gmra.mxu0 %v975
  %v2074 = vpop.f32.mrf.mxu0
  %v2075 = vadd.f32 0.0, %v2074
  %2076 = vmatmul.f32.gmra.mxu0 %v978
  %v2077 = vpop.f32.mrf.mxu0
  %v2078 = vadd.f32 0.0, %v2077
  %2079 = vmatmul.f32.gmra.mxu0 %v981
  %v2080 = vpop.f32.mrf.mxu0
  %v2081 = vadd.f32 0.0, %v2080
  %2082 = vmatmul.f32.gmra.mxu0 %v984
  %v2083 = vpop.f32.mrf.mxu0
  %v2084 = vadd.f32 0.0, %v2083
  %2085 = vmatmul.f32.gmra.mxu0 %v987
  %v2086 = vpop.f32.mrf.mxu0
  %v2087 = vadd.f32 0.0, %v2086
  %2088 = vmatmul.f32.gmra.mxu0 %v990
  %v2089 = vpop.f32.mrf.mxu0
  %v2090 = vadd.f32 0.0, %v2089
  %2091 = vmatmul.f32.gmra.mxu0 %v993
  %v2092 = vpop.f32.mrf.mxu0
  %v2093 = vadd.f32 0.0, %v2092
  %2094 = vmatmul.f32.gmra.mxu0 %v996
  %v2095 = vpop.f32.mrf.mxu0
  %v2096 = vadd.f32 0.0, %v2095
  %2097 = vmatmul.f32.gmra.mxu0 %v999
  %v2098 = vpop.f32.mrf.mxu0
  %v2099 = vadd.f32 0.0, %v2098
  %2100 = vmatmul.f32.gmra.mxu0 %v1002
  %v2101 = vpop.f32.mrf.mxu0
  %v2102 = vadd.f32 0.0, %v2101
  %2103 = vmatmul.f32.gmra.mxu0 %v1005
  %v2104 = vpop.f32.mrf.mxu0
  %v2105 = vadd.f32 0.0, %v2104
  %2106 = vmatmul.f32.gmra.mxu0 %v1008
  %v2107 = vpop.f32.mrf.mxu0
  %v2108 = vadd.f32 0.0, %v2107
  %2109 = vmatmul.f32.gmra.mxu0 %v1011
  %v2110 = vpop.f32.mrf.mxu0
  %v2111 = vadd.f32 0.0, %v2110
  %2112 = vmatmul.f32.gmra.mxu0 %v1014
  %v2113 = vpop.f32.mrf.mxu0
  %v2114 = vadd.f32 0.0, %v2113
  %2115 = vmatmul.f32.gmra.mxu0 %v1017
  %v2116 = vpop.f32.mrf.mxu0
  %v2117 = vadd.f32 0.0, %v2116
  %2118 = vmatmul.f32.gmra.mxu0 %v1020
  %v2119 = vpop.f32.mrf.mxu0
  %v2120 = vadd.f32 0.0, %v2119
  %2121 = vmatmul.f32.gmra.mxu0 %v1023
  %v2122 = vpop.f32.mrf.mxu0
  %v2123 = vadd.f32 0.0, %v2122
  %2124 = vmatmul.f32.gmra.mxu0 %v1026
  %v2125 = vpop.f32.mrf.mxu0
  %v2126 = vadd.f32 0.0, %v2125
  %2127 = vmatmul.f32.gmra.mxu0 %v1029
  %v2128 = vpop.f32.mrf.mxu0
  %v2129 = vadd.f32 0.0, %v2128
  %2130 = vmatmul.f32.gmra.mxu0 %v1032
  %v2131 = vpop.f32.mrf.mxu0
  %v2132 = vadd.f32 0.0, %v2131
  %2133 = vmatmul.f32.gmra.mxu0 %v1035
  %v2134 = vpop.f32.mrf.mxu0
  %v2135 = vadd.f32 0.0, %v2134
  %2136 = vmatmul.f32.gmra.mxu0 %v1038
  %v2137 = vpop.f32.mrf.mxu0
  %v2138 = vadd.f32 0.0, %v2137
  %2139 = vmatmul.f32.gmra.mxu0 %v1041
  %v2140 = vpop.f32.mrf.mxu0
  %v2141 = vadd.f32 0.0, %v2140
  %2142 = vmatmul.f32.gmra.mxu0 %v1044
  %v2143 = vpop.f32.mrf.mxu0
  %v2144 = vadd.f32 0.0, %v2143
  %2145 = vmatmul.f32.gmra.mxu0 %v1047
  %v2146 = vpop.f32.mrf.mxu0
  %v2147 = vadd.f32 0.0, %v2146
  %2148 = vmatmul.f32.gmra.mxu0 %v1050
  %v2149 = vpop.f32.mrf.mxu0
  %v2150 = vadd.f32 0.0, %v2149
  %2151 = vmatmul.f32.gmra.mxu0 %v1053
  %v2152 = vpop.f32.mrf.mxu0
  %v2153 = vadd.f32 0.0, %v2152
  %2154 = vmatmul.f32.gmra.mxu0 %v1056
  %v2155 = vpop.f32.mrf.mxu0
  %v2156 = vadd.f32 0.0, %v2155
  %2157 = vmatmul.f32.gmra.mxu0 %v1059
  %v2158 = vpop.f32.mrf.mxu0
  %v2159 = vadd.f32 0.0, %v2158
  %2160 = vmatmul.f32.gmra.mxu0 %v1062
  %v2161 = vpop.f32.mrf.mxu0
  %v2162 = vadd.f32 0.0, %v2161
  %2163 = vmatmul.f32.gmra.mxu0 %v1065
  %v2164 = vpop.f32.mrf.mxu0
  %v2165 = vadd.f32 0.0, %v2164
  %2166 = vmatmul.f32.gmra.mxu0 %v1068
  %v2167 = vpop.f32.mrf.mxu0
  %v2168 = vadd.f32 0.0, %v2167
  %2169 = vmatmul.f32.gmra.mxu0 %v1071
  %v2170 = vpop.f32.mrf.mxu0
  %v2171 = vadd.f32 0.0, %v2170
  %2172 = vmatmul.f32.gmra.mxu0 %v1074
  %v2173 = vpop.f32.mrf.mxu0
  %v2174 = vadd.f32 0.0, %v2173
  %2175 = vmatmul.f32.gmra.mxu0 %v1077
  %v2176 = vpop.f32.mrf.mxu0
  %v2177 = vadd.f32 0.0, %v2176
  %2178 = vmatmul.f32.gmra.mxu0 %v1080
  %v2179 = vpop.f32.mrf.mxu0
  %v2180 = vadd.f32 0.0, %v2179
  %2181 = vmatmul.f32.gmra.mxu0 %v1083
  %v2182 = vpop.f32.mrf.mxu0
  %v2183 = vadd.f32 0.0, %v2182
  %2184 = vmatmul.f32.gmra.mxu0 %v1086
  %v2185 = vpop.f32.mrf.mxu0
  %v2186 = vadd.f32 0.0, %v2185
  %2187 = vmatmul.f32.gmra.mxu0 %v1089
  %v2188 = vpop.f32.mrf.mxu0
  %v2189 = vadd.f32 0.0, %v2188
  %2190 = vmatmul.f32.gmra.mxu0 %v1092
  %v2191 = vpop.f32.mrf.mxu0
  %v2192 = vadd.f32 0.0, %v2191
  %2193 = vmatmul.f32.gmra.mxu0 %v1095
  %v2194 = vpop.f32.mrf.mxu0
  %v2195 = vadd.f32 0.0, %v2194
  %2196 = vmatmul.f32.gmra.mxu0 %v1098
  %v2197 = vpop.f32.mrf.mxu0
  %v2198 = vadd.f32 0.0, %v2197
  %2199 = vmatmul.f32.gmra.mxu0 %v1101
  %v2200 = vpop.f32.mrf.mxu0
  %v2201 = vadd.f32 0.0, %v2200
  %2202 = vmatmul.f32.gmra.mxu0 %v1104
  %v2203 = vpop.f32.mrf.mxu0
  %v2204 = vadd.f32 0.0, %v2203
  %2205 = vmatmul.f32.gmra.mxu0 %v1107
  %v2206 = vpop.f32.mrf.mxu0
  %v2207 = vadd.f32 0.0, %v2206
  %2208 = vmatmul.f32.gmra.mxu0 %v1110
  %v2209 = vpop.f32.mrf.mxu0
  %v2210 = vadd.f32 0.0, %v2209
  %2211 = vmatmul.f32.gmra.mxu0 %v1113
  %v2212 = vpop.f32.mrf.mxu0
  %v2213 = vadd.f32 0.0, %v2212
  %2214 = vmatmul.f32.gmra.mxu0 %v1116
  %v2215 = vpop.f32.mrf.mxu0
  %v2216 = vadd.f32 0.0, %v2215
  %2217 = vmatmul.f32.gmra.mxu0 %v1119
  %v2218 = vpop.f32.mrf.mxu0
  %v2219 = vadd.f32 0.0, %v2218
  %2220 = vmatmul.f32.gmra.mxu0 %v1122
  %v2221 = vpop.f32.mrf.mxu0
  %v2222 = vadd.f32 0.0, %v2221
  %2223 = vmatmul.f32.gmra.mxu0 %v1125
  %v2224 = vpop.f32.mrf.mxu0
  %v2225 = vadd.f32 0.0, %v2224
  %2226 = vmatmul.f32.gmra.mxu0 %v1128
  %v2227 = vpop.f32.mrf.mxu0
  %v2228 = vadd.f32 0.0, %v2227
  %2229 = vmatmul.f32.gmra.mxu0 %v1131
  %v2230 = vpop.f32.mrf.mxu0
  %v2231 = vadd.f32 0.0, %v2230
  %2232 = vmatmul.f32.gmra.mxu0 %v1134
  %v2233 = vpop.f32.mrf.mxu0
  %v2234 = vadd.f32 0.0, %v2233
  %2235 = vmatmul.f32.gmra.mxu0 %v1137
  %v2236 = vpop.f32.mrf.mxu0
  %v2237 = vadd.f32 0.0, %v2236
  %2238 = vmatmul.f32.gmra.mxu0 %v1140
  %v2239 = vpop.f32.mrf.mxu0
  %v2240 = vadd.f32 0.0, %v2239
  %2241 = vmatmul.f32.gmra.mxu0 %v1143
  %v2242 = vpop.f32.mrf.mxu0
  %v2243 = vadd.f32 0.0, %v2242
  %2244 = vmatmul.f32.gmra.mxu0 %v1146
  %v2245 = vpop.f32.mrf.mxu0
  %v2246 = vadd.f32 0.0, %v2245
  %2247 = vmatmul.f32.gmra.mxu0 %v1149
  %v2248 = vpop.f32.mrf.mxu0
  %v2249 = vadd.f32 0.0, %v2248
  %2250 = vmatmul.f32.gmra.mxu0 %v1152
  %v2251 = vpop.f32.mrf.mxu0
  %v2252 = vadd.f32 0.0, %v2251
  %2253 = vmatmul.f32.gmra.mxu0 %v1155
  %v2254 = vpop.f32.mrf.mxu0
  %v2255 = vadd.f32 0.0, %v2254
  %2256 = vmatmul.f32.gmra.mxu0 %v1158
  %v2257 = vpop.f32.mrf.mxu0
  %v2258 = vadd.f32 0.0, %v2257
  %2259 = vmatmul.f32.gmra.mxu0 %v1161
  %v2260 = vpop.f32.mrf.mxu0
  %v2261 = vadd.f32 0.0, %v2260
  %2262 = vmatmul.f32.gmra.mxu0 %v1164
  %v2263 = vpop.f32.mrf.mxu0
  %v2264 = vadd.f32 0.0, %v2263
  %2265 = vmatmul.f32.gmra.mxu0 %v1167
  %v2266 = vpop.f32.mrf.mxu0
  %v2267 = vadd.f32 0.0, %v2266
  %2268 = vmatmul.f32.gmra.mxu0 %v1170
  %v2269 = vpop.f32.mrf.mxu0
  %v2270 = vadd.f32 0.0, %v2269
  %2271 = vmatmul.f32.gmra.mxu0 %v1173
  %v2272 = vpop.f32.mrf.mxu0
  %v2273 = vadd.f32 0.0, %v2272
  %2274 = vmatmul.f32.gmra.mxu0 %v1176
  %v2275 = vpop.f32.mrf.mxu0
  %v2276 = vadd.f32 0.0, %v2275
  %2277 = vmatmul.f32.gmra.mxu0 %v1179
  %v2278 = vpop.f32.mrf.mxu0
  %v2279 = vadd.f32 0.0, %v2278
  %2280 = vmatmul.f32.gmra.mxu0 %v1182
  %v2281 = vpop.f32.mrf.mxu0
  %v2282 = vadd.f32 0.0, %v2281
  %2283 = vmatmul.f32.gmra.mxu0 %v1185
  %v2284 = vpop.f32.mrf.mxu0
  %v2285 = vadd.f32 0.0, %v2284
  %2286 = vmatmul.f32.gmra.mxu0 %v1188
  %v2287 = vpop.f32.mrf.mxu0
  %v2288 = vadd.f32 0.0, %v2287
  %2289 = vmatmul.f32.gmra.mxu0 %v1191
  %v2290 = vpop.f32.mrf.mxu0
  %v2291 = vadd.f32 0.0, %v2290
  %2292 = vmatmul.f32.gmra.mxu0 %v1194
  %v2293 = vpop.f32.mrf.mxu0
  %v2294 = vadd.f32 0.0, %v2293
  %2295 = vmatmul.f32.gmra.mxu0 %v1197
  %v2296 = vpop.f32.mrf.mxu0
  %v2297 = vadd.f32 0.0, %v2296
  %2298 = vmatmul.f32.gmra.mxu0 %v1200
  %v2299 = vpop.f32.mrf.mxu0
  %v2300 = vadd.f32 0.0, %v2299
  %2301 = vmatmul.f32.gmra.mxu0 %v1203
  %v2302 = vpop.f32.mrf.mxu0
  %v2303 = vadd.f32 0.0, %v2302
  %2304 = vmatmul.f32.gmra.mxu0 %v1206
  %v2305 = vpop.f32.mrf.mxu0
  %v2306 = vadd.f32 0.0, %v2305
  %2307 = vmatmul.f32.gmra.mxu0 %v1209
  %v2308 = vpop.f32.mrf.mxu0
  %v2309 = vadd.f32 0.0, %v2308
  %2310 = vmatmul.f32.gmra.mxu0 %v1212
  %v2311 = vpop.f32.mrf.mxu0
  %v2312 = vadd.f32 0.0, %v2311
  %2313 = vmatmul.f32.gmra.mxu0 %v1215
  %v2314 = vpop.f32.mrf.mxu0
  %v2315 = vadd.f32 0.0, %v2314
  %2316 = vmatmul.f32.gmra.mxu0 %v1218
  %v2317 = vpop.f32.mrf.mxu0
  %v2318 = vadd.f32 0.0, %v2317
  %2319 = vmatmul.f32.gmra.mxu0 %v1221
  %v2320 = vpop.f32.mrf.mxu0
  %v2321 = vadd.f32 0.0, %v2320
  %2322 = vmatmul.f32.gmra.mxu0 %v1224
  %v2323 = vpop.f32.mrf.mxu0
  %v2324 = vadd.f32 0.0, %v2323
  %2325 = vmatmul.f32.gmra.mxu0 %v1227
  %v2326 = vpop.f32.mrf.mxu0
  %v2327 = vadd.f32 0.0, %v2326
  %2328 = vmatmul.f32.gmra.mxu0 %v1230
  %v2329 = vpop.f32.mrf.mxu0
  %v2330 = vadd.f32 0.0, %v2329
  %2331 = vmatmul.f32.gmra.mxu0 %v1233
  %v2332 = vpop.f32.mrf.mxu0
  %v2333 = vadd.f32 0.0, %v2332
  %2334 = vmatmul.f32.gmra.mxu0 %v1236
  %v2335 = vpop.f32.mrf.mxu0
  %v2336 = vadd.f32 0.0, %v2335
  %2337 = vmatmul.f32.gmra.mxu0 %v1239
  %v2338 = vpop.f32.mrf.mxu0
  %v2339 = vadd.f32 0.0, %v2338
  %2340 = vmatmul.f32.gmra.mxu0 %v1242
  %v2341 = vpop.f32.mrf.mxu0
  %v2342 = vadd.f32 0.0, %v2341
  %2343 = vmatmul.f32.gmra.mxu0 %v1245
  %v2344 = vpop.f32.mrf.mxu0
  %v2345 = vadd.f32 0.0, %v2344
  %2346 = vmatmul.f32.gmra.mxu0 %v1248
  %v2347 = vpop.f32.mrf.mxu0
  %v2348 = vadd.f32 0.0, %v2347
  %2349 = vmatmul.f32.gmra.mxu0 %v1251
  %v2350 = vpop.f32.mrf.mxu0
  %v2351 = vadd.f32 0.0, %v2350
  %2352 = vmatmul.f32.gmra.mxu0 %v1254
  %v2353 = vpop.f32.mrf.mxu0
  %v2354 = vadd.f32 0.0, %v2353
  %2355 = vmatmul.f32.gmra.mxu0 %v1257
  %v2356 = vpop.f32.mrf.mxu0
  %v2357 = vadd.f32 0.0, %v2356
  %2358 = vmatmul.f32.gmra.mxu0 %v1260
  %v2359 = vpop.f32.mrf.mxu0
  %v2360 = vadd.f32 0.0, %v2359
  %2361 = vmatmul.f32.gmra.mxu0 %v1263
  %v2362 = vpop.f32.mrf.mxu0
  %v2363 = vadd.f32 0.0, %v2362
  %2364 = vmatmul.f32.gmra.mxu0 %v1266
  %v2365 = vpop.f32.mrf.mxu0
  %v2366 = vadd.f32 0.0, %v2365
  %2367 = vmatmul.f32.gmra.mxu0 %v1269
  %v2368 = vpop.f32.mrf.mxu0
  %v2369 = vadd.f32 0.0, %v2368
  %2370 = vmatmul.f32.gmra.mxu0 %v1272
  %v2371 = vpop.f32.mrf.mxu0
  %v2372 = vadd.f32 0.0, %v2371
  %2373 = vmatmul.f32.gmra.mxu0 %v1275
  %v2374 = vpop.f32.mrf.mxu0
  %v2375 = vadd.f32 0.0, %v2374
  %2376 = vmatmul.f32.gmra.mxu0 %v1278
  %v2377 = vpop.f32.mrf.mxu0
  %v2378 = vadd.f32 0.0, %v2377
  %2379 = vmatmul.f32.gmra.mxu0 %v1281
  %v2380 = vpop.f32.mrf.mxu0
  %v2381 = vadd.f32 0.0, %v2380
  %2382 = vmatmul.f32.gmra.mxu0 %v1284
  %v2383 = vpop.f32.mrf.mxu0
  %v2384 = vadd.f32 0.0, %v2383
  %2385 = vmatmul.f32.gmra.mxu0 %v1287
  %v2386 = vpop.f32.mrf.mxu0
  %v2387 = vadd.f32 0.0, %v2386
  %2388 = vmatmul.f32.gmra.mxu0 %v1290
  %v2389 = vpop.f32.mrf.mxu0
  %v2390 = vadd.f32 0.0, %v2389
  %2391 = vmatmul.f32.gmra.mxu0 %v1293
  %v2392 = vpop.f32.mrf.mxu0
  %v2393 = vadd.f32 0.0, %v2392
  %2394 = vmatmul.f32.gmra.mxu0 %v1296
  %v2395 = vpop.f32.mrf.mxu0
  %v2396 = vadd.f32 0.0, %v2395
  %2397 = vmatmul.f32.gmra.mxu0 %v1299
  %v2398 = vpop.f32.mrf.mxu0
  %v2399 = vadd.f32 0.0, %v2398
  %2400 = vmatmul.f32.gmra.mxu0 %v1302
  %v2401 = vpop.f32.mrf.mxu0
  %v2402 = vadd.f32 0.0, %v2401
  %2403 = vmatmul.f32.gmra.mxu0 %v1305
  %v2404 = vpop.f32.mrf.mxu0
  %v2405 = vadd.f32 0.0, %v2404
  %2406 = vmatmul.f32.gmra.mxu0 %v1308
  %v2407 = vpop.f32.mrf.mxu0
  %v2408 = vadd.f32 0.0, %v2407
  %2409 = vmatmul.f32.gmra.mxu0 %v1311
  %v2410 = vpop.f32.mrf.mxu0
  %v2411 = vadd.f32 0.0, %v2410
  %2412 = vmatmul.f32.gmra.mxu0 %v1314
  %v2413 = vpop.f32.mrf.mxu0
  %v2414 = vadd.f32 0.0, %v2413
  %2415 = vmatmul.f32.gmra.mxu0 %v1317
  %v2416 = vpop.f32.mrf.mxu0
  %v2417 = vadd.f32 0.0, %v2416
  %2418 = vmatmul.f32.gmra.mxu0 %v1320
  %v2419 = vpop.f32.mrf.mxu0
  %v2420 = vadd.f32 0.0, %v2419
  %2421 = vmatmul.f32.gmra.mxu0 %v1323
  %v2422 = vpop.f32.mrf.mxu0
  %v2423 = vadd.f32 0.0, %v2422
  %2424 = vmatmul.f32.gmra.mxu0 %v1326
  %v2425 = vpop.f32.mrf.mxu0
  %v2426 = vadd.f32 0.0, %v2425
  %2427 = vmatmul.f32.gmra.mxu0 %v1329
  %v2428 = vpop.f32.mrf.mxu0
  %v2429 = vadd.f32 0.0, %v2428
  %2430 = vmatmul.f32.gmra.mxu0 %v1332
  %v2431 = vpop.f32.mrf.mxu0
  %v2432 = vadd.f32 0.0, %v2431
  %2433 = vmatmul.f32.gmra.mxu0 %v1335
  %v2434 = vpop.f32.mrf.mxu0
  %v2435 = vadd.f32 0.0, %v2434
  %2436 = vmatmul.f32.gmra.mxu0 %v1338
  %v2437 = vpop.f32.mrf.mxu0
  %v2438 = vadd.f32 0.0, %v2437
  %2439 = vmatmul.f32.gmra.mxu0 %v1341
  %v2440 = vpop.f32.mrf.mxu0
  %v2441 = vadd.f32 0.0, %v2440
  %2442 = vmatmul.f32.gmra.mxu0 %v1344
  %v2443 = vpop.f32.mrf.mxu0
  %v2444 = vadd.f32 0.0, %v2443
  %2445 = vmatmul.f32.gmra.mxu0 %v1347
  %v2446 = vpop.f32.mrf.mxu0
  %v2447 = vadd.f32 0.0, %v2446
  %2448 = vmatmul.f32.gmra.mxu0 %v1350
  %v2449 = vpop.f32.mrf.mxu0
  %v2450 = vadd.f32 0.0, %v2449
  %2451 = vmatmul.f32.gmra.mxu0 %v1353
  %v2452 = vpop.f32.mrf.mxu0
  %v2453 = vadd.f32 0.0, %v2452
  %2454 = vmatmul.f32.gmra.mxu0 %v1356
  %v2455 = vpop.f32.mrf.mxu0
  %v2456 = vadd.f32 0.0, %v2455
  %2457 = vmatmul.f32.gmra.mxu0 %v1359
  %v2458 = vpop.f32.mrf.mxu0
  %v2459 = vadd.f32 0.0, %v2458
  %2460 = vmatmul.f32.gmra.mxu0 %v1362
  %v2461 = vpop.f32.mrf.mxu0
  %v2462 = vadd.f32 0.0, %v2461
  %2463 = vmatmul.f32.gmra.mxu0 %v1365
  %v2464 = vpop.f32.mrf.mxu0
  %v2465 = vadd.f32 0.0, %v2464
  %2466 = vmatmul.f32.gmra.mxu0 %v1368
  %v2467 = vpop.f32.mrf.mxu0
  %v2468 = vadd.f32 0.0, %v2467
  %2469 = vmatmul.f32.gmra.mxu0 %v1371
  %v2470 = vpop.f32.mrf.mxu0
  %v2471 = vadd.f32 0.0, %v2470
  %2472 = vmatmul.f32.gmra.mxu0 %v1374
  %v2473 = vpop.f32.mrf.mxu0
  %v2474 = vadd.f32 0.0, %v2473
  %2475 = vmatmul.f32.gmra.mxu0 %v1377
  %v2476 = vpop.f32.mrf.mxu0
  %v2477 = vadd.f32 0.0, %v2476
  %2478 = vmatmul.f32.gmra.mxu0 %v1380
  %v2479 = vpop.f32.mrf.mxu0
  %v2480 = vadd.f32 0.0, %v2479
  %2481 = vmatmul.f32.gmra.mxu0 %v1383
  %v2482 = vpop.f32.mrf.mxu0
  %v2483 = vadd.f32 0.0, %v2482
  %2484 = vmatmul.f32.gmra.mxu0 %v1386
  %v2485 = vpop.f32.mrf.mxu0
  %v2486 = vadd.f32 0.0, %v2485
  %2487 = vmatmul.f32.gmra.mxu0 %v1389
  %v2488 = vpop.f32.mrf.mxu0
  %v2489 = vadd.f32 0.0, %v2488
  %2490 = vmatmul.f32.gmra.mxu0 %v1392
  %v2491 = vpop.f32.mrf.mxu0
  %v2492 = vadd.f32 0.0, %v2491
  %2493 = vmatmul.f32.gmra.mxu0 %v1395
  %v2494 = vpop.f32.mrf.mxu0
  %v2495 = vadd.f32 0.0, %v2494
  %2496 = vmatmul.f32.gmra.mxu0 %v1398
  %v2497 = vpop.f32.mrf.mxu0
  %v2498 = vadd.f32 0.0, %v2497
  %2499 = vmatmul.f32.gmra.mxu0 %v1401
  %v2500 = vpop.f32.mrf.mxu0
  %v2501 = vadd.f32 0.0, %v2500
  %2502 = vmatmul.f32.gmra.mxu0 %v1404
  %v2503 = vpop.f32.mrf.mxu0
  %v2504 = vadd.f32 0.0, %v2503
  %2505 = vmatmul.f32.gmra.mxu0 %v1407
  %v2506 = vpop.f32.mrf.mxu0
  %v2507 = vadd.f32 0.0, %v2506
  %2508 = vmatmul.f32.gmra.mxu0 %v1410
  %v2509 = vpop.f32.mrf.mxu0
  %v2510 = vadd.f32 0.0, %v2509
  %2511 = vmatmul.f32.gmra.mxu0 %v1413
  %v2512 = vpop.f32.mrf.mxu0
  %v2513 = vadd.f32 0.0, %v2512
  %2514 = vmatmul.f32.gmra.mxu0 %v1416
  %v2515 = vpop.f32.mrf.mxu0
  %v2516 = vadd.f32 0.0, %v2515
  %2517 = vmatmul.f32.gmra.mxu0 %v1419
  %v2518 = vpop.f32.mrf.mxu0
  %v2519 = vadd.f32 0.0, %v2518
  %2520 = vmatmul.f32.gmra.mxu0 %v1422
  %v2521 = vpop.f32.mrf.mxu0
  %v2522 = vadd.f32 0.0, %v2521
  %2523 = vmatmul.f32.gmra.mxu0 %v1425
  %v2524 = vpop.f32.mrf.mxu0
  %v2525 = vadd.f32 0.0, %v2524
  %2526 = vmatmul.f32.gmra.mxu0 %v1428
  %v2527 = vpop.f32.mrf.mxu0
  %v2528 = vadd.f32 0.0, %v2527
  %2529 = vmatmul.f32.gmra.mxu0 %v1431
  %v2530 = vpop.f32.mrf.mxu0
  %v2531 = vadd.f32 0.0, %v2530
  %2532 = vmatmul.f32.gmra.mxu0 %v1434
  %v2533 = vpop.f32.mrf.mxu0
  %v2534 = vadd.f32 0.0, %v2533
  %2535 = vmatmul.f32.gmra.mxu0 %v1437
  %v2536 = vpop.f32.mrf.mxu0
  %v2537 = vadd.f32 0.0, %v2536
  %2538 = vmatmul.f32.gmra.mxu0 %v1440
  %v2539 = vpop.f32.mrf.mxu0
  %v2540 = vadd.f32 0.0, %v2539
  %2541 = vmatmul.f32.gmra.mxu0 %v1443
  %v2542 = vpop.f32.mrf.mxu0
  %v2543 = vadd.f32 0.0, %v2542
  %2544 = vmatmul.f32.gmra.mxu0 %v1446
  %v2545 = vpop.f32.mrf.mxu0
  %v2546 = vadd.f32 0.0, %v2545
  %2547 = vmatmul.f32.gmra.mxu0 %v1449
  %v2548 = vpop.f32.mrf.mxu0
  %v2549 = vadd.f32 0.0, %v2548
  %2550 = vmatmul.f32.gmra.mxu0 %v1452
  %v2551 = vpop.f32.mrf.mxu0
  %v2552 = vadd.f32 0.0, %v2551
  %2553 = vmatmul.f32.gmra.mxu0 %v1455
  %v2554 = vpop.f32.mrf.mxu0
  %v2555 = vadd.f32 0.0, %v2554
  %2556 = vmatmul.f32.gmra.mxu0 %v1458
  %v2557 = vpop.f32.mrf.mxu0
  %v2558 = vadd.f32 0.0, %v2557
  %2559 = vmatmul.f32.gmra.mxu0 %v1461
  %v2560 = vpop.f32.mrf.mxu0
  %v2561 = vadd.f32 0.0, %v2560
  %2562 = vmatmul.f32.gmra.mxu0 %v1464
  %v2563 = vpop.f32.mrf.mxu0
  %v2564 = vadd.f32 0.0, %v2563
  %2565 = vmatmul.f32.gmra.mxu0 %v1467
  %v2566 = vpop.f32.mrf.mxu0
  %v2567 = vadd.f32 0.0, %v2566
  %2568 = vmatmul.f32.gmra.mxu0 %v1470
  %v2569 = vpop.f32.mrf.mxu0
  %v2570 = vadd.f32 0.0, %v2569
  %2571 = vmatmul.f32.gmra.mxu0 %v1473
  %v2572 = vpop.f32.mrf.mxu0
  %v2573 = vadd.f32 0.0, %v2572
  %2574 = vmatmul.f32.gmra.mxu0 %v1476
  %v2575 = vpop.f32.mrf.mxu0
  %v2576 = vadd.f32 0.0, %v2575
  %2577 = vmatmul.f32.gmra.mxu0 %v1479
  %v2578 = vpop.f32.mrf.mxu0
  %v2579 = vadd.f32 0.0, %v2578
  %2580 = vmatmul.f32.gmra.mxu0 %v1482
  %v2581 = vpop.f32.mrf.mxu0
  %v2582 = vadd.f32 0.0, %v2581
  %2583 = vmatmul.f32.gmra.mxu0 %v1485
  %v2584 = vpop.f32.mrf.mxu0
  %v2585 = vadd.f32 0.0, %v2584
  %2586 = vmatmul.f32.gmra.mxu0 %v1488
  %v2587 = vpop.f32.mrf.mxu0
  %v2588 = vadd.f32 0.0, %v2587
  %2589 = vmatmul.f32.gmra.mxu0 %v1491
  %v2590 = vpop.f32.mrf.mxu0
  %v2591 = vadd.f32 0.0, %v2590
  %2592 = vmatmul.f32.gmra.mxu0 %v1494
  %v2593 = vpop.f32.mrf.mxu0
  %v2594 = vadd.f32 0.0, %v2593
  %2595 = vmatmul.f32.gmra.mxu0 %v1497
  %v2596 = vpop.f32.mrf.mxu0
  %v2597 = vadd.f32 0.0, %v2596
  %2598 = vmatmul.f32.gmra.mxu0 %v1500
  %v2599 = vpop.f32.mrf.mxu0
  %v2600 = vadd.f32 0.0, %v2599
  %2601 = vmatmul.f32.gmra.mxu0 %v1503
  %v2602 = vpop.f32.mrf.mxu0
  %v2603 = vadd.f32 0.0, %v2602
  %2604 = vmatmul.f32.gmra.mxu0 %v1506
  %v2605 = vpop.f32.mrf.mxu0
  %v2606 = vadd.f32 0.0, %v2605
  %2607 = vmatmul.f32.gmra.mxu0 %v1509
  %v2608 = vpop.f32.mrf.mxu0
  %v2609 = vadd.f32 0.0, %v2608
  %2610 = vmatmul.f32.gmra.mxu0 %v1512
  %v2611 = vpop.f32.mrf.mxu0
  %v2612 = vadd.f32 0.0, %v2611
  %2613 = vmatmul.f32.gmra.mxu0 %v1515
  %v2614 = vpop.f32.mrf.mxu0
  %v2615 = vadd.f32 0.0, %v2614
  %2616 = vmatmul.f32.gmra.mxu0 %v1518
  %v2617 = vpop.f32.mrf.mxu0
  %v2618 = vadd.f32 0.0, %v2617
  %2619 = vmatmul.f32.gmra.mxu0 %v1521
  %v2620 = vpop.f32.mrf.mxu0
  %v2621 = vadd.f32 0.0, %v2620
  %2622 = vdwg.mxu0
  %v2624 = vsel %vm439, %v34, 0
  %v2627 = vsel %vm439, %v54, 0
  %v2630 = vsel %vm439, %v74, 0
  %v2633 = vsel %vm439, %v94, 0
  %v2636 = vsel %vm439, %v114, 0
  %v2639 = vsel %vm439, %v134, 0
  %v2642 = vsel %vm439, %v154, 0
  %v2645 = vsel %vm439, %v174, 0
  %v2648 = vsel %vm439, %v194, 0
  %v2651 = vsel %vm439, %v214, 0
  %v2654 = vsel %vm439, %v234, 0
  %v2657 = vsel %vm439, %v254, 0
  %v2660 = vsel %vm439, %v274, 0
  %v2663 = vsel %vm439, %v294, 0
  %v2666 = vsel %vm439, %v314, 0
  %v2669 = vsel %vm439, %v334, 0
  %v2672 = vsel %vm439, %v354, 0
  %v2675 = vsel %vm439, %v374, 0
  %v2678 = vsel %vm439, %v394, 0
  %2680 = vmatpush.msra.mxu0 0.0
  %2681 = vmatpush.msra.mxu0 0.0
  %2682 = vmatpush.msra.mxu0 0.0
  %2683 = vmatpush.msra.mxu0 0.0
  %2684 = vmatpush.msra.mxu0 0.0
  %2685 = vmatpush.msra.mxu0 0.0
  %2686 = vmatpush.msra.mxu0 0.0
  %2687 = vmatpush.msra.mxu0 0.0
  %2688 = vmatpush.msra.mxu0 0.0
  %2689 = vmatpush.msra.mxu0 0.0
  %2690 = vmatpush.msra.mxu0 0.0
  %2691 = vmatpush.msra.mxu0 0.0
  %2692 = vmatpush.msra.mxu0 0.0
  %2693 = vmatpush.msra.mxu0 0.0
  %2694 = vmatpush.msra.mxu0 %v435
  %2695 = vmatpush.msra.mxu0 %v434
  %2696 = vmatmul.f32.gmra.mxu0 %v2624
  %v2697 = vpop.f32.mrf.mxu0
  %v2698 = vadd.f32 %v1541, %v2697
  %2699 = vmatmul.f32.gmra.mxu0 %v441
  %v2700 = vpop.f32.mrf.mxu0
  %v2701 = vadd.f32 %v1544, %v2700
  %2702 = vmatmul.f32.gmra.mxu0 %v444
  %v2703 = vpop.f32.mrf.mxu0
  %v2704 = vadd.f32 %v1547, %v2703
  %2705 = vmatmul.f32.gmra.mxu0 %v447
  %v2706 = vpop.f32.mrf.mxu0
  %v2707 = vadd.f32 %v1550, %v2706
  %2708 = vmatmul.f32.gmra.mxu0 %v450
  %v2709 = vpop.f32.mrf.mxu0
  %v2710 = vadd.f32 %v1553, %v2709
  %2711 = vmatmul.f32.gmra.mxu0 %v453
  %v2712 = vpop.f32.mrf.mxu0
  %v2713 = vadd.f32 %v1556, %v2712
  %2714 = vmatmul.f32.gmra.mxu0 %v456
  %v2715 = vpop.f32.mrf.mxu0
  %v2716 = vadd.f32 %v1559, %v2715
  %2717 = vmatmul.f32.gmra.mxu0 %v459
  %v2718 = vpop.f32.mrf.mxu0
  %v2719 = vadd.f32 %v1562, %v2718
  %2720 = vmatmul.f32.gmra.mxu0 %v462
  %v2721 = vpop.f32.mrf.mxu0
  %v2722 = vadd.f32 %v1565, %v2721
  %2723 = vmatmul.f32.gmra.mxu0 %v465
  %v2724 = vpop.f32.mrf.mxu0
  %v2725 = vadd.f32 %v1568, %v2724
  %2726 = vmatmul.f32.gmra.mxu0 %v468
  %v2727 = vpop.f32.mrf.mxu0
  %v2728 = vadd.f32 %v1571, %v2727
  %2729 = vmatmul.f32.gmra.mxu0 %v471
  %v2730 = vpop.f32.mrf.mxu0
  %v2731 = vadd.f32 %v1574, %v2730
  %2732 = vmatmul.f32.gmra.mxu0 %v474
  %v2733 = vpop.f32.mrf.mxu0
  %v2734 = vadd.f32 %v1577, %v2733
  %2735 = vmatmul.f32.gmra.mxu0 %v477
  %v2736 = vpop.f32.mrf.mxu0
  %v2737 = vadd.f32 %v1580, %v2736
  %2738 = vmatmul.f32.gmra.mxu0 %v480
  %v2739 = vpop.f32.mrf.mxu0
  %v2740 = vadd.f32 %v1583, %v2739
  %2741 = vmatmul.f32.gmra.mxu0 %v483
  %v2742 = vpop.f32.mrf.mxu0
  %v2743 = vadd.f32 %v1586, %v2742
  %2744 = vmatmul.f32.gmra.mxu0 %v486
  %v2745 = vpop.f32.mrf.mxu0
  %v2746 = vadd.f32 %v1589, %v2745
  %2747 = vmatmul.f32.gmra.mxu0 %v489
  %v2748 = vpop.f32.mrf.mxu0
  %v2749 = vadd.f32 %v1592, %v2748
  %2750 = vmatmul.f32.gmra.mxu0 %v492
  %v2751 = vpop.f32.mrf.mxu0
  %v2752 = vadd.f32 %v1595, %v2751
  %2753 = vmatmul.f32.gmra.mxu0 %v2627
  %v2754 = vpop.f32.mrf.mxu0
  %v2755 = vadd.f32 %v1598, %v2754
  %2756 = vmatmul.f32.gmra.mxu0 %v498
  %v2757 = vpop.f32.mrf.mxu0
  %v2758 = vadd.f32 %v1601, %v2757
  %2759 = vmatmul.f32.gmra.mxu0 %v501
  %v2760 = vpop.f32.mrf.mxu0
  %v2761 = vadd.f32 %v1604, %v2760
  %2762 = vmatmul.f32.gmra.mxu0 %v504
  %v2763 = vpop.f32.mrf.mxu0
  %v2764 = vadd.f32 %v1607, %v2763
  %2765 = vmatmul.f32.gmra.mxu0 %v507
  %v2766 = vpop.f32.mrf.mxu0
  %v2767 = vadd.f32 %v1610, %v2766
  %2768 = vmatmul.f32.gmra.mxu0 %v510
  %v2769 = vpop.f32.mrf.mxu0
  %v2770 = vadd.f32 %v1613, %v2769
  %2771 = vmatmul.f32.gmra.mxu0 %v513
  %v2772 = vpop.f32.mrf.mxu0
  %v2773 = vadd.f32 %v1616, %v2772
  %2774 = vmatmul.f32.gmra.mxu0 %v516
  %v2775 = vpop.f32.mrf.mxu0
  %v2776 = vadd.f32 %v1619, %v2775
  %2777 = vmatmul.f32.gmra.mxu0 %v519
  %v2778 = vpop.f32.mrf.mxu0
  %v2779 = vadd.f32 %v1622, %v2778
  %2780 = vmatmul.f32.gmra.mxu0 %v522
  %v2781 = vpop.f32.mrf.mxu0
  %v2782 = vadd.f32 %v1625, %v2781
  %2783 = vmatmul.f32.gmra.mxu0 %v525
  %v2784 = vpop.f32.mrf.mxu0
  %v2785 = vadd.f32 %v1628, %v2784
  %2786 = vmatmul.f32.gmra.mxu0 %v528
  %v2787 = vpop.f32.mrf.mxu0
  %v2788 = vadd.f32 %v1631, %v2787
  %2789 = vmatmul.f32.gmra.mxu0 %v531
  %v2790 = vpop.f32.mrf.mxu0
  %v2791 = vadd.f32 %v1634, %v2790
  %2792 = vmatmul.f32.gmra.mxu0 %v534
  %v2793 = vpop.f32.mrf.mxu0
  %v2794 = vadd.f32 %v1637, %v2793
  %2795 = vmatmul.f32.gmra.mxu0 %v537
  %v2796 = vpop.f32.mrf.mxu0
  %v2797 = vadd.f32 %v1640, %v2796
  %2798 = vmatmul.f32.gmra.mxu0 %v540
  %v2799 = vpop.f32.mrf.mxu0
  %v2800 = vadd.f32 %v1643, %v2799
  %2801 = vmatmul.f32.gmra.mxu0 %v543
  %v2802 = vpop.f32.mrf.mxu0
  %v2803 = vadd.f32 %v1646, %v2802
  %2804 = vmatmul.f32.gmra.mxu0 %v546
  %v2805 = vpop.f32.mrf.mxu0
  %v2806 = vadd.f32 %v1649, %v2805
  %2807 = vmatmul.f32.gmra.mxu0 %v549
  %v2808 = vpop.f32.mrf.mxu0
  %v2809 = vadd.f32 %v1652, %v2808
  %2810 = vmatmul.f32.gmra.mxu0 %v2630
  %v2811 = vpop.f32.mrf.mxu0
  %v2812 = vadd.f32 %v1655, %v2811
  %2813 = vmatmul.f32.gmra.mxu0 %v555
  %v2814 = vpop.f32.mrf.mxu0
  %v2815 = vadd.f32 %v1658, %v2814
  %2816 = vmatmul.f32.gmra.mxu0 %v558
  %v2817 = vpop.f32.mrf.mxu0
  %v2818 = vadd.f32 %v1661, %v2817
  %2819 = vmatmul.f32.gmra.mxu0 %v561
  %v2820 = vpop.f32.mrf.mxu0
  %v2821 = vadd.f32 %v1664, %v2820
  %2822 = vmatmul.f32.gmra.mxu0 %v564
  %v2823 = vpop.f32.mrf.mxu0
  %v2824 = vadd.f32 %v1667, %v2823
  %2825 = vmatmul.f32.gmra.mxu0 %v567
  %v2826 = vpop.f32.mrf.mxu0
  %v2827 = vadd.f32 %v1670, %v2826
  %2828 = vmatmul.f32.gmra.mxu0 %v570
  %v2829 = vpop.f32.mrf.mxu0
  %v2830 = vadd.f32 %v1673, %v2829
  %2831 = vmatmul.f32.gmra.mxu0 %v573
  %v2832 = vpop.f32.mrf.mxu0
  %v2833 = vadd.f32 %v1676, %v2832
  %2834 = vmatmul.f32.gmra.mxu0 %v576
  %v2835 = vpop.f32.mrf.mxu0
  %v2836 = vadd.f32 %v1679, %v2835
  %2837 = vmatmul.f32.gmra.mxu0 %v579
  %v2838 = vpop.f32.mrf.mxu0
  %v2839 = vadd.f32 %v1682, %v2838
  %2840 = vmatmul.f32.gmra.mxu0 %v582
  %v2841 = vpop.f32.mrf.mxu0
  %v2842 = vadd.f32 %v1685, %v2841
  %2843 = vmatmul.f32.gmra.mxu0 %v585
  %v2844 = vpop.f32.mrf.mxu0
  %v2845 = vadd.f32 %v1688, %v2844
  %2846 = vmatmul.f32.gmra.mxu0 %v588
  %v2847 = vpop.f32.mrf.mxu0
  %v2848 = vadd.f32 %v1691, %v2847
  %2849 = vmatmul.f32.gmra.mxu0 %v591
  %v2850 = vpop.f32.mrf.mxu0
  %v2851 = vadd.f32 %v1694, %v2850
  %2852 = vmatmul.f32.gmra.mxu0 %v594
  %v2853 = vpop.f32.mrf.mxu0
  %v2854 = vadd.f32 %v1697, %v2853
  %2855 = vmatmul.f32.gmra.mxu0 %v597
  %v2856 = vpop.f32.mrf.mxu0
  %v2857 = vadd.f32 %v1700, %v2856
  %2858 = vmatmul.f32.gmra.mxu0 %v600
  %v2859 = vpop.f32.mrf.mxu0
  %v2860 = vadd.f32 %v1703, %v2859
  %2861 = vmatmul.f32.gmra.mxu0 %v603
  %v2862 = vpop.f32.mrf.mxu0
  %v2863 = vadd.f32 %v1706, %v2862
  %2864 = vmatmul.f32.gmra.mxu0 %v606
  %v2865 = vpop.f32.mrf.mxu0
  %v2866 = vadd.f32 %v1709, %v2865
  %2867 = vmatmul.f32.gmra.mxu0 %v2633
  %v2868 = vpop.f32.mrf.mxu0
  %v2869 = vadd.f32 %v1712, %v2868
  %2870 = vmatmul.f32.gmra.mxu0 %v612
  %v2871 = vpop.f32.mrf.mxu0
  %v2872 = vadd.f32 %v1715, %v2871
  %2873 = vmatmul.f32.gmra.mxu0 %v615
  %v2874 = vpop.f32.mrf.mxu0
  %v2875 = vadd.f32 %v1718, %v2874
  %2876 = vmatmul.f32.gmra.mxu0 %v618
  %v2877 = vpop.f32.mrf.mxu0
  %v2878 = vadd.f32 %v1721, %v2877
  %2879 = vmatmul.f32.gmra.mxu0 %v621
  %v2880 = vpop.f32.mrf.mxu0
  %v2881 = vadd.f32 %v1724, %v2880
  %2882 = vmatmul.f32.gmra.mxu0 %v624
  %v2883 = vpop.f32.mrf.mxu0
  %v2884 = vadd.f32 %v1727, %v2883
  %2885 = vmatmul.f32.gmra.mxu0 %v627
  %v2886 = vpop.f32.mrf.mxu0
  %v2887 = vadd.f32 %v1730, %v2886
  %2888 = vmatmul.f32.gmra.mxu0 %v630
  %v2889 = vpop.f32.mrf.mxu0
  %v2890 = vadd.f32 %v1733, %v2889
  %2891 = vmatmul.f32.gmra.mxu0 %v633
  %v2892 = vpop.f32.mrf.mxu0
  %v2893 = vadd.f32 %v1736, %v2892
  %2894 = vmatmul.f32.gmra.mxu0 %v636
  %v2895 = vpop.f32.mrf.mxu0
  %v2896 = vadd.f32 %v1739, %v2895
  %2897 = vmatmul.f32.gmra.mxu0 %v639
  %v2898 = vpop.f32.mrf.mxu0
  %v2899 = vadd.f32 %v1742, %v2898
  %2900 = vmatmul.f32.gmra.mxu0 %v642
  %v2901 = vpop.f32.mrf.mxu0
  %v2902 = vadd.f32 %v1745, %v2901
  %2903 = vmatmul.f32.gmra.mxu0 %v645
  %v2904 = vpop.f32.mrf.mxu0
  %v2905 = vadd.f32 %v1748, %v2904
  %2906 = vmatmul.f32.gmra.mxu0 %v648
  %v2907 = vpop.f32.mrf.mxu0
  %v2908 = vadd.f32 %v1751, %v2907
  %2909 = vmatmul.f32.gmra.mxu0 %v651
  %v2910 = vpop.f32.mrf.mxu0
  %v2911 = vadd.f32 %v1754, %v2910
  %2912 = vmatmul.f32.gmra.mxu0 %v654
  %v2913 = vpop.f32.mrf.mxu0
  %v2914 = vadd.f32 %v1757, %v2913
  %2915 = vmatmul.f32.gmra.mxu0 %v657
  %v2916 = vpop.f32.mrf.mxu0
  %v2917 = vadd.f32 %v1760, %v2916
  %2918 = vmatmul.f32.gmra.mxu0 %v660
  %v2919 = vpop.f32.mrf.mxu0
  %v2920 = vadd.f32 %v1763, %v2919
  %2921 = vmatmul.f32.gmra.mxu0 %v663
  %v2922 = vpop.f32.mrf.mxu0
  %v2923 = vadd.f32 %v1766, %v2922
  %2924 = vmatmul.f32.gmra.mxu0 %v2636
  %v2925 = vpop.f32.mrf.mxu0
  %v2926 = vadd.f32 %v1769, %v2925
  %2927 = vmatmul.f32.gmra.mxu0 %v669
  %v2928 = vpop.f32.mrf.mxu0
  %v2929 = vadd.f32 %v1772, %v2928
  %2930 = vmatmul.f32.gmra.mxu0 %v672
  %v2931 = vpop.f32.mrf.mxu0
  %v2932 = vadd.f32 %v1775, %v2931
  %2933 = vmatmul.f32.gmra.mxu0 %v675
  %v2934 = vpop.f32.mrf.mxu0
  %v2935 = vadd.f32 %v1778, %v2934
  %2936 = vmatmul.f32.gmra.mxu0 %v678
  %v2937 = vpop.f32.mrf.mxu0
  %v2938 = vadd.f32 %v1781, %v2937
  %2939 = vmatmul.f32.gmra.mxu0 %v681
  %v2940 = vpop.f32.mrf.mxu0
  %v2941 = vadd.f32 %v1784, %v2940
  %2942 = vmatmul.f32.gmra.mxu0 %v684
  %v2943 = vpop.f32.mrf.mxu0
  %v2944 = vadd.f32 %v1787, %v2943
  %2945 = vmatmul.f32.gmra.mxu0 %v687
  %v2946 = vpop.f32.mrf.mxu0
  %v2947 = vadd.f32 %v1790, %v2946
  %2948 = vmatmul.f32.gmra.mxu0 %v690
  %v2949 = vpop.f32.mrf.mxu0
  %v2950 = vadd.f32 %v1793, %v2949
  %2951 = vmatmul.f32.gmra.mxu0 %v693
  %v2952 = vpop.f32.mrf.mxu0
  %v2953 = vadd.f32 %v1796, %v2952
  %2954 = vmatmul.f32.gmra.mxu0 %v696
  %v2955 = vpop.f32.mrf.mxu0
  %v2956 = vadd.f32 %v1799, %v2955
  %2957 = vmatmul.f32.gmra.mxu0 %v699
  %v2958 = vpop.f32.mrf.mxu0
  %v2959 = vadd.f32 %v1802, %v2958
  %2960 = vmatmul.f32.gmra.mxu0 %v702
  %v2961 = vpop.f32.mrf.mxu0
  %v2962 = vadd.f32 %v1805, %v2961
  %2963 = vmatmul.f32.gmra.mxu0 %v705
  %v2964 = vpop.f32.mrf.mxu0
  %v2965 = vadd.f32 %v1808, %v2964
  %2966 = vmatmul.f32.gmra.mxu0 %v708
  %v2967 = vpop.f32.mrf.mxu0
  %v2968 = vadd.f32 %v1811, %v2967
  %2969 = vmatmul.f32.gmra.mxu0 %v711
  %v2970 = vpop.f32.mrf.mxu0
  %v2971 = vadd.f32 %v1814, %v2970
  %2972 = vmatmul.f32.gmra.mxu0 %v714
  %v2973 = vpop.f32.mrf.mxu0
  %v2974 = vadd.f32 %v1817, %v2973
  %2975 = vmatmul.f32.gmra.mxu0 %v717
  %v2976 = vpop.f32.mrf.mxu0
  %v2977 = vadd.f32 %v1820, %v2976
  %2978 = vmatmul.f32.gmra.mxu0 %v720
  %v2979 = vpop.f32.mrf.mxu0
  %v2980 = vadd.f32 %v1823, %v2979
  %2981 = vmatmul.f32.gmra.mxu0 %v2639
  %v2982 = vpop.f32.mrf.mxu0
  %v2983 = vadd.f32 %v1826, %v2982
  %2984 = vmatmul.f32.gmra.mxu0 %v726
  %v2985 = vpop.f32.mrf.mxu0
  %v2986 = vadd.f32 %v1829, %v2985
  %2987 = vmatmul.f32.gmra.mxu0 %v729
  %v2988 = vpop.f32.mrf.mxu0
  %v2989 = vadd.f32 %v1832, %v2988
  %2990 = vmatmul.f32.gmra.mxu0 %v732
  %v2991 = vpop.f32.mrf.mxu0
  %v2992 = vadd.f32 %v1835, %v2991
  %2993 = vmatmul.f32.gmra.mxu0 %v735
  %v2994 = vpop.f32.mrf.mxu0
  %v2995 = vadd.f32 %v1838, %v2994
  %2996 = vmatmul.f32.gmra.mxu0 %v738
  %v2997 = vpop.f32.mrf.mxu0
  %v2998 = vadd.f32 %v1841, %v2997
  %2999 = vmatmul.f32.gmra.mxu0 %v741
  %v3000 = vpop.f32.mrf.mxu0
  %v3001 = vadd.f32 %v1844, %v3000
  %3002 = vmatmul.f32.gmra.mxu0 %v744
  %v3003 = vpop.f32.mrf.mxu0
  %v3004 = vadd.f32 %v1847, %v3003
  %3005 = vmatmul.f32.gmra.mxu0 %v747
  %v3006 = vpop.f32.mrf.mxu0
  %v3007 = vadd.f32 %v1850, %v3006
  %3008 = vmatmul.f32.gmra.mxu0 %v750
  %v3009 = vpop.f32.mrf.mxu0
  %v3010 = vadd.f32 %v1853, %v3009
  %3011 = vmatmul.f32.gmra.mxu0 %v753
  %v3012 = vpop.f32.mrf.mxu0
  %v3013 = vadd.f32 %v1856, %v3012
  %3014 = vmatmul.f32.gmra.mxu0 %v756
  %v3015 = vpop.f32.mrf.mxu0
  %v3016 = vadd.f32 %v1859, %v3015
  %3017 = vmatmul.f32.gmra.mxu0 %v759
  %v3018 = vpop.f32.mrf.mxu0
  %v3019 = vadd.f32 %v1862, %v3018
  %3020 = vmatmul.f32.gmra.mxu0 %v762
  %v3021 = vpop.f32.mrf.mxu0
  %v3022 = vadd.f32 %v1865, %v3021
  %3023 = vmatmul.f32.gmra.mxu0 %v765
  %v3024 = vpop.f32.mrf.mxu0
  %v3025 = vadd.f32 %v1868, %v3024
  %3026 = vmatmul.f32.gmra.mxu0 %v768
  %v3027 = vpop.f32.mrf.mxu0
  %v3028 = vadd.f32 %v1871, %v3027
  %3029 = vmatmul.f32.gmra.mxu0 %v771
  %v3030 = vpop.f32.mrf.mxu0
  %v3031 = vadd.f32 %v1874, %v3030
  %3032 = vmatmul.f32.gmra.mxu0 %v774
  %v3033 = vpop.f32.mrf.mxu0
  %v3034 = vadd.f32 %v1877, %v3033
  %3035 = vmatmul.f32.gmra.mxu0 %v777
  %v3036 = vpop.f32.mrf.mxu0
  %v3037 = vadd.f32 %v1880, %v3036
  %3038 = vmatmul.f32.gmra.mxu0 %v2642
  %v3039 = vpop.f32.mrf.mxu0
  %v3040 = vadd.f32 %v1883, %v3039
  %3041 = vmatmul.f32.gmra.mxu0 %v783
  %v3042 = vpop.f32.mrf.mxu0
  %v3043 = vadd.f32 %v1886, %v3042
  %3044 = vmatmul.f32.gmra.mxu0 %v786
  %v3045 = vpop.f32.mrf.mxu0
  %v3046 = vadd.f32 %v1889, %v3045
  %3047 = vmatmul.f32.gmra.mxu0 %v789
  %v3048 = vpop.f32.mrf.mxu0
  %v3049 = vadd.f32 %v1892, %v3048
  %3050 = vmatmul.f32.gmra.mxu0 %v792
  %v3051 = vpop.f32.mrf.mxu0
  %v3052 = vadd.f32 %v1895, %v3051
  %3053 = vmatmul.f32.gmra.mxu0 %v795
  %v3054 = vpop.f32.mrf.mxu0
  %v3055 = vadd.f32 %v1898, %v3054
  %3056 = vmatmul.f32.gmra.mxu0 %v798
  %v3057 = vpop.f32.mrf.mxu0
  %v3058 = vadd.f32 %v1901, %v3057
  %3059 = vmatmul.f32.gmra.mxu0 %v801
  %v3060 = vpop.f32.mrf.mxu0
  %v3061 = vadd.f32 %v1904, %v3060
  %3062 = vmatmul.f32.gmra.mxu0 %v804
  %v3063 = vpop.f32.mrf.mxu0
  %v3064 = vadd.f32 %v1907, %v3063
  %3065 = vmatmul.f32.gmra.mxu0 %v807
  %v3066 = vpop.f32.mrf.mxu0
  %v3067 = vadd.f32 %v1910, %v3066
  %3068 = vmatmul.f32.gmra.mxu0 %v810
  %v3069 = vpop.f32.mrf.mxu0
  %v3070 = vadd.f32 %v1913, %v3069
  %3071 = vmatmul.f32.gmra.mxu0 %v813
  %v3072 = vpop.f32.mrf.mxu0
  %v3073 = vadd.f32 %v1916, %v3072
  %3074 = vmatmul.f32.gmra.mxu0 %v816
  %v3075 = vpop.f32.mrf.mxu0
  %v3076 = vadd.f32 %v1919, %v3075
  %3077 = vmatmul.f32.gmra.mxu0 %v819
  %v3078 = vpop.f32.mrf.mxu0
  %v3079 = vadd.f32 %v1922, %v3078
  %3080 = vmatmul.f32.gmra.mxu0 %v822
  %v3081 = vpop.f32.mrf.mxu0
  %v3082 = vadd.f32 %v1925, %v3081
  %3083 = vmatmul.f32.gmra.mxu0 %v825
  %v3084 = vpop.f32.mrf.mxu0
  %v3085 = vadd.f32 %v1928, %v3084
  %3086 = vmatmul.f32.gmra.mxu0 %v828
  %v3087 = vpop.f32.mrf.mxu0
  %v3088 = vadd.f32 %v1931, %v3087
  %3089 = vmatmul.f32.gmra.mxu0 %v831
  %v3090 = vpop.f32.mrf.mxu0
  %v3091 = vadd.f32 %v1934, %v3090
  %3092 = vmatmul.f32.gmra.mxu0 %v834
  %v3093 = vpop.f32.mrf.mxu0
  %v3094 = vadd.f32 %v1937, %v3093
  %3095 = vmatmul.f32.gmra.mxu0 %v2645
  %v3096 = vpop.f32.mrf.mxu0
  %v3097 = vadd.f32 %v1940, %v3096
  %3098 = vmatmul.f32.gmra.mxu0 %v840
  %v3099 = vpop.f32.mrf.mxu0
  %v3100 = vadd.f32 %v1943, %v3099
  %3101 = vmatmul.f32.gmra.mxu0 %v843
  %v3102 = vpop.f32.mrf.mxu0
  %v3103 = vadd.f32 %v1946, %v3102
  %3104 = vmatmul.f32.gmra.mxu0 %v846
  %v3105 = vpop.f32.mrf.mxu0
  %v3106 = vadd.f32 %v1949, %v3105
  %3107 = vmatmul.f32.gmra.mxu0 %v849
  %v3108 = vpop.f32.mrf.mxu0
  %v3109 = vadd.f32 %v1952, %v3108
  %3110 = vmatmul.f32.gmra.mxu0 %v852
  %v3111 = vpop.f32.mrf.mxu0
  %v3112 = vadd.f32 %v1955, %v3111
  %3113 = vmatmul.f32.gmra.mxu0 %v855
  %v3114 = vpop.f32.mrf.mxu0
  %v3115 = vadd.f32 %v1958, %v3114
  %3116 = vmatmul.f32.gmra.mxu0 %v858
  %v3117 = vpop.f32.mrf.mxu0
  %v3118 = vadd.f32 %v1961, %v3117
  %3119 = vmatmul.f32.gmra.mxu0 %v861
  %v3120 = vpop.f32.mrf.mxu0
  %v3121 = vadd.f32 %v1964, %v3120
  %3122 = vmatmul.f32.gmra.mxu0 %v864
  %v3123 = vpop.f32.mrf.mxu0
  %v3124 = vadd.f32 %v1967, %v3123
  %3125 = vmatmul.f32.gmra.mxu0 %v867
  %v3126 = vpop.f32.mrf.mxu0
  %v3127 = vadd.f32 %v1970, %v3126
  %3128 = vmatmul.f32.gmra.mxu0 %v870
  %v3129 = vpop.f32.mrf.mxu0
  %v3130 = vadd.f32 %v1973, %v3129
  %3131 = vmatmul.f32.gmra.mxu0 %v873
  %v3132 = vpop.f32.mrf.mxu0
  %v3133 = vadd.f32 %v1976, %v3132
  %3134 = vmatmul.f32.gmra.mxu0 %v876
  %v3135 = vpop.f32.mrf.mxu0
  %v3136 = vadd.f32 %v1979, %v3135
  %3137 = vmatmul.f32.gmra.mxu0 %v879
  %v3138 = vpop.f32.mrf.mxu0
  %v3139 = vadd.f32 %v1982, %v3138
  %3140 = vmatmul.f32.gmra.mxu0 %v882
  %v3141 = vpop.f32.mrf.mxu0
  %v3142 = vadd.f32 %v1985, %v3141
  %3143 = vmatmul.f32.gmra.mxu0 %v885
  %v3144 = vpop.f32.mrf.mxu0
  %v3145 = vadd.f32 %v1988, %v3144
  %3146 = vmatmul.f32.gmra.mxu0 %v888
  %v3147 = vpop.f32.mrf.mxu0
  %v3148 = vadd.f32 %v1991, %v3147
  %3149 = vmatmul.f32.gmra.mxu0 %v891
  %v3150 = vpop.f32.mrf.mxu0
  %v3151 = vadd.f32 %v1994, %v3150
  %3152 = vmatmul.f32.gmra.mxu0 %v2648
  %v3153 = vpop.f32.mrf.mxu0
  %v3154 = vadd.f32 %v1997, %v3153
  %3155 = vmatmul.f32.gmra.mxu0 %v897
  %v3156 = vpop.f32.mrf.mxu0
  %v3157 = vadd.f32 %v2000, %v3156
  %3158 = vmatmul.f32.gmra.mxu0 %v900
  %v3159 = vpop.f32.mrf.mxu0
  %v3160 = vadd.f32 %v2003, %v3159
  %3161 = vmatmul.f32.gmra.mxu0 %v903
  %v3162 = vpop.f32.mrf.mxu0
  %v3163 = vadd.f32 %v2006, %v3162
  %3164 = vmatmul.f32.gmra.mxu0 %v906
  %v3165 = vpop.f32.mrf.mxu0
  %v3166 = vadd.f32 %v2009, %v3165
  %3167 = vmatmul.f32.gmra.mxu0 %v909
  %v3168 = vpop.f32.mrf.mxu0
  %v3169 = vadd.f32 %v2012, %v3168
  %3170 = vmatmul.f32.gmra.mxu0 %v912
  %v3171 = vpop.f32.mrf.mxu0
  %v3172 = vadd.f32 %v2015, %v3171
  %3173 = vmatmul.f32.gmra.mxu0 %v915
  %v3174 = vpop.f32.mrf.mxu0
  %v3175 = vadd.f32 %v2018, %v3174
  %3176 = vmatmul.f32.gmra.mxu0 %v918
  %v3177 = vpop.f32.mrf.mxu0
  %v3178 = vadd.f32 %v2021, %v3177
  %3179 = vmatmul.f32.gmra.mxu0 %v921
  %v3180 = vpop.f32.mrf.mxu0
  %v3181 = vadd.f32 %v2024, %v3180
  %3182 = vmatmul.f32.gmra.mxu0 %v924
  %v3183 = vpop.f32.mrf.mxu0
  %v3184 = vadd.f32 %v2027, %v3183
  %3185 = vmatmul.f32.gmra.mxu0 %v927
  %v3186 = vpop.f32.mrf.mxu0
  %v3187 = vadd.f32 %v2030, %v3186
  %3188 = vmatmul.f32.gmra.mxu0 %v930
  %v3189 = vpop.f32.mrf.mxu0
  %v3190 = vadd.f32 %v2033, %v3189
  %3191 = vmatmul.f32.gmra.mxu0 %v933
  %v3192 = vpop.f32.mrf.mxu0
  %v3193 = vadd.f32 %v2036, %v3192
  %3194 = vmatmul.f32.gmra.mxu0 %v936
  %v3195 = vpop.f32.mrf.mxu0
  %v3196 = vadd.f32 %v2039, %v3195
  %3197 = vmatmul.f32.gmra.mxu0 %v939
  %v3198 = vpop.f32.mrf.mxu0
  %v3199 = vadd.f32 %v2042, %v3198
  %3200 = vmatmul.f32.gmra.mxu0 %v942
  %v3201 = vpop.f32.mrf.mxu0
  %v3202 = vadd.f32 %v2045, %v3201
  %3203 = vmatmul.f32.gmra.mxu0 %v945
  %v3204 = vpop.f32.mrf.mxu0
  %v3205 = vadd.f32 %v2048, %v3204
  %3206 = vmatmul.f32.gmra.mxu0 %v948
  %v3207 = vpop.f32.mrf.mxu0
  %v3208 = vadd.f32 %v2051, %v3207
  %3209 = vmatmul.f32.gmra.mxu0 %v2651
  %v3210 = vpop.f32.mrf.mxu0
  %v3211 = vadd.f32 %v2054, %v3210
  %3212 = vmatmul.f32.gmra.mxu0 %v954
  %v3213 = vpop.f32.mrf.mxu0
  %v3214 = vadd.f32 %v2057, %v3213
  %3215 = vmatmul.f32.gmra.mxu0 %v957
  %v3216 = vpop.f32.mrf.mxu0
  %v3217 = vadd.f32 %v2060, %v3216
  %3218 = vmatmul.f32.gmra.mxu0 %v960
  %v3219 = vpop.f32.mrf.mxu0
  %v3220 = vadd.f32 %v2063, %v3219
  %3221 = vmatmul.f32.gmra.mxu0 %v963
  %v3222 = vpop.f32.mrf.mxu0
  %v3223 = vadd.f32 %v2066, %v3222
  %3224 = vmatmul.f32.gmra.mxu0 %v966
  %v3225 = vpop.f32.mrf.mxu0
  %v3226 = vadd.f32 %v2069, %v3225
  %3227 = vmatmul.f32.gmra.mxu0 %v969
  %v3228 = vpop.f32.mrf.mxu0
  %v3229 = vadd.f32 %v2072, %v3228
  %3230 = vmatmul.f32.gmra.mxu0 %v972
  %v3231 = vpop.f32.mrf.mxu0
  %v3232 = vadd.f32 %v2075, %v3231
  %3233 = vmatmul.f32.gmra.mxu0 %v975
  %v3234 = vpop.f32.mrf.mxu0
  %v3235 = vadd.f32 %v2078, %v3234
  %3236 = vmatmul.f32.gmra.mxu0 %v978
  %v3237 = vpop.f32.mrf.mxu0
  %v3238 = vadd.f32 %v2081, %v3237
  %3239 = vmatmul.f32.gmra.mxu0 %v981
  %v3240 = vpop.f32.mrf.mxu0
  %v3241 = vadd.f32 %v2084, %v3240
  %3242 = vmatmul.f32.gmra.mxu0 %v984
  %v3243 = vpop.f32.mrf.mxu0
  %v3244 = vadd.f32 %v2087, %v3243
  %3245 = vmatmul.f32.gmra.mxu0 %v987
  %v3246 = vpop.f32.mrf.mxu0
  %v3247 = vadd.f32 %v2090, %v3246
  %3248 = vmatmul.f32.gmra.mxu0 %v990
  %v3249 = vpop.f32.mrf.mxu0
  %v3250 = vadd.f32 %v2093, %v3249
  %3251 = vmatmul.f32.gmra.mxu0 %v993
  %v3252 = vpop.f32.mrf.mxu0
  %v3253 = vadd.f32 %v2096, %v3252
  %3254 = vmatmul.f32.gmra.mxu0 %v996
  %v3255 = vpop.f32.mrf.mxu0
  %v3256 = vadd.f32 %v2099, %v3255
  %3257 = vmatmul.f32.gmra.mxu0 %v999
  %v3258 = vpop.f32.mrf.mxu0
  %v3259 = vadd.f32 %v2102, %v3258
  %3260 = vmatmul.f32.gmra.mxu0 %v1002
  %v3261 = vpop.f32.mrf.mxu0
  %v3262 = vadd.f32 %v2105, %v3261
  %3263 = vmatmul.f32.gmra.mxu0 %v1005
  %v3264 = vpop.f32.mrf.mxu0
  %v3265 = vadd.f32 %v2108, %v3264
  %3266 = vmatmul.f32.gmra.mxu0 %v2654
  %v3267 = vpop.f32.mrf.mxu0
  %v3268 = vadd.f32 %v2111, %v3267
  %3269 = vmatmul.f32.gmra.mxu0 %v1011
  %v3270 = vpop.f32.mrf.mxu0
  %v3271 = vadd.f32 %v2114, %v3270
  %3272 = vmatmul.f32.gmra.mxu0 %v1014
  %v3273 = vpop.f32.mrf.mxu0
  %v3274 = vadd.f32 %v2117, %v3273
  %3275 = vmatmul.f32.gmra.mxu0 %v1017
  %v3276 = vpop.f32.mrf.mxu0
  %v3277 = vadd.f32 %v2120, %v3276
  %3278 = vmatmul.f32.gmra.mxu0 %v1020
  %v3279 = vpop.f32.mrf.mxu0
  %v3280 = vadd.f32 %v2123, %v3279
  %3281 = vmatmul.f32.gmra.mxu0 %v1023
  %v3282 = vpop.f32.mrf.mxu0
  %v3283 = vadd.f32 %v2126, %v3282
  %3284 = vmatmul.f32.gmra.mxu0 %v1026
  %v3285 = vpop.f32.mrf.mxu0
  %v3286 = vadd.f32 %v2129, %v3285
  %3287 = vmatmul.f32.gmra.mxu0 %v1029
  %v3288 = vpop.f32.mrf.mxu0
  %v3289 = vadd.f32 %v2132, %v3288
  %3290 = vmatmul.f32.gmra.mxu0 %v1032
  %v3291 = vpop.f32.mrf.mxu0
  %v3292 = vadd.f32 %v2135, %v3291
  %3293 = vmatmul.f32.gmra.mxu0 %v1035
  %v3294 = vpop.f32.mrf.mxu0
  %v3295 = vadd.f32 %v2138, %v3294
  %3296 = vmatmul.f32.gmra.mxu0 %v1038
  %v3297 = vpop.f32.mrf.mxu0
  %v3298 = vadd.f32 %v2141, %v3297
  %3299 = vmatmul.f32.gmra.mxu0 %v1041
  %v3300 = vpop.f32.mrf.mxu0
  %v3301 = vadd.f32 %v2144, %v3300
  %3302 = vmatmul.f32.gmra.mxu0 %v1044
  %v3303 = vpop.f32.mrf.mxu0
  %v3304 = vadd.f32 %v2147, %v3303
  %3305 = vmatmul.f32.gmra.mxu0 %v1047
  %v3306 = vpop.f32.mrf.mxu0
  %v3307 = vadd.f32 %v2150, %v3306
  %3308 = vmatmul.f32.gmra.mxu0 %v1050
  %v3309 = vpop.f32.mrf.mxu0
  %v3310 = vadd.f32 %v2153, %v3309
  %3311 = vmatmul.f32.gmra.mxu0 %v1053
  %v3312 = vpop.f32.mrf.mxu0
  %v3313 = vadd.f32 %v2156, %v3312
  %3314 = vmatmul.f32.gmra.mxu0 %v1056
  %v3315 = vpop.f32.mrf.mxu0
  %v3316 = vadd.f32 %v2159, %v3315
  %3317 = vmatmul.f32.gmra.mxu0 %v1059
  %v3318 = vpop.f32.mrf.mxu0
  %v3319 = vadd.f32 %v2162, %v3318
  %3320 = vmatmul.f32.gmra.mxu0 %v1062
  %v3321 = vpop.f32.mrf.mxu0
  %v3322 = vadd.f32 %v2165, %v3321
  %3323 = vmatmul.f32.gmra.mxu0 %v2657
  %v3324 = vpop.f32.mrf.mxu0
  %v3325 = vadd.f32 %v2168, %v3324
  %3326 = vmatmul.f32.gmra.mxu0 %v1068
  %v3327 = vpop.f32.mrf.mxu0
  %v3328 = vadd.f32 %v2171, %v3327
  %3329 = vmatmul.f32.gmra.mxu0 %v1071
  %v3330 = vpop.f32.mrf.mxu0
  %v3331 = vadd.f32 %v2174, %v3330
  %3332 = vmatmul.f32.gmra.mxu0 %v1074
  %v3333 = vpop.f32.mrf.mxu0
  %v3334 = vadd.f32 %v2177, %v3333
  %3335 = vmatmul.f32.gmra.mxu0 %v1077
  %v3336 = vpop.f32.mrf.mxu0
  %v3337 = vadd.f32 %v2180, %v3336
  %3338 = vmatmul.f32.gmra.mxu0 %v1080
  %v3339 = vpop.f32.mrf.mxu0
  %v3340 = vadd.f32 %v2183, %v3339
  %3341 = vmatmul.f32.gmra.mxu0 %v1083
  %v3342 = vpop.f32.mrf.mxu0
  %v3343 = vadd.f32 %v2186, %v3342
  %3344 = vmatmul.f32.gmra.mxu0 %v1086
  %v3345 = vpop.f32.mrf.mxu0
  %v3346 = vadd.f32 %v2189, %v3345
  %3347 = vmatmul.f32.gmra.mxu0 %v1089
  %v3348 = vpop.f32.mrf.mxu0
  %v3349 = vadd.f32 %v2192, %v3348
  %3350 = vmatmul.f32.gmra.mxu0 %v1092
  %v3351 = vpop.f32.mrf.mxu0
  %v3352 = vadd.f32 %v2195, %v3351
  %3353 = vmatmul.f32.gmra.mxu0 %v1095
  %v3354 = vpop.f32.mrf.mxu0
  %v3355 = vadd.f32 %v2198, %v3354
  %3356 = vmatmul.f32.gmra.mxu0 %v1098
  %v3357 = vpop.f32.mrf.mxu0
  %v3358 = vadd.f32 %v2201, %v3357
  %3359 = vmatmul.f32.gmra.mxu0 %v1101
  %v3360 = vpop.f32.mrf.mxu0
  %v3361 = vadd.f32 %v2204, %v3360
  %3362 = vmatmul.f32.gmra.mxu0 %v1104
  %v3363 = vpop.f32.mrf.mxu0
  %v3364 = vadd.f32 %v2207, %v3363
  %3365 = vmatmul.f32.gmra.mxu0 %v1107
  %v3366 = vpop.f32.mrf.mxu0
  %v3367 = vadd.f32 %v2210, %v3366
  %3368 = vmatmul.f32.gmra.mxu0 %v1110
  %v3369 = vpop.f32.mrf.mxu0
  %v3370 = vadd.f32 %v2213, %v3369
  %3371 = vmatmul.f32.gmra.mxu0 %v1113
  %v3372 = vpop.f32.mrf.mxu0
  %v3373 = vadd.f32 %v2216, %v3372
  %3374 = vmatmul.f32.gmra.mxu0 %v1116
  %v3375 = vpop.f32.mrf.mxu0
  %v3376 = vadd.f32 %v2219, %v3375
  %3377 = vmatmul.f32.gmra.mxu0 %v1119
  %v3378 = vpop.f32.mrf.mxu0
  %v3379 = vadd.f32 %v2222, %v3378
  %3380 = vmatmul.f32.gmra.mxu0 %v2660
  %v3381 = vpop.f32.mrf.mxu0
  %v3382 = vadd.f32 %v2225, %v3381
  %3383 = vmatmul.f32.gmra.mxu0 %v1125
  %v3384 = vpop.f32.mrf.mxu0
  %v3385 = vadd.f32 %v2228, %v3384
  %3386 = vmatmul.f32.gmra.mxu0 %v1128
  %v3387 = vpop.f32.mrf.mxu0
  %v3388 = vadd.f32 %v2231, %v3387
  %3389 = vmatmul.f32.gmra.mxu0 %v1131
  %v3390 = vpop.f32.mrf.mxu0
  %v3391 = vadd.f32 %v2234, %v3390
  %3392 = vmatmul.f32.gmra.mxu0 %v1134
  %v3393 = vpop.f32.mrf.mxu0
  %v3394 = vadd.f32 %v2237, %v3393
  %3395 = vmatmul.f32.gmra.mxu0 %v1137
  %v3396 = vpop.f32.mrf.mxu0
  %v3397 = vadd.f32 %v2240, %v3396
  %3398 = vmatmul.f32.gmra.mxu0 %v1140
  %v3399 = vpop.f32.mrf.mxu0
  %v3400 = vadd.f32 %v2243, %v3399
  %3401 = vmatmul.f32.gmra.mxu0 %v1143
  %v3402 = vpop.f32.mrf.mxu0
  %v3403 = vadd.f32 %v2246, %v3402
  %3404 = vmatmul.f32.gmra.mxu0 %v1146
  %v3405 = vpop.f32.mrf.mxu0
  %v3406 = vadd.f32 %v2249, %v3405
  %3407 = vmatmul.f32.gmra.mxu0 %v1149
  %v3408 = vpop.f32.mrf.mxu0
  %v3409 = vadd.f32 %v2252, %v3408
  %3410 = vmatmul.f32.gmra.mxu0 %v1152
  %v3411 = vpop.f32.mrf.mxu0
  %v3412 = vadd.f32 %v2255, %v3411
  %3413 = vmatmul.f32.gmra.mxu0 %v1155
  %v3414 = vpop.f32.mrf.mxu0
  %v3415 = vadd.f32 %v2258, %v3414
  %3416 = vmatmul.f32.gmra.mxu0 %v1158
  %v3417 = vpop.f32.mrf.mxu0
  %v3418 = vadd.f32 %v2261, %v3417
  %3419 = vmatmul.f32.gmra.mxu0 %v1161
  %v3420 = vpop.f32.mrf.mxu0
  %v3421 = vadd.f32 %v2264, %v3420
  %3422 = vmatmul.f32.gmra.mxu0 %v1164
  %v3423 = vpop.f32.mrf.mxu0
  %v3424 = vadd.f32 %v2267, %v3423
  %3425 = vmatmul.f32.gmra.mxu0 %v1167
  %v3426 = vpop.f32.mrf.mxu0
  %v3427 = vadd.f32 %v2270, %v3426
  %3428 = vmatmul.f32.gmra.mxu0 %v1170
  %v3429 = vpop.f32.mrf.mxu0
  %v3430 = vadd.f32 %v2273, %v3429
  %3431 = vmatmul.f32.gmra.mxu0 %v1173
  %v3432 = vpop.f32.mrf.mxu0
  %v3433 = vadd.f32 %v2276, %v3432
  %3434 = vmatmul.f32.gmra.mxu0 %v1176
  %v3435 = vpop.f32.mrf.mxu0
  %v3436 = vadd.f32 %v2279, %v3435
  %3437 = vmatmul.f32.gmra.mxu0 %v2663
  %v3438 = vpop.f32.mrf.mxu0
  %v3439 = vadd.f32 %v2282, %v3438
  %3440 = vmatmul.f32.gmra.mxu0 %v1182
  %v3441 = vpop.f32.mrf.mxu0
  %v3442 = vadd.f32 %v2285, %v3441
  %3443 = vmatmul.f32.gmra.mxu0 %v1185
  %v3444 = vpop.f32.mrf.mxu0
  %v3445 = vadd.f32 %v2288, %v3444
  %3446 = vmatmul.f32.gmra.mxu0 %v1188
  %v3447 = vpop.f32.mrf.mxu0
  %v3448 = vadd.f32 %v2291, %v3447
  %3449 = vmatmul.f32.gmra.mxu0 %v1191
  %v3450 = vpop.f32.mrf.mxu0
  %v3451 = vadd.f32 %v2294, %v3450
  %3452 = vmatmul.f32.gmra.mxu0 %v1194
  %v3453 = vpop.f32.mrf.mxu0
  %v3454 = vadd.f32 %v2297, %v3453
  %3455 = vmatmul.f32.gmra.mxu0 %v1197
  %v3456 = vpop.f32.mrf.mxu0
  %v3457 = vadd.f32 %v2300, %v3456
  %3458 = vmatmul.f32.gmra.mxu0 %v1200
  %v3459 = vpop.f32.mrf.mxu0
  %v3460 = vadd.f32 %v2303, %v3459
  %3461 = vmatmul.f32.gmra.mxu0 %v1203
  %v3462 = vpop.f32.mrf.mxu0
  %v3463 = vadd.f32 %v2306, %v3462
  %3464 = vmatmul.f32.gmra.mxu0 %v1206
  %v3465 = vpop.f32.mrf.mxu0
  %v3466 = vadd.f32 %v2309, %v3465
  %3467 = vmatmul.f32.gmra.mxu0 %v1209
  %v3468 = vpop.f32.mrf.mxu0
  %v3469 = vadd.f32 %v2312, %v3468
  %3470 = vmatmul.f32.gmra.mxu0 %v1212
  %v3471 = vpop.f32.mrf.mxu0
  %v3472 = vadd.f32 %v2315, %v3471
  %3473 = vmatmul.f32.gmra.mxu0 %v1215
  %v3474 = vpop.f32.mrf.mxu0
  %v3475 = vadd.f32 %v2318, %v3474
  %3476 = vmatmul.f32.gmra.mxu0 %v1218
  %v3477 = vpop.f32.mrf.mxu0
  %v3478 = vadd.f32 %v2321, %v3477
  %3479 = vmatmul.f32.gmra.mxu0 %v1221
  %v3480 = vpop.f32.mrf.mxu0
  %v3481 = vadd.f32 %v2324, %v3480
  %3482 = vmatmul.f32.gmra.mxu0 %v1224
  %v3483 = vpop.f32.mrf.mxu0
  %v3484 = vadd.f32 %v2327, %v3483
  %3485 = vmatmul.f32.gmra.mxu0 %v1227
  %v3486 = vpop.f32.mrf.mxu0
  %v3487 = vadd.f32 %v2330, %v3486
  %3488 = vmatmul.f32.gmra.mxu0 %v1230
  %v3489 = vpop.f32.mrf.mxu0
  %v3490 = vadd.f32 %v2333, %v3489
  %3491 = vmatmul.f32.gmra.mxu0 %v1233
  %v3492 = vpop.f32.mrf.mxu0
  %v3493 = vadd.f32 %v2336, %v3492
  %3494 = vmatmul.f32.gmra.mxu0 %v2666
  %v3495 = vpop.f32.mrf.mxu0
  %v3496 = vadd.f32 %v2339, %v3495
  %3497 = vmatmul.f32.gmra.mxu0 %v1239
  %v3498 = vpop.f32.mrf.mxu0
  %v3499 = vadd.f32 %v2342, %v3498
  %3500 = vmatmul.f32.gmra.mxu0 %v1242
  %v3501 = vpop.f32.mrf.mxu0
  %v3502 = vadd.f32 %v2345, %v3501
  %3503 = vmatmul.f32.gmra.mxu0 %v1245
  %v3504 = vpop.f32.mrf.mxu0
  %v3505 = vadd.f32 %v2348, %v3504
  %3506 = vmatmul.f32.gmra.mxu0 %v1248
  %v3507 = vpop.f32.mrf.mxu0
  %v3508 = vadd.f32 %v2351, %v3507
  %3509 = vmatmul.f32.gmra.mxu0 %v1251
  %v3510 = vpop.f32.mrf.mxu0
  %v3511 = vadd.f32 %v2354, %v3510
  %3512 = vmatmul.f32.gmra.mxu0 %v1254
  %v3513 = vpop.f32.mrf.mxu0
  %v3514 = vadd.f32 %v2357, %v3513
  %3515 = vmatmul.f32.gmra.mxu0 %v1257
  %v3516 = vpop.f32.mrf.mxu0
  %v3517 = vadd.f32 %v2360, %v3516
  %3518 = vmatmul.f32.gmra.mxu0 %v1260
  %v3519 = vpop.f32.mrf.mxu0
  %v3520 = vadd.f32 %v2363, %v3519
  %3521 = vmatmul.f32.gmra.mxu0 %v1263
  %v3522 = vpop.f32.mrf.mxu0
  %v3523 = vadd.f32 %v2366, %v3522
  %3524 = vmatmul.f32.gmra.mxu0 %v1266
  %v3525 = vpop.f32.mrf.mxu0
  %v3526 = vadd.f32 %v2369, %v3525
  %3527 = vmatmul.f32.gmra.mxu0 %v1269
  %v3528 = vpop.f32.mrf.mxu0
  %v3529 = vadd.f32 %v2372, %v3528
  %3530 = vmatmul.f32.gmra.mxu0 %v1272
  %v3531 = vpop.f32.mrf.mxu0
  %v3532 = vadd.f32 %v2375, %v3531
  %3533 = vmatmul.f32.gmra.mxu0 %v1275
  %v3534 = vpop.f32.mrf.mxu0
  %v3535 = vadd.f32 %v2378, %v3534
  %3536 = vmatmul.f32.gmra.mxu0 %v1278
  %v3537 = vpop.f32.mrf.mxu0
  %v3538 = vadd.f32 %v2381, %v3537
  %3539 = vmatmul.f32.gmra.mxu0 %v1281
  %v3540 = vpop.f32.mrf.mxu0
  %v3541 = vadd.f32 %v2384, %v3540
  %3542 = vmatmul.f32.gmra.mxu0 %v1284
  %v3543 = vpop.f32.mrf.mxu0
  %v3544 = vadd.f32 %v2387, %v3543
  %3545 = vmatmul.f32.gmra.mxu0 %v1287
  %v3546 = vpop.f32.mrf.mxu0
  %v3547 = vadd.f32 %v2390, %v3546
  %3548 = vmatmul.f32.gmra.mxu0 %v1290
  %v3549 = vpop.f32.mrf.mxu0
  %v3550 = vadd.f32 %v2393, %v3549
  %3551 = vmatmul.f32.gmra.mxu0 %v2669
  %v3552 = vpop.f32.mrf.mxu0
  %v3553 = vadd.f32 %v2396, %v3552
  %3554 = vmatmul.f32.gmra.mxu0 %v1296
  %v3555 = vpop.f32.mrf.mxu0
  %v3556 = vadd.f32 %v2399, %v3555
  %3557 = vmatmul.f32.gmra.mxu0 %v1299
  %v3558 = vpop.f32.mrf.mxu0
  %v3559 = vadd.f32 %v2402, %v3558
  %3560 = vmatmul.f32.gmra.mxu0 %v1302
  %v3561 = vpop.f32.mrf.mxu0
  %v3562 = vadd.f32 %v2405, %v3561
  %3563 = vmatmul.f32.gmra.mxu0 %v1305
  %v3564 = vpop.f32.mrf.mxu0
  %v3565 = vadd.f32 %v2408, %v3564
  %3566 = vmatmul.f32.gmra.mxu0 %v1308
  %v3567 = vpop.f32.mrf.mxu0
  %v3568 = vadd.f32 %v2411, %v3567
  %3569 = vmatmul.f32.gmra.mxu0 %v1311
  %v3570 = vpop.f32.mrf.mxu0
  %v3571 = vadd.f32 %v2414, %v3570
  %3572 = vmatmul.f32.gmra.mxu0 %v1314
  %v3573 = vpop.f32.mrf.mxu0
  %v3574 = vadd.f32 %v2417, %v3573
  %3575 = vmatmul.f32.gmra.mxu0 %v1317
  %v3576 = vpop.f32.mrf.mxu0
  %v3577 = vadd.f32 %v2420, %v3576
  %3578 = vmatmul.f32.gmra.mxu0 %v1320
  %v3579 = vpop.f32.mrf.mxu0
  %v3580 = vadd.f32 %v2423, %v3579
  %3581 = vmatmul.f32.gmra.mxu0 %v1323
  %v3582 = vpop.f32.mrf.mxu0
  %v3583 = vadd.f32 %v2426, %v3582
  %3584 = vmatmul.f32.gmra.mxu0 %v1326
  %v3585 = vpop.f32.mrf.mxu0
  %v3586 = vadd.f32 %v2429, %v3585
  %3587 = vmatmul.f32.gmra.mxu0 %v1329
  %v3588 = vpop.f32.mrf.mxu0
  %v3589 = vadd.f32 %v2432, %v3588
  %3590 = vmatmul.f32.gmra.mxu0 %v1332
  %v3591 = vpop.f32.mrf.mxu0
  %v3592 = vadd.f32 %v2435, %v3591
  %3593 = vmatmul.f32.gmra.mxu0 %v1335
  %v3594 = vpop.f32.mrf.mxu0
  %v3595 = vadd.f32 %v2438, %v3594
  %3596 = vmatmul.f32.gmra.mxu0 %v1338
  %v3597 = vpop.f32.mrf.mxu0
  %v3598 = vadd.f32 %v2441, %v3597
  %3599 = vmatmul.f32.gmra.mxu0 %v1341
  %v3600 = vpop.f32.mrf.mxu0
  %v3601 = vadd.f32 %v2444, %v3600
  %3602 = vmatmul.f32.gmra.mxu0 %v1344
  %v3603 = vpop.f32.mrf.mxu0
  %v3604 = vadd.f32 %v2447, %v3603
  %3605 = vmatmul.f32.gmra.mxu0 %v1347
  %v3606 = vpop.f32.mrf.mxu0
  %v3607 = vadd.f32 %v2450, %v3606
  %3608 = vmatmul.f32.gmra.mxu0 %v2672
  %v3609 = vpop.f32.mrf.mxu0
  %v3610 = vadd.f32 %v2453, %v3609
  %3611 = vmatmul.f32.gmra.mxu0 %v1353
  %v3612 = vpop.f32.mrf.mxu0
  %v3613 = vadd.f32 %v2456, %v3612
  %3614 = vmatmul.f32.gmra.mxu0 %v1356
  %v3615 = vpop.f32.mrf.mxu0
  %v3616 = vadd.f32 %v2459, %v3615
  %3617 = vmatmul.f32.gmra.mxu0 %v1359
  %v3618 = vpop.f32.mrf.mxu0
  %v3619 = vadd.f32 %v2462, %v3618
  %3620 = vmatmul.f32.gmra.mxu0 %v1362
  %v3621 = vpop.f32.mrf.mxu0
  %v3622 = vadd.f32 %v2465, %v3621
  %3623 = vmatmul.f32.gmra.mxu0 %v1365
  %v3624 = vpop.f32.mrf.mxu0
  %v3625 = vadd.f32 %v2468, %v3624
  %3626 = vmatmul.f32.gmra.mxu0 %v1368
  %v3627 = vpop.f32.mrf.mxu0
  %v3628 = vadd.f32 %v2471, %v3627
  %3629 = vmatmul.f32.gmra.mxu0 %v1371
  %v3630 = vpop.f32.mrf.mxu0
  %v3631 = vadd.f32 %v2474, %v3630
  %3632 = vmatmul.f32.gmra.mxu0 %v1374
  %v3633 = vpop.f32.mrf.mxu0
  %v3634 = vadd.f32 %v2477, %v3633
  %3635 = vmatmul.f32.gmra.mxu0 %v1377
  %v3636 = vpop.f32.mrf.mxu0
  %v3637 = vadd.f32 %v2480, %v3636
  %3638 = vmatmul.f32.gmra.mxu0 %v1380
  %v3639 = vpop.f32.mrf.mxu0
  %v3640 = vadd.f32 %v2483, %v3639
  %3641 = vmatmul.f32.gmra.mxu0 %v1383
  %v3642 = vpop.f32.mrf.mxu0
  %v3643 = vadd.f32 %v2486, %v3642
  %3644 = vmatmul.f32.gmra.mxu0 %v1386
  %v3645 = vpop.f32.mrf.mxu0
  %v3646 = vadd.f32 %v2489, %v3645
  %3647 = vmatmul.f32.gmra.mxu0 %v1389
  %v3648 = vpop.f32.mrf.mxu0
  %v3649 = vadd.f32 %v2492, %v3648
  %3650 = vmatmul.f32.gmra.mxu0 %v1392
  %v3651 = vpop.f32.mrf.mxu0
  %v3652 = vadd.f32 %v2495, %v3651
  %3653 = vmatmul.f32.gmra.mxu0 %v1395
  %v3654 = vpop.f32.mrf.mxu0
  %v3655 = vadd.f32 %v2498, %v3654
  %3656 = vmatmul.f32.gmra.mxu0 %v1398
  %v3657 = vpop.f32.mrf.mxu0
  %v3658 = vadd.f32 %v2501, %v3657
  %3659 = vmatmul.f32.gmra.mxu0 %v1401
  %v3660 = vpop.f32.mrf.mxu0
  %v3661 = vadd.f32 %v2504, %v3660
  %3662 = vmatmul.f32.gmra.mxu0 %v1404
  %v3663 = vpop.f32.mrf.mxu0
  %v3664 = vadd.f32 %v2507, %v3663
  %3665 = vmatmul.f32.gmra.mxu0 %v2675
  %v3666 = vpop.f32.mrf.mxu0
  %v3667 = vadd.f32 %v2510, %v3666
  %3668 = vmatmul.f32.gmra.mxu0 %v1410
  %v3669 = vpop.f32.mrf.mxu0
  %v3670 = vadd.f32 %v2513, %v3669
  %3671 = vmatmul.f32.gmra.mxu0 %v1413
  %v3672 = vpop.f32.mrf.mxu0
  %v3673 = vadd.f32 %v2516, %v3672
  %3674 = vmatmul.f32.gmra.mxu0 %v1416
  %v3675 = vpop.f32.mrf.mxu0
  %v3676 = vadd.f32 %v2519, %v3675
  %3677 = vmatmul.f32.gmra.mxu0 %v1419
  %v3678 = vpop.f32.mrf.mxu0
  %v3679 = vadd.f32 %v2522, %v3678
  %3680 = vmatmul.f32.gmra.mxu0 %v1422
  %v3681 = vpop.f32.mrf.mxu0
  %v3682 = vadd.f32 %v2525, %v3681
  %3683 = vmatmul.f32.gmra.mxu0 %v1425
  %v3684 = vpop.f32.mrf.mxu0
  %v3685 = vadd.f32 %v2528, %v3684
  %3686 = vmatmul.f32.gmra.mxu0 %v1428
  %v3687 = vpop.f32.mrf.mxu0
  %v3688 = vadd.f32 %v2531, %v3687
  %3689 = vmatmul.f32.gmra.mxu0 %v1431
  %v3690 = vpop.f32.mrf.mxu0
  %v3691 = vadd.f32 %v2534, %v3690
  %3692 = vmatmul.f32.gmra.mxu0 %v1434
  %v3693 = vpop.f32.mrf.mxu0
  %v3694 = vadd.f32 %v2537, %v3693
  %3695 = vmatmul.f32.gmra.mxu0 %v1437
  %v3696 = vpop.f32.mrf.mxu0
  %v3697 = vadd.f32 %v2540, %v3696
  %3698 = vmatmul.f32.gmra.mxu0 %v1440
  %v3699 = vpop.f32.mrf.mxu0
  %v3700 = vadd.f32 %v2543, %v3699
  %3701 = vmatmul.f32.gmra.mxu0 %v1443
  %v3702 = vpop.f32.mrf.mxu0
  %v3703 = vadd.f32 %v2546, %v3702
  %3704 = vmatmul.f32.gmra.mxu0 %v1446
  %v3705 = vpop.f32.mrf.mxu0
  %v3706 = vadd.f32 %v2549, %v3705
  %3707 = vmatmul.f32.gmra.mxu0 %v1449
  %v3708 = vpop.f32.mrf.mxu0
  %v3709 = vadd.f32 %v2552, %v3708
  %3710 = vmatmul.f32.gmra.mxu0 %v1452
  %v3711 = vpop.f32.mrf.mxu0
  %v3712 = vadd.f32 %v2555, %v3711
  %3713 = vmatmul.f32.gmra.mxu0 %v1455
  %v3714 = vpop.f32.mrf.mxu0
  %v3715 = vadd.f32 %v2558, %v3714
  %3716 = vmatmul.f32.gmra.mxu0 %v1458
  %v3717 = vpop.f32.mrf.mxu0
  %v3718 = vadd.f32 %v2561, %v3717
  %3719 = vmatmul.f32.gmra.mxu0 %v1461
  %v3720 = vpop.f32.mrf.mxu0
  %v3721 = vadd.f32 %v2564, %v3720
  %3722 = vmatmul.f32.gmra.mxu0 %v2678
  %v3723 = vpop.f32.mrf.mxu0
  %v3724 = vadd.f32 %v2567, %v3723
  %3725 = vmatmul.f32.gmra.mxu0 %v1467
  %v3726 = vpop.f32.mrf.mxu0
  %v3727 = vadd.f32 %v2570, %v3726
  %3728 = vmatmul.f32.gmra.mxu0 %v1470
  %v3729 = vpop.f32.mrf.mxu0
  %v3730 = vadd.f32 %v2573, %v3729
  %3731 = vmatmul.f32.gmra.mxu0 %v1473
  %v3732 = vpop.f32.mrf.mxu0
  %v3733 = vadd.f32 %v2576, %v3732
  %3734 = vmatmul.f32.gmra.mxu0 %v1476
  %v3735 = vpop.f32.mrf.mxu0
  %v3736 = vadd.f32 %v2579, %v3735
  %3737 = vmatmul.f32.gmra.mxu0 %v1479
  %v3738 = vpop.f32.mrf.mxu0
  %v3739 = vadd.f32 %v2582, %v3738
  %3740 = vmatmul.f32.gmra.mxu0 %v1482
  %v3741 = vpop.f32.mrf.mxu0
  %v3742 = vadd.f32 %v2585, %v3741
  %3743 = vmatmul.f32.gmra.mxu0 %v1485
  %v3744 = vpop.f32.mrf.mxu0
  %v3745 = vadd.f32 %v2588, %v3744
  %3746 = vmatmul.f32.gmra.mxu0 %v1488
  %v3747 = vpop.f32.mrf.mxu0
  %v3748 = vadd.f32 %v2591, %v3747
  %3749 = vmatmul.f32.gmra.mxu0 %v1491
  %v3750 = vpop.f32.mrf.mxu0
  %v3751 = vadd.f32 %v2594, %v3750
  %3752 = vmatmul.f32.gmra.mxu0 %v1494
  %v3753 = vpop.f32.mrf.mxu0
  %v3754 = vadd.f32 %v2597, %v3753
  %3755 = vmatmul.f32.gmra.mxu0 %v1497
  %v3756 = vpop.f32.mrf.mxu0
  %v3757 = vadd.f32 %v2600, %v3756
  %3758 = vmatmul.f32.gmra.mxu0 %v1500
  %v3759 = vpop.f32.mrf.mxu0
  %v3760 = vadd.f32 %v2603, %v3759
  %3761 = vmatmul.f32.gmra.mxu0 %v1503
  %v3762 = vpop.f32.mrf.mxu0
  %v3763 = vadd.f32 %v2606, %v3762
  %3764 = vmatmul.f32.gmra.mxu0 %v1506
  %v3765 = vpop.f32.mrf.mxu0
  %v3766 = vadd.f32 %v2609, %v3765
  %3767 = vmatmul.f32.gmra.mxu0 %v1509
  %v3768 = vpop.f32.mrf.mxu0
  %v3769 = vadd.f32 %v2612, %v3768
  %3770 = vmatmul.f32.gmra.mxu0 %v1512
  %v3771 = vpop.f32.mrf.mxu0
  %v3772 = vadd.f32 %v2615, %v3771
  %3773 = vmatmul.f32.gmra.mxu0 %v1515
  %v3774 = vpop.f32.mrf.mxu0
  %v3775 = vadd.f32 %v2618, %v3774
  %3776 = vmatmul.f32.gmra.mxu0 %v1518
  %v3777 = vpop.f32.mrf.mxu0
  %v3778 = vadd.f32 %v2621, %v3777
  %3779 = vdwg.mxu0
  %s3780 = scalar_lea.vmem %s1, 32
  %v3781 = vld [vmem:[%s3780] sm:$0xff]
  %v3782 = vld [vmem:[%s3780 + $0x8] sm:$0xff]
  %v3784 = vsel %vm439, %v414, 0
  %v3787 = vsel %vm439, %v415, 0
  %v3790 = vsel %vm439, %v416, 0
  %v3793 = vsel %vm439, %v417, 0
  %v3796 = vsel %vm439, %v418, 0
  %v3799 = vsel %vm439, %v419, 0
  %v3802 = vsel %vm439, %v420, 0
  %v3805 = vsel %vm439, %v421, 0
  %v3808 = vsel %vm439, %v422, 0
  %v3811 = vsel %vm439, %v423, 0
  %v3814 = vsel %vm439, %v424, 0
  %v3817 = vsel %vm439, %v425, 0
  %v3820 = vsel %vm439, %v426, 0
  %v3823 = vsel %vm439, %v427, 0
  %v3826 = vsel %vm439, %v428, 0
  %v3829 = vsel %vm439, %v429, 0
  %v3832 = vsel %vm439, %v430, 0
  %v3835 = vsel %vm439, %v431, 0
  %v3838 = vsel %vm439, %v432, 0
  %3840 = vmatpush.msra.mxu0 0.0
  %3841 = vmatpush.msra.mxu0 0.0
  %3842 = vmatpush.msra.mxu0 0.0
  %3843 = vmatpush.msra.mxu0 0.0
  %3844 = vmatpush.msra.mxu0 0.0
  %3845 = vmatpush.msra.mxu0 0.0
  %3846 = vmatpush.msra.mxu0 0.0
  %3847 = vmatpush.msra.mxu0 0.0
  %3848 = vmatpush.msra.mxu0 0.0
  %3849 = vmatpush.msra.mxu0 0.0
  %3850 = vmatpush.msra.mxu0 0.0
  %3851 = vmatpush.msra.mxu0 0.0
  %3852 = vmatpush.msra.mxu0 0.0
  %3853 = vmatpush.msra.mxu0 0.0
  %3854 = vmatpush.msra.mxu0 %v3782
  %3855 = vmatpush.msra.mxu0 %v3781
  %3856 = vmatmul.f32.gmra.mxu0 %v2627
  %v3857 = vpop.f32.mrf.mxu0
  %v3858 = vadd.f32 0.0, %v3857
  %3859 = vmatmul.f32.gmra.mxu0 %v498
  %v3860 = vpop.f32.mrf.mxu0
  %v3861 = vadd.f32 0.0, %v3860
  %3862 = vmatmul.f32.gmra.mxu0 %v501
  %v3863 = vpop.f32.mrf.mxu0
  %v3864 = vadd.f32 0.0, %v3863
  %3865 = vmatmul.f32.gmra.mxu0 %v504
  %v3866 = vpop.f32.mrf.mxu0
  %v3867 = vadd.f32 0.0, %v3866
  %3868 = vmatmul.f32.gmra.mxu0 %v507
  %v3869 = vpop.f32.mrf.mxu0
  %v3870 = vadd.f32 0.0, %v3869
  %3871 = vmatmul.f32.gmra.mxu0 %v510
  %v3872 = vpop.f32.mrf.mxu0
  %v3873 = vadd.f32 0.0, %v3872
  %3874 = vmatmul.f32.gmra.mxu0 %v513
  %v3875 = vpop.f32.mrf.mxu0
  %v3876 = vadd.f32 0.0, %v3875
  %3877 = vmatmul.f32.gmra.mxu0 %v516
  %v3878 = vpop.f32.mrf.mxu0
  %v3879 = vadd.f32 0.0, %v3878
  %3880 = vmatmul.f32.gmra.mxu0 %v519
  %v3881 = vpop.f32.mrf.mxu0
  %v3882 = vadd.f32 0.0, %v3881
  %3883 = vmatmul.f32.gmra.mxu0 %v522
  %v3884 = vpop.f32.mrf.mxu0
  %v3885 = vadd.f32 0.0, %v3884
  %3886 = vmatmul.f32.gmra.mxu0 %v525
  %v3887 = vpop.f32.mrf.mxu0
  %v3888 = vadd.f32 0.0, %v3887
  %3889 = vmatmul.f32.gmra.mxu0 %v528
  %v3890 = vpop.f32.mrf.mxu0
  %v3891 = vadd.f32 0.0, %v3890
  %3892 = vmatmul.f32.gmra.mxu0 %v531
  %v3893 = vpop.f32.mrf.mxu0
  %v3894 = vadd.f32 0.0, %v3893
  %3895 = vmatmul.f32.gmra.mxu0 %v534
  %v3896 = vpop.f32.mrf.mxu0
  %v3897 = vadd.f32 0.0, %v3896
  %3898 = vmatmul.f32.gmra.mxu0 %v537
  %v3899 = vpop.f32.mrf.mxu0
  %v3900 = vadd.f32 0.0, %v3899
  %3901 = vmatmul.f32.gmra.mxu0 %v540
  %v3902 = vpop.f32.mrf.mxu0
  %v3903 = vadd.f32 0.0, %v3902
  %3904 = vmatmul.f32.gmra.mxu0 %v543
  %v3905 = vpop.f32.mrf.mxu0
  %v3906 = vadd.f32 0.0, %v3905
  %3907 = vmatmul.f32.gmra.mxu0 %v546
  %v3908 = vpop.f32.mrf.mxu0
  %v3909 = vadd.f32 0.0, %v3908
  %3910 = vmatmul.f32.gmra.mxu0 %v549
  %v3911 = vpop.f32.mrf.mxu0
  %v3912 = vadd.f32 0.0, %v3911
  %3913 = vmatmul.f32.gmra.mxu0 %v2630
  %v3914 = vpop.f32.mrf.mxu0
  %v3915 = vadd.f32 0.0, %v3914
  %3916 = vmatmul.f32.gmra.mxu0 %v555
  %v3917 = vpop.f32.mrf.mxu0
  %v3918 = vadd.f32 0.0, %v3917
  %3919 = vmatmul.f32.gmra.mxu0 %v558
  %v3920 = vpop.f32.mrf.mxu0
  %v3921 = vadd.f32 0.0, %v3920
  %3922 = vmatmul.f32.gmra.mxu0 %v561
  %v3923 = vpop.f32.mrf.mxu0
  %v3924 = vadd.f32 0.0, %v3923
  %3925 = vmatmul.f32.gmra.mxu0 %v564
  %v3926 = vpop.f32.mrf.mxu0
  %v3927 = vadd.f32 0.0, %v3926
  %3928 = vmatmul.f32.gmra.mxu0 %v567
  %v3929 = vpop.f32.mrf.mxu0
  %v3930 = vadd.f32 0.0, %v3929
  %3931 = vmatmul.f32.gmra.mxu0 %v570
  %v3932 = vpop.f32.mrf.mxu0
  %v3933 = vadd.f32 0.0, %v3932
  %3934 = vmatmul.f32.gmra.mxu0 %v573
  %v3935 = vpop.f32.mrf.mxu0
  %v3936 = vadd.f32 0.0, %v3935
  %3937 = vmatmul.f32.gmra.mxu0 %v576
  %v3938 = vpop.f32.mrf.mxu0
  %v3939 = vadd.f32 0.0, %v3938
  %3940 = vmatmul.f32.gmra.mxu0 %v579
  %v3941 = vpop.f32.mrf.mxu0
  %v3942 = vadd.f32 0.0, %v3941
  %3943 = vmatmul.f32.gmra.mxu0 %v582
  %v3944 = vpop.f32.mrf.mxu0
  %v3945 = vadd.f32 0.0, %v3944
  %3946 = vmatmul.f32.gmra.mxu0 %v585
  %v3947 = vpop.f32.mrf.mxu0
  %v3948 = vadd.f32 0.0, %v3947
  %3949 = vmatmul.f32.gmra.mxu0 %v588
  %v3950 = vpop.f32.mrf.mxu0
  %v3951 = vadd.f32 0.0, %v3950
  %3952 = vmatmul.f32.gmra.mxu0 %v591
  %v3953 = vpop.f32.mrf.mxu0
  %v3954 = vadd.f32 0.0, %v3953
  %3955 = vmatmul.f32.gmra.mxu0 %v594
  %v3956 = vpop.f32.mrf.mxu0
  %v3957 = vadd.f32 0.0, %v3956
  %3958 = vmatmul.f32.gmra.mxu0 %v597
  %v3959 = vpop.f32.mrf.mxu0
  %v3960 = vadd.f32 0.0, %v3959
  %3961 = vmatmul.f32.gmra.mxu0 %v600
  %v3962 = vpop.f32.mrf.mxu0
  %v3963 = vadd.f32 0.0, %v3962
  %3964 = vmatmul.f32.gmra.mxu0 %v603
  %v3965 = vpop.f32.mrf.mxu0
  %v3966 = vadd.f32 0.0, %v3965
  %3967 = vmatmul.f32.gmra.mxu0 %v606
  %v3968 = vpop.f32.mrf.mxu0
  %v3969 = vadd.f32 0.0, %v3968
  %3970 = vmatmul.f32.gmra.mxu0 %v2633
  %v3971 = vpop.f32.mrf.mxu0
  %v3972 = vadd.f32 0.0, %v3971
  %3973 = vmatmul.f32.gmra.mxu0 %v612
  %v3974 = vpop.f32.mrf.mxu0
  %v3975 = vadd.f32 0.0, %v3974
  %3976 = vmatmul.f32.gmra.mxu0 %v615
  %v3977 = vpop.f32.mrf.mxu0
  %v3978 = vadd.f32 0.0, %v3977
  %3979 = vmatmul.f32.gmra.mxu0 %v618
  %v3980 = vpop.f32.mrf.mxu0
  %v3981 = vadd.f32 0.0, %v3980
  %3982 = vmatmul.f32.gmra.mxu0 %v621
  %v3983 = vpop.f32.mrf.mxu0
  %v3984 = vadd.f32 0.0, %v3983
  %3985 = vmatmul.f32.gmra.mxu0 %v624
  %v3986 = vpop.f32.mrf.mxu0
  %v3987 = vadd.f32 0.0, %v3986
  %3988 = vmatmul.f32.gmra.mxu0 %v627
  %v3989 = vpop.f32.mrf.mxu0
  %v3990 = vadd.f32 0.0, %v3989
  %3991 = vmatmul.f32.gmra.mxu0 %v630
  %v3992 = vpop.f32.mrf.mxu0
  %v3993 = vadd.f32 0.0, %v3992
  %3994 = vmatmul.f32.gmra.mxu0 %v633
  %v3995 = vpop.f32.mrf.mxu0
  %v3996 = vadd.f32 0.0, %v3995
  %3997 = vmatmul.f32.gmra.mxu0 %v636
  %v3998 = vpop.f32.mrf.mxu0
  %v3999 = vadd.f32 0.0, %v3998
  %4000 = vmatmul.f32.gmra.mxu0 %v639
  %v4001 = vpop.f32.mrf.mxu0
  %v4002 = vadd.f32 0.0, %v4001
  %4003 = vmatmul.f32.gmra.mxu0 %v642
  %v4004 = vpop.f32.mrf.mxu0
  %v4005 = vadd.f32 0.0, %v4004
  %4006 = vmatmul.f32.gmra.mxu0 %v645
  %v4007 = vpop.f32.mrf.mxu0
  %v4008 = vadd.f32 0.0, %v4007
  %4009 = vmatmul.f32.gmra.mxu0 %v648
  %v4010 = vpop.f32.mrf.mxu0
  %v4011 = vadd.f32 0.0, %v4010
  %4012 = vmatmul.f32.gmra.mxu0 %v651
  %v4013 = vpop.f32.mrf.mxu0
  %v4014 = vadd.f32 0.0, %v4013
  %4015 = vmatmul.f32.gmra.mxu0 %v654
  %v4016 = vpop.f32.mrf.mxu0
  %v4017 = vadd.f32 0.0, %v4016
  %4018 = vmatmul.f32.gmra.mxu0 %v657
  %v4019 = vpop.f32.mrf.mxu0
  %v4020 = vadd.f32 0.0, %v4019
  %4021 = vmatmul.f32.gmra.mxu0 %v660
  %v4022 = vpop.f32.mrf.mxu0
  %v4023 = vadd.f32 0.0, %v4022
  %4024 = vmatmul.f32.gmra.mxu0 %v663
  %v4025 = vpop.f32.mrf.mxu0
  %v4026 = vadd.f32 0.0, %v4025
  %4027 = vmatmul.f32.gmra.mxu0 %v2636
  %v4028 = vpop.f32.mrf.mxu0
  %v4029 = vadd.f32 0.0, %v4028
  %4030 = vmatmul.f32.gmra.mxu0 %v669
  %v4031 = vpop.f32.mrf.mxu0
  %v4032 = vadd.f32 0.0, %v4031
  %4033 = vmatmul.f32.gmra.mxu0 %v672
  %v4034 = vpop.f32.mrf.mxu0
  %v4035 = vadd.f32 0.0, %v4034
  %4036 = vmatmul.f32.gmra.mxu0 %v675
  %v4037 = vpop.f32.mrf.mxu0
  %v4038 = vadd.f32 0.0, %v4037
  %4039 = vmatmul.f32.gmra.mxu0 %v678
  %v4040 = vpop.f32.mrf.mxu0
  %v4041 = vadd.f32 0.0, %v4040
  %4042 = vmatmul.f32.gmra.mxu0 %v681
  %v4043 = vpop.f32.mrf.mxu0
  %v4044 = vadd.f32 0.0, %v4043
  %4045 = vmatmul.f32.gmra.mxu0 %v684
  %v4046 = vpop.f32.mrf.mxu0
  %v4047 = vadd.f32 0.0, %v4046
  %4048 = vmatmul.f32.gmra.mxu0 %v687
  %v4049 = vpop.f32.mrf.mxu0
  %v4050 = vadd.f32 0.0, %v4049
  %4051 = vmatmul.f32.gmra.mxu0 %v690
  %v4052 = vpop.f32.mrf.mxu0
  %v4053 = vadd.f32 0.0, %v4052
  %4054 = vmatmul.f32.gmra.mxu0 %v693
  %v4055 = vpop.f32.mrf.mxu0
  %v4056 = vadd.f32 0.0, %v4055
  %4057 = vmatmul.f32.gmra.mxu0 %v696
  %v4058 = vpop.f32.mrf.mxu0
  %v4059 = vadd.f32 0.0, %v4058
  %4060 = vmatmul.f32.gmra.mxu0 %v699
  %v4061 = vpop.f32.mrf.mxu0
  %v4062 = vadd.f32 0.0, %v4061
  %4063 = vmatmul.f32.gmra.mxu0 %v702
  %v4064 = vpop.f32.mrf.mxu0
  %v4065 = vadd.f32 0.0, %v4064
  %4066 = vmatmul.f32.gmra.mxu0 %v705
  %v4067 = vpop.f32.mrf.mxu0
  %v4068 = vadd.f32 0.0, %v4067
  %4069 = vmatmul.f32.gmra.mxu0 %v708
  %v4070 = vpop.f32.mrf.mxu0
  %v4071 = vadd.f32 0.0, %v4070
  %4072 = vmatmul.f32.gmra.mxu0 %v711
  %v4073 = vpop.f32.mrf.mxu0
  %v4074 = vadd.f32 0.0, %v4073
  %4075 = vmatmul.f32.gmra.mxu0 %v714
  %v4076 = vpop.f32.mrf.mxu0
  %v4077 = vadd.f32 0.0, %v4076
  %4078 = vmatmul.f32.gmra.mxu0 %v717
  %v4079 = vpop.f32.mrf.mxu0
  %v4080 = vadd.f32 0.0, %v4079
  %4081 = vmatmul.f32.gmra.mxu0 %v720
  %v4082 = vpop.f32.mrf.mxu0
  %v4083 = vadd.f32 0.0, %v4082
  %4084 = vmatmul.f32.gmra.mxu0 %v2639
  %v4085 = vpop.f32.mrf.mxu0
  %v4086 = vadd.f32 0.0, %v4085
  %4087 = vmatmul.f32.gmra.mxu0 %v726
  %v4088 = vpop.f32.mrf.mxu0
  %v4089 = vadd.f32 0.0, %v4088
  %4090 = vmatmul.f32.gmra.mxu0 %v729
  %v4091 = vpop.f32.mrf.mxu0
  %v4092 = vadd.f32 0.0, %v4091
  %4093 = vmatmul.f32.gmra.mxu0 %v732
  %v4094 = vpop.f32.mrf.mxu0
  %v4095 = vadd.f32 0.0, %v4094
  %4096 = vmatmul.f32.gmra.mxu0 %v735
  %v4097 = vpop.f32.mrf.mxu0
  %v4098 = vadd.f32 0.0, %v4097
  %4099 = vmatmul.f32.gmra.mxu0 %v738
  %v4100 = vpop.f32.mrf.mxu0
  %v4101 = vadd.f32 0.0, %v4100
  %4102 = vmatmul.f32.gmra.mxu0 %v741
  %v4103 = vpop.f32.mrf.mxu0
  %v4104 = vadd.f32 0.0, %v4103
  %4105 = vmatmul.f32.gmra.mxu0 %v744
  %v4106 = vpop.f32.mrf.mxu0
  %v4107 = vadd.f32 0.0, %v4106
  %4108 = vmatmul.f32.gmra.mxu0 %v747
  %v4109 = vpop.f32.mrf.mxu0
  %v4110 = vadd.f32 0.0, %v4109
  %4111 = vmatmul.f32.gmra.mxu0 %v750
  %v4112 = vpop.f32.mrf.mxu0
  %v4113 = vadd.f32 0.0, %v4112
  %4114 = vmatmul.f32.gmra.mxu0 %v753
  %v4115 = vpop.f32.mrf.mxu0
  %v4116 = vadd.f32 0.0, %v4115
  %4117 = vmatmul.f32.gmra.mxu0 %v756
  %v4118 = vpop.f32.mrf.mxu0
  %v4119 = vadd.f32 0.0, %v4118
  %4120 = vmatmul.f32.gmra.mxu0 %v759
  %v4121 = vpop.f32.mrf.mxu0
  %v4122 = vadd.f32 0.0, %v4121
  %4123 = vmatmul.f32.gmra.mxu0 %v762
  %v4124 = vpop.f32.mrf.mxu0
  %v4125 = vadd.f32 0.0, %v4124
  %4126 = vmatmul.f32.gmra.mxu0 %v765
  %v4127 = vpop.f32.mrf.mxu0
  %v4128 = vadd.f32 0.0, %v4127
  %4129 = vmatmul.f32.gmra.mxu0 %v768
  %v4130 = vpop.f32.mrf.mxu0
  %v4131 = vadd.f32 0.0, %v4130
  %4132 = vmatmul.f32.gmra.mxu0 %v771
  %v4133 = vpop.f32.mrf.mxu0
  %v4134 = vadd.f32 0.0, %v4133
  %4135 = vmatmul.f32.gmra.mxu0 %v774
  %v4136 = vpop.f32.mrf.mxu0
  %v4137 = vadd.f32 0.0, %v4136
  %4138 = vmatmul.f32.gmra.mxu0 %v777
  %v4139 = vpop.f32.mrf.mxu0
  %v4140 = vadd.f32 0.0, %v4139
  %4141 = vmatmul.f32.gmra.mxu0 %v2642
  %v4142 = vpop.f32.mrf.mxu0
  %v4143 = vadd.f32 0.0, %v4142
  %4144 = vmatmul.f32.gmra.mxu0 %v783
  %v4145 = vpop.f32.mrf.mxu0
  %v4146 = vadd.f32 0.0, %v4145
  %4147 = vmatmul.f32.gmra.mxu0 %v786
  %v4148 = vpop.f32.mrf.mxu0
  %v4149 = vadd.f32 0.0, %v4148
  %4150 = vmatmul.f32.gmra.mxu0 %v789
  %v4151 = vpop.f32.mrf.mxu0
  %v4152 = vadd.f32 0.0, %v4151
  %4153 = vmatmul.f32.gmra.mxu0 %v792
  %v4154 = vpop.f32.mrf.mxu0
  %v4155 = vadd.f32 0.0, %v4154
  %4156 = vmatmul.f32.gmra.mxu0 %v795
  %v4157 = vpop.f32.mrf.mxu0
  %v4158 = vadd.f32 0.0, %v4157
  %4159 = vmatmul.f32.gmra.mxu0 %v798
  %v4160 = vpop.f32.mrf.mxu0
  %v4161 = vadd.f32 0.0, %v4160
  %4162 = vmatmul.f32.gmra.mxu0 %v801
  %v4163 = vpop.f32.mrf.mxu0
  %v4164 = vadd.f32 0.0, %v4163
  %4165 = vmatmul.f32.gmra.mxu0 %v804
  %v4166 = vpop.f32.mrf.mxu0
  %v4167 = vadd.f32 0.0, %v4166
  %4168 = vmatmul.f32.gmra.mxu0 %v807
  %v4169 = vpop.f32.mrf.mxu0
  %v4170 = vadd.f32 0.0, %v4169
  %4171 = vmatmul.f32.gmra.mxu0 %v810
  %v4172 = vpop.f32.mrf.mxu0
  %v4173 = vadd.f32 0.0, %v4172
  %4174 = vmatmul.f32.gmra.mxu0 %v813
  %v4175 = vpop.f32.mrf.mxu0
  %v4176 = vadd.f32 0.0, %v4175
  %4177 = vmatmul.f32.gmra.mxu0 %v816
  %v4178 = vpop.f32.mrf.mxu0
  %v4179 = vadd.f32 0.0, %v4178
  %4180 = vmatmul.f32.gmra.mxu0 %v819
  %v4181 = vpop.f32.mrf.mxu0
  %v4182 = vadd.f32 0.0, %v4181
  %4183 = vmatmul.f32.gmra.mxu0 %v822
  %v4184 = vpop.f32.mrf.mxu0
  %v4185 = vadd.f32 0.0, %v4184
  %4186 = vmatmul.f32.gmra.mxu0 %v825
  %v4187 = vpop.f32.mrf.mxu0
  %v4188 = vadd.f32 0.0, %v4187
  %4189 = vmatmul.f32.gmra.mxu0 %v828
  %v4190 = vpop.f32.mrf.mxu0
  %v4191 = vadd.f32 0.0, %v4190
  %4192 = vmatmul.f32.gmra.mxu0 %v831
  %v4193 = vpop.f32.mrf.mxu0
  %v4194 = vadd.f32 0.0, %v4193
  %4195 = vmatmul.f32.gmra.mxu0 %v834
  %v4196 = vpop.f32.mrf.mxu0
  %v4197 = vadd.f32 0.0, %v4196
  %4198 = vmatmul.f32.gmra.mxu0 %v2645
  %v4199 = vpop.f32.mrf.mxu0
  %v4200 = vadd.f32 0.0, %v4199
  %4201 = vmatmul.f32.gmra.mxu0 %v840
  %v4202 = vpop.f32.mrf.mxu0
  %v4203 = vadd.f32 0.0, %v4202
  %4204 = vmatmul.f32.gmra.mxu0 %v843
  %v4205 = vpop.f32.mrf.mxu0
  %v4206 = vadd.f32 0.0, %v4205
  %4207 = vmatmul.f32.gmra.mxu0 %v846
  %v4208 = vpop.f32.mrf.mxu0
  %v4209 = vadd.f32 0.0, %v4208
  %4210 = vmatmul.f32.gmra.mxu0 %v849
  %v4211 = vpop.f32.mrf.mxu0
  %v4212 = vadd.f32 0.0, %v4211
  %4213 = vmatmul.f32.gmra.mxu0 %v852
  %v4214 = vpop.f32.mrf.mxu0
  %v4215 = vadd.f32 0.0, %v4214
  %4216 = vmatmul.f32.gmra.mxu0 %v855
  %v4217 = vpop.f32.mrf.mxu0
  %v4218 = vadd.f32 0.0, %v4217
  %4219 = vmatmul.f32.gmra.mxu0 %v858
  %v4220 = vpop.f32.mrf.mxu0
  %v4221 = vadd.f32 0.0, %v4220
  %4222 = vmatmul.f32.gmra.mxu0 %v861
  %v4223 = vpop.f32.mrf.mxu0
  %v4224 = vadd.f32 0.0, %v4223
  %4225 = vmatmul.f32.gmra.mxu0 %v864
  %v4226 = vpop.f32.mrf.mxu0
  %v4227 = vadd.f32 0.0, %v4226
  %4228 = vmatmul.f32.gmra.mxu0 %v867
  %v4229 = vpop.f32.mrf.mxu0
  %v4230 = vadd.f32 0.0, %v4229
  %4231 = vmatmul.f32.gmra.mxu0 %v870
  %v4232 = vpop.f32.mrf.mxu0
  %v4233 = vadd.f32 0.0, %v4232
  %4234 = vmatmul.f32.gmra.mxu0 %v873
  %v4235 = vpop.f32.mrf.mxu0
  %v4236 = vadd.f32 0.0, %v4235
  %4237 = vmatmul.f32.gmra.mxu0 %v876
  %v4238 = vpop.f32.mrf.mxu0
  %v4239 = vadd.f32 0.0, %v4238
  %4240 = vmatmul.f32.gmra.mxu0 %v879
  %v4241 = vpop.f32.mrf.mxu0
  %v4242 = vadd.f32 0.0, %v4241
  %4243 = vmatmul.f32.gmra.mxu0 %v882
  %v4244 = vpop.f32.mrf.mxu0
  %v4245 = vadd.f32 0.0, %v4244
  %4246 = vmatmul.f32.gmra.mxu0 %v885
  %v4247 = vpop.f32.mrf.mxu0
  %v4248 = vadd.f32 0.0, %v4247
  %4249 = vmatmul.f32.gmra.mxu0 %v888
  %v4250 = vpop.f32.mrf.mxu0
  %v4251 = vadd.f32 0.0, %v4250
  %4252 = vmatmul.f32.gmra.mxu0 %v891
  %v4253 = vpop.f32.mrf.mxu0
  %v4254 = vadd.f32 0.0, %v4253
  %4255 = vmatmul.f32.gmra.mxu0 %v2648
  %v4256 = vpop.f32.mrf.mxu0
  %v4257 = vadd.f32 0.0, %v4256
  %4258 = vmatmul.f32.gmra.mxu0 %v897
  %v4259 = vpop.f32.mrf.mxu0
  %v4260 = vadd.f32 0.0, %v4259
  %4261 = vmatmul.f32.gmra.mxu0 %v900
  %v4262 = vpop.f32.mrf.mxu0
  %v4263 = vadd.f32 0.0, %v4262
  %4264 = vmatmul.f32.gmra.mxu0 %v903
  %v4265 = vpop.f32.mrf.mxu0
  %v4266 = vadd.f32 0.0, %v4265
  %4267 = vmatmul.f32.gmra.mxu0 %v906
  %v4268 = vpop.f32.mrf.mxu0
  %v4269 = vadd.f32 0.0, %v4268
  %4270 = vmatmul.f32.gmra.mxu0 %v909
  %v4271 = vpop.f32.mrf.mxu0
  %v4272 = vadd.f32 0.0, %v4271
  %4273 = vmatmul.f32.gmra.mxu0 %v912
  %v4274 = vpop.f32.mrf.mxu0
  %v4275 = vadd.f32 0.0, %v4274
  %4276 = vmatmul.f32.gmra.mxu0 %v915
  %v4277 = vpop.f32.mrf.mxu0
  %v4278 = vadd.f32 0.0, %v4277
  %4279 = vmatmul.f32.gmra.mxu0 %v918
  %v4280 = vpop.f32.mrf.mxu0
  %v4281 = vadd.f32 0.0, %v4280
  %4282 = vmatmul.f32.gmra.mxu0 %v921
  %v4283 = vpop.f32.mrf.mxu0
  %v4284 = vadd.f32 0.0, %v4283
  %4285 = vmatmul.f32.gmra.mxu0 %v924
  %v4286 = vpop.f32.mrf.mxu0
  %v4287 = vadd.f32 0.0, %v4286
  %4288 = vmatmul.f32.gmra.mxu0 %v927
  %v4289 = vpop.f32.mrf.mxu0
  %v4290 = vadd.f32 0.0, %v4289
  %4291 = vmatmul.f32.gmra.mxu0 %v930
  %v4292 = vpop.f32.mrf.mxu0
  %v4293 = vadd.f32 0.0, %v4292
  %4294 = vmatmul.f32.gmra.mxu0 %v933
  %v4295 = vpop.f32.mrf.mxu0
  %v4296 = vadd.f32 0.0, %v4295
  %4297 = vmatmul.f32.gmra.mxu0 %v936
  %v4298 = vpop.f32.mrf.mxu0
  %v4299 = vadd.f32 0.0, %v4298
  %4300 = vmatmul.f32.gmra.mxu0 %v939
  %v4301 = vpop.f32.mrf.mxu0
  %v4302 = vadd.f32 0.0, %v4301
  %4303 = vmatmul.f32.gmra.mxu0 %v942
  %v4304 = vpop.f32.mrf.mxu0
  %v4305 = vadd.f32 0.0, %v4304
  %4306 = vmatmul.f32.gmra.mxu0 %v945
  %v4307 = vpop.f32.mrf.mxu0
  %v4308 = vadd.f32 0.0, %v4307
  %4309 = vmatmul.f32.gmra.mxu0 %v948
  %v4310 = vpop.f32.mrf.mxu0
  %v4311 = vadd.f32 0.0, %v4310
  %4312 = vmatmul.f32.gmra.mxu0 %v2651
  %v4313 = vpop.f32.mrf.mxu0
  %v4314 = vadd.f32 0.0, %v4313
  %4315 = vmatmul.f32.gmra.mxu0 %v954
  %v4316 = vpop.f32.mrf.mxu0
  %v4317 = vadd.f32 0.0, %v4316
  %4318 = vmatmul.f32.gmra.mxu0 %v957
  %v4319 = vpop.f32.mrf.mxu0
  %v4320 = vadd.f32 0.0, %v4319
  %4321 = vmatmul.f32.gmra.mxu0 %v960
  %v4322 = vpop.f32.mrf.mxu0
  %v4323 = vadd.f32 0.0, %v4322
  %4324 = vmatmul.f32.gmra.mxu0 %v963
  %v4325 = vpop.f32.mrf.mxu0
  %v4326 = vadd.f32 0.0, %v4325
  %4327 = vmatmul.f32.gmra.mxu0 %v966
  %v4328 = vpop.f32.mrf.mxu0
  %v4329 = vadd.f32 0.0, %v4328
  %4330 = vmatmul.f32.gmra.mxu0 %v969
  %v4331 = vpop.f32.mrf.mxu0
  %v4332 = vadd.f32 0.0, %v4331
  %4333 = vmatmul.f32.gmra.mxu0 %v972
  %v4334 = vpop.f32.mrf.mxu0
  %v4335 = vadd.f32 0.0, %v4334
  %4336 = vmatmul.f32.gmra.mxu0 %v975
  %v4337 = vpop.f32.mrf.mxu0
  %v4338 = vadd.f32 0.0, %v4337
  %4339 = vmatmul.f32.gmra.mxu0 %v978
  %v4340 = vpop.f32.mrf.mxu0
  %v4341 = vadd.f32 0.0, %v4340
  %4342 = vmatmul.f32.gmra.mxu0 %v981
  %v4343 = vpop.f32.mrf.mxu0
  %v4344 = vadd.f32 0.0, %v4343
  %4345 = vmatmul.f32.gmra.mxu0 %v984
  %v4346 = vpop.f32.mrf.mxu0
  %v4347 = vadd.f32 0.0, %v4346
  %4348 = vmatmul.f32.gmra.mxu0 %v987
  %v4349 = vpop.f32.mrf.mxu0
  %v4350 = vadd.f32 0.0, %v4349
  %4351 = vmatmul.f32.gmra.mxu0 %v990
  %v4352 = vpop.f32.mrf.mxu0
  %v4353 = vadd.f32 0.0, %v4352
  %4354 = vmatmul.f32.gmra.mxu0 %v993
  %v4355 = vpop.f32.mrf.mxu0
  %v4356 = vadd.f32 0.0, %v4355
  %4357 = vmatmul.f32.gmra.mxu0 %v996
  %v4358 = vpop.f32.mrf.mxu0
  %v4359 = vadd.f32 0.0, %v4358
  %4360 = vmatmul.f32.gmra.mxu0 %v999
  %v4361 = vpop.f32.mrf.mxu0
  %v4362 = vadd.f32 0.0, %v4361
  %4363 = vmatmul.f32.gmra.mxu0 %v1002
  %v4364 = vpop.f32.mrf.mxu0
  %v4365 = vadd.f32 0.0, %v4364
  %4366 = vmatmul.f32.gmra.mxu0 %v1005
  %v4367 = vpop.f32.mrf.mxu0
  %v4368 = vadd.f32 0.0, %v4367
  %4369 = vmatmul.f32.gmra.mxu0 %v2654
  %v4370 = vpop.f32.mrf.mxu0
  %v4371 = vadd.f32 0.0, %v4370
  %4372 = vmatmul.f32.gmra.mxu0 %v1011
  %v4373 = vpop.f32.mrf.mxu0
  %v4374 = vadd.f32 0.0, %v4373
  %4375 = vmatmul.f32.gmra.mxu0 %v1014
  %v4376 = vpop.f32.mrf.mxu0
  %v4377 = vadd.f32 0.0, %v4376
  %4378 = vmatmul.f32.gmra.mxu0 %v1017
  %v4379 = vpop.f32.mrf.mxu0
  %v4380 = vadd.f32 0.0, %v4379
  %4381 = vmatmul.f32.gmra.mxu0 %v1020
  %v4382 = vpop.f32.mrf.mxu0
  %v4383 = vadd.f32 0.0, %v4382
  %4384 = vmatmul.f32.gmra.mxu0 %v1023
  %v4385 = vpop.f32.mrf.mxu0
  %v4386 = vadd.f32 0.0, %v4385
  %4387 = vmatmul.f32.gmra.mxu0 %v1026
  %v4388 = vpop.f32.mrf.mxu0
  %v4389 = vadd.f32 0.0, %v4388
  %4390 = vmatmul.f32.gmra.mxu0 %v1029
  %v4391 = vpop.f32.mrf.mxu0
  %v4392 = vadd.f32 0.0, %v4391
  %4393 = vmatmul.f32.gmra.mxu0 %v1032
  %v4394 = vpop.f32.mrf.mxu0
  %v4395 = vadd.f32 0.0, %v4394
  %4396 = vmatmul.f32.gmra.mxu0 %v1035
  %v4397 = vpop.f32.mrf.mxu0
  %v4398 = vadd.f32 0.0, %v4397
  %4399 = vmatmul.f32.gmra.mxu0 %v1038
  %v4400 = vpop.f32.mrf.mxu0
  %v4401 = vadd.f32 0.0, %v4400
  %4402 = vmatmul.f32.gmra.mxu0 %v1041
  %v4403 = vpop.f32.mrf.mxu0
  %v4404 = vadd.f32 0.0, %v4403
  %4405 = vmatmul.f32.gmra.mxu0 %v1044
  %v4406 = vpop.f32.mrf.mxu0
  %v4407 = vadd.f32 0.0, %v4406
  %4408 = vmatmul.f32.gmra.mxu0 %v1047
  %v4409 = vpop.f32.mrf.mxu0
  %v4410 = vadd.f32 0.0, %v4409
  %4411 = vmatmul.f32.gmra.mxu0 %v1050
  %v4412 = vpop.f32.mrf.mxu0
  %v4413 = vadd.f32 0.0, %v4412
  %4414 = vmatmul.f32.gmra.mxu0 %v1053
  %v4415 = vpop.f32.mrf.mxu0
  %v4416 = vadd.f32 0.0, %v4415
  %4417 = vmatmul.f32.gmra.mxu0 %v1056
  %v4418 = vpop.f32.mrf.mxu0
  %v4419 = vadd.f32 0.0, %v4418
  %4420 = vmatmul.f32.gmra.mxu0 %v1059
  %v4421 = vpop.f32.mrf.mxu0
  %v4422 = vadd.f32 0.0, %v4421
  %4423 = vmatmul.f32.gmra.mxu0 %v1062
  %v4424 = vpop.f32.mrf.mxu0
  %v4425 = vadd.f32 0.0, %v4424
  %4426 = vmatmul.f32.gmra.mxu0 %v2657
  %v4427 = vpop.f32.mrf.mxu0
  %v4428 = vadd.f32 0.0, %v4427
  %4429 = vmatmul.f32.gmra.mxu0 %v1068
  %v4430 = vpop.f32.mrf.mxu0
  %v4431 = vadd.f32 0.0, %v4430
  %4432 = vmatmul.f32.gmra.mxu0 %v1071
  %v4433 = vpop.f32.mrf.mxu0
  %v4434 = vadd.f32 0.0, %v4433
  %4435 = vmatmul.f32.gmra.mxu0 %v1074
  %v4436 = vpop.f32.mrf.mxu0
  %v4437 = vadd.f32 0.0, %v4436
  %4438 = vmatmul.f32.gmra.mxu0 %v1077
  %v4439 = vpop.f32.mrf.mxu0
  %v4440 = vadd.f32 0.0, %v4439
  %4441 = vmatmul.f32.gmra.mxu0 %v1080
  %v4442 = vpop.f32.mrf.mxu0
  %v4443 = vadd.f32 0.0, %v4442
  %4444 = vmatmul.f32.gmra.mxu0 %v1083
  %v4445 = vpop.f32.mrf.mxu0
  %v4446 = vadd.f32 0.0, %v4445
  %4447 = vmatmul.f32.gmra.mxu0 %v1086
  %v4448 = vpop.f32.mrf.mxu0
  %v4449 = vadd.f32 0.0, %v4448
  %4450 = vmatmul.f32.gmra.mxu0 %v1089
  %v4451 = vpop.f32.mrf.mxu0
  %v4452 = vadd.f32 0.0, %v4451
  %4453 = vmatmul.f32.gmra.mxu0 %v1092
  %v4454 = vpop.f32.mrf.mxu0
  %v4455 = vadd.f32 0.0, %v4454
  %4456 = vmatmul.f32.gmra.mxu0 %v1095
  %v4457 = vpop.f32.mrf.mxu0
  %v4458 = vadd.f32 0.0, %v4457
  %4459 = vmatmul.f32.gmra.mxu0 %v1098
  %v4460 = vpop.f32.mrf.mxu0
  %v4461 = vadd.f32 0.0, %v4460
  %4462 = vmatmul.f32.gmra.mxu0 %v1101
  %v4463 = vpop.f32.mrf.mxu0
  %v4464 = vadd.f32 0.0, %v4463
  %4465 = vmatmul.f32.gmra.mxu0 %v1104
  %v4466 = vpop.f32.mrf.mxu0
  %v4467 = vadd.f32 0.0, %v4466
  %4468 = vmatmul.f32.gmra.mxu0 %v1107
  %v4469 = vpop.f32.mrf.mxu0
  %v4470 = vadd.f32 0.0, %v4469
  %4471 = vmatmul.f32.gmra.mxu0 %v1110
  %v4472 = vpop.f32.mrf.mxu0
  %v4473 = vadd.f32 0.0, %v4472
  %4474 = vmatmul.f32.gmra.mxu0 %v1113
  %v4475 = vpop.f32.mrf.mxu0
  %v4476 = vadd.f32 0.0, %v4475
  %4477 = vmatmul.f32.gmra.mxu0 %v1116
  %v4478 = vpop.f32.mrf.mxu0
  %v4479 = vadd.f32 0.0, %v4478
  %4480 = vmatmul.f32.gmra.mxu0 %v1119
  %v4481 = vpop.f32.mrf.mxu0
  %v4482 = vadd.f32 0.0, %v4481
  %4483 = vmatmul.f32.gmra.mxu0 %v2660
  %v4484 = vpop.f32.mrf.mxu0
  %v4485 = vadd.f32 0.0, %v4484
  %4486 = vmatmul.f32.gmra.mxu0 %v1125
  %v4487 = vpop.f32.mrf.mxu0
  %v4488 = vadd.f32 0.0, %v4487
  %4489 = vmatmul.f32.gmra.mxu0 %v1128
  %v4490 = vpop.f32.mrf.mxu0
  %v4491 = vadd.f32 0.0, %v4490
  %4492 = vmatmul.f32.gmra.mxu0 %v1131
  %v4493 = vpop.f32.mrf.mxu0
  %v4494 = vadd.f32 0.0, %v4493
  %4495 = vmatmul.f32.gmra.mxu0 %v1134
  %v4496 = vpop.f32.mrf.mxu0
  %v4497 = vadd.f32 0.0, %v4496
  %4498 = vmatmul.f32.gmra.mxu0 %v1137
  %v4499 = vpop.f32.mrf.mxu0
  %v4500 = vadd.f32 0.0, %v4499
  %4501 = vmatmul.f32.gmra.mxu0 %v1140
  %v4502 = vpop.f32.mrf.mxu0
  %v4503 = vadd.f32 0.0, %v4502
  %4504 = vmatmul.f32.gmra.mxu0 %v1143
  %v4505 = vpop.f32.mrf.mxu0
  %v4506 = vadd.f32 0.0, %v4505
  %4507 = vmatmul.f32.gmra.mxu0 %v1146
  %v4508 = vpop.f32.mrf.mxu0
  %v4509 = vadd.f32 0.0, %v4508
  %4510 = vmatmul.f32.gmra.mxu0 %v1149
  %v4511 = vpop.f32.mrf.mxu0
  %v4512 = vadd.f32 0.0, %v4511
  %4513 = vmatmul.f32.gmra.mxu0 %v1152
  %v4514 = vpop.f32.mrf.mxu0
  %v4515 = vadd.f32 0.0, %v4514
  %4516 = vmatmul.f32.gmra.mxu0 %v1155
  %v4517 = vpop.f32.mrf.mxu0
  %v4518 = vadd.f32 0.0, %v4517
  %4519 = vmatmul.f32.gmra.mxu0 %v1158
  %v4520 = vpop.f32.mrf.mxu0
  %v4521 = vadd.f32 0.0, %v4520
  %4522 = vmatmul.f32.gmra.mxu0 %v1161
  %v4523 = vpop.f32.mrf.mxu0
  %v4524 = vadd.f32 0.0, %v4523
  %4525 = vmatmul.f32.gmra.mxu0 %v1164
  %v4526 = vpop.f32.mrf.mxu0
  %v4527 = vadd.f32 0.0, %v4526
  %4528 = vmatmul.f32.gmra.mxu0 %v1167
  %v4529 = vpop.f32.mrf.mxu0
  %v4530 = vadd.f32 0.0, %v4529
  %4531 = vmatmul.f32.gmra.mxu0 %v1170
  %v4532 = vpop.f32.mrf.mxu0
  %v4533 = vadd.f32 0.0, %v4532
  %4534 = vmatmul.f32.gmra.mxu0 %v1173
  %v4535 = vpop.f32.mrf.mxu0
  %v4536 = vadd.f32 0.0, %v4535
  %4537 = vmatmul.f32.gmra.mxu0 %v1176
  %v4538 = vpop.f32.mrf.mxu0
  %v4539 = vadd.f32 0.0, %v4538
  %4540 = vmatmul.f32.gmra.mxu0 %v2663
  %v4541 = vpop.f32.mrf.mxu0
  %v4542 = vadd.f32 0.0, %v4541
  %4543 = vmatmul.f32.gmra.mxu0 %v1182
  %v4544 = vpop.f32.mrf.mxu0
  %v4545 = vadd.f32 0.0, %v4544
  %4546 = vmatmul.f32.gmra.mxu0 %v1185
  %v4547 = vpop.f32.mrf.mxu0
  %v4548 = vadd.f32 0.0, %v4547
  %4549 = vmatmul.f32.gmra.mxu0 %v1188
  %v4550 = vpop.f32.mrf.mxu0
  %v4551 = vadd.f32 0.0, %v4550
  %4552 = vmatmul.f32.gmra.mxu0 %v1191
  %v4553 = vpop.f32.mrf.mxu0
  %v4554 = vadd.f32 0.0, %v4553
  %4555 = vmatmul.f32.gmra.mxu0 %v1194
  %v4556 = vpop.f32.mrf.mxu0
  %v4557 = vadd.f32 0.0, %v4556
  %4558 = vmatmul.f32.gmra.mxu0 %v1197
  %v4559 = vpop.f32.mrf.mxu0
  %v4560 = vadd.f32 0.0, %v4559
  %4561 = vmatmul.f32.gmra.mxu0 %v1200
  %v4562 = vpop.f32.mrf.mxu0
  %v4563 = vadd.f32 0.0, %v4562
  %4564 = vmatmul.f32.gmra.mxu0 %v1203
  %v4565 = vpop.f32.mrf.mxu0
  %v4566 = vadd.f32 0.0, %v4565
  %4567 = vmatmul.f32.gmra.mxu0 %v1206
  %v4568 = vpop.f32.mrf.mxu0
  %v4569 = vadd.f32 0.0, %v4568
  %4570 = vmatmul.f32.gmra.mxu0 %v1209
  %v4571 = vpop.f32.mrf.mxu0
  %v4572 = vadd.f32 0.0, %v4571
  %4573 = vmatmul.f32.gmra.mxu0 %v1212
  %v4574 = vpop.f32.mrf.mxu0
  %v4575 = vadd.f32 0.0, %v4574
  %4576 = vmatmul.f32.gmra.mxu0 %v1215
  %v4577 = vpop.f32.mrf.mxu0
  %v4578 = vadd.f32 0.0, %v4577
  %4579 = vmatmul.f32.gmra.mxu0 %v1218
  %v4580 = vpop.f32.mrf.mxu0
  %v4581 = vadd.f32 0.0, %v4580
  %4582 = vmatmul.f32.gmra.mxu0 %v1221
  %v4583 = vpop.f32.mrf.mxu0
  %v4584 = vadd.f32 0.0, %v4583
  %4585 = vmatmul.f32.gmra.mxu0 %v1224
  %v4586 = vpop.f32.mrf.mxu0
  %v4587 = vadd.f32 0.0, %v4586
  %4588 = vmatmul.f32.gmra.mxu0 %v1227
  %v4589 = vpop.f32.mrf.mxu0
  %v4590 = vadd.f32 0.0, %v4589
  %4591 = vmatmul.f32.gmra.mxu0 %v1230
  %v4592 = vpop.f32.mrf.mxu0
  %v4593 = vadd.f32 0.0, %v4592
  %4594 = vmatmul.f32.gmra.mxu0 %v1233
  %v4595 = vpop.f32.mrf.mxu0
  %v4596 = vadd.f32 0.0, %v4595
  %4597 = vmatmul.f32.gmra.mxu0 %v2666
  %v4598 = vpop.f32.mrf.mxu0
  %v4599 = vadd.f32 0.0, %v4598
  %4600 = vmatmul.f32.gmra.mxu0 %v1239
  %v4601 = vpop.f32.mrf.mxu0
  %v4602 = vadd.f32 0.0, %v4601
  %4603 = vmatmul.f32.gmra.mxu0 %v1242
  %v4604 = vpop.f32.mrf.mxu0
  %v4605 = vadd.f32 0.0, %v4604
  %4606 = vmatmul.f32.gmra.mxu0 %v1245
  %v4607 = vpop.f32.mrf.mxu0
  %v4608 = vadd.f32 0.0, %v4607
  %4609 = vmatmul.f32.gmra.mxu0 %v1248
  %v4610 = vpop.f32.mrf.mxu0
  %v4611 = vadd.f32 0.0, %v4610
  %4612 = vmatmul.f32.gmra.mxu0 %v1251
  %v4613 = vpop.f32.mrf.mxu0
  %v4614 = vadd.f32 0.0, %v4613
  %4615 = vmatmul.f32.gmra.mxu0 %v1254
  %v4616 = vpop.f32.mrf.mxu0
  %v4617 = vadd.f32 0.0, %v4616
  %4618 = vmatmul.f32.gmra.mxu0 %v1257
  %v4619 = vpop.f32.mrf.mxu0
  %v4620 = vadd.f32 0.0, %v4619
  %4621 = vmatmul.f32.gmra.mxu0 %v1260
  %v4622 = vpop.f32.mrf.mxu0
  %v4623 = vadd.f32 0.0, %v4622
  %4624 = vmatmul.f32.gmra.mxu0 %v1263
  %v4625 = vpop.f32.mrf.mxu0
  %v4626 = vadd.f32 0.0, %v4625
  %4627 = vmatmul.f32.gmra.mxu0 %v1266
  %v4628 = vpop.f32.mrf.mxu0
  %v4629 = vadd.f32 0.0, %v4628
  %4630 = vmatmul.f32.gmra.mxu0 %v1269
  %v4631 = vpop.f32.mrf.mxu0
  %v4632 = vadd.f32 0.0, %v4631
  %4633 = vmatmul.f32.gmra.mxu0 %v1272
  %v4634 = vpop.f32.mrf.mxu0
  %v4635 = vadd.f32 0.0, %v4634
  %4636 = vmatmul.f32.gmra.mxu0 %v1275
  %v4637 = vpop.f32.mrf.mxu0
  %v4638 = vadd.f32 0.0, %v4637
  %4639 = vmatmul.f32.gmra.mxu0 %v1278
  %v4640 = vpop.f32.mrf.mxu0
  %v4641 = vadd.f32 0.0, %v4640
  %4642 = vmatmul.f32.gmra.mxu0 %v1281
  %v4643 = vpop.f32.mrf.mxu0
  %v4644 = vadd.f32 0.0, %v4643
  %4645 = vmatmul.f32.gmra.mxu0 %v1284
  %v4646 = vpop.f32.mrf.mxu0
  %v4647 = vadd.f32 0.0, %v4646
  %4648 = vmatmul.f32.gmra.mxu0 %v1287
  %v4649 = vpop.f32.mrf.mxu0
  %v4650 = vadd.f32 0.0, %v4649
  %4651 = vmatmul.f32.gmra.mxu0 %v1290
  %v4652 = vpop.f32.mrf.mxu0
  %v4653 = vadd.f32 0.0, %v4652
  %4654 = vmatmul.f32.gmra.mxu0 %v2669
  %v4655 = vpop.f32.mrf.mxu0
  %v4656 = vadd.f32 0.0, %v4655
  %4657 = vmatmul.f32.gmra.mxu0 %v1296
  %v4658 = vpop.f32.mrf.mxu0
  %v4659 = vadd.f32 0.0, %v4658
  %4660 = vmatmul.f32.gmra.mxu0 %v1299
  %v4661 = vpop.f32.mrf.mxu0
  %v4662 = vadd.f32 0.0, %v4661
  %4663 = vmatmul.f32.gmra.mxu0 %v1302
  %v4664 = vpop.f32.mrf.mxu0
  %v4665 = vadd.f32 0.0, %v4664
  %4666 = vmatmul.f32.gmra.mxu0 %v1305
  %v4667 = vpop.f32.mrf.mxu0
  %v4668 = vadd.f32 0.0, %v4667
  %4669 = vmatmul.f32.gmra.mxu0 %v1308
  %v4670 = vpop.f32.mrf.mxu0
  %v4671 = vadd.f32 0.0, %v4670
  %4672 = vmatmul.f32.gmra.mxu0 %v1311
  %v4673 = vpop.f32.mrf.mxu0
  %v4674 = vadd.f32 0.0, %v4673
  %4675 = vmatmul.f32.gmra.mxu0 %v1314
  %v4676 = vpop.f32.mrf.mxu0
  %v4677 = vadd.f32 0.0, %v4676
  %4678 = vmatmul.f32.gmra.mxu0 %v1317
  %v4679 = vpop.f32.mrf.mxu0
  %v4680 = vadd.f32 0.0, %v4679
  %4681 = vmatmul.f32.gmra.mxu0 %v1320
  %v4682 = vpop.f32.mrf.mxu0
  %v4683 = vadd.f32 0.0, %v4682
  %4684 = vmatmul.f32.gmra.mxu0 %v1323
  %v4685 = vpop.f32.mrf.mxu0
  %v4686 = vadd.f32 0.0, %v4685
  %4687 = vmatmul.f32.gmra.mxu0 %v1326
  %v4688 = vpop.f32.mrf.mxu0
  %v4689 = vadd.f32 0.0, %v4688
  %4690 = vmatmul.f32.gmra.mxu0 %v1329
  %v4691 = vpop.f32.mrf.mxu0
  %v4692 = vadd.f32 0.0, %v4691
  %4693 = vmatmul.f32.gmra.mxu0 %v1332
  %v4694 = vpop.f32.mrf.mxu0
  %v4695 = vadd.f32 0.0, %v4694
  %4696 = vmatmul.f32.gmra.mxu0 %v1335
  %v4697 = vpop.f32.mrf.mxu0
  %v4698 = vadd.f32 0.0, %v4697
  %4699 = vmatmul.f32.gmra.mxu0 %v1338
  %v4700 = vpop.f32.mrf.mxu0
  %v4701 = vadd.f32 0.0, %v4700
  %4702 = vmatmul.f32.gmra.mxu0 %v1341
  %v4703 = vpop.f32.mrf.mxu0
  %v4704 = vadd.f32 0.0, %v4703
  %4705 = vmatmul.f32.gmra.mxu0 %v1344
  %v4706 = vpop.f32.mrf.mxu0
  %v4707 = vadd.f32 0.0, %v4706
  %4708 = vmatmul.f32.gmra.mxu0 %v1347
  %v4709 = vpop.f32.mrf.mxu0
  %v4710 = vadd.f32 0.0, %v4709
  %4711 = vmatmul.f32.gmra.mxu0 %v2672
  %v4712 = vpop.f32.mrf.mxu0
  %v4713 = vadd.f32 0.0, %v4712
  %4714 = vmatmul.f32.gmra.mxu0 %v1353
  %v4715 = vpop.f32.mrf.mxu0
  %v4716 = vadd.f32 0.0, %v4715
  %4717 = vmatmul.f32.gmra.mxu0 %v1356
  %v4718 = vpop.f32.mrf.mxu0
  %v4719 = vadd.f32 0.0, %v4718
  %4720 = vmatmul.f32.gmra.mxu0 %v1359
  %v4721 = vpop.f32.mrf.mxu0
  %v4722 = vadd.f32 0.0, %v4721
  %4723 = vmatmul.f32.gmra.mxu0 %v1362
  %v4724 = vpop.f32.mrf.mxu0
  %v4725 = vadd.f32 0.0, %v4724
  %4726 = vmatmul.f32.gmra.mxu0 %v1365
  %v4727 = vpop.f32.mrf.mxu0
  %v4728 = vadd.f32 0.0, %v4727
  %4729 = vmatmul.f32.gmra.mxu0 %v1368
  %v4730 = vpop.f32.mrf.mxu0
  %v4731 = vadd.f32 0.0, %v4730
  %4732 = vmatmul.f32.gmra.mxu0 %v1371
  %v4733 = vpop.f32.mrf.mxu0
  %v4734 = vadd.f32 0.0, %v4733
  %4735 = vmatmul.f32.gmra.mxu0 %v1374
  %v4736 = vpop.f32.mrf.mxu0
  %v4737 = vadd.f32 0.0, %v4736
  %4738 = vmatmul.f32.gmra.mxu0 %v1377
  %v4739 = vpop.f32.mrf.mxu0
  %v4740 = vadd.f32 0.0, %v4739
  %4741 = vmatmul.f32.gmra.mxu0 %v1380
  %v4742 = vpop.f32.mrf.mxu0
  %v4743 = vadd.f32 0.0, %v4742
  %4744 = vmatmul.f32.gmra.mxu0 %v1383
  %v4745 = vpop.f32.mrf.mxu0
  %v4746 = vadd.f32 0.0, %v4745
  %4747 = vmatmul.f32.gmra.mxu0 %v1386
  %v4748 = vpop.f32.mrf.mxu0
  %v4749 = vadd.f32 0.0, %v4748
  %4750 = vmatmul.f32.gmra.mxu0 %v1389
  %v4751 = vpop.f32.mrf.mxu0
  %v4752 = vadd.f32 0.0, %v4751
  %4753 = vmatmul.f32.gmra.mxu0 %v1392
  %v4754 = vpop.f32.mrf.mxu0
  %v4755 = vadd.f32 0.0, %v4754
  %4756 = vmatmul.f32.gmra.mxu0 %v1395
  %v4757 = vpop.f32.mrf.mxu0
  %v4758 = vadd.f32 0.0, %v4757
  %4759 = vmatmul.f32.gmra.mxu0 %v1398
  %v4760 = vpop.f32.mrf.mxu0
  %v4761 = vadd.f32 0.0, %v4760
  %4762 = vmatmul.f32.gmra.mxu0 %v1401
  %v4763 = vpop.f32.mrf.mxu0
  %v4764 = vadd.f32 0.0, %v4763
  %4765 = vmatmul.f32.gmra.mxu0 %v1404
  %v4766 = vpop.f32.mrf.mxu0
  %v4767 = vadd.f32 0.0, %v4766
  %4768 = vmatmul.f32.gmra.mxu0 %v2675
  %v4769 = vpop.f32.mrf.mxu0
  %v4770 = vadd.f32 0.0, %v4769
  %4771 = vmatmul.f32.gmra.mxu0 %v1410
  %v4772 = vpop.f32.mrf.mxu0
  %v4773 = vadd.f32 0.0, %v4772
  %4774 = vmatmul.f32.gmra.mxu0 %v1413
  %v4775 = vpop.f32.mrf.mxu0
  %v4776 = vadd.f32 0.0, %v4775
  %4777 = vmatmul.f32.gmra.mxu0 %v1416
  %v4778 = vpop.f32.mrf.mxu0
  %v4779 = vadd.f32 0.0, %v4778
  %4780 = vmatmul.f32.gmra.mxu0 %v1419
  %v4781 = vpop.f32.mrf.mxu0
  %v4782 = vadd.f32 0.0, %v4781
  %4783 = vmatmul.f32.gmra.mxu0 %v1422
  %v4784 = vpop.f32.mrf.mxu0
  %v4785 = vadd.f32 0.0, %v4784
  %4786 = vmatmul.f32.gmra.mxu0 %v1425
  %v4787 = vpop.f32.mrf.mxu0
  %v4788 = vadd.f32 0.0, %v4787
  %4789 = vmatmul.f32.gmra.mxu0 %v1428
  %v4790 = vpop.f32.mrf.mxu0
  %v4791 = vadd.f32 0.0, %v4790
  %4792 = vmatmul.f32.gmra.mxu0 %v1431
  %v4793 = vpop.f32.mrf.mxu0
  %v4794 = vadd.f32 0.0, %v4793
  %4795 = vmatmul.f32.gmra.mxu0 %v1434
  %v4796 = vpop.f32.mrf.mxu0
  %v4797 = vadd.f32 0.0, %v4796
  %4798 = vmatmul.f32.gmra.mxu0 %v1437
  %v4799 = vpop.f32.mrf.mxu0
  %v4800 = vadd.f32 0.0, %v4799
  %4801 = vmatmul.f32.gmra.mxu0 %v1440
  %v4802 = vpop.f32.mrf.mxu0
  %v4803 = vadd.f32 0.0, %v4802
  %4804 = vmatmul.f32.gmra.mxu0 %v1443
  %v4805 = vpop.f32.mrf.mxu0
  %v4806 = vadd.f32 0.0, %v4805
  %4807 = vmatmul.f32.gmra.mxu0 %v1446
  %v4808 = vpop.f32.mrf.mxu0
  %v4809 = vadd.f32 0.0, %v4808
  %4810 = vmatmul.f32.gmra.mxu0 %v1449
  %v4811 = vpop.f32.mrf.mxu0
  %v4812 = vadd.f32 0.0, %v4811
  %4813 = vmatmul.f32.gmra.mxu0 %v1452
  %v4814 = vpop.f32.mrf.mxu0
  %v4815 = vadd.f32 0.0, %v4814
  %4816 = vmatmul.f32.gmra.mxu0 %v1455
  %v4817 = vpop.f32.mrf.mxu0
  %v4818 = vadd.f32 0.0, %v4817
  %4819 = vmatmul.f32.gmra.mxu0 %v1458
  %v4820 = vpop.f32.mrf.mxu0
  %v4821 = vadd.f32 0.0, %v4820
  %4822 = vmatmul.f32.gmra.mxu0 %v1461
  %v4823 = vpop.f32.mrf.mxu0
  %v4824 = vadd.f32 0.0, %v4823
  %4825 = vmatmul.f32.gmra.mxu0 %v2678
  %v4826 = vpop.f32.mrf.mxu0
  %v4827 = vadd.f32 0.0, %v4826
  %4828 = vmatmul.f32.gmra.mxu0 %v1467
  %v4829 = vpop.f32.mrf.mxu0
  %v4830 = vadd.f32 0.0, %v4829
  %4831 = vmatmul.f32.gmra.mxu0 %v1470
  %v4832 = vpop.f32.mrf.mxu0
  %v4833 = vadd.f32 0.0, %v4832
  %4834 = vmatmul.f32.gmra.mxu0 %v1473
  %v4835 = vpop.f32.mrf.mxu0
  %v4836 = vadd.f32 0.0, %v4835
  %4837 = vmatmul.f32.gmra.mxu0 %v1476
  %v4838 = vpop.f32.mrf.mxu0
  %v4839 = vadd.f32 0.0, %v4838
  %4840 = vmatmul.f32.gmra.mxu0 %v1479
  %v4841 = vpop.f32.mrf.mxu0
  %v4842 = vadd.f32 0.0, %v4841
  %4843 = vmatmul.f32.gmra.mxu0 %v1482
  %v4844 = vpop.f32.mrf.mxu0
  %v4845 = vadd.f32 0.0, %v4844
  %4846 = vmatmul.f32.gmra.mxu0 %v1485
  %v4847 = vpop.f32.mrf.mxu0
  %v4848 = vadd.f32 0.0, %v4847
  %4849 = vmatmul.f32.gmra.mxu0 %v1488
  %v4850 = vpop.f32.mrf.mxu0
  %v4851 = vadd.f32 0.0, %v4850
  %4852 = vmatmul.f32.gmra.mxu0 %v1491
  %v4853 = vpop.f32.mrf.mxu0
  %v4854 = vadd.f32 0.0, %v4853
  %4855 = vmatmul.f32.gmra.mxu0 %v1494
  %v4856 = vpop.f32.mrf.mxu0
  %v4857 = vadd.f32 0.0, %v4856
  %4858 = vmatmul.f32.gmra.mxu0 %v1497
  %v4859 = vpop.f32.mrf.mxu0
  %v4860 = vadd.f32 0.0, %v4859
  %4861 = vmatmul.f32.gmra.mxu0 %v1500
  %v4862 = vpop.f32.mrf.mxu0
  %v4863 = vadd.f32 0.0, %v4862
  %4864 = vmatmul.f32.gmra.mxu0 %v1503
  %v4865 = vpop.f32.mrf.mxu0
  %v4866 = vadd.f32 0.0, %v4865
  %4867 = vmatmul.f32.gmra.mxu0 %v1506
  %v4868 = vpop.f32.mrf.mxu0
  %v4869 = vadd.f32 0.0, %v4868
  %4870 = vmatmul.f32.gmra.mxu0 %v1509
  %v4871 = vpop.f32.mrf.mxu0
  %v4872 = vadd.f32 0.0, %v4871
  %4873 = vmatmul.f32.gmra.mxu0 %v1512
  %v4874 = vpop.f32.mrf.mxu0
  %v4875 = vadd.f32 0.0, %v4874
  %4876 = vmatmul.f32.gmra.mxu0 %v1515
  %v4877 = vpop.f32.mrf.mxu0
  %v4878 = vadd.f32 0.0, %v4877
  %4879 = vmatmul.f32.gmra.mxu0 %v1518
  %v4880 = vpop.f32.mrf.mxu0
  %v4881 = vadd.f32 0.0, %v4880
  %4882 = vmatmul.f32.gmra.mxu0 %v3784
  %v4883 = vpop.f32.mrf.mxu0
  %v4884 = vadd.f32 0.0, %v4883
  %4885 = vmatmul.f32.gmra.mxu0 %v3787
  %v4886 = vpop.f32.mrf.mxu0
  %v4887 = vadd.f32 0.0, %v4886
  %4888 = vmatmul.f32.gmra.mxu0 %v3790
  %v4889 = vpop.f32.mrf.mxu0
  %v4890 = vadd.f32 0.0, %v4889
  %4891 = vmatmul.f32.gmra.mxu0 %v3793
  %v4892 = vpop.f32.mrf.mxu0
  %v4893 = vadd.f32 0.0, %v4892
  %4894 = vmatmul.f32.gmra.mxu0 %v3796
  %v4895 = vpop.f32.mrf.mxu0
  %v4896 = vadd.f32 0.0, %v4895
  %4897 = vmatmul.f32.gmra.mxu0 %v3799
  %v4898 = vpop.f32.mrf.mxu0
  %v4899 = vadd.f32 0.0, %v4898
  %4900 = vmatmul.f32.gmra.mxu0 %v3802
  %v4901 = vpop.f32.mrf.mxu0
  %v4902 = vadd.f32 0.0, %v4901
  %4903 = vmatmul.f32.gmra.mxu0 %v3805
  %v4904 = vpop.f32.mrf.mxu0
  %v4905 = vadd.f32 0.0, %v4904
  %4906 = vmatmul.f32.gmra.mxu0 %v3808
  %v4907 = vpop.f32.mrf.mxu0
  %v4908 = vadd.f32 0.0, %v4907
  %4909 = vmatmul.f32.gmra.mxu0 %v3811
  %v4910 = vpop.f32.mrf.mxu0
  %v4911 = vadd.f32 0.0, %v4910
  %4912 = vmatmul.f32.gmra.mxu0 %v3814
  %v4913 = vpop.f32.mrf.mxu0
  %v4914 = vadd.f32 0.0, %v4913
  %4915 = vmatmul.f32.gmra.mxu0 %v3817
  %v4916 = vpop.f32.mrf.mxu0
  %v4917 = vadd.f32 0.0, %v4916
  %4918 = vmatmul.f32.gmra.mxu0 %v3820
  %v4919 = vpop.f32.mrf.mxu0
  %v4920 = vadd.f32 0.0, %v4919
  %4921 = vmatmul.f32.gmra.mxu0 %v3823
  %v4922 = vpop.f32.mrf.mxu0
  %v4923 = vadd.f32 0.0, %v4922
  %4924 = vmatmul.f32.gmra.mxu0 %v3826
  %v4925 = vpop.f32.mrf.mxu0
  %v4926 = vadd.f32 0.0, %v4925
  %4927 = vmatmul.f32.gmra.mxu0 %v3829
  %v4928 = vpop.f32.mrf.mxu0
  %v4929 = vadd.f32 0.0, %v4928
  %4930 = vmatmul.f32.gmra.mxu0 %v3832
  %v4931 = vpop.f32.mrf.mxu0
  %v4932 = vadd.f32 0.0, %v4931
  %4933 = vmatmul.f32.gmra.mxu0 %v3835
  %v4934 = vpop.f32.mrf.mxu0
  %v4935 = vadd.f32 0.0, %v4934
  %4936 = vmatmul.f32.gmra.mxu0 %v3838
  %v4937 = vpop.f32.mrf.mxu0
  %v4938 = vadd.f32 0.0, %v4937
  %4939 = vdwg.mxu0
  %v4940 = vadd.f32 %v2698, %v3858
  %v4941 = vadd.f32 %v2701, %v3861
  %v4942 = vadd.f32 %v2704, %v3864
  %v4943 = vadd.f32 %v2707, %v3867
  %v4944 = vadd.f32 %v2710, %v3870
  %v4945 = vadd.f32 %v2713, %v3873
  %v4946 = vadd.f32 %v2716, %v3876
  %v4947 = vadd.f32 %v2719, %v3879
  %v4948 = vadd.f32 %v2722, %v3882
  %v4949 = vadd.f32 %v2725, %v3885
  %v4950 = vadd.f32 %v2728, %v3888
  %v4951 = vadd.f32 %v2731, %v3891
  %v4952 = vadd.f32 %v2734, %v3894
  %v4953 = vadd.f32 %v2737, %v3897
  %v4954 = vadd.f32 %v2740, %v3900
  %v4955 = vadd.f32 %v2743, %v3903
  %v4956 = vadd.f32 %v2746, %v3906
  %v4957 = vadd.f32 %v2749, %v3909
  %v4958 = vadd.f32 %v2752, %v3912
  %v4959 = vadd.f32 %v2755, %v3915
  %v4960 = vadd.f32 %v2758, %v3918
  %v4961 = vadd.f32 %v2761, %v3921
  %v4962 = vadd.f32 %v2764, %v3924
  %v4963 = vadd.f32 %v2767, %v3927
  %v4964 = vadd.f32 %v2770, %v3930
  %v4965 = vadd.f32 %v2773, %v3933
  %v4966 = vadd.f32 %v2776, %v3936
  %v4967 = vadd.f32 %v2779, %v3939
  %v4968 = vadd.f32 %v2782, %v3942
  %v4969 = vadd.f32 %v2785, %v3945
  %v4970 = vadd.f32 %v2788, %v3948
  %v4971 = vadd.f32 %v2791, %v3951
  %v4972 = vadd.f32 %v2794, %v3954
  %v4973 = vadd.f32 %v2797, %v3957
  %v4974 = vadd.f32 %v2800, %v3960
  %v4975 = vadd.f32 %v2803, %v3963
  %v4976 = vadd.f32 %v2806, %v3966
  %v4977 = vadd.f32 %v2809, %v3969
  %v4978 = vadd.f32 %v2812, %v3972
  %v4979 = vadd.f32 %v2815, %v3975
  %v4980 = vadd.f32 %v2818, %v3978
  %v4981 = vadd.f32 %v2821, %v3981
  %v4982 = vadd.f32 %v2824, %v3984
  %v4983 = vadd.f32 %v2827, %v3987
  %v4984 = vadd.f32 %v2830, %v3990
  %v4985 = vadd.f32 %v2833, %v3993
  %v4986 = vadd.f32 %v2836, %v3996
  %v4987 = vadd.f32 %v2839, %v3999
  %v4988 = vadd.f32 %v2842, %v4002
  %v4989 = vadd.f32 %v2845, %v4005
  %v4990 = vadd.f32 %v2848, %v4008
  %v4991 = vadd.f32 %v2851, %v4011
  %v4992 = vadd.f32 %v2854, %v4014
  %v4993 = vadd.f32 %v2857, %v4017
  %v4994 = vadd.f32 %v2860, %v4020
  %v4995 = vadd.f32 %v2863, %v4023
  %v4996 = vadd.f32 %v2866, %v4026
  %v4997 = vadd.f32 %v2869, %v4029
  %v4998 = vadd.f32 %v2872, %v4032
  %v4999 = vadd.f32 %v2875, %v4035
  %v5000 = vadd.f32 %v2878, %v4038
  %v5001 = vadd.f32 %v2881, %v4041
  %v5002 = vadd.f32 %v2884, %v4044
  %v5003 = vadd.f32 %v2887, %v4047
  %v5004 = vadd.f32 %v2890, %v4050
  %v5005 = vadd.f32 %v2893, %v4053
  %v5006 = vadd.f32 %v2896, %v4056
  %v5007 = vadd.f32 %v2899, %v4059
  %v5008 = vadd.f32 %v2902, %v4062
  %v5009 = vadd.f32 %v2905, %v4065
  %v5010 = vadd.f32 %v2908, %v4068
  %v5011 = vadd.f32 %v2911, %v4071
  %v5012 = vadd.f32 %v2914, %v4074
  %v5013 = vadd.f32 %v2917, %v4077
  %v5014 = vadd.f32 %v2920, %v4080
  %v5015 = vadd.f32 %v2923, %v4083
  %v5016 = vadd.f32 %v2926, %v4086
  %v5017 = vadd.f32 %v2929, %v4089
  %v5018 = vadd.f32 %v2932, %v4092
  %v5019 = vadd.f32 %v2935, %v4095
  %v5020 = vadd.f32 %v2938, %v4098
  %v5021 = vadd.f32 %v2941, %v4101
  %v5022 = vadd.f32 %v2944, %v4104
  %v5023 = vadd.f32 %v2947, %v4107
  %v5024 = vadd.f32 %v2950, %v4110
  %v5025 = vadd.f32 %v2953, %v4113
  %v5026 = vadd.f32 %v2956, %v4116
  %v5027 = vadd.f32 %v2959, %v4119
  %v5028 = vadd.f32 %v2962, %v4122
  %v5029 = vadd.f32 %v2965, %v4125
  %v5030 = vadd.f32 %v2968, %v4128
  %v5031 = vadd.f32 %v2971, %v4131
  %v5032 = vadd.f32 %v2974, %v4134
  %v5033 = vadd.f32 %v2977, %v4137
  %v5034 = vadd.f32 %v2980, %v4140
  %v5035 = vadd.f32 %v2983, %v4143
  %v5036 = vadd.f32 %v2986, %v4146
  %v5037 = vadd.f32 %v2989, %v4149
  %v5038 = vadd.f32 %v2992, %v4152
  %v5039 = vadd.f32 %v2995, %v4155
  %v5040 = vadd.f32 %v2998, %v4158
  %v5041 = vadd.f32 %v3001, %v4161
  %v5042 = vadd.f32 %v3004, %v4164
  %v5043 = vadd.f32 %v3007, %v4167
  %v5044 = vadd.f32 %v3010, %v4170
  %v5045 = vadd.f32 %v3013, %v4173
  %v5046 = vadd.f32 %v3016, %v4176
  %v5047 = vadd.f32 %v3019, %v4179
  %v5048 = vadd.f32 %v3022, %v4182
  %v5049 = vadd.f32 %v3025, %v4185
  %v5050 = vadd.f32 %v3028, %v4188
  %v5051 = vadd.f32 %v3031, %v4191
  %v5052 = vadd.f32 %v3034, %v4194
  %v5053 = vadd.f32 %v3037, %v4197
  %v5054 = vadd.f32 %v3040, %v4200
  %v5055 = vadd.f32 %v3043, %v4203
  %v5056 = vadd.f32 %v3046, %v4206
  %v5057 = vadd.f32 %v3049, %v4209
  %v5058 = vadd.f32 %v3052, %v4212
  %v5059 = vadd.f32 %v3055, %v4215
  %v5060 = vadd.f32 %v3058, %v4218
  %v5061 = vadd.f32 %v3061, %v4221
  %v5062 = vadd.f32 %v3064, %v4224
  %v5063 = vadd.f32 %v3067, %v4227
  %v5064 = vadd.f32 %v3070, %v4230
  %v5065 = vadd.f32 %v3073, %v4233
  %v5066 = vadd.f32 %v3076, %v4236
  %v5067 = vadd.f32 %v3079, %v4239
  %v5068 = vadd.f32 %v3082, %v4242
  %v5069 = vadd.f32 %v3085, %v4245
  %v5070 = vadd.f32 %v3088, %v4248
  %v5071 = vadd.f32 %v3091, %v4251
  %v5072 = vadd.f32 %v3094, %v4254
  %v5073 = vadd.f32 %v3097, %v4257
  %v5074 = vadd.f32 %v3100, %v4260
  %v5075 = vadd.f32 %v3103, %v4263
  %v5076 = vadd.f32 %v3106, %v4266
  %v5077 = vadd.f32 %v3109, %v4269
  %v5078 = vadd.f32 %v3112, %v4272
  %v5079 = vadd.f32 %v3115, %v4275
  %v5080 = vadd.f32 %v3118, %v4278
  %v5081 = vadd.f32 %v3121, %v4281
  %v5082 = vadd.f32 %v3124, %v4284
  %v5083 = vadd.f32 %v3127, %v4287
  %v5084 = vadd.f32 %v3130, %v4290
  %v5085 = vadd.f32 %v3133, %v4293
  %v5086 = vadd.f32 %v3136, %v4296
  %v5087 = vadd.f32 %v3139, %v4299
  %v5088 = vadd.f32 %v3142, %v4302
  %v5089 = vadd.f32 %v3145, %v4305
  %v5090 = vadd.f32 %v3148, %v4308
  %v5091 = vadd.f32 %v3151, %v4311
  %v5092 = vadd.f32 %v3154, %v4314
  %v5093 = vadd.f32 %v3157, %v4317
  %v5094 = vadd.f32 %v3160, %v4320
  %v5095 = vadd.f32 %v3163, %v4323
  %v5096 = vadd.f32 %v3166, %v4326
  %v5097 = vadd.f32 %v3169, %v4329
  %v5098 = vadd.f32 %v3172, %v4332
  %v5099 = vadd.f32 %v3175, %v4335
  %v5100 = vadd.f32 %v3178, %v4338
  %v5101 = vadd.f32 %v3181, %v4341
  %v5102 = vadd.f32 %v3184, %v4344
  %v5103 = vadd.f32 %v3187, %v4347
  %v5104 = vadd.f32 %v3190, %v4350
  %v5105 = vadd.f32 %v3193, %v4353
  %v5106 = vadd.f32 %v3196, %v4356
  %v5107 = vadd.f32 %v3199, %v4359
  %v5108 = vadd.f32 %v3202, %v4362
  %v5109 = vadd.f32 %v3205, %v4365
  %v5110 = vadd.f32 %v3208, %v4368
  %v5111 = vadd.f32 %v3211, %v4371
  %v5112 = vadd.f32 %v3214, %v4374
  %v5113 = vadd.f32 %v3217, %v4377
  %v5114 = vadd.f32 %v3220, %v4380
  %v5115 = vadd.f32 %v3223, %v4383
  %v5116 = vadd.f32 %v3226, %v4386
  %v5117 = vadd.f32 %v3229, %v4389
  %v5118 = vadd.f32 %v3232, %v4392
  %v5119 = vadd.f32 %v3235, %v4395
  %v5120 = vadd.f32 %v3238, %v4398
  %v5121 = vadd.f32 %v3241, %v4401
  %v5122 = vadd.f32 %v3244, %v4404
  %v5123 = vadd.f32 %v3247, %v4407
  %v5124 = vadd.f32 %v3250, %v4410
  %v5125 = vadd.f32 %v3253, %v4413
  %v5126 = vadd.f32 %v3256, %v4416
  %v5127 = vadd.f32 %v3259, %v4419
  %v5128 = vadd.f32 %v3262, %v4422
  %v5129 = vadd.f32 %v3265, %v4425
  %v5130 = vadd.f32 %v3268, %v4428
  %v5131 = vadd.f32 %v3271, %v4431
  %v5132 = vadd.f32 %v3274, %v4434
  %v5133 = vadd.f32 %v3277, %v4437
  %v5134 = vadd.f32 %v3280, %v4440
  %v5135 = vadd.f32 %v3283, %v4443
  %v5136 = vadd.f32 %v3286, %v4446
  %v5137 = vadd.f32 %v3289, %v4449
  %v5138 = vadd.f32 %v3292, %v4452
  %v5139 = vadd.f32 %v3295, %v4455
  %v5140 = vadd.f32 %v3298, %v4458
  %v5141 = vadd.f32 %v3301, %v4461
  %v5142 = vadd.f32 %v3304, %v4464
  %v5143 = vadd.f32 %v3307, %v4467
  %v5144 = vadd.f32 %v3310, %v4470
  %v5145 = vadd.f32 %v3313, %v4473
  %v5146 = vadd.f32 %v3316, %v4476
  %v5147 = vadd.f32 %v3319, %v4479
  %v5148 = vadd.f32 %v3322, %v4482
  %v5149 = vadd.f32 %v3325, %v4485
  %v5150 = vadd.f32 %v3328, %v4488
  %v5151 = vadd.f32 %v3331, %v4491
  %v5152 = vadd.f32 %v3334, %v4494
  %v5153 = vadd.f32 %v3337, %v4497
  %v5154 = vadd.f32 %v3340, %v4500
  %v5155 = vadd.f32 %v3343, %v4503
  %v5156 = vadd.f32 %v3346, %v4506
  %v5157 = vadd.f32 %v3349, %v4509
  %v5158 = vadd.f32 %v3352, %v4512
  %v5159 = vadd.f32 %v3355, %v4515
  %v5160 = vadd.f32 %v3358, %v4518
  %v5161 = vadd.f32 %v3361, %v4521
  %v5162 = vadd.f32 %v3364, %v4524
  %v5163 = vadd.f32 %v3367, %v4527
  %v5164 = vadd.f32 %v3370, %v4530
  %v5165 = vadd.f32 %v3373, %v4533
  %v5166 = vadd.f32 %v3376, %v4536
  %v5167 = vadd.f32 %v3379, %v4539
  %v5168 = vadd.f32 %v3382, %v4542
  %v5169 = vadd.f32 %v3385, %v4545
  %v5170 = vadd.f32 %v3388, %v4548
  %v5171 = vadd.f32 %v3391, %v4551
  %v5172 = vadd.f32 %v3394, %v4554
  %v5173 = vadd.f32 %v3397, %v4557
  %v5174 = vadd.f32 %v3400, %v4560
  %v5175 = vadd.f32 %v3403, %v4563
  %v5176 = vadd.f32 %v3406, %v4566
  %v5177 = vadd.f32 %v3409, %v4569
  %v5178 = vadd.f32 %v3412, %v4572
  %v5179 = vadd.f32 %v3415, %v4575
  %v5180 = vadd.f32 %v3418, %v4578
  %v5181 = vadd.f32 %v3421, %v4581
  %v5182 = vadd.f32 %v3424, %v4584
  %v5183 = vadd.f32 %v3427, %v4587
  %v5184 = vadd.f32 %v3430, %v4590
  %v5185 = vadd.f32 %v3433, %v4593
  %v5186 = vadd.f32 %v3436, %v4596
  %v5187 = vadd.f32 %v3439, %v4599
  %v5188 = vadd.f32 %v3442, %v4602
  %v5189 = vadd.f32 %v3445, %v4605
  %v5190 = vadd.f32 %v3448, %v4608
  %v5191 = vadd.f32 %v3451, %v4611
  %v5192 = vadd.f32 %v3454, %v4614
  %v5193 = vadd.f32 %v3457, %v4617
  %v5194 = vadd.f32 %v3460, %v4620
  %v5195 = vadd.f32 %v3463, %v4623
  %v5196 = vadd.f32 %v3466, %v4626
  %v5197 = vadd.f32 %v3469, %v4629
  %v5198 = vadd.f32 %v3472, %v4632
  %v5199 = vadd.f32 %v3475, %v4635
  %v5200 = vadd.f32 %v3478, %v4638
  %v5201 = vadd.f32 %v3481, %v4641
  %v5202 = vadd.f32 %v3484, %v4644
  %v5203 = vadd.f32 %v3487, %v4647
  %v5204 = vadd.f32 %v3490, %v4650
  %v5205 = vadd.f32 %v3493, %v4653
  %v5206 = vadd.f32 %v3496, %v4656
  %v5207 = vadd.f32 %v3499, %v4659
  %v5208 = vadd.f32 %v3502, %v4662
  %v5209 = vadd.f32 %v3505, %v4665
  %v5210 = vadd.f32 %v3508, %v4668
  %v5211 = vadd.f32 %v3511, %v4671
  %v5212 = vadd.f32 %v3514, %v4674
  %v5213 = vadd.f32 %v3517, %v4677
  %v5214 = vadd.f32 %v3520, %v4680
  %v5215 = vadd.f32 %v3523, %v4683
  %v5216 = vadd.f32 %v3526, %v4686
  %v5217 = vadd.f32 %v3529, %v4689
  %v5218 = vadd.f32 %v3532, %v4692
  %v5219 = vadd.f32 %v3535, %v4695
  %v5220 = vadd.f32 %v3538, %v4698
  %v5221 = vadd.f32 %v3541, %v4701
  %v5222 = vadd.f32 %v3544, %v4704
  %v5223 = vadd.f32 %v3547, %v4707
  %v5224 = vadd.f32 %v3550, %v4710
  %v5225 = vadd.f32 %v3553, %v4713
  %v5226 = vadd.f32 %v3556, %v4716
  %v5227 = vadd.f32 %v3559, %v4719
  %v5228 = vadd.f32 %v3562, %v4722
  %v5229 = vadd.f32 %v3565, %v4725
  %v5230 = vadd.f32 %v3568, %v4728
  %v5231 = vadd.f32 %v3571, %v4731
  %v5232 = vadd.f32 %v3574, %v4734
  %v5233 = vadd.f32 %v3577, %v4737
  %v5234 = vadd.f32 %v3580, %v4740
  %v5235 = vadd.f32 %v3583, %v4743
  %v5236 = vadd.f32 %v3586, %v4746
  %v5237 = vadd.f32 %v3589, %v4749
  %v5238 = vadd.f32 %v3592, %v4752
  %v5239 = vadd.f32 %v3595, %v4755
  %v5240 = vadd.f32 %v3598, %v4758
  %v5241 = vadd.f32 %v3601, %v4761
  %v5242 = vadd.f32 %v3604, %v4764
  %v5243 = vadd.f32 %v3607, %v4767
  %v5244 = vadd.f32 %v3610, %v4770
  %v5245 = vadd.f32 %v3613, %v4773
  %v5246 = vadd.f32 %v3616, %v4776
  %v5247 = vadd.f32 %v3619, %v4779
  %v5248 = vadd.f32 %v3622, %v4782
  %v5249 = vadd.f32 %v3625, %v4785
  %v5250 = vadd.f32 %v3628, %v4788
  %v5251 = vadd.f32 %v3631, %v4791
  %v5252 = vadd.f32 %v3634, %v4794
  %v5253 = vadd.f32 %v3637, %v4797
  %v5254 = vadd.f32 %v3640, %v4800
  %v5255 = vadd.f32 %v3643, %v4803
  %v5256 = vadd.f32 %v3646, %v4806
  %v5257 = vadd.f32 %v3649, %v4809
  %v5258 = vadd.f32 %v3652, %v4812
  %v5259 = vadd.f32 %v3655, %v4815
  %v5260 = vadd.f32 %v3658, %v4818
  %v5261 = vadd.f32 %v3661, %v4821
  %v5262 = vadd.f32 %v3664, %v4824
  %v5263 = vadd.f32 %v3667, %v4827
  %v5264 = vadd.f32 %v3670, %v4830
  %v5265 = vadd.f32 %v3673, %v4833
  %v5266 = vadd.f32 %v3676, %v4836
  %v5267 = vadd.f32 %v3679, %v4839
  %v5268 = vadd.f32 %v3682, %v4842
  %v5269 = vadd.f32 %v3685, %v4845
  %v5270 = vadd.f32 %v3688, %v4848
  %v5271 = vadd.f32 %v3691, %v4851
  %v5272 = vadd.f32 %v3694, %v4854
  %v5273 = vadd.f32 %v3697, %v4857
  %v5274 = vadd.f32 %v3700, %v4860
  %v5275 = vadd.f32 %v3703, %v4863
  %v5276 = vadd.f32 %v3706, %v4866
  %v5277 = vadd.f32 %v3709, %v4869
  %v5278 = vadd.f32 %v3712, %v4872
  %v5279 = vadd.f32 %v3715, %v4875
  %v5280 = vadd.f32 %v3718, %v4878
  %v5281 = vadd.f32 %v3721, %v4881
  %v5282 = vadd.f32 %v3724, %v4884
  %v5283 = vadd.f32 %v3727, %v4887
  %v5284 = vadd.f32 %v3730, %v4890
  %v5285 = vadd.f32 %v3733, %v4893
  %v5286 = vadd.f32 %v3736, %v4896
  %v5287 = vadd.f32 %v3739, %v4899
  %v5288 = vadd.f32 %v3742, %v4902
  %v5289 = vadd.f32 %v3745, %v4905
  %v5290 = vadd.f32 %v3748, %v4908
  %v5291 = vadd.f32 %v3751, %v4911
  %v5292 = vadd.f32 %v3754, %v4914
  %v5293 = vadd.f32 %v3757, %v4917
  %v5294 = vadd.f32 %v3760, %v4920
  %v5295 = vadd.f32 %v3763, %v4923
  %v5296 = vadd.f32 %v3766, %v4926
  %v5297 = vadd.f32 %v3769, %v4929
  %v5298 = vadd.f32 %v3772, %v4932
  %v5299 = vadd.f32 %v3775, %v4935
  %v5300 = vadd.f32 %v3778, %v4938
  %s5301 = scalar_lea.vmem %s1, 48
  %v5302 = vld [vmem:[%s5301] sm:$0xff]
  %v5303 = vld [vmem:[%s5301 + $0x8] sm:$0xff]
  %v5305 = vsel %vm439, %v433, 0
  %5307 = vmatpush.msra.mxu0 0.0
  %5308 = vmatpush.msra.mxu0 0.0
  %5309 = vmatpush.msra.mxu0 0.0
  %5310 = vmatpush.msra.mxu0 0.0
  %5311 = vmatpush.msra.mxu0 0.0
  %5312 = vmatpush.msra.mxu0 0.0
  %5313 = vmatpush.msra.mxu0 0.0
  %5314 = vmatpush.msra.mxu0 0.0
  %5315 = vmatpush.msra.mxu0 0.0
  %5316 = vmatpush.msra.mxu0 0.0
  %5317 = vmatpush.msra.mxu0 0.0
  %5318 = vmatpush.msra.mxu0 0.0
  %5319 = vmatpush.msra.mxu0 0.0
  %5320 = vmatpush.msra.mxu0 0.0
  %5321 = vmatpush.msra.mxu0 %v5303
  %5322 = vmatpush.msra.mxu0 %v5302
  %5323 = vmatmul.f32.gmra.mxu0 %v498
  %v5324 = vpop.f32.mrf.mxu0
  %v5325 = vadd.f32 0.0, %v5324
  %5326 = vmatmul.f32.gmra.mxu0 %v501
  %v5327 = vpop.f32.mrf.mxu0
  %v5328 = vadd.f32 0.0, %v5327
  %5329 = vmatmul.f32.gmra.mxu0 %v504
  %v5330 = vpop.f32.mrf.mxu0
  %v5331 = vadd.f32 0.0, %v5330
  %5332 = vmatmul.f32.gmra.mxu0 %v507
  %v5333 = vpop.f32.mrf.mxu0
  %v5334 = vadd.f32 0.0, %v5333
  %5335 = vmatmul.f32.gmra.mxu0 %v510
  %v5336 = vpop.f32.mrf.mxu0
  %v5337 = vadd.f32 0.0, %v5336
  %5338 = vmatmul.f32.gmra.mxu0 %v513
  %v5339 = vpop.f32.mrf.mxu0
  %v5340 = vadd.f32 0.0, %v5339
  %5341 = vmatmul.f32.gmra.mxu0 %v516
  %v5342 = vpop.f32.mrf.mxu0
  %v5343 = vadd.f32 0.0, %v5342
  %5344 = vmatmul.f32.gmra.mxu0 %v519
  %v5345 = vpop.f32.mrf.mxu0
  %v5346 = vadd.f32 0.0, %v5345
  %5347 = vmatmul.f32.gmra.mxu0 %v522
  %v5348 = vpop.f32.mrf.mxu0
  %v5349 = vadd.f32 0.0, %v5348
  %5350 = vmatmul.f32.gmra.mxu0 %v525
  %v5351 = vpop.f32.mrf.mxu0
  %v5352 = vadd.f32 0.0, %v5351
  %5353 = vmatmul.f32.gmra.mxu0 %v528
  %v5354 = vpop.f32.mrf.mxu0
  %v5355 = vadd.f32 0.0, %v5354
  %5356 = vmatmul.f32.gmra.mxu0 %v531
  %v5357 = vpop.f32.mrf.mxu0
  %v5358 = vadd.f32 0.0, %v5357
  %5359 = vmatmul.f32.gmra.mxu0 %v534
  %v5360 = vpop.f32.mrf.mxu0
  %v5361 = vadd.f32 0.0, %v5360
  %5362 = vmatmul.f32.gmra.mxu0 %v537
  %v5363 = vpop.f32.mrf.mxu0
  %v5364 = vadd.f32 0.0, %v5363
  %5365 = vmatmul.f32.gmra.mxu0 %v540
  %v5366 = vpop.f32.mrf.mxu0
  %v5367 = vadd.f32 0.0, %v5366
  %5368 = vmatmul.f32.gmra.mxu0 %v543
  %v5369 = vpop.f32.mrf.mxu0
  %v5370 = vadd.f32 0.0, %v5369
  %5371 = vmatmul.f32.gmra.mxu0 %v546
  %v5372 = vpop.f32.mrf.mxu0
  %v5373 = vadd.f32 0.0, %v5372
  %5374 = vmatmul.f32.gmra.mxu0 %v549
  %v5375 = vpop.f32.mrf.mxu0
  %v5376 = vadd.f32 0.0, %v5375
  %5377 = vmatmul.f32.gmra.mxu0 %v552
  %v5378 = vpop.f32.mrf.mxu0
  %v5379 = vadd.f32 0.0, %v5378
  %5380 = vmatmul.f32.gmra.mxu0 %v555
  %v5381 = vpop.f32.mrf.mxu0
  %v5382 = vadd.f32 0.0, %v5381
  %5383 = vmatmul.f32.gmra.mxu0 %v558
  %v5384 = vpop.f32.mrf.mxu0
  %v5385 = vadd.f32 0.0, %v5384
  %5386 = vmatmul.f32.gmra.mxu0 %v561
  %v5387 = vpop.f32.mrf.mxu0
  %v5388 = vadd.f32 0.0, %v5387
  %5389 = vmatmul.f32.gmra.mxu0 %v564
  %v5390 = vpop.f32.mrf.mxu0
  %v5391 = vadd.f32 0.0, %v5390
  %5392 = vmatmul.f32.gmra.mxu0 %v567
  %v5393 = vpop.f32.mrf.mxu0
  %v5394 = vadd.f32 0.0, %v5393
  %5395 = vmatmul.f32.gmra.mxu0 %v570
  %v5396 = vpop.f32.mrf.mxu0
  %v5397 = vadd.f32 0.0, %v5396
  %5398 = vmatmul.f32.gmra.mxu0 %v573
  %v5399 = vpop.f32.mrf.mxu0
  %v5400 = vadd.f32 0.0, %v5399
  %5401 = vmatmul.f32.gmra.mxu0 %v576
  %v5402 = vpop.f32.mrf.mxu0
  %v5403 = vadd.f32 0.0, %v5402
  %5404 = vmatmul.f32.gmra.mxu0 %v579
  %v5405 = vpop.f32.mrf.mxu0
  %v5406 = vadd.f32 0.0, %v5405
  %5407 = vmatmul.f32.gmra.mxu0 %v582
  %v5408 = vpop.f32.mrf.mxu0
  %v5409 = vadd.f32 0.0, %v5408
  %5410 = vmatmul.f32.gmra.mxu0 %v585
  %v5411 = vpop.f32.mrf.mxu0
  %v5412 = vadd.f32 0.0, %v5411
  %5413 = vmatmul.f32.gmra.mxu0 %v588
  %v5414 = vpop.f32.mrf.mxu0
  %v5415 = vadd.f32 0.0, %v5414
  %5416 = vmatmul.f32.gmra.mxu0 %v591
  %v5417 = vpop.f32.mrf.mxu0
  %v5418 = vadd.f32 0.0, %v5417
  %5419 = vmatmul.f32.gmra.mxu0 %v594
  %v5420 = vpop.f32.mrf.mxu0
  %v5421 = vadd.f32 0.0, %v5420
  %5422 = vmatmul.f32.gmra.mxu0 %v597
  %v5423 = vpop.f32.mrf.mxu0
  %v5424 = vadd.f32 0.0, %v5423
  %5425 = vmatmul.f32.gmra.mxu0 %v600
  %v5426 = vpop.f32.mrf.mxu0
  %v5427 = vadd.f32 0.0, %v5426
  %5428 = vmatmul.f32.gmra.mxu0 %v603
  %v5429 = vpop.f32.mrf.mxu0
  %v5430 = vadd.f32 0.0, %v5429
  %5431 = vmatmul.f32.gmra.mxu0 %v606
  %v5432 = vpop.f32.mrf.mxu0
  %v5433 = vadd.f32 0.0, %v5432
  %5434 = vmatmul.f32.gmra.mxu0 %v609
  %v5435 = vpop.f32.mrf.mxu0
  %v5436 = vadd.f32 0.0, %v5435
  %5437 = vmatmul.f32.gmra.mxu0 %v612
  %v5438 = vpop.f32.mrf.mxu0
  %v5439 = vadd.f32 0.0, %v5438
  %5440 = vmatmul.f32.gmra.mxu0 %v615
  %v5441 = vpop.f32.mrf.mxu0
  %v5442 = vadd.f32 0.0, %v5441
  %5443 = vmatmul.f32.gmra.mxu0 %v618
  %v5444 = vpop.f32.mrf.mxu0
  %v5445 = vadd.f32 0.0, %v5444
  %5446 = vmatmul.f32.gmra.mxu0 %v621
  %v5447 = vpop.f32.mrf.mxu0
  %v5448 = vadd.f32 0.0, %v5447
  %5449 = vmatmul.f32.gmra.mxu0 %v624
  %v5450 = vpop.f32.mrf.mxu0
  %v5451 = vadd.f32 0.0, %v5450
  %5452 = vmatmul.f32.gmra.mxu0 %v627
  %v5453 = vpop.f32.mrf.mxu0
  %v5454 = vadd.f32 0.0, %v5453
  %5455 = vmatmul.f32.gmra.mxu0 %v630
  %v5456 = vpop.f32.mrf.mxu0
  %v5457 = vadd.f32 0.0, %v5456
  %5458 = vmatmul.f32.gmra.mxu0 %v633
  %v5459 = vpop.f32.mrf.mxu0
  %v5460 = vadd.f32 0.0, %v5459
  %5461 = vmatmul.f32.gmra.mxu0 %v636
  %v5462 = vpop.f32.mrf.mxu0
  %v5463 = vadd.f32 0.0, %v5462
  %5464 = vmatmul.f32.gmra.mxu0 %v639
  %v5465 = vpop.f32.mrf.mxu0
  %v5466 = vadd.f32 0.0, %v5465
  %5467 = vmatmul.f32.gmra.mxu0 %v642
  %v5468 = vpop.f32.mrf.mxu0
  %v5469 = vadd.f32 0.0, %v5468
  %5470 = vmatmul.f32.gmra.mxu0 %v645
  %v5471 = vpop.f32.mrf.mxu0
  %v5472 = vadd.f32 0.0, %v5471
  %5473 = vmatmul.f32.gmra.mxu0 %v648
  %v5474 = vpop.f32.mrf.mxu0
  %v5475 = vadd.f32 0.0, %v5474
  %5476 = vmatmul.f32.gmra.mxu0 %v651
  %v5477 = vpop.f32.mrf.mxu0
  %v5478 = vadd.f32 0.0, %v5477
  %5479 = vmatmul.f32.gmra.mxu0 %v654
  %v5480 = vpop.f32.mrf.mxu0
  %v5481 = vadd.f32 0.0, %v5480
  %5482 = vmatmul.f32.gmra.mxu0 %v657
  %v5483 = vpop.f32.mrf.mxu0
  %v5484 = vadd.f32 0.0, %v5483
  %5485 = vmatmul.f32.gmra.mxu0 %v660
  %v5486 = vpop.f32.mrf.mxu0
  %v5487 = vadd.f32 0.0, %v5486
  %5488 = vmatmul.f32.gmra.mxu0 %v663
  %v5489 = vpop.f32.mrf.mxu0
  %v5490 = vadd.f32 0.0, %v5489
  %5491 = vmatmul.f32.gmra.mxu0 %v666
  %v5492 = vpop.f32.mrf.mxu0
  %v5493 = vadd.f32 0.0, %v5492
  %5494 = vmatmul.f32.gmra.mxu0 %v669
  %v5495 = vpop.f32.mrf.mxu0
  %v5496 = vadd.f32 0.0, %v5495
  %5497 = vmatmul.f32.gmra.mxu0 %v672
  %v5498 = vpop.f32.mrf.mxu0
  %v5499 = vadd.f32 0.0, %v5498
  %5500 = vmatmul.f32.gmra.mxu0 %v675
  %v5501 = vpop.f32.mrf.mxu0
  %v5502 = vadd.f32 0.0, %v5501
  %5503 = vmatmul.f32.gmra.mxu0 %v678
  %v5504 = vpop.f32.mrf.mxu0
  %v5505 = vadd.f32 0.0, %v5504
  %5506 = vmatmul.f32.gmra.mxu0 %v681
  %v5507 = vpop.f32.mrf.mxu0
  %v5508 = vadd.f32 0.0, %v5507
  %5509 = vmatmul.f32.gmra.mxu0 %v684
  %v5510 = vpop.f32.mrf.mxu0
  %v5511 = vadd.f32 0.0, %v5510
  %5512 = vmatmul.f32.gmra.mxu0 %v687
  %v5513 = vpop.f32.mrf.mxu0
  %v5514 = vadd.f32 0.0, %v5513
  %5515 = vmatmul.f32.gmra.mxu0 %v690
  %v5516 = vpop.f32.mrf.mxu0
  %v5517 = vadd.f32 0.0, %v5516
  %5518 = vmatmul.f32.gmra.mxu0 %v693
  %v5519 = vpop.f32.mrf.mxu0
  %v5520 = vadd.f32 0.0, %v5519
  %5521 = vmatmul.f32.gmra.mxu0 %v696
  %v5522 = vpop.f32.mrf.mxu0
  %v5523 = vadd.f32 0.0, %v5522
  %5524 = vmatmul.f32.gmra.mxu0 %v699
  %v5525 = vpop.f32.mrf.mxu0
  %v5526 = vadd.f32 0.0, %v5525
  %5527 = vmatmul.f32.gmra.mxu0 %v702
  %v5528 = vpop.f32.mrf.mxu0
  %v5529 = vadd.f32 0.0, %v5528
  %5530 = vmatmul.f32.gmra.mxu0 %v705
  %v5531 = vpop.f32.mrf.mxu0
  %v5532 = vadd.f32 0.0, %v5531
  %5533 = vmatmul.f32.gmra.mxu0 %v708
  %v5534 = vpop.f32.mrf.mxu0
  %v5535 = vadd.f32 0.0, %v5534
  %5536 = vmatmul.f32.gmra.mxu0 %v711
  %v5537 = vpop.f32.mrf.mxu0
  %v5538 = vadd.f32 0.0, %v5537
  %5539 = vmatmul.f32.gmra.mxu0 %v714
  %v5540 = vpop.f32.mrf.mxu0
  %v5541 = vadd.f32 0.0, %v5540
  %5542 = vmatmul.f32.gmra.mxu0 %v717
  %v5543 = vpop.f32.mrf.mxu0
  %v5544 = vadd.f32 0.0, %v5543
  %5545 = vmatmul.f32.gmra.mxu0 %v720
  %v5546 = vpop.f32.mrf.mxu0
  %v5547 = vadd.f32 0.0, %v5546
  %5548 = vmatmul.f32.gmra.mxu0 %v723
  %v5549 = vpop.f32.mrf.mxu0
  %v5550 = vadd.f32 0.0, %v5549
  %5551 = vmatmul.f32.gmra.mxu0 %v726
  %v5552 = vpop.f32.mrf.mxu0
  %v5553 = vadd.f32 0.0, %v5552
  %5554 = vmatmul.f32.gmra.mxu0 %v729
  %v5555 = vpop.f32.mrf.mxu0
  %v5556 = vadd.f32 0.0, %v5555
  %5557 = vmatmul.f32.gmra.mxu0 %v732
  %v5558 = vpop.f32.mrf.mxu0
  %v5559 = vadd.f32 0.0, %v5558
  %5560 = vmatmul.f32.gmra.mxu0 %v735
  %v5561 = vpop.f32.mrf.mxu0
  %v5562 = vadd.f32 0.0, %v5561
  %5563 = vmatmul.f32.gmra.mxu0 %v738
  %v5564 = vpop.f32.mrf.mxu0
  %v5565 = vadd.f32 0.0, %v5564
  %5566 = vmatmul.f32.gmra.mxu0 %v741
  %v5567 = vpop.f32.mrf.mxu0
  %v5568 = vadd.f32 0.0, %v5567
  %5569 = vmatmul.f32.gmra.mxu0 %v744
  %v5570 = vpop.f32.mrf.mxu0
  %v5571 = vadd.f32 0.0, %v5570
  %5572 = vmatmul.f32.gmra.mxu0 %v747
  %v5573 = vpop.f32.mrf.mxu0
  %v5574 = vadd.f32 0.0, %v5573
  %5575 = vmatmul.f32.gmra.mxu0 %v750
  %v5576 = vpop.f32.mrf.mxu0
  %v5577 = vadd.f32 0.0, %v5576
  %5578 = vmatmul.f32.gmra.mxu0 %v753
  %v5579 = vpop.f32.mrf.mxu0
  %v5580 = vadd.f32 0.0, %v5579
  %5581 = vmatmul.f32.gmra.mxu0 %v756
  %v5582 = vpop.f32.mrf.mxu0
  %v5583 = vadd.f32 0.0, %v5582
  %5584 = vmatmul.f32.gmra.mxu0 %v759
  %v5585 = vpop.f32.mrf.mxu0
  %v5586 = vadd.f32 0.0, %v5585
  %5587 = vmatmul.f32.gmra.mxu0 %v762
  %v5588 = vpop.f32.mrf.mxu0
  %v5589 = vadd.f32 0.0, %v5588
  %5590 = vmatmul.f32.gmra.mxu0 %v765
  %v5591 = vpop.f32.mrf.mxu0
  %v5592 = vadd.f32 0.0, %v5591
  %5593 = vmatmul.f32.gmra.mxu0 %v768
  %v5594 = vpop.f32.mrf.mxu0
  %v5595 = vadd.f32 0.0, %v5594
  %5596 = vmatmul.f32.gmra.mxu0 %v771
  %v5597 = vpop.f32.mrf.mxu0
  %v5598 = vadd.f32 0.0, %v5597
  %5599 = vmatmul.f32.gmra.mxu0 %v774
  %v5600 = vpop.f32.mrf.mxu0
  %v5601 = vadd.f32 0.0, %v5600
  %5602 = vmatmul.f32.gmra.mxu0 %v777
  %v5603 = vpop.f32.mrf.mxu0
  %v5604 = vadd.f32 0.0, %v5603
  %5605 = vmatmul.f32.gmra.mxu0 %v780
  %v5606 = vpop.f32.mrf.mxu0
  %v5607 = vadd.f32 0.0, %v5606
  %5608 = vmatmul.f32.gmra.mxu0 %v783
  %v5609 = vpop.f32.mrf.mxu0
  %v5610 = vadd.f32 0.0, %v5609
  %5611 = vmatmul.f32.gmra.mxu0 %v786
  %v5612 = vpop.f32.mrf.mxu0
  %v5613 = vadd.f32 0.0, %v5612
  %5614 = vmatmul.f32.gmra.mxu0 %v789
  %v5615 = vpop.f32.mrf.mxu0
  %v5616 = vadd.f32 0.0, %v5615
  %5617 = vmatmul.f32.gmra.mxu0 %v792
  %v5618 = vpop.f32.mrf.mxu0
  %v5619 = vadd.f32 0.0, %v5618
  %5620 = vmatmul.f32.gmra.mxu0 %v795
  %v5621 = vpop.f32.mrf.mxu0
  %v5622 = vadd.f32 0.0, %v5621
  %5623 = vmatmul.f32.gmra.mxu0 %v798
  %v5624 = vpop.f32.mrf.mxu0
  %v5625 = vadd.f32 0.0, %v5624
  %5626 = vmatmul.f32.gmra.mxu0 %v801
  %v5627 = vpop.f32.mrf.mxu0
  %v5628 = vadd.f32 0.0, %v5627
  %5629 = vmatmul.f32.gmra.mxu0 %v804
  %v5630 = vpop.f32.mrf.mxu0
  %v5631 = vadd.f32 0.0, %v5630
  %5632 = vmatmul.f32.gmra.mxu0 %v807
  %v5633 = vpop.f32.mrf.mxu0
  %v5634 = vadd.f32 0.0, %v5633
  %5635 = vmatmul.f32.gmra.mxu0 %v810
  %v5636 = vpop.f32.mrf.mxu0
  %v5637 = vadd.f32 0.0, %v5636
  %5638 = vmatmul.f32.gmra.mxu0 %v813
  %v5639 = vpop.f32.mrf.mxu0
  %v5640 = vadd.f32 0.0, %v5639
  %5641 = vmatmul.f32.gmra.mxu0 %v816
  %v5642 = vpop.f32.mrf.mxu0
  %v5643 = vadd.f32 0.0, %v5642
  %5644 = vmatmul.f32.gmra.mxu0 %v819
  %v5645 = vpop.f32.mrf.mxu0
  %v5646 = vadd.f32 0.0, %v5645
  %5647 = vmatmul.f32.gmra.mxu0 %v822
  %v5648 = vpop.f32.mrf.mxu0
  %v5649 = vadd.f32 0.0, %v5648
  %5650 = vmatmul.f32.gmra.mxu0 %v825
  %v5651 = vpop.f32.mrf.mxu0
  %v5652 = vadd.f32 0.0, %v5651
  %5653 = vmatmul.f32.gmra.mxu0 %v828
  %v5654 = vpop.f32.mrf.mxu0
  %v5655 = vadd.f32 0.0, %v5654
  %5656 = vmatmul.f32.gmra.mxu0 %v831
  %v5657 = vpop.f32.mrf.mxu0
  %v5658 = vadd.f32 0.0, %v5657
  %5659 = vmatmul.f32.gmra.mxu0 %v834
  %v5660 = vpop.f32.mrf.mxu0
  %v5661 = vadd.f32 0.0, %v5660
  %5662 = vmatmul.f32.gmra.mxu0 %v837
  %v5663 = vpop.f32.mrf.mxu0
  %v5664 = vadd.f32 0.0, %v5663
  %5665 = vmatmul.f32.gmra.mxu0 %v840
  %v5666 = vpop.f32.mrf.mxu0
  %v5667 = vadd.f32 0.0, %v5666
  %5668 = vmatmul.f32.gmra.mxu0 %v843
  %v5669 = vpop.f32.mrf.mxu0
  %v5670 = vadd.f32 0.0, %v5669
  %5671 = vmatmul.f32.gmra.mxu0 %v846
  %v5672 = vpop.f32.mrf.mxu0
  %v5673 = vadd.f32 0.0, %v5672
  %5674 = vmatmul.f32.gmra.mxu0 %v849
  %v5675 = vpop.f32.mrf.mxu0
  %v5676 = vadd.f32 0.0, %v5675
  %5677 = vmatmul.f32.gmra.mxu0 %v852
  %v5678 = vpop.f32.mrf.mxu0
  %v5679 = vadd.f32 0.0, %v5678
  %5680 = vmatmul.f32.gmra.mxu0 %v855
  %v5681 = vpop.f32.mrf.mxu0
  %v5682 = vadd.f32 0.0, %v5681
  %5683 = vmatmul.f32.gmra.mxu0 %v858
  %v5684 = vpop.f32.mrf.mxu0
  %v5685 = vadd.f32 0.0, %v5684
  %5686 = vmatmul.f32.gmra.mxu0 %v861
  %v5687 = vpop.f32.mrf.mxu0
  %v5688 = vadd.f32 0.0, %v5687
  %5689 = vmatmul.f32.gmra.mxu0 %v864
  %v5690 = vpop.f32.mrf.mxu0
  %v5691 = vadd.f32 0.0, %v5690
  %5692 = vmatmul.f32.gmra.mxu0 %v867
  %v5693 = vpop.f32.mrf.mxu0
  %v5694 = vadd.f32 0.0, %v5693
  %5695 = vmatmul.f32.gmra.mxu0 %v870
  %v5696 = vpop.f32.mrf.mxu0
  %v5697 = vadd.f32 0.0, %v5696
  %5698 = vmatmul.f32.gmra.mxu0 %v873
  %v5699 = vpop.f32.mrf.mxu0
  %v5700 = vadd.f32 0.0, %v5699
  %5701 = vmatmul.f32.gmra.mxu0 %v876
  %v5702 = vpop.f32.mrf.mxu0
  %v5703 = vadd.f32 0.0, %v5702
  %5704 = vmatmul.f32.gmra.mxu0 %v879
  %v5705 = vpop.f32.mrf.mxu0
  %v5706 = vadd.f32 0.0, %v5705
  %5707 = vmatmul.f32.gmra.mxu0 %v882
  %v5708 = vpop.f32.mrf.mxu0
  %v5709 = vadd.f32 0.0, %v5708
  %5710 = vmatmul.f32.gmra.mxu0 %v885
  %v5711 = vpop.f32.mrf.mxu0
  %v5712 = vadd.f32 0.0, %v5711
  %5713 = vmatmul.f32.gmra.mxu0 %v888
  %v5714 = vpop.f32.mrf.mxu0
  %v5715 = vadd.f32 0.0, %v5714
  %5716 = vmatmul.f32.gmra.mxu0 %v891
  %v5717 = vpop.f32.mrf.mxu0
  %v5718 = vadd.f32 0.0, %v5717
  %5719 = vmatmul.f32.gmra.mxu0 %v894
  %v5720 = vpop.f32.mrf.mxu0
  %v5721 = vadd.f32 0.0, %v5720
  %5722 = vmatmul.f32.gmra.mxu0 %v897
  %v5723 = vpop.f32.mrf.mxu0
  %v5724 = vadd.f32 0.0, %v5723
  %5725 = vmatmul.f32.gmra.mxu0 %v900
  %v5726 = vpop.f32.mrf.mxu0
  %v5727 = vadd.f32 0.0, %v5726
  %5728 = vmatmul.f32.gmra.mxu0 %v903
  %v5729 = vpop.f32.mrf.mxu0
  %v5730 = vadd.f32 0.0, %v5729
  %5731 = vmatmul.f32.gmra.mxu0 %v906
  %v5732 = vpop.f32.mrf.mxu0
  %v5733 = vadd.f32 0.0, %v5732
  %5734 = vmatmul.f32.gmra.mxu0 %v909
  %v5735 = vpop.f32.mrf.mxu0
  %v5736 = vadd.f32 0.0, %v5735
  %5737 = vmatmul.f32.gmra.mxu0 %v912
  %v5738 = vpop.f32.mrf.mxu0
  %v5739 = vadd.f32 0.0, %v5738
  %5740 = vmatmul.f32.gmra.mxu0 %v915
  %v5741 = vpop.f32.mrf.mxu0
  %v5742 = vadd.f32 0.0, %v5741
  %5743 = vmatmul.f32.gmra.mxu0 %v918
  %v5744 = vpop.f32.mrf.mxu0
  %v5745 = vadd.f32 0.0, %v5744
  %5746 = vmatmul.f32.gmra.mxu0 %v921
  %v5747 = vpop.f32.mrf.mxu0
  %v5748 = vadd.f32 0.0, %v5747
  %5749 = vmatmul.f32.gmra.mxu0 %v924
  %v5750 = vpop.f32.mrf.mxu0
  %v5751 = vadd.f32 0.0, %v5750
  %5752 = vmatmul.f32.gmra.mxu0 %v927
  %v5753 = vpop.f32.mrf.mxu0
  %v5754 = vadd.f32 0.0, %v5753
  %5755 = vmatmul.f32.gmra.mxu0 %v930
  %v5756 = vpop.f32.mrf.mxu0
  %v5757 = vadd.f32 0.0, %v5756
  %5758 = vmatmul.f32.gmra.mxu0 %v933
  %v5759 = vpop.f32.mrf.mxu0
  %v5760 = vadd.f32 0.0, %v5759
  %5761 = vmatmul.f32.gmra.mxu0 %v936
  %v5762 = vpop.f32.mrf.mxu0
  %v5763 = vadd.f32 0.0, %v5762
  %5764 = vmatmul.f32.gmra.mxu0 %v939
  %v5765 = vpop.f32.mrf.mxu0
  %v5766 = vadd.f32 0.0, %v5765
  %5767 = vmatmul.f32.gmra.mxu0 %v942
  %v5768 = vpop.f32.mrf.mxu0
  %v5769 = vadd.f32 0.0, %v5768
  %5770 = vmatmul.f32.gmra.mxu0 %v945
  %v5771 = vpop.f32.mrf.mxu0
  %v5772 = vadd.f32 0.0, %v5771
  %5773 = vmatmul.f32.gmra.mxu0 %v948
  %v5774 = vpop.f32.mrf.mxu0
  %v5775 = vadd.f32 0.0, %v5774
  %5776 = vmatmul.f32.gmra.mxu0 %v951
  %v5777 = vpop.f32.mrf.mxu0
  %v5778 = vadd.f32 0.0, %v5777
  %5779 = vmatmul.f32.gmra.mxu0 %v954
  %v5780 = vpop.f32.mrf.mxu0
  %v5781 = vadd.f32 0.0, %v5780
  %5782 = vmatmul.f32.gmra.mxu0 %v957
  %v5783 = vpop.f32.mrf.mxu0
  %v5784 = vadd.f32 0.0, %v5783
  %5785 = vmatmul.f32.gmra.mxu0 %v960
  %v5786 = vpop.f32.mrf.mxu0
  %v5787 = vadd.f32 0.0, %v5786
  %5788 = vmatmul.f32.gmra.mxu0 %v963
  %v5789 = vpop.f32.mrf.mxu0
  %v5790 = vadd.f32 0.0, %v5789
  %5791 = vmatmul.f32.gmra.mxu0 %v966
  %v5792 = vpop.f32.mrf.mxu0
  %v5793 = vadd.f32 0.0, %v5792
  %5794 = vmatmul.f32.gmra.mxu0 %v969
  %v5795 = vpop.f32.mrf.mxu0
  %v5796 = vadd.f32 0.0, %v5795
  %5797 = vmatmul.f32.gmra.mxu0 %v972
  %v5798 = vpop.f32.mrf.mxu0
  %v5799 = vadd.f32 0.0, %v5798
  %5800 = vmatmul.f32.gmra.mxu0 %v975
  %v5801 = vpop.f32.mrf.mxu0
  %v5802 = vadd.f32 0.0, %v5801
  %5803 = vmatmul.f32.gmra.mxu0 %v978
  %v5804 = vpop.f32.mrf.mxu0
  %v5805 = vadd.f32 0.0, %v5804
  %5806 = vmatmul.f32.gmra.mxu0 %v981
  %v5807 = vpop.f32.mrf.mxu0
  %v5808 = vadd.f32 0.0, %v5807
  %5809 = vmatmul.f32.gmra.mxu0 %v984
  %v5810 = vpop.f32.mrf.mxu0
  %v5811 = vadd.f32 0.0, %v5810
  %5812 = vmatmul.f32.gmra.mxu0 %v987
  %v5813 = vpop.f32.mrf.mxu0
  %v5814 = vadd.f32 0.0, %v5813
  %5815 = vmatmul.f32.gmra.mxu0 %v990
  %v5816 = vpop.f32.mrf.mxu0
  %v5817 = vadd.f32 0.0, %v5816
  %5818 = vmatmul.f32.gmra.mxu0 %v993
  %v5819 = vpop.f32.mrf.mxu0
  %v5820 = vadd.f32 0.0, %v5819
  %5821 = vmatmul.f32.gmra.mxu0 %v996
  %v5822 = vpop.f32.mrf.mxu0
  %v5823 = vadd.f32 0.0, %v5822
  %5824 = vmatmul.f32.gmra.mxu0 %v999
  %v5825 = vpop.f32.mrf.mxu0
  %v5826 = vadd.f32 0.0, %v5825
  %5827 = vmatmul.f32.gmra.mxu0 %v1002
  %v5828 = vpop.f32.mrf.mxu0
  %v5829 = vadd.f32 0.0, %v5828
  %5830 = vmatmul.f32.gmra.mxu0 %v1005
  %v5831 = vpop.f32.mrf.mxu0
  %v5832 = vadd.f32 0.0, %v5831
  %5833 = vmatmul.f32.gmra.mxu0 %v1008
  %v5834 = vpop.f32.mrf.mxu0
  %v5835 = vadd.f32 0.0, %v5834
  %5836 = vmatmul.f32.gmra.mxu0 %v1011
  %v5837 = vpop.f32.mrf.mxu0
  %v5838 = vadd.f32 0.0, %v5837
  %5839 = vmatmul.f32.gmra.mxu0 %v1014
  %v5840 = vpop.f32.mrf.mxu0
  %v5841 = vadd.f32 0.0, %v5840
  %5842 = vmatmul.f32.gmra.mxu0 %v1017
  %v5843 = vpop.f32.mrf.mxu0
  %v5844 = vadd.f32 0.0, %v5843
  %5845 = vmatmul.f32.gmra.mxu0 %v1020
  %v5846 = vpop.f32.mrf.mxu0
  %v5847 = vadd.f32 0.0, %v5846
  %5848 = vmatmul.f32.gmra.mxu0 %v1023
  %v5849 = vpop.f32.mrf.mxu0
  %v5850 = vadd.f32 0.0, %v5849
  %5851 = vmatmul.f32.gmra.mxu0 %v1026
  %v5852 = vpop.f32.mrf.mxu0
  %v5853 = vadd.f32 0.0, %v5852
  %5854 = vmatmul.f32.gmra.mxu0 %v1029
  %v5855 = vpop.f32.mrf.mxu0
  %v5856 = vadd.f32 0.0, %v5855
  %5857 = vmatmul.f32.gmra.mxu0 %v1032
  %v5858 = vpop.f32.mrf.mxu0
  %v5859 = vadd.f32 0.0, %v5858
  %5860 = vmatmul.f32.gmra.mxu0 %v1035
  %v5861 = vpop.f32.mrf.mxu0
  %v5862 = vadd.f32 0.0, %v5861
  %5863 = vmatmul.f32.gmra.mxu0 %v1038
  %v5864 = vpop.f32.mrf.mxu0
  %v5865 = vadd.f32 0.0, %v5864
  %5866 = vmatmul.f32.gmra.mxu0 %v1041
  %v5867 = vpop.f32.mrf.mxu0
  %v5868 = vadd.f32 0.0, %v5867
  %5869 = vmatmul.f32.gmra.mxu0 %v1044
  %v5870 = vpop.f32.mrf.mxu0
  %v5871 = vadd.f32 0.0, %v5870
  %5872 = vmatmul.f32.gmra.mxu0 %v1047
  %v5873 = vpop.f32.mrf.mxu0
  %v5874 = vadd.f32 0.0, %v5873
  %5875 = vmatmul.f32.gmra.mxu0 %v1050
  %v5876 = vpop.f32.mrf.mxu0
  %v5877 = vadd.f32 0.0, %v5876
  %5878 = vmatmul.f32.gmra.mxu0 %v1053
  %v5879 = vpop.f32.mrf.mxu0
  %v5880 = vadd.f32 0.0, %v5879
  %5881 = vmatmul.f32.gmra.mxu0 %v1056
  %v5882 = vpop.f32.mrf.mxu0
  %v5883 = vadd.f32 0.0, %v5882
  %5884 = vmatmul.f32.gmra.mxu0 %v1059
  %v5885 = vpop.f32.mrf.mxu0
  %v5886 = vadd.f32 0.0, %v5885
  %5887 = vmatmul.f32.gmra.mxu0 %v1062
  %v5888 = vpop.f32.mrf.mxu0
  %v5889 = vadd.f32 0.0, %v5888
  %5890 = vmatmul.f32.gmra.mxu0 %v1065
  %v5891 = vpop.f32.mrf.mxu0
  %v5892 = vadd.f32 0.0, %v5891
  %5893 = vmatmul.f32.gmra.mxu0 %v1068
  %v5894 = vpop.f32.mrf.mxu0
  %v5895 = vadd.f32 0.0, %v5894
  %5896 = vmatmul.f32.gmra.mxu0 %v1071
  %v5897 = vpop.f32.mrf.mxu0
  %v5898 = vadd.f32 0.0, %v5897
  %5899 = vmatmul.f32.gmra.mxu0 %v1074
  %v5900 = vpop.f32.mrf.mxu0
  %v5901 = vadd.f32 0.0, %v5900
  %5902 = vmatmul.f32.gmra.mxu0 %v1077
  %v5903 = vpop.f32.mrf.mxu0
  %v5904 = vadd.f32 0.0, %v5903
  %5905 = vmatmul.f32.gmra.mxu0 %v1080
  %v5906 = vpop.f32.mrf.mxu0
  %v5907 = vadd.f32 0.0, %v5906
  %5908 = vmatmul.f32.gmra.mxu0 %v1083
  %v5909 = vpop.f32.mrf.mxu0
  %v5910 = vadd.f32 0.0, %v5909
  %5911 = vmatmul.f32.gmra.mxu0 %v1086
  %v5912 = vpop.f32.mrf.mxu0
  %v5913 = vadd.f32 0.0, %v5912
  %5914 = vmatmul.f32.gmra.mxu0 %v1089
  %v5915 = vpop.f32.mrf.mxu0
  %v5916 = vadd.f32 0.0, %v5915
  %5917 = vmatmul.f32.gmra.mxu0 %v1092
  %v5918 = vpop.f32.mrf.mxu0
  %v5919 = vadd.f32 0.0, %v5918
  %5920 = vmatmul.f32.gmra.mxu0 %v1095
  %v5921 = vpop.f32.mrf.mxu0
  %v5922 = vadd.f32 0.0, %v5921
  %5923 = vmatmul.f32.gmra.mxu0 %v1098
  %v5924 = vpop.f32.mrf.mxu0
  %v5925 = vadd.f32 0.0, %v5924
  %5926 = vmatmul.f32.gmra.mxu0 %v1101
  %v5927 = vpop.f32.mrf.mxu0
  %v5928 = vadd.f32 0.0, %v5927
  %5929 = vmatmul.f32.gmra.mxu0 %v1104
  %v5930 = vpop.f32.mrf.mxu0
  %v5931 = vadd.f32 0.0, %v5930
  %5932 = vmatmul.f32.gmra.mxu0 %v1107
  %v5933 = vpop.f32.mrf.mxu0
  %v5934 = vadd.f32 0.0, %v5933
  %5935 = vmatmul.f32.gmra.mxu0 %v1110
  %v5936 = vpop.f32.mrf.mxu0
  %v5937 = vadd.f32 0.0, %v5936
  %5938 = vmatmul.f32.gmra.mxu0 %v1113
  %v5939 = vpop.f32.mrf.mxu0
  %v5940 = vadd.f32 0.0, %v5939
  %5941 = vmatmul.f32.gmra.mxu0 %v1116
  %v5942 = vpop.f32.mrf.mxu0
  %v5943 = vadd.f32 0.0, %v5942
  %5944 = vmatmul.f32.gmra.mxu0 %v1119
  %v5945 = vpop.f32.mrf.mxu0
  %v5946 = vadd.f32 0.0, %v5945
  %5947 = vmatmul.f32.gmra.mxu0 %v1122
  %v5948 = vpop.f32.mrf.mxu0
  %v5949 = vadd.f32 0.0, %v5948
  %5950 = vmatmul.f32.gmra.mxu0 %v1125
  %v5951 = vpop.f32.mrf.mxu0
  %v5952 = vadd.f32 0.0, %v5951
  %5953 = vmatmul.f32.gmra.mxu0 %v1128
  %v5954 = vpop.f32.mrf.mxu0
  %v5955 = vadd.f32 0.0, %v5954
  %5956 = vmatmul.f32.gmra.mxu0 %v1131
  %v5957 = vpop.f32.mrf.mxu0
  %v5958 = vadd.f32 0.0, %v5957
  %5959 = vmatmul.f32.gmra.mxu0 %v1134
  %v5960 = vpop.f32.mrf.mxu0
  %v5961 = vadd.f32 0.0, %v5960
  %5962 = vmatmul.f32.gmra.mxu0 %v1137
  %v5963 = vpop.f32.mrf.mxu0
  %v5964 = vadd.f32 0.0, %v5963
  %5965 = vmatmul.f32.gmra.mxu0 %v1140
  %v5966 = vpop.f32.mrf.mxu0
  %v5967 = vadd.f32 0.0, %v5966
  %5968 = vmatmul.f32.gmra.mxu0 %v1143
  %v5969 = vpop.f32.mrf.mxu0
  %v5970 = vadd.f32 0.0, %v5969
  %5971 = vmatmul.f32.gmra.mxu0 %v1146
  %v5972 = vpop.f32.mrf.mxu0
  %v5973 = vadd.f32 0.0, %v5972
  %5974 = vmatmul.f32.gmra.mxu0 %v1149
  %v5975 = vpop.f32.mrf.mxu0
  %v5976 = vadd.f32 0.0, %v5975
  %5977 = vmatmul.f32.gmra.mxu0 %v1152
  %v5978 = vpop.f32.mrf.mxu0
  %v5979 = vadd.f32 0.0, %v5978
  %5980 = vmatmul.f32.gmra.mxu0 %v1155
  %v5981 = vpop.f32.mrf.mxu0
  %v5982 = vadd.f32 0.0, %v5981
  %5983 = vmatmul.f32.gmra.mxu0 %v1158
  %v5984 = vpop.f32.mrf.mxu0
  %v5985 = vadd.f32 0.0, %v5984
  %5986 = vmatmul.f32.gmra.mxu0 %v1161
  %v5987 = vpop.f32.mrf.mxu0
  %v5988 = vadd.f32 0.0, %v5987
  %5989 = vmatmul.f32.gmra.mxu0 %v1164
  %v5990 = vpop.f32.mrf.mxu0
  %v5991 = vadd.f32 0.0, %v5990
  %5992 = vmatmul.f32.gmra.mxu0 %v1167
  %v5993 = vpop.f32.mrf.mxu0
  %v5994 = vadd.f32 0.0, %v5993
  %5995 = vmatmul.f32.gmra.mxu0 %v1170
  %v5996 = vpop.f32.mrf.mxu0
  %v5997 = vadd.f32 0.0, %v5996
  %5998 = vmatmul.f32.gmra.mxu0 %v1173
  %v5999 = vpop.f32.mrf.mxu0
  %v6000 = vadd.f32 0.0, %v5999
  %6001 = vmatmul.f32.gmra.mxu0 %v1176
  %v6002 = vpop.f32.mrf.mxu0
  %v6003 = vadd.f32 0.0, %v6002
  %6004 = vmatmul.f32.gmra.mxu0 %v1179
  %v6005 = vpop.f32.mrf.mxu0
  %v6006 = vadd.f32 0.0, %v6005
  %6007 = vmatmul.f32.gmra.mxu0 %v1182
  %v6008 = vpop.f32.mrf.mxu0
  %v6009 = vadd.f32 0.0, %v6008
  %6010 = vmatmul.f32.gmra.mxu0 %v1185
  %v6011 = vpop.f32.mrf.mxu0
  %v6012 = vadd.f32 0.0, %v6011
  %6013 = vmatmul.f32.gmra.mxu0 %v1188
  %v6014 = vpop.f32.mrf.mxu0
  %v6015 = vadd.f32 0.0, %v6014
  %6016 = vmatmul.f32.gmra.mxu0 %v1191
  %v6017 = vpop.f32.mrf.mxu0
  %v6018 = vadd.f32 0.0, %v6017
  %6019 = vmatmul.f32.gmra.mxu0 %v1194
  %v6020 = vpop.f32.mrf.mxu0
  %v6021 = vadd.f32 0.0, %v6020
  %6022 = vmatmul.f32.gmra.mxu0 %v1197
  %v6023 = vpop.f32.mrf.mxu0
  %v6024 = vadd.f32 0.0, %v6023
  %6025 = vmatmul.f32.gmra.mxu0 %v1200
  %v6026 = vpop.f32.mrf.mxu0
  %v6027 = vadd.f32 0.0, %v6026
  %6028 = vmatmul.f32.gmra.mxu0 %v1203
  %v6029 = vpop.f32.mrf.mxu0
  %v6030 = vadd.f32 0.0, %v6029
  %6031 = vmatmul.f32.gmra.mxu0 %v1206
  %v6032 = vpop.f32.mrf.mxu0
  %v6033 = vadd.f32 0.0, %v6032
  %6034 = vmatmul.f32.gmra.mxu0 %v1209
  %v6035 = vpop.f32.mrf.mxu0
  %v6036 = vadd.f32 0.0, %v6035
  %6037 = vmatmul.f32.gmra.mxu0 %v1212
  %v6038 = vpop.f32.mrf.mxu0
  %v6039 = vadd.f32 0.0, %v6038
  %6040 = vmatmul.f32.gmra.mxu0 %v1215
  %v6041 = vpop.f32.mrf.mxu0
  %v6042 = vadd.f32 0.0, %v6041
  %6043 = vmatmul.f32.gmra.mxu0 %v1218
  %v6044 = vpop.f32.mrf.mxu0
  %v6045 = vadd.f32 0.0, %v6044
  %6046 = vmatmul.f32.gmra.mxu0 %v1221
  %v6047 = vpop.f32.mrf.mxu0
  %v6048 = vadd.f32 0.0, %v6047
  %6049 = vmatmul.f32.gmra.mxu0 %v1224
  %v6050 = vpop.f32.mrf.mxu0
  %v6051 = vadd.f32 0.0, %v6050
  %6052 = vmatmul.f32.gmra.mxu0 %v1227
  %v6053 = vpop.f32.mrf.mxu0
  %v6054 = vadd.f32 0.0, %v6053
  %6055 = vmatmul.f32.gmra.mxu0 %v1230
  %v6056 = vpop.f32.mrf.mxu0
  %v6057 = vadd.f32 0.0, %v6056
  %6058 = vmatmul.f32.gmra.mxu0 %v1233
  %v6059 = vpop.f32.mrf.mxu0
  %v6060 = vadd.f32 0.0, %v6059
  %6061 = vmatmul.f32.gmra.mxu0 %v1236
  %v6062 = vpop.f32.mrf.mxu0
  %v6063 = vadd.f32 0.0, %v6062
  %6064 = vmatmul.f32.gmra.mxu0 %v1239
  %v6065 = vpop.f32.mrf.mxu0
  %v6066 = vadd.f32 0.0, %v6065
  %6067 = vmatmul.f32.gmra.mxu0 %v1242
  %v6068 = vpop.f32.mrf.mxu0
  %v6069 = vadd.f32 0.0, %v6068
  %6070 = vmatmul.f32.gmra.mxu0 %v1245
  %v6071 = vpop.f32.mrf.mxu0
  %v6072 = vadd.f32 0.0, %v6071
  %6073 = vmatmul.f32.gmra.mxu0 %v1248
  %v6074 = vpop.f32.mrf.mxu0
  %v6075 = vadd.f32 0.0, %v6074
  %6076 = vmatmul.f32.gmra.mxu0 %v1251
  %v6077 = vpop.f32.mrf.mxu0
  %v6078 = vadd.f32 0.0, %v6077
  %6079 = vmatmul.f32.gmra.mxu0 %v1254
  %v6080 = vpop.f32.mrf.mxu0
  %v6081 = vadd.f32 0.0, %v6080
  %6082 = vmatmul.f32.gmra.mxu0 %v1257
  %v6083 = vpop.f32.mrf.mxu0
  %v6084 = vadd.f32 0.0, %v6083
  %6085 = vmatmul.f32.gmra.mxu0 %v1260
  %v6086 = vpop.f32.mrf.mxu0
  %v6087 = vadd.f32 0.0, %v6086
  %6088 = vmatmul.f32.gmra.mxu0 %v1263
  %v6089 = vpop.f32.mrf.mxu0
  %v6090 = vadd.f32 0.0, %v6089
  %6091 = vmatmul.f32.gmra.mxu0 %v1266
  %v6092 = vpop.f32.mrf.mxu0
  %v6093 = vadd.f32 0.0, %v6092
  %6094 = vmatmul.f32.gmra.mxu0 %v1269
  %v6095 = vpop.f32.mrf.mxu0
  %v6096 = vadd.f32 0.0, %v6095
  %6097 = vmatmul.f32.gmra.mxu0 %v1272
  %v6098 = vpop.f32.mrf.mxu0
  %v6099 = vadd.f32 0.0, %v6098
  %6100 = vmatmul.f32.gmra.mxu0 %v1275
  %v6101 = vpop.f32.mrf.mxu0
  %v6102 = vadd.f32 0.0, %v6101
  %6103 = vmatmul.f32.gmra.mxu0 %v1278
  %v6104 = vpop.f32.mrf.mxu0
  %v6105 = vadd.f32 0.0, %v6104
  %6106 = vmatmul.f32.gmra.mxu0 %v1281
  %v6107 = vpop.f32.mrf.mxu0
  %v6108 = vadd.f32 0.0, %v6107
  %6109 = vmatmul.f32.gmra.mxu0 %v1284
  %v6110 = vpop.f32.mrf.mxu0
  %v6111 = vadd.f32 0.0, %v6110
  %6112 = vmatmul.f32.gmra.mxu0 %v1287
  %v6113 = vpop.f32.mrf.mxu0
  %v6114 = vadd.f32 0.0, %v6113
  %6115 = vmatmul.f32.gmra.mxu0 %v1290
  %v6116 = vpop.f32.mrf.mxu0
  %v6117 = vadd.f32 0.0, %v6116
  %6118 = vmatmul.f32.gmra.mxu0 %v1293
  %v6119 = vpop.f32.mrf.mxu0
  %v6120 = vadd.f32 0.0, %v6119
  %6121 = vmatmul.f32.gmra.mxu0 %v1296
  %v6122 = vpop.f32.mrf.mxu0
  %v6123 = vadd.f32 0.0, %v6122
  %6124 = vmatmul.f32.gmra.mxu0 %v1299
  %v6125 = vpop.f32.mrf.mxu0
  %v6126 = vadd.f32 0.0, %v6125
  %6127 = vmatmul.f32.gmra.mxu0 %v1302
  %v6128 = vpop.f32.mrf.mxu0
  %v6129 = vadd.f32 0.0, %v6128
  %6130 = vmatmul.f32.gmra.mxu0 %v1305
  %v6131 = vpop.f32.mrf.mxu0
  %v6132 = vadd.f32 0.0, %v6131
  %6133 = vmatmul.f32.gmra.mxu0 %v1308
  %v6134 = vpop.f32.mrf.mxu0
  %v6135 = vadd.f32 0.0, %v6134
  %6136 = vmatmul.f32.gmra.mxu0 %v1311
  %v6137 = vpop.f32.mrf.mxu0
  %v6138 = vadd.f32 0.0, %v6137
  %6139 = vmatmul.f32.gmra.mxu0 %v1314
  %v6140 = vpop.f32.mrf.mxu0
  %v6141 = vadd.f32 0.0, %v6140
  %6142 = vmatmul.f32.gmra.mxu0 %v1317
  %v6143 = vpop.f32.mrf.mxu0
  %v6144 = vadd.f32 0.0, %v6143
  %6145 = vmatmul.f32.gmra.mxu0 %v1320
  %v6146 = vpop.f32.mrf.mxu0
  %v6147 = vadd.f32 0.0, %v6146
  %6148 = vmatmul.f32.gmra.mxu0 %v1323
  %v6149 = vpop.f32.mrf.mxu0
  %v6150 = vadd.f32 0.0, %v6149
  %6151 = vmatmul.f32.gmra.mxu0 %v1326
  %v6152 = vpop.f32.mrf.mxu0
  %v6153 = vadd.f32 0.0, %v6152
  %6154 = vmatmul.f32.gmra.mxu0 %v1329
  %v6155 = vpop.f32.mrf.mxu0
  %v6156 = vadd.f32 0.0, %v6155
  %6157 = vmatmul.f32.gmra.mxu0 %v1332
  %v6158 = vpop.f32.mrf.mxu0
  %v6159 = vadd.f32 0.0, %v6158
  %6160 = vmatmul.f32.gmra.mxu0 %v1335
  %v6161 = vpop.f32.mrf.mxu0
  %v6162 = vadd.f32 0.0, %v6161
  %6163 = vmatmul.f32.gmra.mxu0 %v1338
  %v6164 = vpop.f32.mrf.mxu0
  %v6165 = vadd.f32 0.0, %v6164
  %6166 = vmatmul.f32.gmra.mxu0 %v1341
  %v6167 = vpop.f32.mrf.mxu0
  %v6168 = vadd.f32 0.0, %v6167
  %6169 = vmatmul.f32.gmra.mxu0 %v1344
  %v6170 = vpop.f32.mrf.mxu0
  %v6171 = vadd.f32 0.0, %v6170
  %6172 = vmatmul.f32.gmra.mxu0 %v1347
  %v6173 = vpop.f32.mrf.mxu0
  %v6174 = vadd.f32 0.0, %v6173
  %6175 = vmatmul.f32.gmra.mxu0 %v1350
  %v6176 = vpop.f32.mrf.mxu0
  %v6177 = vadd.f32 0.0, %v6176
  %6178 = vmatmul.f32.gmra.mxu0 %v1353
  %v6179 = vpop.f32.mrf.mxu0
  %v6180 = vadd.f32 0.0, %v6179
  %6181 = vmatmul.f32.gmra.mxu0 %v1356
  %v6182 = vpop.f32.mrf.mxu0
  %v6183 = vadd.f32 0.0, %v6182
  %6184 = vmatmul.f32.gmra.mxu0 %v1359
  %v6185 = vpop.f32.mrf.mxu0
  %v6186 = vadd.f32 0.0, %v6185
  %6187 = vmatmul.f32.gmra.mxu0 %v1362
  %v6188 = vpop.f32.mrf.mxu0
  %v6189 = vadd.f32 0.0, %v6188
  %6190 = vmatmul.f32.gmra.mxu0 %v1365
  %v6191 = vpop.f32.mrf.mxu0
  %v6192 = vadd.f32 0.0, %v6191
  %6193 = vmatmul.f32.gmra.mxu0 %v1368
  %v6194 = vpop.f32.mrf.mxu0
  %v6195 = vadd.f32 0.0, %v6194
  %6196 = vmatmul.f32.gmra.mxu0 %v1371
  %v6197 = vpop.f32.mrf.mxu0
  %v6198 = vadd.f32 0.0, %v6197
  %6199 = vmatmul.f32.gmra.mxu0 %v1374
  %v6200 = vpop.f32.mrf.mxu0
  %v6201 = vadd.f32 0.0, %v6200
  %6202 = vmatmul.f32.gmra.mxu0 %v1377
  %v6203 = vpop.f32.mrf.mxu0
  %v6204 = vadd.f32 0.0, %v6203
  %6205 = vmatmul.f32.gmra.mxu0 %v1380
  %v6206 = vpop.f32.mrf.mxu0
  %v6207 = vadd.f32 0.0, %v6206
  %6208 = vmatmul.f32.gmra.mxu0 %v1383
  %v6209 = vpop.f32.mrf.mxu0
  %v6210 = vadd.f32 0.0, %v6209
  %6211 = vmatmul.f32.gmra.mxu0 %v1386
  %v6212 = vpop.f32.mrf.mxu0
  %v6213 = vadd.f32 0.0, %v6212
  %6214 = vmatmul.f32.gmra.mxu0 %v1389
  %v6215 = vpop.f32.mrf.mxu0
  %v6216 = vadd.f32 0.0, %v6215
  %6217 = vmatmul.f32.gmra.mxu0 %v1392
  %v6218 = vpop.f32.mrf.mxu0
  %v6219 = vadd.f32 0.0, %v6218
  %6220 = vmatmul.f32.gmra.mxu0 %v1395
  %v6221 = vpop.f32.mrf.mxu0
  %v6222 = vadd.f32 0.0, %v6221
  %6223 = vmatmul.f32.gmra.mxu0 %v1398
  %v6224 = vpop.f32.mrf.mxu0
  %v6225 = vadd.f32 0.0, %v6224
  %6226 = vmatmul.f32.gmra.mxu0 %v1401
  %v6227 = vpop.f32.mrf.mxu0
  %v6228 = vadd.f32 0.0, %v6227
  %6229 = vmatmul.f32.gmra.mxu0 %v1404
  %v6230 = vpop.f32.mrf.mxu0
  %v6231 = vadd.f32 0.0, %v6230
  %6232 = vmatmul.f32.gmra.mxu0 %v1407
  %v6233 = vpop.f32.mrf.mxu0
  %v6234 = vadd.f32 0.0, %v6233
  %6235 = vmatmul.f32.gmra.mxu0 %v1410
  %v6236 = vpop.f32.mrf.mxu0
  %v6237 = vadd.f32 0.0, %v6236
  %6238 = vmatmul.f32.gmra.mxu0 %v1413
  %v6239 = vpop.f32.mrf.mxu0
  %v6240 = vadd.f32 0.0, %v6239
  %6241 = vmatmul.f32.gmra.mxu0 %v1416
  %v6242 = vpop.f32.mrf.mxu0
  %v6243 = vadd.f32 0.0, %v6242
  %6244 = vmatmul.f32.gmra.mxu0 %v1419
  %v6245 = vpop.f32.mrf.mxu0
  %v6246 = vadd.f32 0.0, %v6245
  %6247 = vmatmul.f32.gmra.mxu0 %v1422
  %v6248 = vpop.f32.mrf.mxu0
  %v6249 = vadd.f32 0.0, %v6248
  %6250 = vmatmul.f32.gmra.mxu0 %v1425
  %v6251 = vpop.f32.mrf.mxu0
  %v6252 = vadd.f32 0.0, %v6251
  %6253 = vmatmul.f32.gmra.mxu0 %v1428
  %v6254 = vpop.f32.mrf.mxu0
  %v6255 = vadd.f32 0.0, %v6254
  %6256 = vmatmul.f32.gmra.mxu0 %v1431
  %v6257 = vpop.f32.mrf.mxu0
  %v6258 = vadd.f32 0.0, %v6257
  %6259 = vmatmul.f32.gmra.mxu0 %v1434
  %v6260 = vpop.f32.mrf.mxu0
  %v6261 = vadd.f32 0.0, %v6260
  %6262 = vmatmul.f32.gmra.mxu0 %v1437
  %v6263 = vpop.f32.mrf.mxu0
  %v6264 = vadd.f32 0.0, %v6263
  %6265 = vmatmul.f32.gmra.mxu0 %v1440
  %v6266 = vpop.f32.mrf.mxu0
  %v6267 = vadd.f32 0.0, %v6266
  %6268 = vmatmul.f32.gmra.mxu0 %v1443
  %v6269 = vpop.f32.mrf.mxu0
  %v6270 = vadd.f32 0.0, %v6269
  %6271 = vmatmul.f32.gmra.mxu0 %v1446
  %v6272 = vpop.f32.mrf.mxu0
  %v6273 = vadd.f32 0.0, %v6272
  %6274 = vmatmul.f32.gmra.mxu0 %v1449
  %v6275 = vpop.f32.mrf.mxu0
  %v6276 = vadd.f32 0.0, %v6275
  %6277 = vmatmul.f32.gmra.mxu0 %v1452
  %v6278 = vpop.f32.mrf.mxu0
  %v6279 = vadd.f32 0.0, %v6278
  %6280 = vmatmul.f32.gmra.mxu0 %v1455
  %v6281 = vpop.f32.mrf.mxu0
  %v6282 = vadd.f32 0.0, %v6281
  %6283 = vmatmul.f32.gmra.mxu0 %v1458
  %v6284 = vpop.f32.mrf.mxu0
  %v6285 = vadd.f32 0.0, %v6284
  %6286 = vmatmul.f32.gmra.mxu0 %v1461
  %v6287 = vpop.f32.mrf.mxu0
  %v6288 = vadd.f32 0.0, %v6287
  %6289 = vmatmul.f32.gmra.mxu0 %v1464
  %v6290 = vpop.f32.mrf.mxu0
  %v6291 = vadd.f32 0.0, %v6290
  %6292 = vmatmul.f32.gmra.mxu0 %v1467
  %v6293 = vpop.f32.mrf.mxu0
  %v6294 = vadd.f32 0.0, %v6293
  %6295 = vmatmul.f32.gmra.mxu0 %v1470
  %v6296 = vpop.f32.mrf.mxu0
  %v6297 = vadd.f32 0.0, %v6296
  %6298 = vmatmul.f32.gmra.mxu0 %v1473
  %v6299 = vpop.f32.mrf.mxu0
  %v6300 = vadd.f32 0.0, %v6299
  %6301 = vmatmul.f32.gmra.mxu0 %v1476
  %v6302 = vpop.f32.mrf.mxu0
  %v6303 = vadd.f32 0.0, %v6302
  %6304 = vmatmul.f32.gmra.mxu0 %v1479
  %v6305 = vpop.f32.mrf.mxu0
  %v6306 = vadd.f32 0.0, %v6305
  %6307 = vmatmul.f32.gmra.mxu0 %v1482
  %v6308 = vpop.f32.mrf.mxu0
  %v6309 = vadd.f32 0.0, %v6308
  %6310 = vmatmul.f32.gmra.mxu0 %v1485
  %v6311 = vpop.f32.mrf.mxu0
  %v6312 = vadd.f32 0.0, %v6311
  %6313 = vmatmul.f32.gmra.mxu0 %v1488
  %v6314 = vpop.f32.mrf.mxu0
  %v6315 = vadd.f32 0.0, %v6314
  %6316 = vmatmul.f32.gmra.mxu0 %v1491
  %v6317 = vpop.f32.mrf.mxu0
  %v6318 = vadd.f32 0.0, %v6317
  %6319 = vmatmul.f32.gmra.mxu0 %v1494
  %v6320 = vpop.f32.mrf.mxu0
  %v6321 = vadd.f32 0.0, %v6320
  %6322 = vmatmul.f32.gmra.mxu0 %v1497
  %v6323 = vpop.f32.mrf.mxu0
  %v6324 = vadd.f32 0.0, %v6323
  %6325 = vmatmul.f32.gmra.mxu0 %v1500
  %v6326 = vpop.f32.mrf.mxu0
  %v6327 = vadd.f32 0.0, %v6326
  %6328 = vmatmul.f32.gmra.mxu0 %v1503
  %v6329 = vpop.f32.mrf.mxu0
  %v6330 = vadd.f32 0.0, %v6329
  %6331 = vmatmul.f32.gmra.mxu0 %v1506
  %v6332 = vpop.f32.mrf.mxu0
  %v6333 = vadd.f32 0.0, %v6332
  %6334 = vmatmul.f32.gmra.mxu0 %v1509
  %v6335 = vpop.f32.mrf.mxu0
  %v6336 = vadd.f32 0.0, %v6335
  %6337 = vmatmul.f32.gmra.mxu0 %v1512
  %v6338 = vpop.f32.mrf.mxu0
  %v6339 = vadd.f32 0.0, %v6338
  %6340 = vmatmul.f32.gmra.mxu0 %v1515
  %v6341 = vpop.f32.mrf.mxu0
  %v6342 = vadd.f32 0.0, %v6341
  %6343 = vmatmul.f32.gmra.mxu0 %v1518
  %v6344 = vpop.f32.mrf.mxu0
  %v6345 = vadd.f32 0.0, %v6344
  %6346 = vmatmul.f32.gmra.mxu0 %v1521
  %v6347 = vpop.f32.mrf.mxu0
  %v6348 = vadd.f32 0.0, %v6347
  %6349 = vmatmul.f32.gmra.mxu0 %v3787
  %v6350 = vpop.f32.mrf.mxu0
  %v6351 = vadd.f32 0.0, %v6350
  %6352 = vmatmul.f32.gmra.mxu0 %v3790
  %v6353 = vpop.f32.mrf.mxu0
  %v6354 = vadd.f32 0.0, %v6353
  %6355 = vmatmul.f32.gmra.mxu0 %v3793
  %v6356 = vpop.f32.mrf.mxu0
  %v6357 = vadd.f32 0.0, %v6356
  %6358 = vmatmul.f32.gmra.mxu0 %v3796
  %v6359 = vpop.f32.mrf.mxu0
  %v6360 = vadd.f32 0.0, %v6359
  %6361 = vmatmul.f32.gmra.mxu0 %v3799
  %v6362 = vpop.f32.mrf.mxu0
  %v6363 = vadd.f32 0.0, %v6362
  %6364 = vmatmul.f32.gmra.mxu0 %v3802
  %v6365 = vpop.f32.mrf.mxu0
  %v6366 = vadd.f32 0.0, %v6365
  %6367 = vmatmul.f32.gmra.mxu0 %v3805
  %v6368 = vpop.f32.mrf.mxu0
  %v6369 = vadd.f32 0.0, %v6368
  %6370 = vmatmul.f32.gmra.mxu0 %v3808
  %v6371 = vpop.f32.mrf.mxu0
  %v6372 = vadd.f32 0.0, %v6371
  %6373 = vmatmul.f32.gmra.mxu0 %v3811
  %v6374 = vpop.f32.mrf.mxu0
  %v6375 = vadd.f32 0.0, %v6374
  %6376 = vmatmul.f32.gmra.mxu0 %v3814
  %v6377 = vpop.f32.mrf.mxu0
  %v6378 = vadd.f32 0.0, %v6377
  %6379 = vmatmul.f32.gmra.mxu0 %v3817
  %v6380 = vpop.f32.mrf.mxu0
  %v6381 = vadd.f32 0.0, %v6380
  %6382 = vmatmul.f32.gmra.mxu0 %v3820
  %v6383 = vpop.f32.mrf.mxu0
  %v6384 = vadd.f32 0.0, %v6383
  %6385 = vmatmul.f32.gmra.mxu0 %v3823
  %v6386 = vpop.f32.mrf.mxu0
  %v6387 = vadd.f32 0.0, %v6386
  %6388 = vmatmul.f32.gmra.mxu0 %v3826
  %v6389 = vpop.f32.mrf.mxu0
  %v6390 = vadd.f32 0.0, %v6389
  %6391 = vmatmul.f32.gmra.mxu0 %v3829
  %v6392 = vpop.f32.mrf.mxu0
  %v6393 = vadd.f32 0.0, %v6392
  %6394 = vmatmul.f32.gmra.mxu0 %v3832
  %v6395 = vpop.f32.mrf.mxu0
  %v6396 = vadd.f32 0.0, %v6395
  %6397 = vmatmul.f32.gmra.mxu0 %v3835
  %v6398 = vpop.f32.mrf.mxu0
  %v6399 = vadd.f32 0.0, %v6398
  %6400 = vmatmul.f32.gmra.mxu0 %v3838
  %v6401 = vpop.f32.mrf.mxu0
  %v6402 = vadd.f32 0.0, %v6401
  %6403 = vmatmul.f32.gmra.mxu0 %v5305
  %v6404 = vpop.f32.mrf.mxu0
  %v6405 = vadd.f32 0.0, %v6404
  %6406 = vdwg.mxu0
  %v6407 = vadd.f32 %v4940, %v5325
  %v6408 = vadd.f32 %v4941, %v5328
  %v6409 = vadd.f32 %v4942, %v5331
  %v6410 = vadd.f32 %v4943, %v5334
  %v6411 = vadd.f32 %v4944, %v5337
  %v6412 = vadd.f32 %v4945, %v5340
  %v6413 = vadd.f32 %v4946, %v5343
  %v6414 = vadd.f32 %v4947, %v5346
  %v6415 = vadd.f32 %v4948, %v5349
  %v6416 = vadd.f32 %v4949, %v5352
  %v6417 = vadd.f32 %v4950, %v5355
  %v6418 = vadd.f32 %v4951, %v5358
  %v6419 = vadd.f32 %v4952, %v5361
  %v6420 = vadd.f32 %v4953, %v5364
  %v6421 = vadd.f32 %v4954, %v5367
  %v6422 = vadd.f32 %v4955, %v5370
  %v6423 = vadd.f32 %v4956, %v5373
  %v6424 = vadd.f32 %v4957, %v5376
  %v6425 = vadd.f32 %v4958, %v5379
  %v6426 = vadd.f32 %v4959, %v5382
  %v6427 = vadd.f32 %v4960, %v5385
  %v6428 = vadd.f32 %v4961, %v5388
  %v6429 = vadd.f32 %v4962, %v5391
  %v6430 = vadd.f32 %v4963, %v5394
  %v6431 = vadd.f32 %v4964, %v5397
  %v6432 = vadd.f32 %v4965, %v5400
  %v6433 = vadd.f32 %v4966, %v5403
  %v6434 = vadd.f32 %v4967, %v5406
  %v6435 = vadd.f32 %v4968, %v5409
  %v6436 = vadd.f32 %v4969, %v5412
  %v6437 = vadd.f32 %v4970, %v5415
  %v6438 = vadd.f32 %v4971, %v5418
  %v6439 = vadd.f32 %v4972, %v5421
  %v6440 = vadd.f32 %v4973, %v5424
  %v6441 = vadd.f32 %v4974, %v5427
  %v6442 = vadd.f32 %v4975, %v5430
  %v6443 = vadd.f32 %v4976, %v5433
  %v6444 = vadd.f32 %v4977, %v5436
  %v6445 = vadd.f32 %v4978, %v5439
  %v6446 = vadd.f32 %v4979, %v5442
  %v6447 = vadd.f32 %v4980, %v5445
  %v6448 = vadd.f32 %v4981, %v5448
  %v6449 = vadd.f32 %v4982, %v5451
  %v6450 = vadd.f32 %v4983, %v5454
  %v6451 = vadd.f32 %v4984, %v5457
  %v6452 = vadd.f32 %v4985, %v5460
  %v6453 = vadd.f32 %v4986, %v5463
  %v6454 = vadd.f32 %v4987, %v5466
  %v6455 = vadd.f32 %v4988, %v5469
  %v6456 = vadd.f32 %v4989, %v5472
  %v6457 = vadd.f32 %v4990, %v5475
  %v6458 = vadd.f32 %v4991, %v5478
  %v6459 = vadd.f32 %v4992, %v5481
  %v6460 = vadd.f32 %v4993, %v5484
  %v6461 = vadd.f32 %v4994, %v5487
  %v6462 = vadd.f32 %v4995, %v5490
  %v6463 = vadd.f32 %v4996, %v5493
  %v6464 = vadd.f32 %v4997, %v5496
  %v6465 = vadd.f32 %v4998, %v5499
  %v6466 = vadd.f32 %v4999, %v5502
  %v6467 = vadd.f32 %v5000, %v5505
  %v6468 = vadd.f32 %v5001, %v5508
  %v6469 = vadd.f32 %v5002, %v5511
  %v6470 = vadd.f32 %v5003, %v5514
  %v6471 = vadd.f32 %v5004, %v5517
  %v6472 = vadd.f32 %v5005, %v5520
  %v6473 = vadd.f32 %v5006, %v5523
  %v6474 = vadd.f32 %v5007, %v5526
  %v6475 = vadd.f32 %v5008, %v5529
  %v6476 = vadd.f32 %v5009, %v5532
  %v6477 = vadd.f32 %v5010, %v5535
  %v6478 = vadd.f32 %v5011, %v5538
  %v6479 = vadd.f32 %v5012, %v5541
  %v6480 = vadd.f32 %v5013, %v5544
  %v6481 = vadd.f32 %v5014, %v5547
  %v6482 = vadd.f32 %v5015, %v5550
  %v6483 = vadd.f32 %v5016, %v5553
  %v6484 = vadd.f32 %v5017, %v5556
  %v6485 = vadd.f32 %v5018, %v5559
  %v6486 = vadd.f32 %v5019, %v5562
  %v6487 = vadd.f32 %v5020, %v5565
  %v6488 = vadd.f32 %v5021, %v5568
  %v6489 = vadd.f32 %v5022, %v5571
  %v6490 = vadd.f32 %v5023, %v5574
  %v6491 = vadd.f32 %v5024, %v5577
  %v6492 = vadd.f32 %v5025, %v5580
  %v6493 = vadd.f32 %v5026, %v5583
  %v6494 = vadd.f32 %v5027, %v5586
  %v6495 = vadd.f32 %v5028, %v5589
  %v6496 = vadd.f32 %v5029, %v5592
  %v6497 = vadd.f32 %v5030, %v5595
  %v6498 = vadd.f32 %v5031, %v5598
  %v6499 = vadd.f32 %v5032, %v5601
  %v6500 = vadd.f32 %v5033, %v5604
  %v6501 = vadd.f32 %v5034, %v5607
  %v6502 = vadd.f32 %v5035, %v5610
  %v6503 = vadd.f32 %v5036, %v5613
  %v6504 = vadd.f32 %v5037, %v5616
  %v6505 = vadd.f32 %v5038, %v5619
  %v6506 = vadd.f32 %v5039, %v5622
  %v6507 = vadd.f32 %v5040, %v5625
  %v6508 = vadd.f32 %v5041, %v5628
  %v6509 = vadd.f32 %v5042, %v5631
  %v6510 = vadd.f32 %v5043, %v5634
  %v6511 = vadd.f32 %v5044, %v5637
  %v6512 = vadd.f32 %v5045, %v5640
  %v6513 = vadd.f32 %v5046, %v5643
  %v6514 = vadd.f32 %v5047, %v5646
  %v6515 = vadd.f32 %v5048, %v5649
  %v6516 = vadd.f32 %v5049, %v5652
  %v6517 = vadd.f32 %v5050, %v5655
  %v6518 = vadd.f32 %v5051, %v5658
  %v6519 = vadd.f32 %v5052, %v5661
  %v6520 = vadd.f32 %v5053, %v5664
  %v6521 = vadd.f32 %v5054, %v5667
  %v6522 = vadd.f32 %v5055, %v5670
  %v6523 = vadd.f32 %v5056, %v5673
  %v6524 = vadd.f32 %v5057, %v5676
  %v6525 = vadd.f32 %v5058, %v5679
  %v6526 = vadd.f32 %v5059, %v5682
  %v6527 = vadd.f32 %v5060, %v5685
  %v6528 = vadd.f32 %v5061, %v5688
  %v6529 = vadd.f32 %v5062, %v5691
  %v6530 = vadd.f32 %v5063, %v5694
  %v6531 = vadd.f32 %v5064, %v5697
  %v6532 = vadd.f32 %v5065, %v5700
  %v6533 = vadd.f32 %v5066, %v5703
  %v6534 = vadd.f32 %v5067, %v5706
  %v6535 = vadd.f32 %v5068, %v5709
  %v6536 = vadd.f32 %v5069, %v5712
  %v6537 = vadd.f32 %v5070, %v5715
  %v6538 = vadd.f32 %v5071, %v5718
  %v6539 = vadd.f32 %v5072, %v5721
  %v6540 = vadd.f32 %v5073, %v5724
  %v6541 = vadd.f32 %v5074, %v5727
  %v6542 = vadd.f32 %v5075, %v5730
  %v6543 = vadd.f32 %v5076, %v5733
  %v6544 = vadd.f32 %v5077, %v5736
  %v6545 = vadd.f32 %v5078, %v5739
  %v6546 = vadd.f32 %v5079, %v5742
  %v6547 = vadd.f32 %v5080, %v5745
  %v6548 = vadd.f32 %v5081, %v5748
  %v6549 = vadd.f32 %v5082, %v5751
  %v6550 = vadd.f32 %v5083, %v5754
  %v6551 = vadd.f32 %v5084, %v5757
  %v6552 = vadd.f32 %v5085, %v5760
  %v6553 = vadd.f32 %v5086, %v5763
  %v6554 = vadd.f32 %v5087, %v5766
  %v6555 = vadd.f32 %v5088, %v5769
  %v6556 = vadd.f32 %v5089, %v5772
  %v6557 = vadd.f32 %v5090, %v5775
  %v6558 = vadd.f32 %v5091, %v5778
  %v6559 = vadd.f32 %v5092, %v5781
  %v6560 = vadd.f32 %v5093, %v5784
  %v6561 = vadd.f32 %v5094, %v5787
  %v6562 = vadd.f32 %v5095, %v5790
  %v6563 = vadd.f32 %v5096, %v5793
  %v6564 = vadd.f32 %v5097, %v5796
  %v6565 = vadd.f32 %v5098, %v5799
  %v6566 = vadd.f32 %v5099, %v5802
  %v6567 = vadd.f32 %v5100, %v5805
  %v6568 = vadd.f32 %v5101, %v5808
  %v6569 = vadd.f32 %v5102, %v5811
  %v6570 = vadd.f32 %v5103, %v5814
  %v6571 = vadd.f32 %v5104, %v5817
  %v6572 = vadd.f32 %v5105, %v5820
  %v6573 = vadd.f32 %v5106, %v5823
  %v6574 = vadd.f32 %v5107, %v5826
  %v6575 = vadd.f32 %v5108, %v5829
  %v6576 = vadd.f32 %v5109, %v5832
  %v6577 = vadd.f32 %v5110, %v5835
  %v6578 = vadd.f32 %v5111, %v5838
  %v6579 = vadd.f32 %v5112, %v5841
  %v6580 = vadd.f32 %v5113, %v5844
  %v6581 = vadd.f32 %v5114, %v5847
  %v6582 = vadd.f32 %v5115, %v5850
  %v6583 = vadd.f32 %v5116, %v5853
  %v6584 = vadd.f32 %v5117, %v5856
  %v6585 = vadd.f32 %v5118, %v5859
  %v6586 = vadd.f32 %v5119, %v5862
  %v6587 = vadd.f32 %v5120, %v5865
  %v6588 = vadd.f32 %v5121, %v5868
  %v6589 = vadd.f32 %v5122, %v5871
  %v6590 = vadd.f32 %v5123, %v5874
  %v6591 = vadd.f32 %v5124, %v5877
  %v6592 = vadd.f32 %v5125, %v5880
  %v6593 = vadd.f32 %v5126, %v5883
  %v6594 = vadd.f32 %v5127, %v5886
  %v6595 = vadd.f32 %v5128, %v5889
  %v6596 = vadd.f32 %v5129, %v5892
  %v6597 = vadd.f32 %v5130, %v5895
  %v6598 = vadd.f32 %v5131, %v5898
  %v6599 = vadd.f32 %v5132, %v5901
  %v6600 = vadd.f32 %v5133, %v5904
  %v6601 = vadd.f32 %v5134, %v5907
  %v6602 = vadd.f32 %v5135, %v5910
  %v6603 = vadd.f32 %v5136, %v5913
  %v6604 = vadd.f32 %v5137, %v5916
  %v6605 = vadd.f32 %v5138, %v5919
  %v6606 = vadd.f32 %v5139, %v5922
  %v6607 = vadd.f32 %v5140, %v5925
  %v6608 = vadd.f32 %v5141, %v5928
  %v6609 = vadd.f32 %v5142, %v5931
  %v6610 = vadd.f32 %v5143, %v5934
  %v6611 = vadd.f32 %v5144, %v5937
  %v6612 = vadd.f32 %v5145, %v5940
  %v6613 = vadd.f32 %v5146, %v5943
  %v6614 = vadd.f32 %v5147, %v5946
  %v6615 = vadd.f32 %v5148, %v5949
  %v6616 = vadd.f32 %v5149, %v5952
  %v6617 = vadd.f32 %v5150, %v5955
  %v6618 = vadd.f32 %v5151, %v5958
  %v6619 = vadd.f32 %v5152, %v5961
  %v6620 = vadd.f32 %v5153, %v5964
  %v6621 = vadd.f32 %v5154, %v5967
  %v6622 = vadd.f32 %v5155, %v5970
  %v6623 = vadd.f32 %v5156, %v5973
  %v6624 = vadd.f32 %v5157, %v5976
  %v6625 = vadd.f32 %v5158, %v5979
  %v6626 = vadd.f32 %v5159, %v5982
  %v6627 = vadd.f32 %v5160, %v5985
  %v6628 = vadd.f32 %v5161, %v5988
  %v6629 = vadd.f32 %v5162, %v5991
  %v6630 = vadd.f32 %v5163, %v5994
  %v6631 = vadd.f32 %v5164, %v5997
  %v6632 = vadd.f32 %v5165, %v6000
  %v6633 = vadd.f32 %v5166, %v6003
  %v6634 = vadd.f32 %v5167, %v6006
  %v6635 = vadd.f32 %v5168, %v6009
  %v6636 = vadd.f32 %v5169, %v6012
  %v6637 = vadd.f32 %v5170, %v6015
  %v6638 = vadd.f32 %v5171, %v6018
  %v6639 = vadd.f32 %v5172, %v6021
  %v6640 = vadd.f32 %v5173, %v6024
  %v6641 = vadd.f32 %v5174, %v6027
  %v6642 = vadd.f32 %v5175, %v6030
  %v6643 = vadd.f32 %v5176, %v6033
  %v6644 = vadd.f32 %v5177, %v6036
  %v6645 = vadd.f32 %v5178, %v6039
  %v6646 = vadd.f32 %v5179, %v6042
  %v6647 = vadd.f32 %v5180, %v6045
  %v6648 = vadd.f32 %v5181, %v6048
  %v6649 = vadd.f32 %v5182, %v6051
  %v6650 = vadd.f32 %v5183, %v6054
  %v6651 = vadd.f32 %v5184, %v6057
  %v6652 = vadd.f32 %v5185, %v6060
  %v6653 = vadd.f32 %v5186, %v6063
  %v6654 = vadd.f32 %v5187, %v6066
  %v6655 = vadd.f32 %v5188, %v6069
  %v6656 = vadd.f32 %v5189, %v6072
  %v6657 = vadd.f32 %v5190, %v6075
  %v6658 = vadd.f32 %v5191, %v6078
  %v6659 = vadd.f32 %v5192, %v6081
  %v6660 = vadd.f32 %v5193, %v6084
  %v6661 = vadd.f32 %v5194, %v6087
  %v6662 = vadd.f32 %v5195, %v6090
  %v6663 = vadd.f32 %v5196, %v6093
  %v6664 = vadd.f32 %v5197, %v6096
  %v6665 = vadd.f32 %v5198, %v6099
  %v6666 = vadd.f32 %v5199, %v6102
  %v6667 = vadd.f32 %v5200, %v6105
  %v6668 = vadd.f32 %v5201, %v6108
  %v6669 = vadd.f32 %v5202, %v6111
  %v6670 = vadd.f32 %v5203, %v6114
  %v6671 = vadd.f32 %v5204, %v6117
  %v6672 = vadd.f32 %v5205, %v6120
  %v6673 = vadd.f32 %v5206, %v6123
  %v6674 = vadd.f32 %v5207, %v6126
  %v6675 = vadd.f32 %v5208, %v6129
  %v6676 = vadd.f32 %v5209, %v6132
  %v6677 = vadd.f32 %v5210, %v6135
  %v6678 = vadd.f32 %v5211, %v6138
  %v6679 = vadd.f32 %v5212, %v6141
  %v6680 = vadd.f32 %v5213, %v6144
  %v6681 = vadd.f32 %v5214, %v6147
  %v6682 = vadd.f32 %v5215, %v6150
  %v6683 = vadd.f32 %v5216, %v6153
  %v6684 = vadd.f32 %v5217, %v6156
  %v6685 = vadd.f32 %v5218, %v6159
  %v6686 = vadd.f32 %v5219, %v6162
  %v6687 = vadd.f32 %v5220, %v6165
  %v6688 = vadd.f32 %v5221, %v6168
  %v6689 = vadd.f32 %v5222, %v6171
  %v6690 = vadd.f32 %v5223, %v6174
  %v6691 = vadd.f32 %v5224, %v6177
  %v6692 = vadd.f32 %v5225, %v6180
  %v6693 = vadd.f32 %v5226, %v6183
  %v6694 = vadd.f32 %v5227, %v6186
  %v6695 = vadd.f32 %v5228, %v6189
  %v6696 = vadd.f32 %v5229, %v6192
  %v6697 = vadd.f32 %v5230, %v6195
  %v6698 = vadd.f32 %v5231, %v6198
  %v6699 = vadd.f32 %v5232, %v6201
  %v6700 = vadd.f32 %v5233, %v6204
  %v6701 = vadd.f32 %v5234, %v6207
  %v6702 = vadd.f32 %v5235, %v6210
  %v6703 = vadd.f32 %v5236, %v6213
  %v6704 = vadd.f32 %v5237, %v6216
  %v6705 = vadd.f32 %v5238, %v6219
  %v6706 = vadd.f32 %v5239, %v6222
  %v6707 = vadd.f32 %v5240, %v6225
  %v6708 = vadd.f32 %v5241, %v6228
  %v6709 = vadd.f32 %v5242, %v6231
  %v6710 = vadd.f32 %v5243, %v6234
  %v6711 = vadd.f32 %v5244, %v6237
  %v6712 = vadd.f32 %v5245, %v6240
  %v6713 = vadd.f32 %v5246, %v6243
  %v6714 = vadd.f32 %v5247, %v6246
  %v6715 = vadd.f32 %v5248, %v6249
  %v6716 = vadd.f32 %v5249, %v6252
  %v6717 = vadd.f32 %v5250, %v6255
  %v6718 = vadd.f32 %v5251, %v6258
  %v6719 = vadd.f32 %v5252, %v6261
  %v6720 = vadd.f32 %v5253, %v6264
  %v6721 = vadd.f32 %v5254, %v6267
  %v6722 = vadd.f32 %v5255, %v6270
  %v6723 = vadd.f32 %v5256, %v6273
  %v6724 = vadd.f32 %v5257, %v6276
  %v6725 = vadd.f32 %v5258, %v6279
  %v6726 = vadd.f32 %v5259, %v6282
  %v6727 = vadd.f32 %v5260, %v6285
  %v6728 = vadd.f32 %v5261, %v6288
  %v6729 = vadd.f32 %v5262, %v6291
  %v6730 = vadd.f32 %v5263, %v6294
  %v6731 = vadd.f32 %v5264, %v6297
  %v6732 = vadd.f32 %v5265, %v6300
  %v6733 = vadd.f32 %v5266, %v6303
  %v6734 = vadd.f32 %v5267, %v6306
  %v6735 = vadd.f32 %v5268, %v6309
  %v6736 = vadd.f32 %v5269, %v6312
  %v6737 = vadd.f32 %v5270, %v6315
  %v6738 = vadd.f32 %v5271, %v6318
  %v6739 = vadd.f32 %v5272, %v6321
  %v6740 = vadd.f32 %v5273, %v6324
  %v6741 = vadd.f32 %v5274, %v6327
  %v6742 = vadd.f32 %v5275, %v6330
  %v6743 = vadd.f32 %v5276, %v6333
  %v6744 = vadd.f32 %v5277, %v6336
  %v6745 = vadd.f32 %v5278, %v6339
  %v6746 = vadd.f32 %v5279, %v6342
  %v6747 = vadd.f32 %v5280, %v6345
  %v6748 = vadd.f32 %v5281, %v6348
  %v6749 = vadd.f32 %v5282, %v6351
  %v6750 = vadd.f32 %v5283, %v6354
  %v6751 = vadd.f32 %v5284, %v6357
  %v6752 = vadd.f32 %v5285, %v6360
  %v6753 = vadd.f32 %v5286, %v6363
  %v6754 = vadd.f32 %v5287, %v6366
  %v6755 = vadd.f32 %v5288, %v6369
  %v6756 = vadd.f32 %v5289, %v6372
  %v6757 = vadd.f32 %v5290, %v6375
  %v6758 = vadd.f32 %v5291, %v6378
  %v6759 = vadd.f32 %v5292, %v6381
  %v6760 = vadd.f32 %v5293, %v6384
  %v6761 = vadd.f32 %v5294, %v6387
  %v6762 = vadd.f32 %v5295, %v6390
  %v6763 = vadd.f32 %v5296, %v6393
  %v6764 = vadd.f32 %v5297, %v6396
  %v6765 = vadd.f32 %v5298, %v6399
  %v6766 = vadd.f32 %v5299, %v6402
  %v6767 = vadd.f32 %v5300, %v6405
  %v6768 = vld [vmem:[%s2] sm:$0x1]
  %v6770 = vperm.slane %v6768, 0
  %v6772 = vadd.f32 %v6407, %v6770
  %v6773 = vadd.f32 %v6408, %v6770
  %v6774 = vadd.f32 %v6409, %v6770
  %v6775 = vadd.f32 %v6410, %v6770
  %v6776 = vadd.f32 %v6411, %v6770
  %v6777 = vadd.f32 %v6412, %v6770
  %v6778 = vadd.f32 %v6413, %v6770
  %v6779 = vadd.f32 %v6414, %v6770
  %v6780 = vadd.f32 %v6415, %v6770
  %v6781 = vadd.f32 %v6416, %v6770
  %v6782 = vadd.f32 %v6417, %v6770
  %v6783 = vadd.f32 %v6418, %v6770
  %v6784 = vadd.f32 %v6419, %v6770
  %v6785 = vadd.f32 %v6420, %v6770
  %v6786 = vadd.f32 %v6421, %v6770
  %v6787 = vadd.f32 %v6422, %v6770
  %v6788 = vadd.f32 %v6423, %v6770
  %v6789 = vadd.f32 %v6424, %v6770
  %v6790 = vadd.f32 %v6425, %v6770
  %v6791 = vadd.f32 %v6426, %v6770
  %v6792 = vadd.f32 %v6427, %v6770
  %v6793 = vadd.f32 %v6428, %v6770
  %v6794 = vadd.f32 %v6429, %v6770
  %v6795 = vadd.f32 %v6430, %v6770
  %v6796 = vadd.f32 %v6431, %v6770
  %v6797 = vadd.f32 %v6432, %v6770
  %v6798 = vadd.f32 %v6433, %v6770
  %v6799 = vadd.f32 %v6434, %v6770
  %v6800 = vadd.f32 %v6435, %v6770
  %v6801 = vadd.f32 %v6436, %v6770
  %v6802 = vadd.f32 %v6437, %v6770
  %v6803 = vadd.f32 %v6438, %v6770
  %v6804 = vadd.f32 %v6439, %v6770
  %v6805 = vadd.f32 %v6440, %v6770
  %v6806 = vadd.f32 %v6441, %v6770
  %v6807 = vadd.f32 %v6442, %v6770
  %v6808 = vadd.f32 %v6443, %v6770
  %v6809 = vadd.f32 %v6444, %v6770
  %v6810 = vadd.f32 %v6445, %v6770
  %v6811 = vadd.f32 %v6446, %v6770
  %v6812 = vadd.f32 %v6447, %v6770
  %v6813 = vadd.f32 %v6448, %v6770
  %v6814 = vadd.f32 %v6449, %v6770
  %v6815 = vadd.f32 %v6450, %v6770
  %v6816 = vadd.f32 %v6451, %v6770
  %v6817 = vadd.f32 %v6452, %v6770
  %v6818 = vadd.f32 %v6453, %v6770
  %v6819 = vadd.f32 %v6454, %v6770
  %v6820 = vadd.f32 %v6455, %v6770
  %v6821 = vadd.f32 %v6456, %v6770
  %v6822 = vadd.f32 %v6457, %v6770
  %v6823 = vadd.f32 %v6458, %v6770
  %v6824 = vadd.f32 %v6459, %v6770
  %v6825 = vadd.f32 %v6460, %v6770
  %v6826 = vadd.f32 %v6461, %v6770
  %v6827 = vadd.f32 %v6462, %v6770
  %v6828 = vadd.f32 %v6463, %v6770
  %v6829 = vadd.f32 %v6464, %v6770
  %v6830 = vadd.f32 %v6465, %v6770
  %v6831 = vadd.f32 %v6466, %v6770
  %v6832 = vadd.f32 %v6467, %v6770
  %v6833 = vadd.f32 %v6468, %v6770
  %v6834 = vadd.f32 %v6469, %v6770
  %v6835 = vadd.f32 %v6470, %v6770
  %v6836 = vadd.f32 %v6471, %v6770
  %v6837 = vadd.f32 %v6472, %v6770
  %v6838 = vadd.f32 %v6473, %v6770
  %v6839 = vadd.f32 %v6474, %v6770
  %v6840 = vadd.f32 %v6475, %v6770
  %v6841 = vadd.f32 %v6476, %v6770
  %v6842 = vadd.f32 %v6477, %v6770
  %v6843 = vadd.f32 %v6478, %v6770
  %v6844 = vadd.f32 %v6479, %v6770
  %v6845 = vadd.f32 %v6480, %v6770
  %v6846 = vadd.f32 %v6481, %v6770
  %v6847 = vadd.f32 %v6482, %v6770
  %v6848 = vadd.f32 %v6483, %v6770
  %v6849 = vadd.f32 %v6484, %v6770
  %v6850 = vadd.f32 %v6485, %v6770
  %v6851 = vadd.f32 %v6486, %v6770
  %v6852 = vadd.f32 %v6487, %v6770
  %v6853 = vadd.f32 %v6488, %v6770
  %v6854 = vadd.f32 %v6489, %v6770
  %v6855 = vadd.f32 %v6490, %v6770
  %v6856 = vadd.f32 %v6491, %v6770
  %v6857 = vadd.f32 %v6492, %v6770
  %v6858 = vadd.f32 %v6493, %v6770
  %v6859 = vadd.f32 %v6494, %v6770
  %v6860 = vadd.f32 %v6495, %v6770
  %v6861 = vadd.f32 %v6496, %v6770
  %v6862 = vadd.f32 %v6497, %v6770
  %v6863 = vadd.f32 %v6498, %v6770
  %v6864 = vadd.f32 %v6499, %v6770
  %v6865 = vadd.f32 %v6500, %v6770
  %v6866 = vadd.f32 %v6501, %v6770
  %v6867 = vadd.f32 %v6502, %v6770
  %v6868 = vadd.f32 %v6503, %v6770
  %v6869 = vadd.f32 %v6504, %v6770
  %v6870 = vadd.f32 %v6505, %v6770
  %v6871 = vadd.f32 %v6506, %v6770
  %v6872 = vadd.f32 %v6507, %v6770
  %v6873 = vadd.f32 %v6508, %v6770
  %v6874 = vadd.f32 %v6509, %v6770
  %v6875 = vadd.f32 %v6510, %v6770
  %v6876 = vadd.f32 %v6511, %v6770
  %v6877 = vadd.f32 %v6512, %v6770
  %v6878 = vadd.f32 %v6513, %v6770
  %v6879 = vadd.f32 %v6514, %v6770
  %v6880 = vadd.f32 %v6515, %v6770
  %v6881 = vadd.f32 %v6516, %v6770
  %v6882 = vadd.f32 %v6517, %v6770
  %v6883 = vadd.f32 %v6518, %v6770
  %v6884 = vadd.f32 %v6519, %v6770
  %v6885 = vadd.f32 %v6520, %v6770
  %v6886 = vadd.f32 %v6521, %v6770
  %v6887 = vadd.f32 %v6522, %v6770
  %v6888 = vadd.f32 %v6523, %v6770
  %v6889 = vadd.f32 %v6524, %v6770
  %v6890 = vadd.f32 %v6525, %v6770
  %v6891 = vadd.f32 %v6526, %v6770
  %v6892 = vadd.f32 %v6527, %v6770
  %v6893 = vadd.f32 %v6528, %v6770
  %v6894 = vadd.f32 %v6529, %v6770
  %v6895 = vadd.f32 %v6530, %v6770
  %v6896 = vadd.f32 %v6531, %v6770
  %v6897 = vadd.f32 %v6532, %v6770
  %v6898 = vadd.f32 %v6533, %v6770
  %v6899 = vadd.f32 %v6534, %v6770
  %v6900 = vadd.f32 %v6535, %v6770
  %v6901 = vadd.f32 %v6536, %v6770
  %v6902 = vadd.f32 %v6537, %v6770
  %v6903 = vadd.f32 %v6538, %v6770
  %v6904 = vadd.f32 %v6539, %v6770
  %v6905 = vadd.f32 %v6540, %v6770
  %v6906 = vadd.f32 %v6541, %v6770
  %v6907 = vadd.f32 %v6542, %v6770
  %v6908 = vadd.f32 %v6543, %v6770
  %v6909 = vadd.f32 %v6544, %v6770
  %v6910 = vadd.f32 %v6545, %v6770
  %v6911 = vadd.f32 %v6546, %v6770
  %v6912 = vadd.f32 %v6547, %v6770
  %v6913 = vadd.f32 %v6548, %v6770
  %v6914 = vadd.f32 %v6549, %v6770
  %v6915 = vadd.f32 %v6550, %v6770
  %v6916 = vadd.f32 %v6551, %v6770
  %v6917 = vadd.f32 %v6552, %v6770
  %v6918 = vadd.f32 %v6553, %v6770
  %v6919 = vadd.f32 %v6554, %v6770
  %v6920 = vadd.f32 %v6555, %v6770
  %v6921 = vadd.f32 %v6556, %v6770
  %v6922 = vadd.f32 %v6557, %v6770
  %v6923 = vadd.f32 %v6558, %v6770
  %v6924 = vadd.f32 %v6559, %v6770
  %v6925 = vadd.f32 %v6560, %v6770
  %v6926 = vadd.f32 %v6561, %v6770
  %v6927 = vadd.f32 %v6562, %v6770
  %v6928 = vadd.f32 %v6563, %v6770
  %v6929 = vadd.f32 %v6564, %v6770
  %v6930 = vadd.f32 %v6565, %v6770
  %v6931 = vadd.f32 %v6566, %v6770
  %v6932 = vadd.f32 %v6567, %v6770
  %v6933 = vadd.f32 %v6568, %v6770
  %v6934 = vadd.f32 %v6569, %v6770
  %v6935 = vadd.f32 %v6570, %v6770
  %v6936 = vadd.f32 %v6571, %v6770
  %v6937 = vadd.f32 %v6572, %v6770
  %v6938 = vadd.f32 %v6573, %v6770
  %v6939 = vadd.f32 %v6574, %v6770
  %v6940 = vadd.f32 %v6575, %v6770
  %v6941 = vadd.f32 %v6576, %v6770
  %v6942 = vadd.f32 %v6577, %v6770
  %v6943 = vadd.f32 %v6578, %v6770
  %v6944 = vadd.f32 %v6579, %v6770
  %v6945 = vadd.f32 %v6580, %v6770
  %v6946 = vadd.f32 %v6581, %v6770
  %v6947 = vadd.f32 %v6582, %v6770
  %v6948 = vadd.f32 %v6583, %v6770
  %v6949 = vadd.f32 %v6584, %v6770
  %v6950 = vadd.f32 %v6585, %v6770
  %v6951 = vadd.f32 %v6586, %v6770
  %v6952 = vadd.f32 %v6587, %v6770
  %v6953 = vadd.f32 %v6588, %v6770
  %v6954 = vadd.f32 %v6589, %v6770
  %v6955 = vadd.f32 %v6590, %v6770
  %v6956 = vadd.f32 %v6591, %v6770
  %v6957 = vadd.f32 %v6592, %v6770
  %v6958 = vadd.f32 %v6593, %v6770
  %v6959 = vadd.f32 %v6594, %v6770
  %v6960 = vadd.f32 %v6595, %v6770
  %v6961 = vadd.f32 %v6596, %v6770
  %v6962 = vadd.f32 %v6597, %v6770
  %v6963 = vadd.f32 %v6598, %v6770
  %v6964 = vadd.f32 %v6599, %v6770
  %v6965 = vadd.f32 %v6600, %v6770
  %v6966 = vadd.f32 %v6601, %v6770
  %v6967 = vadd.f32 %v6602, %v6770
  %v6968 = vadd.f32 %v6603, %v6770
  %v6969 = vadd.f32 %v6604, %v6770
  %v6970 = vadd.f32 %v6605, %v6770
  %v6971 = vadd.f32 %v6606, %v6770
  %v6972 = vadd.f32 %v6607, %v6770
  %v6973 = vadd.f32 %v6608, %v6770
  %v6974 = vadd.f32 %v6609, %v6770
  %v6975 = vadd.f32 %v6610, %v6770
  %v6976 = vadd.f32 %v6611, %v6770
  %v6977 = vadd.f32 %v6612, %v6770
  %v6978 = vadd.f32 %v6613, %v6770
  %v6979 = vadd.f32 %v6614, %v6770
  %v6980 = vadd.f32 %v6615, %v6770
  %v6981 = vadd.f32 %v6616, %v6770
  %v6982 = vadd.f32 %v6617, %v6770
  %v6983 = vadd.f32 %v6618, %v6770
  %v6984 = vadd.f32 %v6619, %v6770
  %v6985 = vadd.f32 %v6620, %v6770
  %v6986 = vadd.f32 %v6621, %v6770
  %v6987 = vadd.f32 %v6622, %v6770
  %v6988 = vadd.f32 %v6623, %v6770
  %v6989 = vadd.f32 %v6624, %v6770
  %v6990 = vadd.f32 %v6625, %v6770
  %v6991 = vadd.f32 %v6626, %v6770
  %v6992 = vadd.f32 %v6627, %v6770
  %v6993 = vadd.f32 %v6628, %v6770
  %v6994 = vadd.f32 %v6629, %v6770
  %v6995 = vadd.f32 %v6630, %v6770
  %v6996 = vadd.f32 %v6631, %v6770
  %v6997 = vadd.f32 %v6632, %v6770
  %v6998 = vadd.f32 %v6633, %v6770
  %v6999 = vadd.f32 %v6634, %v6770
  %v7000 = vadd.f32 %v6635, %v6770
  %v7001 = vadd.f32 %v6636, %v6770
  %v7002 = vadd.f32 %v6637, %v6770
  %v7003 = vadd.f32 %v6638, %v6770
  %v7004 = vadd.f32 %v6639, %v6770
  %v7005 = vadd.f32 %v6640, %v6770
  %v7006 = vadd.f32 %v6641, %v6770
  %v7007 = vadd.f32 %v6642, %v6770
  %v7008 = vadd.f32 %v6643, %v6770
  %v7009 = vadd.f32 %v6644, %v6770
  %v7010 = vadd.f32 %v6645, %v6770
  %v7011 = vadd.f32 %v6646, %v6770
  %v7012 = vadd.f32 %v6647, %v6770
  %v7013 = vadd.f32 %v6648, %v6770
  %v7014 = vadd.f32 %v6649, %v6770
  %v7015 = vadd.f32 %v6650, %v6770
  %v7016 = vadd.f32 %v6651, %v6770
  %v7017 = vadd.f32 %v6652, %v6770
  %v7018 = vadd.f32 %v6653, %v6770
  %v7019 = vadd.f32 %v6654, %v6770
  %v7020 = vadd.f32 %v6655, %v6770
  %v7021 = vadd.f32 %v6656, %v6770
  %v7022 = vadd.f32 %v6657, %v6770
  %v7023 = vadd.f32 %v6658, %v6770
  %v7024 = vadd.f32 %v6659, %v6770
  %v7025 = vadd.f32 %v6660, %v6770
  %v7026 = vadd.f32 %v6661, %v6770
  %v7027 = vadd.f32 %v6662, %v6770
  %v7028 = vadd.f32 %v6663, %v6770
  %v7029 = vadd.f32 %v6664, %v6770
  %v7030 = vadd.f32 %v6665, %v6770
  %v7031 = vadd.f32 %v6666, %v6770
  %v7032 = vadd.f32 %v6667, %v6770
  %v7033 = vadd.f32 %v6668, %v6770
  %v7034 = vadd.f32 %v6669, %v6770
  %v7035 = vadd.f32 %v6670, %v6770
  %v7036 = vadd.f32 %v6671, %v6770
  %v7037 = vadd.f32 %v6672, %v6770
  %v7038 = vadd.f32 %v6673, %v6770
  %v7039 = vadd.f32 %v6674, %v6770
  %v7040 = vadd.f32 %v6675, %v6770
  %v7041 = vadd.f32 %v6676, %v6770
  %v7042 = vadd.f32 %v6677, %v6770
  %v7043 = vadd.f32 %v6678, %v6770
  %v7044 = vadd.f32 %v6679, %v6770
  %v7045 = vadd.f32 %v6680, %v6770
  %v7046 = vadd.f32 %v6681, %v6770
  %v7047 = vadd.f32 %v6682, %v6770
  %v7048 = vadd.f32 %v6683, %v6770
  %v7049 = vadd.f32 %v6684, %v6770
  %v7050 = vadd.f32 %v6685, %v6770
  %v7051 = vadd.f32 %v6686, %v6770
  %v7052 = vadd.f32 %v6687, %v6770
  %v7053 = vadd.f32 %v6688, %v6770
  %v7054 = vadd.f32 %v6689, %v6770
  %v7055 = vadd.f32 %v6690, %v6770
  %v7056 = vadd.f32 %v6691, %v6770
  %v7057 = vadd.f32 %v6692, %v6770
  %v7058 = vadd.f32 %v6693, %v6770
  %v7059 = vadd.f32 %v6694, %v6770
  %v7060 = vadd.f32 %v6695, %v6770
  %v7061 = vadd.f32 %v6696, %v6770
  %v7062 = vadd.f32 %v6697, %v6770
  %v7063 = vadd.f32 %v6698, %v6770
  %v7064 = vadd.f32 %v6699, %v6770
  %v7065 = vadd.f32 %v6700, %v6770
  %v7066 = vadd.f32 %v6701, %v6770
  %v7067 = vadd.f32 %v6702, %v6770
  %v7068 = vadd.f32 %v6703, %v6770
  %v7069 = vadd.f32 %v6704, %v6770
  %v7070 = vadd.f32 %v6705, %v6770
  %v7071 = vadd.f32 %v6706, %v6770
  %v7072 = vadd.f32 %v6707, %v6770
  %v7073 = vadd.f32 %v6708, %v6770
  %v7074 = vadd.f32 %v6709, %v6770
  %v7075 = vadd.f32 %v6710, %v6770
  %v7076 = vadd.f32 %v6711, %v6770
  %v7077 = vadd.f32 %v6712, %v6770
  %v7078 = vadd.f32 %v6713, %v6770
  %v7079 = vadd.f32 %v6714, %v6770
  %v7080 = vadd.f32 %v6715, %v6770
  %v7081 = vadd.f32 %v6716, %v6770
  %v7082 = vadd.f32 %v6717, %v6770
  %v7083 = vadd.f32 %v6718, %v6770
  %v7084 = vadd.f32 %v6719, %v6770
  %v7085 = vadd.f32 %v6720, %v6770
  %v7086 = vadd.f32 %v6721, %v6770
  %v7087 = vadd.f32 %v6722, %v6770
  %v7088 = vadd.f32 %v6723, %v6770
  %v7089 = vadd.f32 %v6724, %v6770
  %v7090 = vadd.f32 %v6725, %v6770
  %v7091 = vadd.f32 %v6726, %v6770
  %v7092 = vadd.f32 %v6727, %v6770
  %v7093 = vadd.f32 %v6728, %v6770
  %v7094 = vadd.f32 %v6729, %v6770
  %v7095 = vadd.f32 %v6730, %v6770
  %v7096 = vadd.f32 %v6731, %v6770
  %v7097 = vadd.f32 %v6732, %v6770
  %v7098 = vadd.f32 %v6733, %v6770
  %v7099 = vadd.f32 %v6734, %v6770
  %v7100 = vadd.f32 %v6735, %v6770
  %v7101 = vadd.f32 %v6736, %v6770
  %v7102 = vadd.f32 %v6737, %v6770
  %v7103 = vadd.f32 %v6738, %v6770
  %v7104 = vadd.f32 %v6739, %v6770
  %v7105 = vadd.f32 %v6740, %v6770
  %v7106 = vadd.f32 %v6741, %v6770
  %v7107 = vadd.f32 %v6742, %v6770
  %v7108 = vadd.f32 %v6743, %v6770
  %v7109 = vadd.f32 %v6744, %v6770
  %v7110 = vadd.f32 %v6745, %v6770
  %v7111 = vadd.f32 %v6746, %v6770
  %v7112 = vadd.f32 %v6747, %v6770
  %v7113 = vadd.f32 %v6748, %v6770
  %v7114 = vadd.f32 %v6749, %v6770
  %v7115 = vadd.f32 %v6750, %v6770
  %v7116 = vadd.f32 %v6751, %v6770
  %v7117 = vadd.f32 %v6752, %v6770
  %v7118 = vadd.f32 %v6753, %v6770
  %v7119 = vadd.f32 %v6754, %v6770
  %v7120 = vadd.f32 %v6755, %v6770
  %v7121 = vadd.f32 %v6756, %v6770
  %v7122 = vadd.f32 %v6757, %v6770
  %v7123 = vadd.f32 %v6758, %v6770
  %v7124 = vadd.f32 %v6759, %v6770
  %v7125 = vadd.f32 %v6760, %v6770
  %v7126 = vadd.f32 %v6761, %v6770
  %v7127 = vadd.f32 %v6762, %v6770
  %v7128 = vadd.f32 %v6763, %v6770
  %v7129 = vadd.f32 %v6764, %v6770
  %v7130 = vadd.f32 %v6765, %v6770
  %v7131 = vadd.f32 %v6766, %v6770
  %v7132 = vadd.f32 %v6767, %v6770
  %v7133 = vmax.f32 %v6772, 0.0
  %v7134 = vmax.f32 %v6773, 0.0
  %v7135 = vmax.f32 %v6774, 0.0
  %v7136 = vmax.f32 %v6775, 0.0
  %v7137 = vmax.f32 %v6776, 0.0
  %v7138 = vmax.f32 %v6777, 0.0
  %v7139 = vmax.f32 %v6778, 0.0
  %v7140 = vmax.f32 %v6779, 0.0
  %v7141 = vmax.f32 %v6780, 0.0
  %v7142 = vmax.f32 %v6781, 0.0
  %v7143 = vmax.f32 %v6782, 0.0
  %v7144 = vmax.f32 %v6783, 0.0
  %v7145 = vmax.f32 %v6784, 0.0
  %v7146 = vmax.f32 %v6785, 0.0
  %v7147 = vmax.f32 %v6786, 0.0
  %v7148 = vmax.f32 %v6787, 0.0
  %v7149 = vmax.f32 %v6788, 0.0
  %v7150 = vmax.f32 %v6789, 0.0
  %v7151 = vmax.f32 %v6790, 0.0
  %v7152 = vmax.f32 %v6791, 0.0
  %v7153 = vmax.f32 %v6792, 0.0
  %v7154 = vmax.f32 %v6793, 0.0
  %v7155 = vmax.f32 %v6794, 0.0
  %v7156 = vmax.f32 %v6795, 0.0
  %v7157 = vmax.f32 %v6796, 0.0
  %v7158 = vmax.f32 %v6797, 0.0
  %v7159 = vmax.f32 %v6798, 0.0
  %v7160 = vmax.f32 %v6799, 0.0
  %v7161 = vmax.f32 %v6800, 0.0
  %v7162 = vmax.f32 %v6801, 0.0
  %v7163 = vmax.f32 %v6802, 0.0
  %v7164 = vmax.f32 %v6803, 0.0
  %v7165 = vmax.f32 %v6804, 0.0
  %v7166 = vmax.f32 %v6805, 0.0
  %v7167 = vmax.f32 %v6806, 0.0
  %v7168 = vmax.f32 %v6807, 0.0
  %v7169 = vmax.f32 %v6808, 0.0
  %v7170 = vmax.f32 %v6809, 0.0
  %v7171 = vmax.f32 %v6810, 0.0
  %v7172 = vmax.f32 %v6811, 0.0
  %v7173 = vmax.f32 %v6812, 0.0
  %v7174 = vmax.f32 %v6813, 0.0
  %v7175 = vmax.f32 %v6814, 0.0
  %v7176 = vmax.f32 %v6815, 0.0
  %v7177 = vmax.f32 %v6816, 0.0
  %v7178 = vmax.f32 %v6817, 0.0
  %v7179 = vmax.f32 %v6818, 0.0
  %v7180 = vmax.f32 %v6819, 0.0
  %v7181 = vmax.f32 %v6820, 0.0
  %v7182 = vmax.f32 %v6821, 0.0
  %v7183 = vmax.f32 %v6822, 0.0
  %v7184 = vmax.f32 %v6823, 0.0
  %v7185 = vmax.f32 %v6824, 0.0
  %v7186 = vmax.f32 %v6825, 0.0
  %v7187 = vmax.f32 %v6826, 0.0
  %v7188 = vmax.f32 %v6827, 0.0
  %v7189 = vmax.f32 %v6828, 0.0
  %v7190 = vmax.f32 %v6829, 0.0
  %v7191 = vmax.f32 %v6830, 0.0
  %v7192 = vmax.f32 %v6831, 0.0
  %v7193 = vmax.f32 %v6832, 0.0
  %v7194 = vmax.f32 %v6833, 0.0
  %v7195 = vmax.f32 %v6834, 0.0
  %v7196 = vmax.f32 %v6835, 0.0
  %v7197 = vmax.f32 %v6836, 0.0
  %v7198 = vmax.f32 %v6837, 0.0
  %v7199 = vmax.f32 %v6838, 0.0
  %v7200 = vmax.f32 %v6839, 0.0
  %v7201 = vmax.f32 %v6840, 0.0
  %v7202 = vmax.f32 %v6841, 0.0
  %v7203 = vmax.f32 %v6842, 0.0
  %v7204 = vmax.f32 %v6843, 0.0
  %v7205 = vmax.f32 %v6844, 0.0
  %v7206 = vmax.f32 %v6845, 0.0
  %v7207 = vmax.f32 %v6846, 0.0
  %v7208 = vmax.f32 %v6847, 0.0
  %v7209 = vmax.f32 %v6848, 0.0
  %v7210 = vmax.f32 %v6849, 0.0
  %v7211 = vmax.f32 %v6850, 0.0
  %v7212 = vmax.f32 %v6851, 0.0
  %v7213 = vmax.f32 %v6852, 0.0
  %v7214 = vmax.f32 %v6853, 0.0
  %v7215 = vmax.f32 %v6854, 0.0
  %v7216 = vmax.f32 %v6855, 0.0
  %v7217 = vmax.f32 %v6856, 0.0
  %v7218 = vmax.f32 %v6857, 0.0
  %v7219 = vmax.f32 %v6858, 0.0
  %v7220 = vmax.f32 %v6859, 0.0
  %v7221 = vmax.f32 %v6860, 0.0
  %v7222 = vmax.f32 %v6861, 0.0
  %v7223 = vmax.f32 %v6862, 0.0
  %v7224 = vmax.f32 %v6863, 0.0
  %v7225 = vmax.f32 %v6864, 0.0
  %v7226 = vmax.f32 %v6865, 0.0
  %v7227 = vmax.f32 %v6866, 0.0
  %v7228 = vmax.f32 %v6867, 0.0
  %v7229 = vmax.f32 %v6868, 0.0
  %v7230 = vmax.f32 %v6869, 0.0
  %v7231 = vmax.f32 %v6870, 0.0
  %v7232 = vmax.f32 %v6871, 0.0
  %v7233 = vmax.f32 %v6872, 0.0
  %v7234 = vmax.f32 %v6873, 0.0
  %v7235 = vmax.f32 %v6874, 0.0
  %v7236 = vmax.f32 %v6875, 0.0
  %v7237 = vmax.f32 %v6876, 0.0
  %v7238 = vmax.f32 %v6877, 0.0
  %v7239 = vmax.f32 %v6878, 0.0
  %v7240 = vmax.f32 %v6879, 0.0
  %v7241 = vmax.f32 %v6880, 0.0
  %v7242 = vmax.f32 %v6881, 0.0
  %v7243 = vmax.f32 %v6882, 0.0
  %v7244 = vmax.f32 %v6883, 0.0
  %v7245 = vmax.f32 %v6884, 0.0
  %v7246 = vmax.f32 %v6885, 0.0
  %v7247 = vmax.f32 %v6886, 0.0
  %v7248 = vmax.f32 %v6887, 0.0
  %v7249 = vmax.f32 %v6888, 0.0
  %v7250 = vmax.f32 %v6889, 0.0
  %v7251 = vmax.f32 %v6890, 0.0
  %v7252 = vmax.f32 %v6891, 0.0
  %v7253 = vmax.f32 %v6892, 0.0
  %v7254 = vmax.f32 %v6893, 0.0
  %v7255 = vmax.f32 %v6894, 0.0
  %v7256 = vmax.f32 %v6895, 0.0
  %v7257 = vmax.f32 %v6896, 0.0
  %v7258 = vmax.f32 %v6897, 0.0
  %v7259 = vmax.f32 %v6898, 0.0
  %v7260 = vmax.f32 %v6899, 0.0
  %v7261 = vmax.f32 %v6900, 0.0
  %v7262 = vmax.f32 %v6901, 0.0
  %v7263 = vmax.f32 %v6902, 0.0
  %v7264 = vmax.f32 %v6903, 0.0
  %v7265 = vmax.f32 %v6904, 0.0
  %v7266 = vmax.f32 %v6905, 0.0
  %v7267 = vmax.f32 %v6906, 0.0
  %v7268 = vmax.f32 %v6907, 0.0
  %v7269 = vmax.f32 %v6908, 0.0
  %v7270 = vmax.f32 %v6909, 0.0
  %v7271 = vmax.f32 %v6910, 0.0
  %v7272 = vmax.f32 %v6911, 0.0
  %v7273 = vmax.f32 %v6912, 0.0
  %v7274 = vmax.f32 %v6913, 0.0
  %v7275 = vmax.f32 %v6914, 0.0
  %v7276 = vmax.f32 %v6915, 0.0
  %v7277 = vmax.f32 %v6916, 0.0
  %v7278 = vmax.f32 %v6917, 0.0
  %v7279 = vmax.f32 %v6918, 0.0
  %v7280 = vmax.f32 %v6919, 0.0
  %v7281 = vmax.f32 %v6920, 0.0
  %v7282 = vmax.f32 %v6921, 0.0
  %v7283 = vmax.f32 %v6922, 0.0
  %v7284 = vmax.f32 %v6923, 0.0
  %v7285 = vmax.f32 %v6924, 0.0
  %v7286 = vmax.f32 %v6925, 0.0
  %v7287 = vmax.f32 %v6926, 0.0
  %v7288 = vmax.f32 %v6927, 0.0
  %v7289 = vmax.f32 %v6928, 0.0
  %v7290 = vmax.f32 %v6929, 0.0
  %v7291 = vmax.f32 %v6930, 0.0
  %v7292 = vmax.f32 %v6931, 0.0
  %v7293 = vmax.f32 %v6932, 0.0
  %v7294 = vmax.f32 %v6933, 0.0
  %v7295 = vmax.f32 %v6934, 0.0
  %v7296 = vmax.f32 %v6935, 0.0
  %v7297 = vmax.f32 %v6936, 0.0
  %v7298 = vmax.f32 %v6937, 0.0
  %v7299 = vmax.f32 %v6938, 0.0
  %v7300 = vmax.f32 %v6939, 0.0
  %v7301 = vmax.f32 %v6940, 0.0
  %v7302 = vmax.f32 %v6941, 0.0
  %v7303 = vmax.f32 %v6942, 0.0
  %v7304 = vmax.f32 %v6943, 0.0
  %v7305 = vmax.f32 %v6944, 0.0
  %v7306 = vmax.f32 %v6945, 0.0
  %v7307 = vmax.f32 %v6946, 0.0
  %v7308 = vmax.f32 %v6947, 0.0
  %v7309 = vmax.f32 %v6948, 0.0
  %v7310 = vmax.f32 %v6949, 0.0
  %v7311 = vmax.f32 %v6950, 0.0
  %v7312 = vmax.f32 %v6951, 0.0
  %v7313 = vmax.f32 %v6952, 0.0
  %v7314 = vmax.f32 %v6953, 0.0
  %v7315 = vmax.f32 %v6954, 0.0
  %v7316 = vmax.f32 %v6955, 0.0
  %v7317 = vmax.f32 %v6956, 0.0
  %v7318 = vmax.f32 %v6957, 0.0
  %v7319 = vmax.f32 %v6958, 0.0
  %v7320 = vmax.f32 %v6959, 0.0
  %v7321 = vmax.f32 %v6960, 0.0
  %v7322 = vmax.f32 %v6961, 0.0
  %v7323 = vmax.f32 %v6962, 0.0
  %v7324 = vmax.f32 %v6963, 0.0
  %v7325 = vmax.f32 %v6964, 0.0
  %v7326 = vmax.f32 %v6965, 0.0
  %v7327 = vmax.f32 %v6966, 0.0
  %v7328 = vmax.f32 %v6967, 0.0
  %v7329 = vmax.f32 %v6968, 0.0
  %v7330 = vmax.f32 %v6969, 0.0
  %v7331 = vmax.f32 %v6970, 0.0
  %v7332 = vmax.f32 %v6971, 0.0
  %v7333 = vmax.f32 %v6972, 0.0
  %v7334 = vmax.f32 %v6973, 0.0
  %v7335 = vmax.f32 %v6974, 0.0
  %v7336 = vmax.f32 %v6975, 0.0
  %v7337 = vmax.f32 %v6976, 0.0
  %v7338 = vmax.f32 %v6977, 0.0
  %v7339 = vmax.f32 %v6978, 0.0
  %v7340 = vmax.f32 %v6979, 0.0
  %v7341 = vmax.f32 %v6980, 0.0
  %v7342 = vmax.f32 %v6981, 0.0
  %v7343 = vmax.f32 %v6982, 0.0
  %v7344 = vmax.f32 %v6983, 0.0
  %v7345 = vmax.f32 %v6984, 0.0
  %v7346 = vmax.f32 %v6985, 0.0
  %v7347 = vmax.f32 %v6986, 0.0
  %v7348 = vmax.f32 %v6987, 0.0
  %v7349 = vmax.f32 %v6988, 0.0
  %v7350 = vmax.f32 %v6989, 0.0
  %v7351 = vmax.f32 %v6990, 0.0
  %v7352 = vmax.f32 %v6991, 0.0
  %v7353 = vmax.f32 %v6992, 0.0
  %v7354 = vmax.f32 %v6993, 0.0
  %v7355 = vmax.f32 %v6994, 0.0
  %v7356 = vmax.f32 %v6995, 0.0
  %v7357 = vmax.f32 %v6996, 0.0
  %v7358 = vmax.f32 %v6997, 0.0
  %v7359 = vmax.f32 %v6998, 0.0
  %v7360 = vmax.f32 %v6999, 0.0
  %v7361 = vmax.f32 %v7000, 0.0
  %v7362 = vmax.f32 %v7001, 0.0
  %v7363 = vmax.f32 %v7002, 0.0
  %v7364 = vmax.f32 %v7003, 0.0
  %v7365 = vmax.f32 %v7004, 0.0
  %v7366 = vmax.f32 %v7005, 0.0
  %v7367 = vmax.f32 %v7006, 0.0
  %v7368 = vmax.f32 %v7007, 0.0
  %v7369 = vmax.f32 %v7008, 0.0
  %v7370 = vmax.f32 %v7009, 0.0
  %v7371 = vmax.f32 %v7010, 0.0
  %v7372 = vmax.f32 %v7011, 0.0
  %v7373 = vmax.f32 %v7012, 0.0
  %v7374 = vmax.f32 %v7013, 0.0
  %v7375 = vmax.f32 %v7014, 0.0
  %v7376 = vmax.f32 %v7015, 0.0
  %v7377 = vmax.f32 %v7016, 0.0
  %v7378 = vmax.f32 %v7017, 0.0
  %v7379 = vmax.f32 %v7018, 0.0
  %v7380 = vmax.f32 %v7019, 0.0
  %v7381 = vmax.f32 %v7020, 0.0
  %v7382 = vmax.f32 %v7021, 0.0
  %v7383 = vmax.f32 %v7022, 0.0
  %v7384 = vmax.f32 %v7023, 0.0
  %v7385 = vmax.f32 %v7024, 0.0
  %v7386 = vmax.f32 %v7025, 0.0
  %v7387 = vmax.f32 %v7026, 0.0
  %v7388 = vmax.f32 %v7027, 0.0
  %v7389 = vmax.f32 %v7028, 0.0
  %v7390 = vmax.f32 %v7029, 0.0
  %v7391 = vmax.f32 %v7030, 0.0
  %v7392 = vmax.f32 %v7031, 0.0
  %v7393 = vmax.f32 %v7032, 0.0
  %v7394 = vmax.f32 %v7033, 0.0
  %v7395 = vmax.f32 %v7034, 0.0
  %v7396 = vmax.f32 %v7035, 0.0
  %v7397 = vmax.f32 %v7036, 0.0
  %v7398 = vmax.f32 %v7037, 0.0
  %v7399 = vmax.f32 %v7038, 0.0
  %v7400 = vmax.f32 %v7039, 0.0
  %v7401 = vmax.f32 %v7040, 0.0
  %v7402 = vmax.f32 %v7041, 0.0
  %v7403 = vmax.f32 %v7042, 0.0
  %v7404 = vmax.f32 %v7043, 0.0
  %v7405 = vmax.f32 %v7044, 0.0
  %v7406 = vmax.f32 %v7045, 0.0
  %v7407 = vmax.f32 %v7046, 0.0
  %v7408 = vmax.f32 %v7047, 0.0
  %v7409 = vmax.f32 %v7048, 0.0
  %v7410 = vmax.f32 %v7049, 0.0
  %v7411 = vmax.f32 %v7050, 0.0
  %v7412 = vmax.f32 %v7051, 0.0
  %v7413 = vmax.f32 %v7052, 0.0
  %v7414 = vmax.f32 %v7053, 0.0
  %v7415 = vmax.f32 %v7054, 0.0
  %v7416 = vmax.f32 %v7055, 0.0
  %v7417 = vmax.f32 %v7056, 0.0
  %v7418 = vmax.f32 %v7057, 0.0
  %v7419 = vmax.f32 %v7058, 0.0
  %v7420 = vmax.f32 %v7059, 0.0
  %v7421 = vmax.f32 %v7060, 0.0
  %v7422 = vmax.f32 %v7061, 0.0
  %v7423 = vmax.f32 %v7062, 0.0
  %v7424 = vmax.f32 %v7063, 0.0
  %v7425 = vmax.f32 %v7064, 0.0
  %v7426 = vmax.f32 %v7065, 0.0
  %v7427 = vmax.f32 %v7066, 0.0
  %v7428 = vmax.f32 %v7067, 0.0
  %v7429 = vmax.f32 %v7068, 0.0
  %v7430 = vmax.f32 %v7069, 0.0
  %v7431 = vmax.f32 %v7070, 0.0
  %v7432 = vmax.f32 %v7071, 0.0
  %v7433 = vmax.f32 %v7072, 0.0
  %v7434 = vmax.f32 %v7073, 0.0
  %v7435 = vmax.f32 %v7074, 0.0
  %v7436 = vmax.f32 %v7075, 0.0
  %v7437 = vmax.f32 %v7076, 0.0
  %v7438 = vmax.f32 %v7077, 0.0
  %v7439 = vmax.f32 %v7078, 0.0
  %v7440 = vmax.f32 %v7079, 0.0
  %v7441 = vmax.f32 %v7080, 0.0
  %v7442 = vmax.f32 %v7081, 0.0
  %v7443 = vmax.f32 %v7082, 0.0
  %v7444 = vmax.f32 %v7083, 0.0
  %v7445 = vmax.f32 %v7084, 0.0
  %v7446 = vmax.f32 %v7085, 0.0
  %v7447 = vmax.f32 %v7086, 0.0
  %v7448 = vmax.f32 %v7087, 0.0
  %v7449 = vmax.f32 %v7088, 0.0
  %v7450 = vmax.f32 %v7089, 0.0
  %v7451 = vmax.f32 %v7090, 0.0
  %v7452 = vmax.f32 %v7091, 0.0
  %v7453 = vmax.f32 %v7092, 0.0
  %v7454 = vmax.f32 %v7093, 0.0
  %v7455 = vmax.f32 %v7094, 0.0
  %v7456 = vmax.f32 %v7095, 0.0
  %v7457 = vmax.f32 %v7096, 0.0
  %v7458 = vmax.f32 %v7097, 0.0
  %v7459 = vmax.f32 %v7098, 0.0
  %v7460 = vmax.f32 %v7099, 0.0
  %v7461 = vmax.f32 %v7100, 0.0
  %v7462 = vmax.f32 %v7101, 0.0
  %v7463 = vmax.f32 %v7102, 0.0
  %v7464 = vmax.f32 %v7103, 0.0
  %v7465 = vmax.f32 %v7104, 0.0
  %v7466 = vmax.f32 %v7105, 0.0
  %v7467 = vmax.f32 %v7106, 0.0
  %v7468 = vmax.f32 %v7107, 0.0
  %v7469 = vmax.f32 %v7108, 0.0
  %v7470 = vmax.f32 %v7109, 0.0
  %v7471 = vmax.f32 %v7110, 0.0
  %v7472 = vmax.f32 %v7111, 0.0
  %v7473 = vmax.f32 %v7112, 0.0
  %v7474 = vmax.f32 %v7113, 0.0
  %v7475 = vmax.f32 %v7114, 0.0
  %v7476 = vmax.f32 %v7115, 0.0
  %v7477 = vmax.f32 %v7116, 0.0
  %v7478 = vmax.f32 %v7117, 0.0
  %v7479 = vmax.f32 %v7118, 0.0
  %v7480 = vmax.f32 %v7119, 0.0
  %v7481 = vmax.f32 %v7120, 0.0
  %v7482 = vmax.f32 %v7121, 0.0
  %v7483 = vmax.f32 %v7122, 0.0
  %v7484 = vmax.f32 %v7123, 0.0
  %v7485 = vmax.f32 %v7124, 0.0
  %v7486 = vmax.f32 %v7125, 0.0
  %v7487 = vmax.f32 %v7126, 0.0
  %v7488 = vmax.f32 %v7127, 0.0
  %v7489 = vmax.f32 %v7128, 0.0
  %v7490 = vmax.f32 %v7129, 0.0
  %v7491 = vmax.f32 %v7130, 0.0
  %v7492 = vmax.f32 %v7131, 0.0
  %v7493 = vmax.f32 %v7132, 0.0
  %v7494 = vmax.f32 %v7133, %v7152
  %v7495 = vmax.f32 %v7134, %v7153
  %v7496 = vmax.f32 %v7135, %v7154
  %v7497 = vmax.f32 %v7136, %v7155
  %v7498 = vmax.f32 %v7137, %v7156
  %v7499 = vmax.f32 %v7138, %v7157
  %v7500 = vmax.f32 %v7139, %v7158
  %v7501 = vmax.f32 %v7140, %v7159
  %v7502 = vmax.f32 %v7141, %v7160
  %v7503 = vmax.f32 %v7142, %v7161
  %v7504 = vmax.f32 %v7143, %v7162
  %v7505 = vmax.f32 %v7144, %v7163
  %v7506 = vmax.f32 %v7145, %v7164
  %v7507 = vmax.f32 %v7146, %v7165
  %v7508 = vmax.f32 %v7147, %v7166
  %v7509 = vmax.f32 %v7148, %v7167
  %v7510 = vmax.f32 %v7149, %v7168
  %v7511 = vmax.f32 %v7150, %v7169
  %v7512 = vmax.f32 %v7151, %v7170
  %v7513 = vmax.f32 %v7171, %v7190
  %v7514 = vmax.f32 %v7172, %v7191
  %v7515 = vmax.f32 %v7173, %v7192
  %v7516 = vmax.f32 %v7174, %v7193
  %v7517 = vmax.f32 %v7175, %v7194
  %v7518 = vmax.f32 %v7176, %v7195
  %v7519 = vmax.f32 %v7177, %v7196
  %v7520 = vmax.f32 %v7178, %v7197
  %v7521 = vmax.f32 %v7179, %v7198
  %v7522 = vmax.f32 %v7180, %v7199
  %v7523 = vmax.f32 %v7181, %v7200
  %v7524 = vmax.f32 %v7182, %v7201
  %v7525 = vmax.f32 %v7183, %v7202
  %v7526 = vmax.f32 %v7184, %v7203
  %v7527 = vmax.f32 %v7185, %v7204
  %v7528 = vmax.f32 %v7186, %v7205
  %v7529 = vmax.f32 %v7187, %v7206
  %v7530 = vmax.f32 %v7188, %v7207
  %v7531 = vmax.f32 %v7189, %v7208
  %v7532 = vmax.f32 %v7209, %v7228
  %v7533 = vmax.f32 %v7210, %v7229
  %v7534 = vmax.f32 %v7211, %v7230
  %v7535 = vmax.f32 %v7212, %v7231
  %v7536 = vmax.f32 %v7213, %v7232
  %v7537 = vmax.f32 %v7214, %v7233
  %v7538 = vmax.f32 %v7215, %v7234
  %v7539 = vmax.f32 %v7216, %v7235
  %v7540 = vmax.f32 %v7217, %v7236
  %v7541 = vmax.f32 %v7218, %v7237
  %v7542 = vmax.f32 %v7219, %v7238
  %v7543 = vmax.f32 %v7220, %v7239
  %v7544 = vmax.f32 %v7221, %v7240
  %v7545 = vmax.f32 %v7222, %v7241
  %v7546 = vmax.f32 %v7223, %v7242
  %v7547 = vmax.f32 %v7224, %v7243
  %v7548 = vmax.f32 %v7225, %v7244
  %v7549 = vmax.f32 %v7226, %v7245
  %v7550 = vmax.f32 %v7227, %v7246
  %v7551 = vmax.f32 %v7247, %v7266
  %v7552 = vmax.f32 %v7248, %v7267
  %v7553 = vmax.f32 %v7249, %v7268
  %v7554 = vmax.f32 %v7250, %v7269
  %v7555 = vmax.f32 %v7251, %v7270
  %v7556 = vmax.f32 %v7252, %v7271
  %v7557 = vmax.f32 %v7253, %v7272
  %v7558 = vmax.f32 %v7254, %v7273
  %v7559 = vmax.f32 %v7255, %v7274
  %v7560 = vmax.f32 %v7256, %v7275
  %v7561 = vmax.f32 %v7257, %v7276
  %v7562 = vmax.f32 %v7258, %v7277
  %v7563 = vmax.f32 %v7259, %v7278
  %v7564 = vmax.f32 %v7260, %v7279
  %v7565 = vmax.f32 %v7261, %v7280
  %v7566 = vmax.f32 %v7262, %v7281
  %v7567 = vmax.f32 %v7263, %v7282
  %v7568 = vmax.f32 %v7264, %v7283
  %v7569 = vmax.f32 %v7265, %v7284
  %v7570 = vmax.f32 %v7285, %v7304
  %v7571 = vmax.f32 %v7286, %v7305
  %v7572 = vmax.f32 %v7287, %v7306
  %v7573 = vmax.f32 %v7288, %v7307
  %v7574 = vmax.f32 %v7289, %v7308
  %v7575 = vmax.f32 %v7290, %v7309
  %v7576 = vmax.f32 %v7291, %v7310
  %v7577 = vmax.f32 %v7292, %v7311
  %v7578 = vmax.f32 %v7293, %v7312
  %v7579 = vmax.f32 %v7294, %v7313
  %v7580 = vmax.f32 %v7295, %v7314
  %v7581 = vmax.f32 %v7296, %v7315
  %v7582 = vmax.f32 %v7297, %v7316
  %v7583 = vmax.f32 %v7298, %v7317
  %v7584 = vmax.f32 %v7299, %v7318
  %v7585 = vmax.f32 %v7300, %v7319
  %v7586 = vmax.f32 %v7301, %v7320
  %v7587 = vmax.f32 %v7302, %v7321
  %v7588 = vmax.f32 %v7303, %v7322
  %v7589 = vmax.f32 %v7323, %v7342
  %v7590 = vmax.f32 %v7324, %v7343
  %v7591 = vmax.f32 %v7325, %v7344
  %v7592 = vmax.f32 %v7326, %v7345
  %v7593 = vmax.f32 %v7327, %v7346
  %v7594 = vmax.f32 %v7328, %v7347
  %v7595 = vmax.f32 %v7329, %v7348
  %v7596 = vmax.f32 %v7330, %v7349
  %v7597 = vmax.f32 %v7331, %v7350
  %v7598 = vmax.f32 %v7332, %v7351
  %v7599 = vmax.f32 %v7333, %v7352
  %v7600 = vmax.f32 %v7334, %v7353
  %v7601 = vmax.f32 %v7335, %v7354
  %v7602 = vmax.f32 %v7336, %v7355
  %v7603 = vmax.f32 %v7337, %v7356
  %v7604 = vmax.f32 %v7338, %v7357
  %v7605 = vmax.f32 %v7339, %v7358
  %v7606 = vmax.f32 %v7340, %v7359
  %v7607 = vmax.f32 %v7341, %v7360
  %v7608 = vmax.f32 %v7361, %v7380
  %v7609 = vmax.f32 %v7362, %v7381
  %v7610 = vmax.f32 %v7363, %v7382
  %v7611 = vmax.f32 %v7364, %v7383
  %v7612 = vmax.f32 %v7365, %v7384
  %v7613 = vmax.f32 %v7366, %v7385
  %v7614 = vmax.f32 %v7367, %v7386
  %v7615 = vmax.f32 %v7368, %v7387
  %v7616 = vmax.f32 %v7369, %v7388
  %v7617 = vmax.f32 %v7370, %v7389
  %v7618 = vmax.f32 %v7371, %v7390
  %v7619 = vmax.f32 %v7372, %v7391
  %v7620 = vmax.f32 %v7373, %v7392
  %v7621 = vmax.f32 %v7374, %v7393
  %v7622 = vmax.f32 %v7375, %v7394
  %v7623 = vmax.f32 %v7376, %v7395
  %v7624 = vmax.f32 %v7377, %v7396
  %v7625 = vmax.f32 %v7378, %v7397
  %v7626 = vmax.f32 %v7379, %v7398
  %v7627 = vmax.f32 %v7399, %v7418
  %v7628 = vmax.f32 %v7400, %v7419
  %v7629 = vmax.f32 %v7401, %v7420
  %v7630 = vmax.f32 %v7402, %v7421
  %v7631 = vmax.f32 %v7403, %v7422
  %v7632 = vmax.f32 %v7404, %v7423
  %v7633 = vmax.f32 %v7405, %v7424
  %v7634 = vmax.f32 %v7406, %v7425
  %v7635 = vmax.f32 %v7407, %v7426
  %v7636 = vmax.f32 %v7408, %v7427
  %v7637 = vmax.f32 %v7409, %v7428
  %v7638 = vmax.f32 %v7410, %v7429
  %v7639 = vmax.f32 %v7411, %v7430
  %v7640 = vmax.f32 %v7412, %v7431
  %v7641 = vmax.f32 %v7413, %v7432
  %v7642 = vmax.f32 %v7414, %v7433
  %v7643 = vmax.f32 %v7415, %v7434
  %v7644 = vmax.f32 %v7416, %v7435
  %v7645 = vmax.f32 %v7417, %v7436
  %v7646 = vmax.f32 %v7437, %v7456
  %v7647 = vmax.f32 %v7438, %v7457
  %v7648 = vmax.f32 %v7439, %v7458
  %v7649 = vmax.f32 %v7440, %v7459
  %v7650 = vmax.f32 %v7441, %v7460
  %v7651 = vmax.f32 %v7442, %v7461
  %v7652 = vmax.f32 %v7443, %v7462
  %v7653 = vmax.f32 %v7444, %v7463
  %v7654 = vmax.f32 %v7445, %v7464
  %v7655 = vmax.f32 %v7446, %v7465
  %v7656 = vmax.f32 %v7447, %v7466
  %v7657 = vmax.f32 %v7448, %v7467
  %v7658 = vmax.f32 %v7449, %v7468
  %v7659 = vmax.f32 %v7450, %v7469
  %v7660 = vmax.f32 %v7451, %v7470
  %v7661 = vmax.f32 %v7452, %v7471
  %v7662 = vmax.f32 %v7453, %v7472
  %v7663 = vmax.f32 %v7454, %v7473
  %v7664 = vmax.f32 %v7455, %v7474
  %v7665 = vmax.f32 %v7494, %v7171
  %v7666 = vmax.f32 %v7495, %v7172
  %v7667 = vmax.f32 %v7496, %v7173
  %v7668 = vmax.f32 %v7497, %v7174
  %v7669 = vmax.f32 %v7498, %v7175
  %v7670 = vmax.f32 %v7499, %v7176
  %v7671 = vmax.f32 %v7500, %v7177
  %v7672 = vmax.f32 %v7501, %v7178
  %v7673 = vmax.f32 %v7502, %v7179
  %v7674 = vmax.f32 %v7503, %v7180
  %v7675 = vmax.f32 %v7504, %v7181
  %v7676 = vmax.f32 %v7505, %v7182
  %v7677 = vmax.f32 %v7506, %v7183
  %v7678 = vmax.f32 %v7507, %v7184
  %v7679 = vmax.f32 %v7508, %v7185
  %v7680 = vmax.f32 %v7509, %v7186
  %v7681 = vmax.f32 %v7510, %v7187
  %v7682 = vmax.f32 %v7511, %v7188
  %v7683 = vmax.f32 %v7512, %v7189
  %v7684 = vmax.f32 %v7513, %v7209
  %v7685 = vmax.f32 %v7514, %v7210
  %v7686 = vmax.f32 %v7515, %v7211
  %v7687 = vmax.f32 %v7516, %v7212
  %v7688 = vmax.f32 %v7517, %v7213
  %v7689 = vmax.f32 %v7518, %v7214
  %v7690 = vmax.f32 %v7519, %v7215
  %v7691 = vmax.f32 %v7520, %v7216
  %v7692 = vmax.f32 %v7521, %v7217
  %v7693 = vmax.f32 %v7522, %v7218
  %v7694 = vmax.f32 %v7523, %v7219
  %v7695 = vmax.f32 %v7524, %v7220
  %v7696 = vmax.f32 %v7525, %v7221
  %v7697 = vmax.f32 %v7526, %v7222
  %v7698 = vmax.f32 %v7527, %v7223
  %v7699 = vmax.f32 %v7528, %v7224
  %v7700 = vmax.f32 %v7529, %v7225
  %v7701 = vmax.f32 %v7530, %v7226
  %v7702 = vmax.f32 %v7531, %v7227
  %v7703 = vmax.f32 %v7532, %v7247
  %v7704 = vmax.f32 %v7533, %v7248
  %v7705 = vmax.f32 %v7534, %v7249
  %v7706 = vmax.f32 %v7535, %v7250
  %v7707 = vmax.f32 %v7536, %v7251
  %v7708 = vmax.f32 %v7537, %v7252
  %v7709 = vmax.f32 %v7538, %v7253
  %v7710 = vmax.f32 %v7539, %v7254
  %v7711 = vmax.f32 %v7540, %v7255
  %v7712 = vmax.f32 %v7541, %v7256
  %v7713 = vmax.f32 %v7542, %v7257
  %v7714 = vmax.f32 %v7543, %v7258
  %v7715 = vmax.f32 %v7544, %v7259
  %v7716 = vmax.f32 %v7545, %v7260
  %v7717 = vmax.f32 %v7546, %v7261
  %v7718 = vmax.f32 %v7547, %v7262
  %v7719 = vmax.f32 %v7548, %v7263
  %v7720 = vmax.f32 %v7549, %v7264
  %v7721 = vmax.f32 %v7550, %v7265
  %v7722 = vmax.f32 %v7551, %v7285
  %v7723 = vmax.f32 %v7552, %v7286
  %v7724 = vmax.f32 %v7553, %v7287
  %v7725 = vmax.f32 %v7554, %v7288
  %v7726 = vmax.f32 %v7555, %v7289
  %v7727 = vmax.f32 %v7556, %v7290
  %v7728 = vmax.f32 %v7557, %v7291
  %v7729 = vmax.f32 %v7558, %v7292
  %v7730 = vmax.f32 %v7559, %v7293
  %v7731 = vmax.f32 %v7560, %v7294
  %v7732 = vmax.f32 %v7561, %v7295
  %v7733 = vmax.f32 %v7562, %v7296
  %v7734 = vmax.f32 %v7563, %v7297
  %v7735 = vmax.f32 %v7564, %v7298
  %v7736 = vmax.f32 %v7565, %v7299
  %v7737 = vmax.f32 %v7566, %v7300
  %v7738 = vmax.f32 %v7567, %v7301
  %v7739 = vmax.f32 %v7568, %v7302
  %v7740 = vmax.f32 %v7569, %v7303
  %v7741 = vmax.f32 %v7570, %v7323
  %v7742 = vmax.f32 %v7571, %v7324
  %v7743 = vmax.f32 %v7572, %v7325
  %v7744 = vmax.f32 %v7573, %v7326
  %v7745 = vmax.f32 %v7574, %v7327
  %v7746 = vmax.f32 %v7575, %v7328
  %v7747 = vmax.f32 %v7576, %v7329
  %v7748 = vmax.f32 %v7577, %v7330
  %v7749 = vmax.f32 %v7578, %v7331
  %v7750 = vmax.f32 %v7579, %v7332
  %v7751 = vmax.f32 %v7580, %v7333
  %v7752 = vmax.f32 %v7581, %v7334
  %v7753 = vmax.f32 %v7582, %v7335
  %v7754 = vmax.f32 %v7583, %v7336
  %v7755 = vmax.f32 %v7584, %v7337
  %v7756 = vmax.f32 %v7585, %v7338
  %v7757 = vmax.f32 %v7586, %v7339
  %v7758 = vmax.f32 %v7587, %v7340
  %v7759 = vmax.f32 %v7588, %v7341
  %v7760 = vmax.f32 %v7589, %v7361
  %v7761 = vmax.f32 %v7590, %v7362
  %v7762 = vmax.f32 %v7591, %v7363
  %v7763 = vmax.f32 %v7592, %v7364
  %v7764 = vmax.f32 %v7593, %v7365
  %v7765 = vmax.f32 %v7594, %v7366
  %v7766 = vmax.f32 %v7595, %v7367
  %v7767 = vmax.f32 %v7596, %v7368
  %v7768 = vmax.f32 %v7597, %v7369
  %v7769 = vmax.f32 %v7598, %v7370
  %v7770 = vmax.f32 %v7599, %v7371
  %v7771 = vmax.f32 %v7600, %v7372
  %v7772 = vmax.f32 %v7601, %v7373
  %v7773 = vmax.f32 %v7602, %v7374
  %v7774 = vmax.f32 %v7603, %v7375
  %v7775 = vmax.f32 %v7604, %v7376
  %v7776 = vmax.f32 %v7605, %v7377
  %v7777 = vmax.f32 %v7606, %v7378
  %v7778 = vmax.f32 %v7607, %v7379
  %v7779 = vmax.f32 %v7608, %v7399
  %v7780 = vmax.f32 %v7609, %v7400
  %v7781 = vmax.f32 %v7610, %v7401
  %v7782 = vmax.f32 %v7611, %v7402
  %v7783 = vmax.f32 %v7612, %v7403
  %v7784 = vmax.f32 %v7613, %v7404
  %v7785 = vmax.f32 %v7614, %v7405
  %v7786 = vmax.f32 %v7615, %v7406
  %v7787 = vmax.f32 %v7616, %v7407
  %v7788 = vmax.f32 %v7617, %v7408
  %v7789 = vmax.f32 %v7618, %v7409
  %v7790 = vmax.f32 %v7619, %v7410
  %v7791 = vmax.f32 %v7620, %v7411
  %v7792 = vmax.f32 %v7621, %v7412
  %v7793 = vmax.f32 %v7622, %v7413
  %v7794 = vmax.f32 %v7623, %v7414
  %v7795 = vmax.f32 %v7624, %v7415
  %v7796 = vmax.f32 %v7625, %v7416
  %v7797 = vmax.f32 %v7626, %v7417
  %v7798 = vmax.f32 %v7627, %v7437
  %v7799 = vmax.f32 %v7628, %v7438
  %v7800 = vmax.f32 %v7629, %v7439
  %v7801 = vmax.f32 %v7630, %v7440
  %v7802 = vmax.f32 %v7631, %v7441
  %v7803 = vmax.f32 %v7632, %v7442
  %v7804 = vmax.f32 %v7633, %v7443
  %v7805 = vmax.f32 %v7634, %v7444
  %v7806 = vmax.f32 %v7635, %v7445
  %v7807 = vmax.f32 %v7636, %v7446
  %v7808 = vmax.f32 %v7637, %v7447
  %v7809 = vmax.f32 %v7638, %v7448
  %v7810 = vmax.f32 %v7639, %v7449
  %v7811 = vmax.f32 %v7640, %v7450
  %v7812 = vmax.f32 %v7641, %v7451
  %v7813 = vmax.f32 %v7642, %v7452
  %v7814 = vmax.f32 %v7643, %v7453
  %v7815 = vmax.f32 %v7644, %v7454
  %v7816 = vmax.f32 %v7645, %v7455
  %v7817 = vmax.f32 %v7646, %v7475
  %v7818 = vmax.f32 %v7647, %v7476
  %v7819 = vmax.f32 %v7648, %v7477
  %v7820 = vmax.f32 %v7649, %v7478
  %v7821 = vmax.f32 %v7650, %v7479
  %v7822 = vmax.f32 %v7651, %v7480
  %v7823 = vmax.f32 %v7652, %v7481
  %v7824 = vmax.f32 %v7653, %v7482
  %v7825 = vmax.f32 %v7654, %v7483
  %v7826 = vmax.f32 %v7655, %v7484
  %v7827 = vmax.f32 %v7656, %v7485
  %v7828 = vmax.f32 %v7657, %v7486
  %v7829 = vmax.f32 %v7658, %v7487
  %v7830 = vmax.f32 %v7659, %v7488
  %v7831 = vmax.f32 %v7660, %v7489
  %v7832 = vmax.f32 %v7661, %v7490
  %v7833 = vmax.f32 %v7662, %v7491
  %v7834 = vmax.f32 %v7663, %v7492
  %v7835 = vmax.f32 %v7664, %v7493
  %v7836 = vmax.f32 %v7665, %v7666
  %v7837 = vmax.f32 %v7667, %v7668
  %v7838 = vmax.f32 %v7669, %v7670
  %v7839 = vmax.f32 %v7671, %v7672
  %v7840 = vmax.f32 %v7673, %v7674
  %v7841 = vmax.f32 %v7675, %v7676
  %v7842 = vmax.f32 %v7677, %v7678
  %v7843 = vmax.f32 %v7679, %v7680
  %v7844 = vmax.f32 %v7681, %v7682
  %v7845 = vmax.f32 %v7684, %v7685
  %v7846 = vmax.f32 %v7686, %v7687
  %v7847 = vmax.f32 %v7688, %v7689
  %v7848 = vmax.f32 %v7690, %v7691
  %v7849 = vmax.f32 %v7692, %v7693
  %v7850 = vmax.f32 %v7694, %v7695
  %v7851 = vmax.f32 %v7696, %v7697
  %v7852 = vmax.f32 %v7698, %v7699
  %v7853 = vmax.f32 %v7700, %v7701
  %v7854 = vmax.f32 %v7703, %v7704
  %v7855 = vmax.f32 %v7705, %v7706
  %v7856 = vmax.f32 %v7707, %v7708
  %v7857 = vmax.f32 %v7709, %v7710
  %v7858 = vmax.f32 %v7711, %v7712
  %v7859 = vmax.f32 %v7713, %v7714
  %v7860 = vmax.f32 %v7715, %v7716
  %v7861 = vmax.f32 %v7717, %v7718
  %v7862 = vmax.f32 %v7719, %v7720
  %v7863 = vmax.f32 %v7722, %v7723
  %v7864 = vmax.f32 %v7724, %v7725
  %v7865 = vmax.f32 %v7726, %v7727
  %v7866 = vmax.f32 %v7728, %v7729
  %v7867 = vmax.f32 %v7730, %v7731
  %v7868 = vmax.f32 %v7732, %v7733
  %v7869 = vmax.f32 %v7734, %v7735
  %v7870 = vmax.f32 %v7736, %v7737
  %v7871 = vmax.f32 %v7738, %v7739
  %v7872 = vmax.f32 %v7741, %v7742
  %v7873 = vmax.f32 %v7743, %v7744
  %v7874 = vmax.f32 %v7745, %v7746
  %v7875 = vmax.f32 %v7747, %v7748
  %v7876 = vmax.f32 %v7749, %v7750
  %v7877 = vmax.f32 %v7751, %v7752
  %v7878 = vmax.f32 %v7753, %v7754
  %v7879 = vmax.f32 %v7755, %v7756
  %v7880 = vmax.f32 %v7757, %v7758
  %v7881 = vmax.f32 %v7760, %v7761
  %v7882 = vmax.f32 %v7762, %v7763
  %v7883 = vmax.f32 %v7764, %v7765
  %v7884 = vmax.f32 %v7766, %v7767
  %v7885 = vmax.f32 %v7768, %v7769
  %v7886 = vmax.f32 %v7770, %v7771
  %v7887 = vmax.f32 %v7772, %v7773
  %v7888 = vmax.f32 %v7774, %v7775
  %v7889 = vmax.f32 %v7776, %v7777
  %v7890 = vmax.f32 %v7779, %v7780
  %v7891 = vmax.f32 %v7781, %v7782
  %v7892 = vmax.f32 %v7783, %v7784
  %v7893 = vmax.f32 %v7785, %v7786
  %v7894 = vmax.f32 %v7787, %v7788
  %v7895 = vmax.f32 %v7789, %v7790
  %v7896 = vmax.f32 %v7791, %v7792
  %v7897 = vmax.f32 %v7793, %v7794
  %v7898 = vmax.f32 %v7795, %v7796
  %v7899 = vmax.f32 %v7798, %v7799
  %v7900 = vmax.f32 %v7800, %v7801
  %v7901 = vmax.f32 %v7802, %v7803
  %v7902 = vmax.f32 %v7804, %v7805
  %v7903 = vmax.f32 %v7806, %v7807
  %v7904 = vmax.f32 %v7808, %v7809
  %v7905 = vmax.f32 %v7810, %v7811
  %v7906 = vmax.f32 %v7812, %v7813
  %v7907 = vmax.f32 %v7814, %v7815
  %v7908 = vmax.f32 %v7817, %v7818
  %v7909 = vmax.f32 %v7819, %v7820
  %v7910 = vmax.f32 %v7821, %v7822
  %v7911 = vmax.f32 %v7823, %v7824
  %v7912 = vmax.f32 %v7825, %v7826
  %v7913 = vmax.f32 %v7827, %v7828
  %v7914 = vmax.f32 %v7829, %v7830
  %v7915 = vmax.f32 %v7831, %v7832
  %v7916 = vmax.f32 %v7833, %v7834
  %v7917 = vmax.f32 %v7836, %v7667
  %v7918 = vmax.f32 %v7837, %v7669
  %v7919 = vmax.f32 %v7838, %v7671
  %v7920 = vmax.f32 %v7839, %v7673
  %v7921 = vmax.f32 %v7840, %v7675
  %v7922 = vmax.f32 %v7841, %v7677
  %v7923 = vmax.f32 %v7842, %v7679
  %v7924 = vmax.f32 %v7843, %v7681
  %v7925 = vmax.f32 %v7844, %v7683
  %v7926 = vmax.f32 %v7845, %v7686
  %v7927 = vmax.f32 %v7846, %v7688
  %v7928 = vmax.f32 %v7847, %v7690
  %v7929 = vmax.f32 %v7848, %v7692
  %v7930 = vmax.f32 %v7849, %v7694
  %v7931 = vmax.f32 %v7850, %v7696
  %v7932 = vmax.f32 %v7851, %v7698
  %v7933 = vmax.f32 %v7852, %v7700
  %v7934 = vmax.f32 %v7853, %v7702
  %v7935 = vmax.f32 %v7854, %v7705
  %v7936 = vmax.f32 %v7855, %v7707
  %v7937 = vmax.f32 %v7856, %v7709
  %v7938 = vmax.f32 %v7857, %v7711
  %v7939 = vmax.f32 %v7858, %v7713
  %v7940 = vmax.f32 %v7859, %v7715
  %v7941 = vmax.f32 %v7860, %v7717
  %v7942 = vmax.f32 %v7861, %v7719
  %v7943 = vmax.f32 %v7862, %v7721
  %v7944 = vmax.f32 %v7863, %v7724
  %v7945 = vmax.f32 %v7864, %v7726
  %v7946 = vmax.f32 %v7865, %v7728
  %v7947 = vmax.f32 %v7866, %v7730
  %v7948 = vmax.f32 %v7867, %v7732
  %v7949 = vmax.f32 %v7868, %v7734
  %v7950 = vmax.f32 %v7869, %v7736
  %v7951 = vmax.f32 %v7870, %v7738
  %v7952 = vmax.f32 %v7871, %v7740
  %v7953 = vmax.f32 %v7872, %v7743
  %v7954 = vmax.f32 %v7873, %v7745
  %v7955 = vmax.f32 %v7874, %v7747
  %v7956 = vmax.f32 %v7875, %v7749
  %v7957 = vmax.f32 %v7876, %v7751
  %v7958 = vmax.f32 %v7877, %v7753
  %v7959 = vmax.f32 %v7878, %v7755
  %v7960 = vmax.f32 %v7879, %v7757
  %v7961 = vmax.f32 %v7880, %v7759
  %v7962 = vmax.f32 %v7881, %v7762
  %v7963 = vmax.f32 %v7882, %v7764
  %v7964 = vmax.f32 %v7883, %v7766
  %v7965 = vmax.f32 %v7884, %v7768
  %v7966 = vmax.f32 %v7885, %v7770
  %v7967 = vmax.f32 %v7886, %v7772
  %v7968 = vmax.f32 %v7887, %v7774
  %v7969 = vmax.f32 %v7888, %v7776
  %v7970 = vmax.f32 %v7889, %v7778
  %v7971 = vmax.f32 %v7890, %v7781
  %v7972 = vmax.f32 %v7891, %v7783
  %v7973 = vmax.f32 %v7892, %v7785
  %v7974 = vmax.f32 %v7893, %v7787
  %v7975 = vmax.f32 %v7894, %v7789
  %v7976 = vmax.f32 %v7895, %v7791
  %v7977 = vmax.f32 %v7896, %v7793
  %v7978 = vmax.f32 %v7897, %v7795
  %v7979 = vmax.f32 %v7898, %v7797
  %v7980 = vmax.f32 %v7899, %v7800
  %v7981 = vmax.f32 %v7900, %v7802
  %v7982 = vmax.f32 %v7901, %v7804
  %v7983 = vmax.f32 %v7902, %v7806
  %v7984 = vmax.f32 %v7903, %v7808
  %v7985 = vmax.f32 %v7904, %v7810
  %v7986 = vmax.f32 %v7905, %v7812
  %v7987 = vmax.f32 %v7906, %v7814
  %v7988 = vmax.f32 %v7907, %v7816
  %v7989 = vmax.f32 %v7908, %v7819
  %v7990 = vmax.f32 %v7909, %v7821
  %v7991 = vmax.f32 %v7910, %v7823
  %v7992 = vmax.f32 %v7911, %v7825
  %v7993 = vmax.f32 %v7912, %v7827
  %v7994 = vmax.f32 %v7913, %v7829
  %v7995 = vmax.f32 %v7914, %v7831
  %v7996 = vmax.f32 %v7915, %v7833
  %v7997 = vmax.f32 %v7916, %v7835
  %v7998 = vld [vmem:[%s3] sm:$0xff]
  %s7999 = scalar_lea.vmem %s3, 8
  %v8000 = vld [vmem:[%s7999] sm:$0xff]
  %vm8001 = vcmask 64512
  %v8003 = vsel %vm8001, %v7918, 0
  %v8006 = vsel %vm8001, %v7919, 0
  %v8009 = vsel %vm8001, %v7920, 0
  %v8012 = vsel %vm8001, %v7921, 0
  %v8015 = vsel %vm8001, %v7922, 0
  %v8018 = vsel %vm8001, %v7923, 0
  %v8021 = vsel %vm8001, %v7924, 0
  %v8024 = vsel %vm8001, %v7925, 0
  %v8027 = vsel %vm8001, %v7927, 0
  %v8030 = vsel %vm8001, %v7928, 0
  %v8033 = vsel %vm8001, %v7929, 0
  %v8036 = vsel %vm8001, %v7930, 0
  %v8039 = vsel %vm8001, %v7931, 0
  %v8042 = vsel %vm8001, %v7932, 0
  %v8045 = vsel %vm8001, %v7933, 0
  %v8048 = vsel %vm8001, %v7934, 0
  %v8051 = vsel %vm8001, %v7936, 0
  %v8054 = vsel %vm8001, %v7937, 0
  %v8057 = vsel %vm8001, %v7938, 0
  %v8060 = vsel %vm8001, %v7939, 0
  %v8063 = vsel %vm8001, %v7940, 0
  %v8066 = vsel %vm8001, %v7941, 0
  %v8069 = vsel %vm8001, %v7942, 0
  %v8072 = vsel %vm8001, %v7943, 0
  %v8075 = vsel %vm8001, %v7945, 0
  %v8078 = vsel %vm8001, %v7946, 0
  %v8081 = vsel %vm8001, %v7947, 0
  %v8084 = vsel %vm8001, %v7948, 0
  %v8087 = vsel %vm8001, %v7949, 0
  %v8090 = vsel %vm8001, %v7950, 0
  %v8093 = vsel %vm8001, %v7951, 0
  %v8096 = vsel %vm8001, %v7952, 0
  %v8099 = vsel %vm8001, %v7954, 0
  %v8102 = vsel %vm8001, %v7955, 0
  %v8105 = vsel %vm8001, %v7956, 0
  %v8108 = vsel %vm8001, %v7957, 0
  %v8111 = vsel %vm8001, %v7958, 0
  %v8114 = vsel %vm8001, %v7959, 0
  %v8117 = vsel %vm8001, %v7960, 0
  %v8120 = vsel %vm8001, %v7961, 0
  %v8123 = vsel %vm8001, %v7963, 0
  %v8126 = vsel %vm8001, %v7964, 0
  %v8129 = vsel %vm8001, %v7965, 0
  %v8132 = vsel %vm8001, %v7966, 0
  %v8135 = vsel %vm8001, %v7967, 0
  %v8138 = vsel %vm8001, %v7968, 0
  %v8141 = vsel %vm8001, %v7969, 0
  %v8144 = vsel %vm8001, %v7970, 0
  %v8147 = vsel %vm8001, %v7972, 0
  %v8150 = vsel %vm8001, %v7973, 0
  %v8153 = vsel %vm8001, %v7974, 0
  %v8156 = vsel %vm8001, %v7975, 0
  %v8159 = vsel %vm8001, %v7976, 0
  %v8162 = vsel %vm8001, %v7977, 0
  %v8165 = vsel %vm8001, %v7978, 0
  %v8168 = vsel %vm8001, %v7979, 0
  %v8171 = vsel %vm8001, %v7981, 0
  %v8174 = vsel %vm8001, %v7982, 0
  %v8177 = vsel %vm8001, %v7983, 0
  %v8180 = vsel %vm8001, %v7984, 0
  %v8183 = vsel %vm8001, %v7985, 0
  %v8186 = vsel %vm8001, %v7986, 0
  %v8189 = vsel %vm8001, %v7987, 0
  %v8192 = vsel %vm8001, %v7988, 0
  %8194 = vmatpush.msra.mxu0 0.0
  %8195 = vmatpush.msra.mxu0 0.0
  %8196 = vmatpush.msra.mxu0 0.0
  %8197 = vmatpush.msra.mxu0 0.0
  %8198 = vmatpush.msra.mxu0 0.0
  %8199 = vmatpush.msra.mxu0 0.0
  %8200 = vmatpush.msra.mxu0 0.0
  %8201 = vmatpush.msra.mxu0 0.0
  %8202 = vmatpush.msra.mxu0 0.0
  %8203 = vmatpush.msra.mxu0 0.0
  %8204 = vmatpush.msra.mxu0 0.0
  %8205 = vmatpush.msra.mxu0 0.0
  %8206 = vmatpush.msra.mxu0 0.0
  %8207 = vmatpush.msra.mxu0 0.0
  %8208 = vmatpush.msra.mxu0 0.0
  %8209 = vmatpush.msra.mxu0 %v8000
  %8210 = vmatmul.f32.gmra.mxu0 %v8003
  %v8211 = vpop.f32.mrf.mxu0
  %v8212 = vadd.f32 0.0, %v8211
  %8213 = vmatmul.f32.gmra.mxu0 %v8006
  %v8214 = vpop.f32.mrf.mxu0
  %v8215 = vadd.f32 0.0, %v8214
  %8216 = vmatmul.f32.gmra.mxu0 %v8009
  %v8217 = vpop.f32.mrf.mxu0
  %v8218 = vadd.f32 0.0, %v8217
  %8219 = vmatmul.f32.gmra.mxu0 %v8012
  %v8220 = vpop.f32.mrf.mxu0
  %v8221 = vadd.f32 0.0, %v8220
  %8222 = vmatmul.f32.gmra.mxu0 %v8015
  %v8223 = vpop.f32.mrf.mxu0
  %v8224 = vadd.f32 0.0, %v8223
  %8225 = vmatmul.f32.gmra.mxu0 %v8018
  %v8226 = vpop.f32.mrf.mxu0
  %v8227 = vadd.f32 0.0, %v8226
  %8228 = vmatmul.f32.gmra.mxu0 %v8021
  %v8229 = vpop.f32.mrf.mxu0
  %v8230 = vadd.f32 0.0, %v8229
  %8231 = vmatmul.f32.gmra.mxu0 %v8024
  %v8232 = vpop.f32.mrf.mxu0
  %v8233 = vadd.f32 0.0, %v8232
  %8234 = vmatmul.f32.gmra.mxu0 %v8027
  %v8235 = vpop.f32.mrf.mxu0
  %v8236 = vadd.f32 0.0, %v8235
  %8237 = vmatmul.f32.gmra.mxu0 %v8030
  %v8238 = vpop.f32.mrf.mxu0
  %v8239 = vadd.f32 0.0, %v8238
  %8240 = vmatmul.f32.gmra.mxu0 %v8033
  %v8241 = vpop.f32.mrf.mxu0
  %v8242 = vadd.f32 0.0, %v8241
  %8243 = vmatmul.f32.gmra.mxu0 %v8036
  %v8244 = vpop.f32.mrf.mxu0
  %v8245 = vadd.f32 0.0, %v8244
  %8246 = vmatmul.f32.gmra.mxu0 %v8039
  %v8247 = vpop.f32.mrf.mxu0
  %v8248 = vadd.f32 0.0, %v8247
  %8249 = vmatmul.f32.gmra.mxu0 %v8042
  %v8250 = vpop.f32.mrf.mxu0
  %v8251 = vadd.f32 0.0, %v8250
  %8252 = vmatmul.f32.gmra.mxu0 %v8045
  %v8253 = vpop.f32.mrf.mxu0
  %v8254 = vadd.f32 0.0, %v8253
  %8255 = vmatmul.f32.gmra.mxu0 %v8048
  %v8256 = vpop.f32.mrf.mxu0
  %v8257 = vadd.f32 0.0, %v8256
  %8258 = vmatmul.f32.gmra.mxu0 %v8051
  %v8259 = vpop.f32.mrf.mxu0
  %v8260 = vadd.f32 0.0, %v8259
  %8261 = vmatmul.f32.gmra.mxu0 %v8054
  %v8262 = vpop.f32.mrf.mxu0
  %v8263 = vadd.f32 0.0, %v8262
  %8264 = vmatmul.f32.gmra.mxu0 %v8057
  %v8265 = vpop.f32.mrf.mxu0
  %v8266 = vadd.f32 0.0, %v8265
  %8267 = vmatmul.f32.gmra.mxu0 %v8060
  %v8268 = vpop.f32.mrf.mxu0
  %v8269 = vadd.f32 0.0, %v8268
  %8270 = vmatmul.f32.gmra.mxu0 %v8063
  %v8271 = vpop.f32.mrf.mxu0
  %v8272 = vadd.f32 0.0, %v8271
  %8273 = vmatmul.f32.gmra.mxu0 %v8066
  %v8274 = vpop.f32.mrf.mxu0
  %v8275 = vadd.f32 0.0, %v8274
  %8276 = vmatmul.f32.gmra.mxu0 %v8069
  %v8277 = vpop.f32.mrf.mxu0
  %v8278 = vadd.f32 0.0, %v8277
  %8279 = vmatmul.f32.gmra.mxu0 %v8072
  %v8280 = vpop.f32.mrf.mxu0
  %v8281 = vadd.f32 0.0, %v8280
  %8282 = vmatmul.f32.gmra.mxu0 %v8075
  %v8283 = vpop.f32.mrf.mxu0
  %v8284 = vadd.f32 0.0, %v8283
  %8285 = vmatmul.f32.gmra.mxu0 %v8078
  %v8286 = vpop.f32.mrf.mxu0
  %v8287 = vadd.f32 0.0, %v8286
  %8288 = vmatmul.f32.gmra.mxu0 %v8081
  %v8289 = vpop.f32.mrf.mxu0
  %v8290 = vadd.f32 0.0, %v8289
  %8291 = vmatmul.f32.gmra.mxu0 %v8084
  %v8292 = vpop.f32.mrf.mxu0
  %v8293 = vadd.f32 0.0, %v8292
  %8294 = vmatmul.f32.gmra.mxu0 %v8087
  %v8295 = vpop.f32.mrf.mxu0
  %v8296 = vadd.f32 0.0, %v8295
  %8297 = vmatmul.f32.gmra.mxu0 %v8090
  %v8298 = vpop.f32.mrf.mxu0
  %v8299 = vadd.f32 0.0, %v8298
  %8300 = vmatmul.f32.gmra.mxu0 %v8093
  %v8301 = vpop.f32.mrf.mxu0
  %v8302 = vadd.f32 0.0, %v8301
  %8303 = vmatmul.f32.gmra.mxu0 %v8096
  %v8304 = vpop.f32.mrf.mxu0
  %v8305 = vadd.f32 0.0, %v8304
  %8306 = vmatmul.f32.gmra.mxu0 %v8099
  %v8307 = vpop.f32.mrf.mxu0
  %v8308 = vadd.f32 0.0, %v8307
  %8309 = vmatmul.f32.gmra.mxu0 %v8102
  %v8310 = vpop.f32.mrf.mxu0
  %v8311 = vadd.f32 0.0, %v8310
  %8312 = vmatmul.f32.gmra.mxu0 %v8105
  %v8313 = vpop.f32.mrf.mxu0
  %v8314 = vadd.f32 0.0, %v8313
  %8315 = vmatmul.f32.gmra.mxu0 %v8108
  %v8316 = vpop.f32.mrf.mxu0
  %v8317 = vadd.f32 0.0, %v8316
  %8318 = vmatmul.f32.gmra.mxu0 %v8111
  %v8319 = vpop.f32.mrf.mxu0
  %v8320 = vadd.f32 0.0, %v8319
  %8321 = vmatmul.f32.gmra.mxu0 %v8114
  %v8322 = vpop.f32.mrf.mxu0
  %v8323 = vadd.f32 0.0, %v8322
  %8324 = vmatmul.f32.gmra.mxu0 %v8117
  %v8325 = vpop.f32.mrf.mxu0
  %v8326 = vadd.f32 0.0, %v8325
  %8327 = vmatmul.f32.gmra.mxu0 %v8120
  %v8328 = vpop.f32.mrf.mxu0
  %v8329 = vadd.f32 0.0, %v8328
  %8330 = vmatmul.f32.gmra.mxu0 %v8123
  %v8331 = vpop.f32.mrf.mxu0
  %v8332 = vadd.f32 0.0, %v8331
  %8333 = vmatmul.f32.gmra.mxu0 %v8126
  %v8334 = vpop.f32.mrf.mxu0
  %v8335 = vadd.f32 0.0, %v8334
  %8336 = vmatmul.f32.gmra.mxu0 %v8129
  %v8337 = vpop.f32.mrf.mxu0
  %v8338 = vadd.f32 0.0, %v8337
  %8339 = vmatmul.f32.gmra.mxu0 %v8132
  %v8340 = vpop.f32.mrf.mxu0
  %v8341 = vadd.f32 0.0, %v8340
  %8342 = vmatmul.f32.gmra.mxu0 %v8135
  %v8343 = vpop.f32.mrf.mxu0
  %v8344 = vadd.f32 0.0, %v8343
  %8345 = vmatmul.f32.gmra.mxu0 %v8138
  %v8346 = vpop.f32.mrf.mxu0
  %v8347 = vadd.f32 0.0, %v8346
  %8348 = vmatmul.f32.gmra.mxu0 %v8141
  %v8349 = vpop.f32.mrf.mxu0
  %v8350 = vadd.f32 0.0, %v8349
  %8351 = vmatmul.f32.gmra.mxu0 %v8144
  %v8352 = vpop.f32.mrf.mxu0
  %v8353 = vadd.f32 0.0, %v8352
  %8354 = vmatmul.f32.gmra.mxu0 %v8147
  %v8355 = vpop.f32.mrf.mxu0
  %v8356 = vadd.f32 0.0, %v8355
  %8357 = vmatmul.f32.gmra.mxu0 %v8150
  %v8358 = vpop.f32.mrf.mxu0
  %v8359 = vadd.f32 0.0, %v8358
  %8360 = vmatmul.f32.gmra.mxu0 %v8153
  %v8361 = vpop.f32.mrf.mxu0
  %v8362 = vadd.f32 0.0, %v8361
  %8363 = vmatmul.f32.gmra.mxu0 %v8156
  %v8364 = vpop.f32.mrf.mxu0
  %v8365 = vadd.f32 0.0, %v8364
  %8366 = vmatmul.f32.gmra.mxu0 %v8159
  %v8367 = vpop.f32.mrf.mxu0
  %v8368 = vadd.f32 0.0, %v8367
  %8369 = vmatmul.f32.gmra.mxu0 %v8162
  %v8370 = vpop.f32.mrf.mxu0
  %v8371 = vadd.f32 0.0, %v8370
  %8372 = vmatmul.f32.gmra.mxu0 %v8165
  %v8373 = vpop.f32.mrf.mxu0
  %v8374 = vadd.f32 0.0, %v8373
  %8375 = vmatmul.f32.gmra.mxu0 %v8168
  %v8376 = vpop.f32.mrf.mxu0
  %v8377 = vadd.f32 0.0, %v8376
  %8378 = vmatmul.f32.gmra.mxu0 %v8171
  %v8379 = vpop.f32.mrf.mxu0
  %v8380 = vadd.f32 0.0, %v8379
  %8381 = vmatmul.f32.gmra.mxu0 %v8174
  %v8382 = vpop.f32.mrf.mxu0
  %v8383 = vadd.f32 0.0, %v8382
  %8384 = vmatmul.f32.gmra.mxu0 %v8177
  %v8385 = vpop.f32.mrf.mxu0
  %v8386 = vadd.f32 0.0, %v8385
  %8387 = vmatmul.f32.gmra.mxu0 %v8180
  %v8388 = vpop.f32.mrf.mxu0
  %v8389 = vadd.f32 0.0, %v8388
  %8390 = vmatmul.f32.gmra.mxu0 %v8183
  %v8391 = vpop.f32.mrf.mxu0
  %v8392 = vadd.f32 0.0, %v8391
  %8393 = vmatmul.f32.gmra.mxu0 %v8186
  %v8394 = vpop.f32.mrf.mxu0
  %v8395 = vadd.f32 0.0, %v8394
  %8396 = vmatmul.f32.gmra.mxu0 %v8189
  %v8397 = vpop.f32.mrf.mxu0
  %v8398 = vadd.f32 0.0, %v8397
  %8399 = vmatmul.f32.gmra.mxu0 %v8192
  %v8400 = vpop.f32.mrf.mxu0
  %v8401 = vadd.f32 0.0, %v8400
  %8402 = vdwg.mxu0
  %v8404 = vsel %vm8001, %v7917, 0
  %v8407 = vsel %vm8001, %v7926, 0
  %v8410 = vsel %vm8001, %v7935, 0
  %v8413 = vsel %vm8001, %v7944, 0
  %v8416 = vsel %vm8001, %v7953, 0
  %v8419 = vsel %vm8001, %v7962, 0
  %v8422 = vsel %vm8001, %v7971, 0
  %v8425 = vsel %vm8001, %v7980, 0
  %8427 = vmatpush.msra.mxu0 0.0
  %8428 = vmatpush.msra.mxu0 0.0
  %8429 = vmatpush.msra.mxu0 0.0
  %8430 = vmatpush.msra.mxu0 0.0
  %8431 = vmatpush.msra.mxu0 0.0
  %8432 = vmatpush.msra.mxu0 0.0
  %8433 = vmatpush.msra.mxu0 0.0
  %8434 = vmatpush.msra.mxu0 0.0
  %8435 = vmatpush.msra.mxu0 0.0
  %8436 = vmatpush.msra.mxu0 0.0
  %8437 = vmatpush.msra.mxu0 0.0
  %8438 = vmatpush.msra.mxu0 0.0
  %8439 = vmatpush.msra.mxu0 0.0
  %8440 = vmatpush.msra.mxu0 0.0
  %8441 = vmatpush.msra.mxu0 0.0
  %8442 = vmatpush.msra.mxu0 %v7998
  %8443 = vmatmul.f32.gmra.mxu0 %v8404
  %v8444 = vpop.f32.mrf.mxu0
  %v8445 = vadd.f32 %v8212, %v8444
  %8446 = vmatmul.f32.gmra.mxu0 %v8003
  %v8447 = vpop.f32.mrf.mxu0
  %v8448 = vadd.f32 %v8215, %v8447
  %8449 = vmatmul.f32.gmra.mxu0 %v8006
  %v8450 = vpop.f32.mrf.mxu0
  %v8451 = vadd.f32 %v8218, %v8450
  %8452 = vmatmul.f32.gmra.mxu0 %v8009
  %v8453 = vpop.f32.mrf.mxu0
  %v8454 = vadd.f32 %v8221, %v8453
  %8455 = vmatmul.f32.gmra.mxu0 %v8012
  %v8456 = vpop.f32.mrf.mxu0
  %v8457 = vadd.f32 %v8224, %v8456
  %8458 = vmatmul.f32.gmra.mxu0 %v8015
  %v8459 = vpop.f32.mrf.mxu0
  %v8460 = vadd.f32 %v8227, %v8459
  %8461 = vmatmul.f32.gmra.mxu0 %v8018
  %v8462 = vpop.f32.mrf.mxu0
  %v8463 = vadd.f32 %v8230, %v8462
  %8464 = vmatmul.f32.gmra.mxu0 %v8021
  %v8465 = vpop.f32.mrf.mxu0
  %v8466 = vadd.f32 %v8233, %v8465
  %8467 = vmatmul.f32.gmra.mxu0 %v8407
  %v8468 = vpop.f32.mrf.mxu0
  %v8469 = vadd.f32 %v8236, %v8468
  %8470 = vmatmul.f32.gmra.mxu0 %v8027
  %v8471 = vpop.f32.mrf.mxu0
  %v8472 = vadd.f32 %v8239, %v8471
  %8473 = vmatmul.f32.gmra.mxu0 %v8030
  %v8474 = vpop.f32.mrf.mxu0
  %v8475 = vadd.f32 %v8242, %v8474
  %8476 = vmatmul.f32.gmra.mxu0 %v8033
  %v8477 = vpop.f32.mrf.mxu0
  %v8478 = vadd.f32 %v8245, %v8477
  %8479 = vmatmul.f32.gmra.mxu0 %v8036
  %v8480 = vpop.f32.mrf.mxu0
  %v8481 = vadd.f32 %v8248, %v8480
  %8482 = vmatmul.f32.gmra.mxu0 %v8039
  %v8483 = vpop.f32.mrf.mxu0
  %v8484 = vadd.f32 %v8251, %v8483
  %8485 = vmatmul.f32.gmra.mxu0 %v8042
  %v8486 = vpop.f32.mrf.mxu0
  %v8487 = vadd.f32 %v8254, %v8486
  %8488 = vmatmul.f32.gmra.mxu0 %v8045
  %v8489 = vpop.f32.mrf.mxu0
  %v8490 = vadd.f32 %v8257, %v8489
  %8491 = vmatmul.f32.gmra.mxu0 %v8410
  %v8492 = vpop.f32.mrf.mxu0
  %v8493 = vadd.f32 %v8260, %v8492
  %8494 = vmatmul.f32.gmra.mxu0 %v8051
  %v8495 = vpop.f32.mrf.mxu0
  %v8496 = vadd.f32 %v8263, %v8495
  %8497 = vmatmul.f32.gmra.mxu0 %v8054
  %v8498 = vpop.f32.mrf.mxu0
  %v8499 = vadd.f32 %v8266, %v8498
  %8500 = vmatmul.f32.gmra.mxu0 %v8057
  %v8501 = vpop.f32.mrf.mxu0
  %v8502 = vadd.f32 %v8269, %v8501
  %8503 = vmatmul.f32.gmra.mxu0 %v8060
  %v8504 = vpop.f32.mrf.mxu0
  %v8505 = vadd.f32 %v8272, %v8504
  %8506 = vmatmul.f32.gmra.mxu0 %v8063
  %v8507 = vpop.f32.mrf.mxu0
  %v8508 = vadd.f32 %v8275, %v8507
  %8509 = vmatmul.f32.gmra.mxu0 %v8066
  %v8510 = vpop.f32.mrf.mxu0
  %v8511 = vadd.f32 %v8278, %v8510
  %8512 = vmatmul.f32.gmra.mxu0 %v8069
  %v8513 = vpop.f32.mrf.mxu0
  %v8514 = vadd.f32 %v8281, %v8513
  %8515 = vmatmul.f32.gmra.mxu0 %v8413
  %v8516 = vpop.f32.mrf.mxu0
  %v8517 = vadd.f32 %v8284, %v8516
  %8518 = vmatmul.f32.gmra.mxu0 %v8075
  %v8519 = vpop.f32.mrf.mxu0
  %v8520 = vadd.f32 %v8287, %v8519
  %8521 = vmatmul.f32.gmra.mxu0 %v8078
  %v8522 = vpop.f32.mrf.mxu0
  %v8523 = vadd.f32 %v8290, %v8522
  %8524 = vmatmul.f32.gmra.mxu0 %v8081
  %v8525 = vpop.f32.mrf.mxu0
  %v8526 = vadd.f32 %v8293, %v8525
  %8527 = vmatmul.f32.gmra.mxu0 %v8084
  %v8528 = vpop.f32.mrf.mxu0
  %v8529 = vadd.f32 %v8296, %v8528
  %8530 = vmatmul.f32.gmra.mxu0 %v8087
  %v8531 = vpop.f32.mrf.mxu0
  %v8532 = vadd.f32 %v8299, %v8531
  %8533 = vmatmul.f32.gmra.mxu0 %v8090
  %v8534 = vpop.f32.mrf.mxu0
  %v8535 = vadd.f32 %v8302, %v8534
  %8536 = vmatmul.f32.gmra.mxu0 %v8093
  %v8537 = vpop.f32.mrf.mxu0
  %v8538 = vadd.f32 %v8305, %v8537
  %8539 = vmatmul.f32.gmra.mxu0 %v8416
  %v8540 = vpop.f32.mrf.mxu0
  %v8541 = vadd.f32 %v8308, %v8540
  %8542 = vmatmul.f32.gmra.mxu0 %v8099
  %v8543 = vpop.f32.mrf.mxu0
  %v8544 = vadd.f32 %v8311, %v8543
  %8545 = vmatmul.f32.gmra.mxu0 %v8102
  %v8546 = vpop.f32.mrf.mxu0
  %v8547 = vadd.f32 %v8314, %v8546
  %8548 = vmatmul.f32.gmra.mxu0 %v8105
  %v8549 = vpop.f32.mrf.mxu0
  %v8550 = vadd.f32 %v8317, %v8549
  %8551 = vmatmul.f32.gmra.mxu0 %v8108
  %v8552 = vpop.f32.mrf.mxu0
  %v8553 = vadd.f32 %v8320, %v8552
  %8554 = vmatmul.f32.gmra.mxu0 %v8111
  %v8555 = vpop.f32.mrf.mxu0
  %v8556 = vadd.f32 %v8323, %v8555
  %8557 = vmatmul.f32.gmra.mxu0 %v8114
  %v8558 = vpop.f32.mrf.mxu0
  %v8559 = vadd.f32 %v8326, %v8558
  %8560 = vmatmul.f32.gmra.mxu0 %v8117
  %v8561 = vpop.f32.mrf.mxu0
  %v8562 = vadd.f32 %v8329, %v8561
  %8563 = vmatmul.f32.gmra.mxu0 %v8419
  %v8564 = vpop.f32.mrf.mxu0
  %v8565 = vadd.f32 %v8332, %v8564
  %8566 = vmatmul.f32.gmra.mxu0 %v8123
  %v8567 = vpop.f32.mrf.mxu0
  %v8568 = vadd.f32 %v8335, %v8567
  %8569 = vmatmul.f32.gmra.mxu0 %v8126
  %v8570 = vpop.f32.mrf.mxu0
  %v8571 = vadd.f32 %v8338, %v8570
  %8572 = vmatmul.f32.gmra.mxu0 %v8129
  %v8573 = vpop.f32.mrf.mxu0
  %v8574 = vadd.f32 %v8341, %v8573
  %8575 = vmatmul.f32.gmra.mxu0 %v8132
  %v8576 = vpop.f32.mrf.mxu0
  %v8577 = vadd.f32 %v8344, %v8576
  %8578 = vmatmul.f32.gmra.mxu0 %v8135
  %v8579 = vpop.f32.mrf.mxu0
  %v8580 = vadd.f32 %v8347, %v8579
  %8581 = vmatmul.f32.gmra.mxu0 %v8138
  %v8582 = vpop.f32.mrf.mxu0
  %v8583 = vadd.f32 %v8350, %v8582
  %8584 = vmatmul.f32.gmra.mxu0 %v8141
  %v8585 = vpop.f32.mrf.mxu0
  %v8586 = vadd.f32 %v8353, %v8585
  %8587 = vmatmul.f32.gmra.mxu0 %v8422
  %v8588 = vpop.f32.mrf.mxu0
  %v8589 = vadd.f32 %v8356, %v8588
  %8590 = vmatmul.f32.gmra.mxu0 %v8147
  %v8591 = vpop.f32.mrf.mxu0
  %v8592 = vadd.f32 %v8359, %v8591
  %8593 = vmatmul.f32.gmra.mxu0 %v8150
  %v8594 = vpop.f32.mrf.mxu0
  %v8595 = vadd.f32 %v8362, %v8594
  %8596 = vmatmul.f32.gmra.mxu0 %v8153
  %v8597 = vpop.f32.mrf.mxu0
  %v8598 = vadd.f32 %v8365, %v8597
  %8599 = vmatmul.f32.gmra.mxu0 %v8156
  %v8600 = vpop.f32.mrf.mxu0
  %v8601 = vadd.f32 %v8368, %v8600
  %8602 = vmatmul.f32.gmra.mxu0 %v8159
  %v8603 = vpop.f32.mrf.mxu0
  %v8604 = vadd.f32 %v8371, %v8603
  %8605 = vmatmul.f32.gmra.mxu0 %v8162
  %v8606 = vpop.f32.mrf.mxu0
  %v8607 = vadd.f32 %v8374, %v8606
  %8608 = vmatmul.f32.gmra.mxu0 %v8165
  %v8609 = vpop.f32.mrf.mxu0
  %v8610 = vadd.f32 %v8377, %v8609
  %8611 = vmatmul.f32.gmra.mxu0 %v8425
  %v8612 = vpop.f32.mrf.mxu0
  %v8613 = vadd.f32 %v8380, %v8612
  %8614 = vmatmul.f32.gmra.mxu0 %v8171
  %v8615 = vpop.f32.mrf.mxu0
  %v8616 = vadd.f32 %v8383, %v8615
  %8617 = vmatmul.f32.gmra.mxu0 %v8174
  %v8618 = vpop.f32.mrf.mxu0
  %v8619 = vadd.f32 %v8386, %v8618
  %8620 = vmatmul.f32.gmra.mxu0 %v8177
  %v8621 = vpop.f32.mrf.mxu0
  %v8622 = vadd.f32 %v8389, %v8621
  %8623 = vmatmul.f32.gmra.mxu0 %v8180
  %v8624 = vpop.f32.mrf.mxu0
  %v8625 = vadd.f32 %v8392, %v8624
  %8626 = vmatmul.f32.gmra.mxu0 %v8183
  %v8627 = vpop.f32.mrf.mxu0
  %v8628 = vadd.f32 %v8395, %v8627
  %8629 = vmatmul.f32.gmra.mxu0 %v8186
  %v8630 = vpop.f32.mrf.mxu0
  %v8631 = vadd.f32 %v8398, %v8630
  %8632 = vmatmul.f32.gmra.mxu0 %v8189
  %v8633 = vpop.f32.mrf.mxu0
  %v8634 = vadd.f32 %v8401, %v8633
  %8635 = vdwg.mxu0
  %s8636 = scalar_lea.vmem %s3, 16
  %v8637 = vld [vmem:[%s8636] sm:$0xff]
  %v8639 = vsel %vm8001, %v7989, 0
  %v8642 = vsel %vm8001, %v7990, 0
  %v8645 = vsel %vm8001, %v7991, 0
  %v8648 = vsel %vm8001, %v7992, 0
  %v8651 = vsel %vm8001, %v7993, 0
  %v8654 = vsel %vm8001, %v7994, 0
  %v8657 = vsel %vm8001, %v7995, 0
  %v8660 = vsel %vm8001, %v7996, 0
  %8662 = vmatpush.msra.mxu0 0.0
  %8663 = vmatpush.msra.mxu0 0.0
  %8664 = vmatpush.msra.mxu0 0.0
  %8665 = vmatpush.msra.mxu0 0.0
  %8666 = vmatpush.msra.mxu0 0.0
  %8667 = vmatpush.msra.mxu0 0.0
  %8668 = vmatpush.msra.mxu0 0.0
  %8669 = vmatpush.msra.mxu0 0.0
  %8670 = vmatpush.msra.mxu0 0.0
  %8671 = vmatpush.msra.mxu0 0.0
  %8672 = vmatpush.msra.mxu0 0.0
  %8673 = vmatpush.msra.mxu0 0.0
  %8674 = vmatpush.msra.mxu0 0.0
  %8675 = vmatpush.msra.mxu0 0.0
  %8676 = vmatpush.msra.mxu0 0.0
  %8677 = vmatpush.msra.mxu0 %v8637
  %8678 = vmatmul.f32.gmra.mxu0 %v8407
  %v8679 = vpop.f32.mrf.mxu0
  %v8680 = vadd.f32 0.0, %v8679
  %8681 = vmatmul.f32.gmra.mxu0 %v8027
  %v8682 = vpop.f32.mrf.mxu0
  %v8683 = vadd.f32 0.0, %v8682
  %8684 = vmatmul.f32.gmra.mxu0 %v8030
  %v8685 = vpop.f32.mrf.mxu0
  %v8686 = vadd.f32 0.0, %v8685
  %8687 = vmatmul.f32.gmra.mxu0 %v8033
  %v8688 = vpop.f32.mrf.mxu0
  %v8689 = vadd.f32 0.0, %v8688
  %8690 = vmatmul.f32.gmra.mxu0 %v8036
  %v8691 = vpop.f32.mrf.mxu0
  %v8692 = vadd.f32 0.0, %v8691
  %8693 = vmatmul.f32.gmra.mxu0 %v8039
  %v8694 = vpop.f32.mrf.mxu0
  %v8695 = vadd.f32 0.0, %v8694
  %8696 = vmatmul.f32.gmra.mxu0 %v8042
  %v8697 = vpop.f32.mrf.mxu0
  %v8698 = vadd.f32 0.0, %v8697
  %8699 = vmatmul.f32.gmra.mxu0 %v8045
  %v8700 = vpop.f32.mrf.mxu0
  %v8701 = vadd.f32 0.0, %v8700
  %8702 = vmatmul.f32.gmra.mxu0 %v8410
  %v8703 = vpop.f32.mrf.mxu0
  %v8704 = vadd.f32 0.0, %v8703
  %8705 = vmatmul.f32.gmra.mxu0 %v8051
  %v8706 = vpop.f32.mrf.mxu0
  %v8707 = vadd.f32 0.0, %v8706
  %8708 = vmatmul.f32.gmra.mxu0 %v8054
  %v8709 = vpop.f32.mrf.mxu0
  %v8710 = vadd.f32 0.0, %v8709
  %8711 = vmatmul.f32.gmra.mxu0 %v8057
  %v8712 = vpop.f32.mrf.mxu0
  %v8713 = vadd.f32 0.0, %v8712
  %8714 = vmatmul.f32.gmra.mxu0 %v8060
  %v8715 = vpop.f32.mrf.mxu0
  %v8716 = vadd.f32 0.0, %v8715
  %8717 = vmatmul.f32.gmra.mxu0 %v8063
  %v8718 = vpop.f32.mrf.mxu0
  %v8719 = vadd.f32 0.0, %v8718
  %8720 = vmatmul.f32.gmra.mxu0 %v8066
  %v8721 = vpop.f32.mrf.mxu0
  %v8722 = vadd.f32 0.0, %v8721
  %8723 = vmatmul.f32.gmra.mxu0 %v8069
  %v8724 = vpop.f32.mrf.mxu0
  %v8725 = vadd.f32 0.0, %v8724
  %8726 = vmatmul.f32.gmra.mxu0 %v8413
  %v8727 = vpop.f32.mrf.mxu0
  %v8728 = vadd.f32 0.0, %v8727
  %8729 = vmatmul.f32.gmra.mxu0 %v8075
  %v8730 = vpop.f32.mrf.mxu0
  %v8731 = vadd.f32 0.0, %v8730
  %8732 = vmatmul.f32.gmra.mxu0 %v8078
  %v8733 = vpop.f32.mrf.mxu0
  %v8734 = vadd.f32 0.0, %v8733
  %8735 = vmatmul.f32.gmra.mxu0 %v8081
  %v8736 = vpop.f32.mrf.mxu0
  %v8737 = vadd.f32 0.0, %v8736
  %8738 = vmatmul.f32.gmra.mxu0 %v8084
  %v8739 = vpop.f32.mrf.mxu0
  %v8740 = vadd.f32 0.0, %v8739
  %8741 = vmatmul.f32.gmra.mxu0 %v8087
  %v8742 = vpop.f32.mrf.mxu0
  %v8743 = vadd.f32 0.0, %v8742
  %8744 = vmatmul.f32.gmra.mxu0 %v8090
  %v8745 = vpop.f32.mrf.mxu0
  %v8746 = vadd.f32 0.0, %v8745
  %8747 = vmatmul.f32.gmra.mxu0 %v8093
  %v8748 = vpop.f32.mrf.mxu0
  %v8749 = vadd.f32 0.0, %v8748
  %8750 = vmatmul.f32.gmra.mxu0 %v8416
  %v8751 = vpop.f32.mrf.mxu0
  %v8752 = vadd.f32 0.0, %v8751
  %8753 = vmatmul.f32.gmra.mxu0 %v8099
  %v8754 = vpop.f32.mrf.mxu0
  %v8755 = vadd.f32 0.0, %v8754
  %8756 = vmatmul.f32.gmra.mxu0 %v8102
  %v8757 = vpop.f32.mrf.mxu0
  %v8758 = vadd.f32 0.0, %v8757
  %8759 = vmatmul.f32.gmra.mxu0 %v8105
  %v8760 = vpop.f32.mrf.mxu0
  %v8761 = vadd.f32 0.0, %v8760
  %8762 = vmatmul.f32.gmra.mxu0 %v8108
  %v8763 = vpop.f32.mrf.mxu0
  %v8764 = vadd.f32 0.0, %v8763
  %8765 = vmatmul.f32.gmra.mxu0 %v8111
  %v8766 = vpop.f32.mrf.mxu0
  %v8767 = vadd.f32 0.0, %v8766
  %8768 = vmatmul.f32.gmra.mxu0 %v8114
  %v8769 = vpop.f32.mrf.mxu0
  %v8770 = vadd.f32 0.0, %v8769
  %8771 = vmatmul.f32.gmra.mxu0 %v8117
  %v8772 = vpop.f32.mrf.mxu0
  %v8773 = vadd.f32 0.0, %v8772
  %8774 = vmatmul.f32.gmra.mxu0 %v8419
  %v8775 = vpop.f32.mrf.mxu0
  %v8776 = vadd.f32 0.0, %v8775
  %8777 = vmatmul.f32.gmra.mxu0 %v8123
  %v8778 = vpop.f32.mrf.mxu0
  %v8779 = vadd.f32 0.0, %v8778
  %8780 = vmatmul.f32.gmra.mxu0 %v8126
  %v8781 = vpop.f32.mrf.mxu0
  %v8782 = vadd.f32 0.0, %v8781
  %8783 = vmatmul.f32.gmra.mxu0 %v8129
  %v8784 = vpop.f32.mrf.mxu0
  %v8785 = vadd.f32 0.0, %v8784
  %8786 = vmatmul.f32.gmra.mxu0 %v8132
  %v8787 = vpop.f32.mrf.mxu0
  %v8788 = vadd.f32 0.0, %v8787
  %8789 = vmatmul.f32.gmra.mxu0 %v8135
  %v8790 = vpop.f32.mrf.mxu0
  %v8791 = vadd.f32 0.0, %v8790
  %8792 = vmatmul.f32.gmra.mxu0 %v8138
  %v8793 = vpop.f32.mrf.mxu0
  %v8794 = vadd.f32 0.0, %v8793
  %8795 = vmatmul.f32.gmra.mxu0 %v8141
  %v8796 = vpop.f32.mrf.mxu0
  %v8797 = vadd.f32 0.0, %v8796
  %8798 = vmatmul.f32.gmra.mxu0 %v8422
  %v8799 = vpop.f32.mrf.mxu0
  %v8800 = vadd.f32 0.0, %v8799
  %8801 = vmatmul.f32.gmra.mxu0 %v8147
  %v8802 = vpop.f32.mrf.mxu0
  %v8803 = vadd.f32 0.0, %v8802
  %8804 = vmatmul.f32.gmra.mxu0 %v8150
  %v8805 = vpop.f32.mrf.mxu0
  %v8806 = vadd.f32 0.0, %v8805
  %8807 = vmatmul.f32.gmra.mxu0 %v8153
  %v8808 = vpop.f32.mrf.mxu0
  %v8809 = vadd.f32 0.0, %v8808
  %8810 = vmatmul.f32.gmra.mxu0 %v8156
  %v8811 = vpop.f32.mrf.mxu0
  %v8812 = vadd.f32 0.0, %v8811
  %8813 = vmatmul.f32.gmra.mxu0 %v8159
  %v8814 = vpop.f32.mrf.mxu0
  %v8815 = vadd.f32 0.0, %v8814
  %8816 = vmatmul.f32.gmra.mxu0 %v8162
  %v8817 = vpop.f32.mrf.mxu0
  %v8818 = vadd.f32 0.0, %v8817
  %8819 = vmatmul.f32.gmra.mxu0 %v8165
  %v8820 = vpop.f32.mrf.mxu0
  %v8821 = vadd.f32 0.0, %v8820
  %8822 = vmatmul.f32.gmra.mxu0 %v8425
  %v8823 = vpop.f32.mrf.mxu0
  %v8824 = vadd.f32 0.0, %v8823
  %8825 = vmatmul.f32.gmra.mxu0 %v8171
  %v8826 = vpop.f32.mrf.mxu0
  %v8827 = vadd.f32 0.0, %v8826
  %8828 = vmatmul.f32.gmra.mxu0 %v8174
  %v8829 = vpop.f32.mrf.mxu0
  %v8830 = vadd.f32 0.0, %v8829
  %8831 = vmatmul.f32.gmra.mxu0 %v8177
  %v8832 = vpop.f32.mrf.mxu0
  %v8833 = vadd.f32 0.0, %v8832
  %8834 = vmatmul.f32.gmra.mxu0 %v8180
  %v8835 = vpop.f32.mrf.mxu0
  %v8836 = vadd.f32 0.0, %v8835
  %8837 = vmatmul.f32.gmra.mxu0 %v8183
  %v8838 = vpop.f32.mrf.mxu0
  %v8839 = vadd.f32 0.0, %v8838
  %8840 = vmatmul.f32.gmra.mxu0 %v8186
  %v8841 = vpop.f32.mrf.mxu0
  %v8842 = vadd.f32 0.0, %v8841
  %8843 = vmatmul.f32.gmra.mxu0 %v8189
  %v8844 = vpop.f32.mrf.mxu0
  %v8845 = vadd.f32 0.0, %v8844
  %8846 = vmatmul.f32.gmra.mxu0 %v8639
  %v8847 = vpop.f32.mrf.mxu0
  %v8848 = vadd.f32 0.0, %v8847
  %8849 = vmatmul.f32.gmra.mxu0 %v8642
  %v8850 = vpop.f32.mrf.mxu0
  %v8851 = vadd.f32 0.0, %v8850
  %8852 = vmatmul.f32.gmra.mxu0 %v8645
  %v8853 = vpop.f32.mrf.mxu0
  %v8854 = vadd.f32 0.0, %v8853
  %8855 = vmatmul.f32.gmra.mxu0 %v8648
  %v8856 = vpop.f32.mrf.mxu0
  %v8857 = vadd.f32 0.0, %v8856
  %8858 = vmatmul.f32.gmra.mxu0 %v8651
  %v8859 = vpop.f32.mrf.mxu0
  %v8860 = vadd.f32 0.0, %v8859
  %8861 = vmatmul.f32.gmra.mxu0 %v8654
  %v8862 = vpop.f32.mrf.mxu0
  %v8863 = vadd.f32 0.0, %v8862
  %8864 = vmatmul.f32.gmra.mxu0 %v8657
  %v8865 = vpop.f32.mrf.mxu0
  %v8866 = vadd.f32 0.0, %v8865
  %8867 = vmatmul.f32.gmra.mxu0 %v8660
  %v8868 = vpop.f32.mrf.mxu0
  %v8869 = vadd.f32 0.0, %v8868
  %8870 = vdwg.mxu0
  %v8871 = vadd.f32 %v8445, %v8680
  %v8872 = vadd.f32 %v8448, %v8683
  %v8873 = vadd.f32 %v8451, %v8686
  %v8874 = vadd.f32 %v8454, %v8689
  %v8875 = vadd.f32 %v8457, %v8692
  %v8876 = vadd.f32 %v8460, %v8695
  %v8877 = vadd.f32 %v8463, %v8698
  %v8878 = vadd.f32 %v8466, %v8701
  %v8879 = vadd.f32 %v8469, %v8704
  %v8880 = vadd.f32 %v8472, %v8707
  %v8881 = vadd.f32 %v8475, %v8710
  %v8882 = vadd.f32 %v8478, %v8713
  %v8883 = vadd.f32 %v8481, %v8716
  %v8884 = vadd.f32 %v8484, %v8719
  %v8885 = vadd.f32 %v8487, %v8722
  %v8886 = vadd.f32 %v8490, %v8725
  %v8887 = vadd.f32 %v8493, %v8728
  %v8888 = vadd.f32 %v8496, %v8731
  %v8889 = vadd.f32 %v8499, %v8734
  %v8890 = vadd.f32 %v8502, %v8737
  %v8891 = vadd.f32 %v8505, %v8740
  %v8892 = vadd.f32 %v8508, %v8743
  %v8893 = vadd.f32 %v8511, %v8746
  %v8894 = vadd.f32 %v8514, %v8749
  %v8895 = vadd.f32 %v8517, %v8752
  %v8896 = vadd.f32 %v8520, %v8755
  %v8897 = vadd.f32 %v8523, %v8758
  %v8898 = vadd.f32 %v8526, %v8761
  %v8899 = vadd.f32 %v8529, %v8764
  %v8900 = vadd.f32 %v8532, %v8767
  %v8901 = vadd.f32 %v8535, %v8770
  %v8902 = vadd.f32 %v8538, %v8773
  %v8903 = vadd.f32 %v8541, %v8776
  %v8904 = vadd.f32 %v8544, %v8779
  %v8905 = vadd.f32 %v8547, %v8782
  %v8906 = vadd.f32 %v8550, %v8785
  %v8907 = vadd.f32 %v8553, %v8788
  %v8908 = vadd.f32 %v8556, %v8791
  %v8909 = vadd.f32 %v8559, %v8794
  %v8910 = vadd.f32 %v8562, %v8797
  %v8911 = vadd.f32 %v8565, %v8800
  %v8912 = vadd.f32 %v8568, %v8803
  %v8913 = vadd.f32 %v8571, %v8806
  %v8914 = vadd.f32 %v8574, %v8809
  %v8915 = vadd.f32 %v8577, %v8812
  %v8916 = vadd.f32 %v8580, %v8815
  %v8917 = vadd.f32 %v8583, %v8818
  %v8918 = vadd.f32 %v8586, %v8821
  %v8919 = vadd.f32 %v8589, %v8824
  %v8920 = vadd.f32 %v8592, %v8827
  %v8921 = vadd.f32 %v8595, %v8830
  %v8922 = vadd.f32 %v8598, %v8833
  %v8923 = vadd.f32 %v8601, %v8836
  %v8924 = vadd.f32 %v8604, %v8839
  %v8925 = vadd.f32 %v8607, %v8842
  %v8926 = vadd.f32 %v8610, %v8845
  %v8927 = vadd.f32 %v8613, %v8848
  %v8928 = vadd.f32 %v8616, %v8851
  %v8929 = vadd.f32 %v8619, %v8854
  %v8930 = vadd.f32 %v8622, %v8857
  %v8931 = vadd.f32 %v8625, %v8860
  %v8932 = vadd.f32 %v8628, %v8863
  %v8933 = vadd.f32 %v8631, %v8866
  %v8934 = vadd.f32 %v8634, %v8869
  %s8935 = scalar_lea.vmem %s3, 24
  %v8936 = vld [vmem:[%s8935] sm:$0xff]
  %v8938 = vsel %vm8001, %v7997, 0
  %8940 = vmatpush.msra.mxu0 0.0
  %8941 = vmatpush.msra.mxu0 0.0
  %8942 = vmatpush.msra.mxu0 0.0
  %8943 = vmatpush.msra.mxu0 0.0
  %8944 = vmatpush.msra.mxu0 0.0
  %8945 = vmatpush.msra.mxu0 0.0
  %8946 = vmatpush.msra.mxu0 0.0
  %8947 = vmatpush.msra.mxu0 0.0
  %8948 = vmatpush.msra.mxu0 0.0
  %8949 = vmatpush.msra.mxu0 0.0
  %8950 = vmatpush.msra.mxu0 0.0
  %8951 = vmatpush.msra.mxu0 0.0
  %8952 = vmatpush.msra.mxu0 0.0
  %8953 = vmatpush.msra.mxu0 0.0
  %8954 = vmatpush.msra.mxu0 0.0
  %8955 = vmatpush.msra.mxu0 %v8936
  %8956 = vmatmul.f32.gmra.mxu0 %v8027
  %v8957 = vpop.f32.mrf.mxu0
  %v8958 = vadd.f32 0.0, %v8957
  %8959 = vmatmul.f32.gmra.mxu0 %v8030
  %v8960 = vpop.f32.mrf.mxu0
  %v8961 = vadd.f32 0.0, %v8960
  %8962 = vmatmul.f32.gmra.mxu0 %v8033
  %v8963 = vpop.f32.mrf.mxu0
  %v8964 = vadd.f32 0.0, %v8963
  %8965 = vmatmul.f32.gmra.mxu0 %v8036
  %v8966 = vpop.f32.mrf.mxu0
  %v8967 = vadd.f32 0.0, %v8966
  %8968 = vmatmul.f32.gmra.mxu0 %v8039
  %v8969 = vpop.f32.mrf.mxu0
  %v8970 = vadd.f32 0.0, %v8969
  %8971 = vmatmul.f32.gmra.mxu0 %v8042
  %v8972 = vpop.f32.mrf.mxu0
  %v8973 = vadd.f32 0.0, %v8972
  %8974 = vmatmul.f32.gmra.mxu0 %v8045
  %v8975 = vpop.f32.mrf.mxu0
  %v8976 = vadd.f32 0.0, %v8975
  %8977 = vmatmul.f32.gmra.mxu0 %v8048
  %v8978 = vpop.f32.mrf.mxu0
  %v8979 = vadd.f32 0.0, %v8978
  %8980 = vmatmul.f32.gmra.mxu0 %v8051
  %v8981 = vpop.f32.mrf.mxu0
  %v8982 = vadd.f32 0.0, %v8981
  %8983 = vmatmul.f32.gmra.mxu0 %v8054
  %v8984 = vpop.f32.mrf.mxu0
  %v8985 = vadd.f32 0.0, %v8984
  %8986 = vmatmul.f32.gmra.mxu0 %v8057
  %v8987 = vpop.f32.mrf.mxu0
  %v8988 = vadd.f32 0.0, %v8987
  %8989 = vmatmul.f32.gmra.mxu0 %v8060
  %v8990 = vpop.f32.mrf.mxu0
  %v8991 = vadd.f32 0.0, %v8990
  %8992 = vmatmul.f32.gmra.mxu0 %v8063
  %v8993 = vpop.f32.mrf.mxu0
  %v8994 = vadd.f32 0.0, %v8993
  %8995 = vmatmul.f32.gmra.mxu0 %v8066
  %v8996 = vpop.f32.mrf.mxu0
  %v8997 = vadd.f32 0.0, %v8996
  %8998 = vmatmul.f32.gmra.mxu0 %v8069
  %v8999 = vpop.f32.mrf.mxu0
  %v9000 = vadd.f32 0.0, %v8999
  %9001 = vmatmul.f32.gmra.mxu0 %v8072
  %v9002 = vpop.f32.mrf.mxu0
  %v9003 = vadd.f32 0.0, %v9002
  %9004 = vmatmul.f32.gmra.mxu0 %v8075
  %v9005 = vpop.f32.mrf.mxu0
  %v9006 = vadd.f32 0.0, %v9005
  %9007 = vmatmul.f32.gmra.mxu0 %v8078
  %v9008 = vpop.f32.mrf.mxu0
  %v9009 = vadd.f32 0.0, %v9008
  %9010 = vmatmul.f32.gmra.mxu0 %v8081
  %v9011 = vpop.f32.mrf.mxu0
  %v9012 = vadd.f32 0.0, %v9011
  %9013 = vmatmul.f32.gmra.mxu0 %v8084
  %v9014 = vpop.f32.mrf.mxu0
  %v9015 = vadd.f32 0.0, %v9014
  %9016 = vmatmul.f32.gmra.mxu0 %v8087
  %v9017 = vpop.f32.mrf.mxu0
  %v9018 = vadd.f32 0.0, %v9017
  %9019 = vmatmul.f32.gmra.mxu0 %v8090
  %v9020 = vpop.f32.mrf.mxu0
  %v9021 = vadd.f32 0.0, %v9020
  %9022 = vmatmul.f32.gmra.mxu0 %v8093
  %v9023 = vpop.f32.mrf.mxu0
  %v9024 = vadd.f32 0.0, %v9023
  %9025 = vmatmul.f32.gmra.mxu0 %v8096
  %v9026 = vpop.f32.mrf.mxu0
  %v9027 = vadd.f32 0.0, %v9026
  %9028 = vmatmul.f32.gmra.mxu0 %v8099
  %v9029 = vpop.f32.mrf.mxu0
  %v9030 = vadd.f32 0.0, %v9029
  %9031 = vmatmul.f32.gmra.mxu0 %v8102
  %v9032 = vpop.f32.mrf.mxu0
  %v9033 = vadd.f32 0.0, %v9032
  %9034 = vmatmul.f32.gmra.mxu0 %v8105
  %v9035 = vpop.f32.mrf.mxu0
  %v9036 = vadd.f32 0.0, %v9035
  %9037 = vmatmul.f32.gmra.mxu0 %v8108
  %v9038 = vpop.f32.mrf.mxu0
  %v9039 = vadd.f32 0.0, %v9038
  %9040 = vmatmul.f32.gmra.mxu0 %v8111
  %v9041 = vpop.f32.mrf.mxu0
  %v9042 = vadd.f32 0.0, %v9041
  %9043 = vmatmul.f32.gmra.mxu0 %v8114
  %v9044 = vpop.f32.mrf.mxu0
  %v9045 = vadd.f32 0.0, %v9044
  %9046 = vmatmul.f32.gmra.mxu0 %v8117
  %v9047 = vpop.f32.mrf.mxu0
  %v9048 = vadd.f32 0.0, %v9047
  %9049 = vmatmul.f32.gmra.mxu0 %v8120
  %v9050 = vpop.f32.mrf.mxu0
  %v9051 = vadd.f32 0.0, %v9050
  %9052 = vmatmul.f32.gmra.mxu0 %v8123
  %v9053 = vpop.f32.mrf.mxu0
  %v9054 = vadd.f32 0.0, %v9053
  %9055 = vmatmul.f32.gmra.mxu0 %v8126
  %v9056 = vpop.f32.mrf.mxu0
  %v9057 = vadd.f32 0.0, %v9056
  %9058 = vmatmul.f32.gmra.mxu0 %v8129
  %v9059 = vpop.f32.mrf.mxu0
  %v9060 = vadd.f32 0.0, %v9059
  %9061 = vmatmul.f32.gmra.mxu0 %v8132
  %v9062 = vpop.f32.mrf.mxu0
  %v9063 = vadd.f32 0.0, %v9062
  %9064 = vmatmul.f32.gmra.mxu0 %v8135
  %v9065 = vpop.f32.mrf.mxu0
  %v9066 = vadd.f32 0.0, %v9065
  %9067 = vmatmul.f32.gmra.mxu0 %v8138
  %v9068 = vpop.f32.mrf.mxu0
  %v9069 = vadd.f32 0.0, %v9068
  %9070 = vmatmul.f32.gmra.mxu0 %v8141
  %v9071 = vpop.f32.mrf.mxu0
  %v9072 = vadd.f32 0.0, %v9071
  %9073 = vmatmul.f32.gmra.mxu0 %v8144
  %v9074 = vpop.f32.mrf.mxu0
  %v9075 = vadd.f32 0.0, %v9074
  %9076 = vmatmul.f32.gmra.mxu0 %v8147
  %v9077 = vpop.f32.mrf.mxu0
  %v9078 = vadd.f32 0.0, %v9077
  %9079 = vmatmul.f32.gmra.mxu0 %v8150
  %v9080 = vpop.f32.mrf.mxu0
  %v9081 = vadd.f32 0.0, %v9080
  %9082 = vmatmul.f32.gmra.mxu0 %v8153
  %v9083 = vpop.f32.mrf.mxu0
  %v9084 = vadd.f32 0.0, %v9083
  %9085 = vmatmul.f32.gmra.mxu0 %v8156
  %v9086 = vpop.f32.mrf.mxu0
  %v9087 = vadd.f32 0.0, %v9086
  %9088 = vmatmul.f32.gmra.mxu0 %v8159
  %v9089 = vpop.f32.mrf.mxu0
  %v9090 = vadd.f32 0.0, %v9089
  %9091 = vmatmul.f32.gmra.mxu0 %v8162
  %v9092 = vpop.f32.mrf.mxu0
  %v9093 = vadd.f32 0.0, %v9092
  %9094 = vmatmul.f32.gmra.mxu0 %v8165
  %v9095 = vpop.f32.mrf.mxu0
  %v9096 = vadd.f32 0.0, %v9095
  %9097 = vmatmul.f32.gmra.mxu0 %v8168
  %v9098 = vpop.f32.mrf.mxu0
  %v9099 = vadd.f32 0.0, %v9098
  %9100 = vmatmul.f32.gmra.mxu0 %v8171
  %v9101 = vpop.f32.mrf.mxu0
  %v9102 = vadd.f32 0.0, %v9101
  %9103 = vmatmul.f32.gmra.mxu0 %v8174
  %v9104 = vpop.f32.mrf.mxu0
  %v9105 = vadd.f32 0.0, %v9104
  %9106 = vmatmul.f32.gmra.mxu0 %v8177
  %v9107 = vpop.f32.mrf.mxu0
  %v9108 = vadd.f32 0.0, %v9107
  %9109 = vmatmul.f32.gmra.mxu0 %v8180
  %v9110 = vpop.f32.mrf.mxu0
  %v9111 = vadd.f32 0.0, %v9110
  %9112 = vmatmul.f32.gmra.mxu0 %v8183
  %v9113 = vpop.f32.mrf.mxu0
  %v9114 = vadd.f32 0.0, %v9113
  %9115 = vmatmul.f32.gmra.mxu0 %v8186
  %v9116 = vpop.f32.mrf.mxu0
  %v9117 = vadd.f32 0.0, %v9116
  %9118 = vmatmul.f32.gmra.mxu0 %v8189
  %v9119 = vpop.f32.mrf.mxu0
  %v9120 = vadd.f32 0.0, %v9119
  %9121 = vmatmul.f32.gmra.mxu0 %v8192
  %v9122 = vpop.f32.mrf.mxu0
  %v9123 = vadd.f32 0.0, %v9122
  %9124 = vmatmul.f32.gmra.mxu0 %v8642
  %v9125 = vpop.f32.mrf.mxu0
  %v9126 = vadd.f32 0.0, %v9125
  %9127 = vmatmul.f32.gmra.mxu0 %v8645
  %v9128 = vpop.f32.mrf.mxu0
  %v9129 = vadd.f32 0.0, %v9128
  %9130 = vmatmul.f32.gmra.mxu0 %v8648
  %v9131 = vpop.f32.mrf.mxu0
  %v9132 = vadd.f32 0.0, %v9131
  %9133 = vmatmul.f32.gmra.mxu0 %v8651
  %v9134 = vpop.f32.mrf.mxu0
  %v9135 = vadd.f32 0.0, %v9134
  %9136 = vmatmul.f32.gmra.mxu0 %v8654
  %v9137 = vpop.f32.mrf.mxu0
  %v9138 = vadd.f32 0.0, %v9137
  %9139 = vmatmul.f32.gmra.mxu0 %v8657
  %v9140 = vpop.f32.mrf.mxu0
  %v9141 = vadd.f32 0.0, %v9140
  %9142 = vmatmul.f32.gmra.mxu0 %v8660
  %v9143 = vpop.f32.mrf.mxu0
  %v9144 = vadd.f32 0.0, %v9143
  %9145 = vmatmul.f32.gmra.mxu0 %v8938
  %v9146 = vpop.f32.mrf.mxu0
  %v9147 = vadd.f32 0.0, %v9146
  %9148 = vdwg.mxu0
  %v9149 = vadd.f32 %v8871, %v8958
  %v9150 = vadd.f32 %v8872, %v8961
  %v9151 = vadd.f32 %v8873, %v8964
  %v9152 = vadd.f32 %v8874, %v8967
  %v9153 = vadd.f32 %v8875, %v8970
  %v9154 = vadd.f32 %v8876, %v8973
  %v9155 = vadd.f32 %v8877, %v8976
  %v9156 = vadd.f32 %v8878, %v8979
  %v9157 = vadd.f32 %v8879, %v8982
  %v9158 = vadd.f32 %v8880, %v8985
  %v9159 = vadd.f32 %v8881, %v8988
  %v9160 = vadd.f32 %v8882, %v8991
  %v9161 = vadd.f32 %v8883, %v8994
  %v9162 = vadd.f32 %v8884, %v8997
  %v9163 = vadd.f32 %v8885, %v9000
  %v9164 = vadd.f32 %v8886, %v9003
  %v9165 = vadd.f32 %v8887, %v9006
  %v9166 = vadd.f32 %v8888, %v9009
  %v9167 = vadd.f32 %v8889, %v9012
  %v9168 = vadd.f32 %v8890, %v9015
  %v9169 = vadd.f32 %v8891, %v9018
  %v9170 = vadd.f32 %v8892, %v9021
  %v9171 = vadd.f32 %v8893, %v9024
  %v9172 = vadd.f32 %v8894, %v9027
  %v9173 = vadd.f32 %v8895, %v9030
  %v9174 = vadd.f32 %v8896, %v9033
  %v9175 = vadd.f32 %v8897, %v9036
  %v9176 = vadd.f32 %v8898, %v9039
  %v9177 = vadd.f32 %v8899, %v9042
  %v9178 = vadd.f32 %v8900, %v9045
  %v9179 = vadd.f32 %v8901, %v9048
  %v9180 = vadd.f32 %v8902, %v9051
  %v9181 = vadd.f32 %v8903, %v9054
  %v9182 = vadd.f32 %v8904, %v9057
  %v9183 = vadd.f32 %v8905, %v9060
  %v9184 = vadd.f32 %v8906, %v9063
  %v9185 = vadd.f32 %v8907, %v9066
  %v9186 = vadd.f32 %v8908, %v9069
  %v9187 = vadd.f32 %v8909, %v9072
  %v9188 = vadd.f32 %v8910, %v9075
  %v9189 = vadd.f32 %v8911, %v9078
  %v9190 = vadd.f32 %v8912, %v9081
  %v9191 = vadd.f32 %v8913, %v9084
  %v9192 = vadd.f32 %v8914, %v9087
  %v9193 = vadd.f32 %v8915, %v9090
  %v9194 = vadd.f32 %v8916, %v9093
  %v9195 = vadd.f32 %v8917, %v9096
  %v9196 = vadd.f32 %v8918, %v9099
  %v9197 = vadd.f32 %v8919, %v9102
  %v9198 = vadd.f32 %v8920, %v9105
  %v9199 = vadd.f32 %v8921, %v9108
  %v9200 = vadd.f32 %v8922, %v9111
  %v9201 = vadd.f32 %v8923, %v9114
  %v9202 = vadd.f32 %v8924, %v9117
  %v9203 = vadd.f32 %v8925, %v9120
  %v9204 = vadd.f32 %v8926, %v9123
  %v9205 = vadd.f32 %v8927, %v9126
  %v9206 = vadd.f32 %v8928, %v9129
  %v9207 = vadd.f32 %v8929, %v9132
  %v9208 = vadd.f32 %v8930, %v9135
  %v9209 = vadd.f32 %v8931, %v9138
  %v9210 = vadd.f32 %v8932, %v9141
  %v9211 = vadd.f32 %v8933, %v9144
  %v9212 = vadd.f32 %v8934, %v9147
  %v9213 = vld [vmem:[%s4] sm:$0x1]
  %v9215 = vperm.slane %v9213, 0
  %v9217 = vadd.f32 %v9149, %v9215
  %v9218 = vadd.f32 %v9150, %v9215
  %v9219 = vadd.f32 %v9151, %v9215
  %v9220 = vadd.f32 %v9152, %v9215
  %v9221 = vadd.f32 %v9153, %v9215
  %v9222 = vadd.f32 %v9154, %v9215
  %v9223 = vadd.f32 %v9155, %v9215
  %v9224 = vadd.f32 %v9156, %v9215
  %v9225 = vadd.f32 %v9157, %v9215
  %v9226 = vadd.f32 %v9158, %v9215
  %v9227 = vadd.f32 %v9159, %v9215
  %v9228 = vadd.f32 %v9160, %v9215
  %v9229 = vadd.f32 %v9161, %v9215
  %v9230 = vadd.f32 %v9162, %v9215
  %v9231 = vadd.f32 %v9163, %v9215
  %v9232 = vadd.f32 %v9164, %v9215
  %v9233 = vadd.f32 %v9165, %v9215
  %v9234 = vadd.f32 %v9166, %v9215
  %v9235 = vadd.f32 %v9167, %v9215
  %v9236 = vadd.f32 %v9168, %v9215
  %v9237 = vadd.f32 %v9169, %v9215
  %v9238 = vadd.f32 %v9170, %v9215
  %v9239 = vadd.f32 %v9171, %v9215
  %v9240 = vadd.f32 %v9172, %v9215
  %v9241 = vadd.f32 %v9173, %v9215
  %v9242 = vadd.f32 %v9174, %v9215
  %v9243 = vadd.f32 %v9175, %v9215
  %v9244 = vadd.f32 %v9176, %v9215
  %v9245 = vadd.f32 %v9177, %v9215
  %v9246 = vadd.f32 %v9178, %v9215
  %v9247 = vadd.f32 %v9179, %v9215
  %v9248 = vadd.f32 %v9180, %v9215
  %v9249 = vadd.f32 %v9181, %v9215
  %v9250 = vadd.f32 %v9182, %v9215
  %v9251 = vadd.f32 %v9183, %v9215
  %v9252 = vadd.f32 %v9184, %v9215
  %v9253 = vadd.f32 %v9185, %v9215
  %v9254 = vadd.f32 %v9186, %v9215
  %v9255 = vadd.f32 %v9187, %v9215
  %v9256 = vadd.f32 %v9188, %v9215
  %v9257 = vadd.f32 %v9189, %v9215
  %v9258 = vadd.f32 %v9190, %v9215
  %v9259 = vadd.f32 %v9191, %v9215
  %v9260 = vadd.f32 %v9192, %v9215
  %v9261 = vadd.f32 %v9193, %v9215
  %v9262 = vadd.f32 %v9194, %v9215
  %v9263 = vadd.f32 %v9195, %v9215
  %v9264 = vadd.f32 %v9196, %v9215
  %v9265 = vadd.f32 %v9197, %v9215
  %v9266 = vadd.f32 %v9198, %v9215
  %v9267 = vadd.f32 %v9199, %v9215
  %v9268 = vadd.f32 %v9200, %v9215
  %v9269 = vadd.f32 %v9201, %v9215
  %v9270 = vadd.f32 %v9202, %v9215
  %v9271 = vadd.f32 %v9203, %v9215
  %v9272 = vadd.f32 %v9204, %v9215
  %v9273 = vadd.f32 %v9205, %v9215
  %v9274 = vadd.f32 %v9206, %v9215
  %v9275 = vadd.f32 %v9207, %v9215
  %v9276 = vadd.f32 %v9208, %v9215
  %v9277 = vadd.f32 %v9209, %v9215
  %v9278 = vadd.f32 %v9210, %v9215
  %v9279 = vadd.f32 %v9211, %v9215
  %v9280 = vadd.f32 %v9212, %v9215
  %v9281 = vmax.f32 %v9217, 0.0
  %v9282 = vmax.f32 %v9218, 0.0
  %v9283 = vmax.f32 %v9219, 0.0
  %v9284 = vmax.f32 %v9220, 0.0
  %v9285 = vmax.f32 %v9221, 0.0
  %v9286 = vmax.f32 %v9222, 0.0
  %v9287 = vmax.f32 %v9223, 0.0
  %v9288 = vmax.f32 %v9224, 0.0
  %v9289 = vmax.f32 %v9225, 0.0
  %v9290 = vmax.f32 %v9226, 0.0
  %v9291 = vmax.f32 %v9227, 0.0
  %v9292 = vmax.f32 %v9228, 0.0
  %v9293 = vmax.f32 %v9229, 0.0
  %v9294 = vmax.f32 %v9230, 0.0
  %v9295 = vmax.f32 %v9231, 0.0
  %v9296 = vmax.f32 %v9232, 0.0
  %v9297 = vmax.f32 %v9233, 0.0
  %v9298 = vmax.f32 %v9234, 0.0
  %v9299 = vmax.f32 %v9235, 0.0
  %v9300 = vmax.f32 %v9236, 0.0
  %v9301 = vmax.f32 %v9237, 0.0
  %v9302 = vmax.f32 %v9238, 0.0
  %v9303 = vmax.f32 %v9239, 0.0
  %v9304 = vmax.f32 %v9240, 0.0
  %v9305 = vmax.f32 %v9241, 0.0
  %v9306 = vmax.f32 %v9242, 0.0
  %v9307 = vmax.f32 %v9243, 0.0
  %v9308 = vmax.f32 %v9244, 0.0
  %v9309 = vmax.f32 %v9245, 0.0
  %v9310 = vmax.f32 %v9246, 0.0
  %v9311 = vmax.f32 %v9247, 0.0
  %v9312 = vmax.f32 %v9248, 0.0
  %v9313 = vmax.f32 %v9249, 0.0
  %v9314 = vmax.f32 %v9250, 0.0
  %v9315 = vmax.f32 %v9251, 0.0
  %v9316 = vmax.f32 %v9252, 0.0
  %v9317 = vmax.f32 %v9253, 0.0
  %v9318 = vmax.f32 %v9254, 0.0
  %v9319 = vmax.f32 %v9255, 0.0
  %v9320 = vmax.f32 %v9256, 0.0
  %v9321 = vmax.f32 %v9257, 0.0
  %v9322 = vmax.f32 %v9258, 0.0
  %v9323 = vmax.f32 %v9259, 0.0
  %v9324 = vmax.f32 %v9260, 0.0
  %v9325 = vmax.f32 %v9261, 0.0
  %v9326 = vmax.f32 %v9262, 0.0
  %v9327 = vmax.f32 %v9263, 0.0
  %v9328 = vmax.f32 %v9264, 0.0
  %v9329 = vmax.f32 %v9265, 0.0
  %v9330 = vmax.f32 %v9266, 0.0
  %v9331 = vmax.f32 %v9267, 0.0
  %v9332 = vmax.f32 %v9268, 0.0
  %v9333 = vmax.f32 %v9269, 0.0
  %v9334 = vmax.f32 %v9270, 0.0
  %v9335 = vmax.f32 %v9271, 0.0
  %v9336 = vmax.f32 %v9272, 0.0
  %v9337 = vmax.f32 %v9273, 0.0
  %v9338 = vmax.f32 %v9274, 0.0
  %v9339 = vmax.f32 %v9275, 0.0
  %v9340 = vmax.f32 %v9276, 0.0
  %v9341 = vmax.f32 %v9277, 0.0
  %v9342 = vmax.f32 %v9278, 0.0
  %v9343 = vmax.f32 %v9279, 0.0
  %v9344 = vmax.f32 %v9280, 0.0
  %v9345 = vmax.f32 %v9281, %v9289
  %v9346 = vmax.f32 %v9282, %v9290
  %v9347 = vmax.f32 %v9283, %v9291
  %v9348 = vmax.f32 %v9284, %v9292
  %v9349 = vmax.f32 %v9285, %v9293
  %v9350 = vmax.f32 %v9286, %v9294
  %v9351 = vmax.f32 %v9287, %v9295
  %v9352 = vmax.f32 %v9288, %v9296
  %v9353 = vmax.f32 %v9289, %v9297
  %v9354 = vmax.f32 %v9290, %v9298
  %v9355 = vmax.f32 %v9291, %v9299
  %v9356 = vmax.f32 %v9292, %v9300
  %v9357 = vmax.f32 %v9293, %v9301
  %v9358 = vmax.f32 %v9294, %v9302
  %v9359 = vmax.f32 %v9295, %v9303
  %v9360 = vmax.f32 %v9296, %v9304
  %v9361 = vmax.f32 %v9297, %v9305
  %v9362 = vmax.f32 %v9298, %v9306
  %v9363 = vmax.f32 %v9299, %v9307
  %v9364 = vmax.f32 %v9300, %v9308
  %v9365 = vmax.f32 %v9301, %v9309
  %v9366 = vmax.f32 %v9302, %v9310
  %v9367 = vmax.f32 %v9303, %v9311
  %v9368 = vmax.f32 %v9304, %v9312
  %v9369 = vmax.f32 %v9305, %v9313
  %v9370 = vmax.f32 %v9306, %v9314
  %v9371 = vmax.f32 %v9307, %v9315
  %v9372 = vmax.f32 %v9308, %v9316
  %v9373 = vmax.f32 %v9309, %v9317
  %v9374 = vmax.f32 %v9310, %v9318
  %v9375 = vmax.f32 %v9311, %v9319
  %v9376 = vmax.f32 %v9312, %v9320
  %v9377 = vmax.f32 %v9313, %v9321
  %v9378 = vmax.f32 %v9314, %v9322
  %v9379 = vmax.f32 %v9315, %v9323
  %v9380 = vmax.f32 %v9316, %v9324
  %v9381 = vmax.f32 %v9317, %v9325
  %v9382 = vmax.f32 %v9318, %v9326
  %v9383 = vmax.f32 %v9319, %v9327
  %v9384 = vmax.f32 %v9320, %v9328
  %v9385 = vmax.f32 %v9321, %v9329
  %v9386 = vmax.f32 %v9322, %v9330
  %v9387 = vmax.f32 %v9323, %v9331
  %v9388 = vmax.f32 %v9324, %v9332
  %v9389 = vmax.f32 %v9325, %v9333
  %v9390 = vmax.f32 %v9326, %v9334
  %v9391 = vmax.f32 %v9327, %v9335
  %v9392 = vmax.f32 %v9328, %v9336
  %v9393 = vmax.f32 %v9329, %v9337
  %v9394 = vmax.f32 %v9330, %v9338
  %v9395 = vmax.f32 %v9331, %v9339
  %v9396 = vmax.f32 %v9332, %v9340
  %v9397 = vmax.f32 %v9333, %v9341
  %v9398 = vmax.f32 %v9334, %v9342
  %v9399 = vmax.f32 %v9335, %v9343
  %v9400 = vmax.f32 %v9336, %v9344
  %v9401 = vmax.f32 %v9345, %v9346
  %v9402 = vmax.f32 %v9346, %v9347
  %v9403 = vmax.f32 %v9347, %v9348
  %v9404 = vmax.f32 %v9348, %v9349
  %v9405 = vmax.f32 %v9349, %v9350
  %v9406 = vmax.f32 %v9350, %v9351
  %v9407 = vmax.f32 %v9351, %v9352
  %v9408 = vmax.f32 %v9353, %v9354
  %v9409 = vmax.f32 %v9354, %v9355
  %v9410 = vmax.f32 %v9355, %v9356
  %v9411 = vmax.f32 %v9356, %v9357
  %v9412 = vmax.f32 %v9357, %v9358
  %v9413 = vmax.f32 %v9358, %v9359
  %v9414 = vmax.f32 %v9359, %v9360
  %v9415 = vmax.f32 %v9361, %v9362
  %v9416 = vmax.f32 %v9362, %v9363
  %v9417 = vmax.f32 %v9363, %v9364
  %v9418 = vmax.f32 %v9364, %v9365
  %v9419 = vmax.f32 %v9365, %v9366
  %v9420 = vmax.f32 %v9366, %v9367
  %v9421 = vmax.f32 %v9367, %v9368
  %v9422 = vmax.f32 %v9369, %v9370
  %v9423 = vmax.f32 %v9370, %v9371
  %v9424 = vmax.f32 %v9371, %v9372
  %v9425 = vmax.f32 %v9372, %v9373
  %v9426 = vmax.f32 %v9373, %v9374
  %v9427 = vmax.f32 %v9374, %v9375
  %v9428 = vmax.f32 %v9375, %v9376
  %v9429 = vmax.f32 %v9377, %v9378
  %v9430 = vmax.f32 %v9378, %v9379
  %v9431 = vmax.f32 %v9379, %v9380
  %v9432 = vmax.f32 %v9380, %v9381
  %v9433 = vmax.f32 %v9381, %v9382
  %v9434 = vmax.f32 %v9382, %v9383
  %v9435 = vmax.f32 %v9383, %v9384
  %v9436 = vmax.f32 %v9385, %v9386
  %v9437 = vmax.f32 %v9386, %v9387
  %v9438 = vmax.f32 %v9387, %v9388
  %v9439 = vmax.f32 %v9388, %v9389
  %v9440 = vmax.f32 %v9389, %v9390
  %v9441 = vmax.f32 %v9390, %v9391
  %v9442 = vmax.f32 %v9391, %v9392
  %v9443 = vmax.f32 %v9393, %v9394
  %v9444 = vmax.f32 %v9394, %v9395
  %v9445 = vmax.f32 %v9395, %v9396
  %v9446 = vmax.f32 %v9396, %v9397
  %v9447 = vmax.f32 %v9397, %v9398
  %v9448 = vmax.f32 %v9398, %v9399
  %v9449 = vmax.f32 %v9399, %v9400
  %v9450 = vld [vmem:[%s5] sm:$0xff]
  %v9451 = vld [vmem:[%s5 + $0x8] sm:$0xff]
  %s9452 = scalar_lea.vmem %s5, 16
  %v9453 = vld [vmem:[%s9452] sm:$0xff]
  %v9454 = vld [vmem:[%s9452 + $0x8] sm:$0xff]
  %v9456 = vsel %vm439, %v9402, 0
  %9458 = vmatpush.msra.mxu0 0.0
  %9459 = vmatpush.msra.mxu0 0.0
  %9460 = vmatpush.msra.mxu0 0.0
  %9461 = vmatpush.msra.mxu0 0.0
  %9462 = vmatpush.msra.mxu0 0.0
  %9463 = vmatpush.msra.mxu0 0.0
  %9464 = vmatpush.msra.mxu0 0.0
  %9465 = vmatpush.msra.mxu0 0.0
  %9466 = vmatpush.msra.mxu0 0.0
  %9467 = vmatpush.msra.mxu0 0.0
  %9468 = vmatpush.msra.mxu0 0.0
  %9469 = vmatpush.msra.mxu0 0.0
  %9470 = vmatpush.msra.mxu0 0.0
  %9471 = vmatpush.msra.mxu0 0.0
  %9472 = vmatpush.msra.mxu0 %v9454
  %9473 = vmatpush.msra.mxu0 %v9453
  %9474 = vmatmul.f32.gmra.mxu0 %v9456
  %v9475 = vpop.f32.mrf.mxu0
  %v9476 = vadd.f32 0.0, %v9475
  %9477 = vdwg.mxu0
  %v9479 = vsel %vm439, %v9401, 0
  %9481 = vmatpush.msra.mxu0 0.0
  %9482 = vmatpush.msra.mxu0 0.0
  %9483 = vmatpush.msra.mxu0 0.0
  %9484 = vmatpush.msra.mxu0 0.0
  %9485 = vmatpush.msra.mxu0 0.0
  %9486 = vmatpush.msra.mxu0 0.0
  %9487 = vmatpush.msra.mxu0 0.0
  %9488 = vmatpush.msra.mxu0 0.0
  %9489 = vmatpush.msra.mxu0 0.0
  %9490 = vmatpush.msra.mxu0 0.0
  %9491 = vmatpush.msra.mxu0 0.0
  %9492 = vmatpush.msra.mxu0 0.0
  %9493 = vmatpush.msra.mxu0 0.0
  %9494 = vmatpush.msra.mxu0 0.0
  %9495 = vmatpush.msra.mxu0 %v9451
  %9496 = vmatpush.msra.mxu0 %v9450
  %9497 = vmatmul.f32.gmra.mxu0 %v9479
  %v9498 = vpop.f32.mrf.mxu0
  %v9499 = vadd.f32 %v9476, %v9498
  %9500 = vdwg.mxu0
  %s9501 = scalar_lea.vmem %s5, 32
  %v9502 = vld [vmem:[%s9501] sm:$0xff]
  %v9503 = vld [vmem:[%s9501 + $0x8] sm:$0xff]
  %v9505 = vsel %vm439, %v9403, 0
  %9507 = vmatpush.msra.mxu0 0.0
  %9508 = vmatpush.msra.mxu0 0.0
  %9509 = vmatpush.msra.mxu0 0.0
  %9510 = vmatpush.msra.mxu0 0.0
  %9511 = vmatpush.msra.mxu0 0.0
  %9512 = vmatpush.msra.mxu0 0.0
  %9513 = vmatpush.msra.mxu0 0.0
  %9514 = vmatpush.msra.mxu0 0.0
  %9515 = vmatpush.msra.mxu0 0.0
  %9516 = vmatpush.msra.mxu0 0.0
  %9517 = vmatpush.msra.mxu0 0.0
  %9518 = vmatpush.msra.mxu0 0.0
  %9519 = vmatpush.msra.mxu0 0.0
  %9520 = vmatpush.msra.mxu0 0.0
  %9521 = vmatpush.msra.mxu0 %v9503
  %9522 = vmatpush.msra.mxu0 %v9502
  %9523 = vmatmul.f32.gmra.mxu0 %v9505
  %v9524 = vpop.f32.mrf.mxu0
  %v9525 = vadd.f32 0.0, %v9524
  %9526 = vdwg.mxu0
  %v9527 = vadd.f32 %v9499, %v9525
  %s9528 = scalar_lea.vmem %s5, 48
  %v9529 = vld [vmem:[%s9528] sm:$0xff]
  %v9530 = vld [vmem:[%s9528 + $0x8] sm:$0xff]
  %v9532 = vsel %vm439, %v9404, 0
  %9534 = vmatpush.msra.mxu0 0.0
  %9535 = vmatpush.msra.mxu0 0.0
  %9536 = vmatpush.msra.mxu0 0.0
  %9537 = vmatpush.msra.mxu0 0.0
  %9538 = vmatpush.msra.mxu0 0.0
  %9539 = vmatpush.msra.mxu0 0.0
  %9540 = vmatpush.msra.mxu0 0.0
  %9541 = vmatpush.msra.mxu0 0.0
  %9542 = vmatpush.msra.mxu0 0.0
  %9543 = vmatpush.msra.mxu0 0.0
  %9544 = vmatpush.msra.mxu0 0.0
  %9545 = vmatpush.msra.mxu0 0.0
  %9546 = vmatpush.msra.mxu0 0.0
  %9547 = vmatpush.msra.mxu0 0.0
  %9548 = vmatpush.msra.mxu0 %v9530
  %9549 = vmatpush.msra.mxu0 %v9529
  %9550 = vmatmul.f32.gmra.mxu0 %v9532
  %v9551 = vpop.f32.mrf.mxu0
  %v9552 = vadd.f32 0.0, %v9551
  %9553 = vdwg.mxu0
  %v9554 = vadd.f32 %v9527, %v9552
  %s9555 = scalar_lea.vmem %s5, 64
  %v9556 = vld [vmem:[%s9555] sm:$0xff]
  %v9557 = vld [vmem:[%s9555 + $0x8] sm:$0xff]
  %v9559 = vsel %vm439, %v9405, 0
  %9561 = vmatpush.msra.mxu0 0.0
  %9562 = vmatpush.msra.mxu0 0.0
  %9563 = vmatpush.msra.mxu0 0.0
  %9564 = vmatpush.msra.mxu0 0.0
  %9565 = vmatpush.msra.mxu0 0.0
  %9566 = vmatpush.msra.mxu0 0.0
  %9567 = vmatpush.msra.mxu0 0.0
  %9568 = vmatpush.msra.mxu0 0.0
  %9569 = vmatpush.msra.mxu0 0.0
  %9570 = vmatpush.msra.mxu0 0.0
  %9571 = vmatpush.msra.mxu0 0.0
  %9572 = vmatpush.msra.mxu0 0.0
  %9573 = vmatpush.msra.mxu0 0.0
  %9574 = vmatpush.msra.mxu0 0.0
  %9575 = vmatpush.msra.mxu0 %v9557
  %9576 = vmatpush.msra.mxu0 %v9556
  %9577 = vmatmul.f32.gmra.mxu0 %v9559
  %v9578 = vpop.f32.mrf.mxu0
  %v9579 = vadd.f32 0.0, %v9578
  %9580 = vdwg.mxu0
  %v9581 = vadd.f32 %v9554, %v9579
  %s9582 = scalar_lea.vmem %s5, 80
  %v9583 = vld [vmem:[%s9582] sm:$0xff]
  %v9584 = vld [vmem:[%s9582 + $0x8] sm:$0xff]
  %v9586 = vsel %vm439, %v9406, 0
  %9588 = vmatpush.msra.mxu0 0.0
  %9589 = vmatpush.msra.mxu0 0.0
  %9590 = vmatpush.msra.mxu0 0.0
  %9591 = vmatpush.msra.mxu0 0.0
  %9592 = vmatpush.msra.mxu0 0.0
  %9593 = vmatpush.msra.mxu0 0.0
  %9594 = vmatpush.msra.mxu0 0.0
  %9595 = vmatpush.msra.mxu0 0.0
  %9596 = vmatpush.msra.mxu0 0.0
  %9597 = vmatpush.msra.mxu0 0.0
  %9598 = vmatpush.msra.mxu0 0.0
  %9599 = vmatpush.msra.mxu0 0.0
  %9600 = vmatpush.msra.mxu0 0.0
  %9601 = vmatpush.msra.mxu0 0.0
  %9602 = vmatpush.msra.mxu0 %v9584
  %9603 = vmatpush.msra.mxu0 %v9583
  %9604 = vmatmul.f32.gmra.mxu0 %v9586
  %v9605 = vpop.f32.mrf.mxu0
  %v9606 = vadd.f32 0.0, %v9605
  %9607 = vdwg.mxu0
  %v9608 = vadd.f32 %v9581, %v9606
  %s9609 = scalar_lea.vmem %s5, 96
  %v9610 = vld [vmem:[%s9609] sm:$0xff]
  %v9611 = vld [vmem:[%s9609 + $0x8] sm:$0xff]
  %v9613 = vsel %vm439, %v9407, 0
  %9615 = vmatpush.msra.mxu0 0.0
  %9616 = vmatpush.msra.mxu0 0.0
  %9617 = vmatpush.msra.mxu0 0.0
  %9618 = vmatpush.msra.mxu0 0.0
  %9619 = vmatpush.msra.mxu0 0.0
  %9620 = vmatpush.msra.mxu0 0.0
  %9621 = vmatpush.msra.mxu0 0.0
  %9622 = vmatpush.msra.mxu0 0.0
  %9623 = vmatpush.msra.mxu0 0.0
  %9624 = vmatpush.msra.mxu0 0.0
  %9625 = vmatpush.msra.mxu0 0.0
  %9626 = vmatpush.msra.mxu0 0.0
  %9627 = vmatpush.msra.mxu0 0.0
  %9628 = vmatpush.msra.mxu0 0.0
  %9629 = vmatpush.msra.mxu0 %v9611
  %9630 = vmatpush.msra.mxu0 %v9610
  %9631 = vmatmul.f32.gmra.mxu0 %v9613
  %v9632 = vpop.f32.mrf.mxu0
  %v9633 = vadd.f32 0.0, %v9632
  %9634 = vdwg.mxu0
  %v9635 = vadd.f32 %v9608, %v9633
  %s9636 = scalar_lea.vmem %s5, 112
  %v9637 = vld [vmem:[%s9636] sm:$0xff]
  %v9638 = vld [vmem:[%s9636 + $0x8] sm:$0xff]
  %v9640 = vsel %vm439, %v9408, 0
  %9642 = vmatpush.msra.mxu0 0.0
  %9643 = vmatpush.msra.mxu0 0.0
  %9644 = vmatpush.msra.mxu0 0.0
  %9645 = vmatpush.msra.mxu0 0.0
  %9646 = vmatpush.msra.mxu0 0.0
  %9647 = vmatpush.msra.mxu0 0.0
  %9648 = vmatpush.msra.mxu0 0.0
  %9649 = vmatpush.msra.mxu0 0.0
  %9650 = vmatpush.msra.mxu0 0.0
  %9651 = vmatpush.msra.mxu0 0.0
  %9652 = vmatpush.msra.mxu0 0.0
  %9653 = vmatpush.msra.mxu0 0.0
  %9654 = vmatpush.msra.mxu0 0.0
  %9655 = vmatpush.msra.mxu0 0.0
  %9656 = vmatpush.msra.mxu0 %v9638
  %9657 = vmatpush.msra.mxu0 %v9637
  %9658 = vmatmul.f32.gmra.mxu0 %v9640
  %v9659 = vpop.f32.mrf.mxu0
  %v9660 = vadd.f32 0.0, %v9659
  %9661 = vdwg.mxu0
  %v9662 = vadd.f32 %v9635, %v9660
  %s9663 = scalar_lea.vmem %s5, 128
  %v9664 = vld [vmem:[%s9663] sm:$0xff]
  %v9665 = vld [vmem:[%s9663 + $0x8] sm:$0xff]
  %v9667 = vsel %vm439, %v9409, 0
  %9669 = vmatpush.msra.mxu0 0.0
  %9670 = vmatpush.msra.mxu0 0.0
  %9671 = vmatpush.msra.mxu0 0.0
  %9672 = vmatpush.msra.mxu0 0.0
  %9673 = vmatpush.msra.mxu0 0.0
  %9674 = vmatpush.msra.mxu0 0.0
  %9675 = vmatpush.msra.mxu0 0.0
  %9676 = vmatpush.msra.mxu0 0.0
  %9677 = vmatpush.msra.mxu0 0.0
  %9678 = vmatpush.msra.mxu0 0.0
  %9679 = vmatpush.msra.mxu0 0.0
  %9680 = vmatpush.msra.mxu0 0.0
  %9681 = vmatpush.msra.mxu0 0.0
  %9682 = vmatpush.msra.mxu0 0.0
  %9683 = vmatpush.msra.mxu0 %v9665
  %9684 = vmatpush.msra.mxu0 %v9664
  %9685 = vmatmul.f32.gmra.mxu0 %v9667
  %v9686 = vpop.f32.mrf.mxu0
  %v9687 = vadd.f32 0.0, %v9686
  %9688 = vdwg.mxu0
  %v9689 = vadd.f32 %v9662, %v9687
  %s9690 = scalar_lea.vmem %s5, 144
  %v9691 = vld [vmem:[%s9690] sm:$0xff]
  %v9692 = vld [vmem:[%s9690 + $0x8] sm:$0xff]
  %v9694 = vsel %vm439, %v9410, 0
  %9696 = vmatpush.msra.mxu0 0.0
  %9697 = vmatpush.msra.mxu0 0.0
  %9698 = vmatpush.msra.mxu0 0.0
  %9699 = vmatpush.msra.mxu0 0.0
  %9700 = vmatpush.msra.mxu0 0.0
  %9701 = vmatpush.msra.mxu0 0.0
  %9702 = vmatpush.msra.mxu0 0.0
  %9703 = vmatpush.msra.mxu0 0.0
  %9704 = vmatpush.msra.mxu0 0.0
  %9705 = vmatpush.msra.mxu0 0.0
  %9706 = vmatpush.msra.mxu0 0.0
  %9707 = vmatpush.msra.mxu0 0.0
  %9708 = vmatpush.msra.mxu0 0.0
  %9709 = vmatpush.msra.mxu0 0.0
  %9710 = vmatpush.msra.mxu0 %v9692
  %9711 = vmatpush.msra.mxu0 %v9691
  %9712 = vmatmul.f32.gmra.mxu0 %v9694
  %v9713 = vpop.f32.mrf.mxu0
  %v9714 = vadd.f32 0.0, %v9713
  %9715 = vdwg.mxu0
  %v9716 = vadd.f32 %v9689, %v9714
  %s9717 = scalar_lea.vmem %s5, 160
  %v9718 = vld [vmem:[%s9717] sm:$0xff]
  %v9719 = vld [vmem:[%s9717 + $0x8] sm:$0xff]
  %v9721 = vsel %vm439, %v9411, 0
  %9723 = vmatpush.msra.mxu0 0.0
  %9724 = vmatpush.msra.mxu0 0.0
  %9725 = vmatpush.msra.mxu0 0.0
  %9726 = vmatpush.msra.mxu0 0.0
  %9727 = vmatpush.msra.mxu0 0.0
  %9728 = vmatpush.msra.mxu0 0.0
  %9729 = vmatpush.msra.mxu0 0.0
  %9730 = vmatpush.msra.mxu0 0.0
  %9731 = vmatpush.msra.mxu0 0.0
  %9732 = vmatpush.msra.mxu0 0.0
  %9733 = vmatpush.msra.mxu0 0.0
  %9734 = vmatpush.msra.mxu0 0.0
  %9735 = vmatpush.msra.mxu0 0.0
  %9736 = vmatpush.msra.mxu0 0.0
  %9737 = vmatpush.msra.mxu0 %v9719
  %9738 = vmatpush.msra.mxu0 %v9718
  %9739 = vmatmul.f32.gmra.mxu0 %v9721
  %v9740 = vpop.f32.mrf.mxu0
  %v9741 = vadd.f32 0.0, %v9740
  %9742 = vdwg.mxu0
  %v9743 = vadd.f32 %v9716, %v9741
  %s9744 = scalar_lea.vmem %s5, 176
  %v9745 = vld [vmem:[%s9744] sm:$0xff]
  %v9746 = vld [vmem:[%s9744 + $0x8] sm:$0xff]
  %v9748 = vsel %vm439, %v9412, 0
  %9750 = vmatpush.msra.mxu0 0.0
  %9751 = vmatpush.msra.mxu0 0.0
  %9752 = vmatpush.msra.mxu0 0.0
  %9753 = vmatpush.msra.mxu0 0.0
  %9754 = vmatpush.msra.mxu0 0.0
  %9755 = vmatpush.msra.mxu0 0.0
  %9756 = vmatpush.msra.mxu0 0.0
  %9757 = vmatpush.msra.mxu0 0.0
  %9758 = vmatpush.msra.mxu0 0.0
  %9759 = vmatpush.msra.mxu0 0.0
  %9760 = vmatpush.msra.mxu0 0.0
  %9761 = vmatpush.msra.mxu0 0.0
  %9762 = vmatpush.msra.mxu0 0.0
  %9763 = vmatpush.msra.mxu0 0.0
  %9764 = vmatpush.msra.mxu0 %v9746
  %9765 = vmatpush.msra.mxu0 %v9745
  %9766 = vmatmul.f32.gmra.mxu0 %v9748
  %v9767 = vpop.f32.mrf.mxu0
  %v9768 = vadd.f32 0.0, %v9767
  %9769 = vdwg.mxu0
  %v9770 = vadd.f32 %v9743, %v9768
  %s9771 = scalar_lea.vmem %s5, 192
  %v9772 = vld [vmem:[%s9771] sm:$0xff]
  %v9773 = vld [vmem:[%s9771 + $0x8] sm:$0xff]
  %v9775 = vsel %vm439, %v9413, 0
  %9777 = vmatpush.msra.mxu0 0.0
  %9778 = vmatpush.msra.mxu0 0.0
  %9779 = vmatpush.msra.mxu0 0.0
  %9780 = vmatpush.msra.mxu0 0.0
  %9781 = vmatpush.msra.mxu0 0.0
  %9782 = vmatpush.msra.mxu0 0.0
  %9783 = vmatpush.msra.mxu0 0.0
  %9784 = vmatpush.msra.mxu0 0.0
  %9785 = vmatpush.msra.mxu0 0.0
  %9786 = vmatpush.msra.mxu0 0.0
  %9787 = vmatpush.msra.mxu0 0.0
  %9788 = vmatpush.msra.mxu0 0.0
  %9789 = vmatpush.msra.mxu0 0.0
  %9790 = vmatpush.msra.mxu0 0.0
  %9791 = vmatpush.msra.mxu0 %v9773
  %9792 = vmatpush.msra.mxu0 %v9772
  %9793 = vmatmul.f32.gmra.mxu0 %v9775
  %v9794 = vpop.f32.mrf.mxu0
  %v9795 = vadd.f32 0.0, %v9794
  %9796 = vdwg.mxu0
  %v9797 = vadd.f32 %v9770, %v9795
  %s9798 = scalar_lea.vmem %s5, 208
  %v9799 = vld [vmem:[%s9798] sm:$0xff]
  %v9800 = vld [vmem:[%s9798 + $0x8] sm:$0xff]
  %v9802 = vsel %vm439, %v9414, 0
  %9804 = vmatpush.msra.mxu0 0.0
  %9805 = vmatpush.msra.mxu0 0.0
  %9806 = vmatpush.msra.mxu0 0.0
  %9807 = vmatpush.msra.mxu0 0.0
  %9808 = vmatpush.msra.mxu0 0.0
  %9809 = vmatpush.msra.mxu0 0.0
  %9810 = vmatpush.msra.mxu0 0.0
  %9811 = vmatpush.msra.mxu0 0.0
  %9812 = vmatpush.msra.mxu0 0.0
  %9813 = vmatpush.msra.mxu0 0.0
  %9814 = vmatpush.msra.mxu0 0.0
  %9815 = vmatpush.msra.mxu0 0.0
  %9816 = vmatpush.msra.mxu0 0.0
  %9817 = vmatpush.msra.mxu0 0.0
  %9818 = vmatpush.msra.mxu0 %v9800
  %9819 = vmatpush.msra.mxu0 %v9799
  %9820 = vmatmul.f32.gmra.mxu0 %v9802
  %v9821 = vpop.f32.mrf.mxu0
  %v9822 = vadd.f32 0.0, %v9821
  %9823 = vdwg.mxu0
  %v9824 = vadd.f32 %v9797, %v9822
  %s9825 = scalar_lea.vmem %s5, 224
  %v9826 = vld [vmem:[%s9825] sm:$0xff]
  %v9827 = vld [vmem:[%s9825 + $0x8] sm:$0xff]
  %v9829 = vsel %vm439, %v9415, 0
  %9831 = vmatpush.msra.mxu0 0.0
  %9832 = vmatpush.msra.mxu0 0.0
  %9833 = vmatpush.msra.mxu0 0.0
  %9834 = vmatpush.msra.mxu0 0.0
  %9835 = vmatpush.msra.mxu0 0.0
  %9836 = vmatpush.msra.mxu0 0.0
  %9837 = vmatpush.msra.mxu0 0.0
  %9838 = vmatpush.msra.mxu0 0.0
  %9839 = vmatpush.msra.mxu0 0.0
  %9840 = vmatpush.msra.mxu0 0.0
  %9841 = vmatpush.msra.mxu0 0.0
  %9842 = vmatpush.msra.mxu0 0.0
  %9843 = vmatpush.msra.mxu0 0.0
  %9844 = vmatpush.msra.mxu0 0.0
  %9845 = vmatpush.msra.mxu0 %v9827
  %9846 = vmatpush.msra.mxu0 %v9826
  %9847 = vmatmul.f32.gmra.mxu0 %v9829
  %v9848 = vpop.f32.mrf.mxu0
  %v9849 = vadd.f32 0.0, %v9848
  %9850 = vdwg.mxu0
  %v9851 = vadd.f32 %v9824, %v9849
  %s9852 = scalar_lea.vmem %s5, 240
  %v9853 = vld [vmem:[%s9852] sm:$0xff]
  %v9854 = vld [vmem:[%s9852 + $0x8] sm:$0xff]
  %v9856 = vsel %vm439, %v9416, 0
  %9858 = vmatpush.msra.mxu0 0.0
  %9859 = vmatpush.msra.mxu0 0.0
  %9860 = vmatpush.msra.mxu0 0.0
  %9861 = vmatpush.msra.mxu0 0.0
  %9862 = vmatpush.msra.mxu0 0.0
  %9863 = vmatpush.msra.mxu0 0.0
  %9864 = vmatpush.msra.mxu0 0.0
  %9865 = vmatpush.msra.mxu0 0.0
  %9866 = vmatpush.msra.mxu0 0.0
  %9867 = vmatpush.msra.mxu0 0.0
  %9868 = vmatpush.msra.mxu0 0.0
  %9869 = vmatpush.msra.mxu0 0.0
  %9870 = vmatpush.msra.mxu0 0.0
  %9871 = vmatpush.msra.mxu0 0.0
  %9872 = vmatpush.msra.mxu0 %v9854
  %9873 = vmatpush.msra.mxu0 %v9853
  %9874 = vmatmul.f32.gmra.mxu0 %v9856
  %v9875 = vpop.f32.mrf.mxu0
  %v9876 = vadd.f32 0.0, %v9875
  %9877 = vdwg.mxu0
  %v9878 = vadd.f32 %v9851, %v9876
  %s9879 = scalar_lea.vmem %s5, 256
  %v9880 = vld [vmem:[%s9879] sm:$0xff]
  %v9881 = vld [vmem:[%s9879 + $0x8] sm:$0xff]
  %v9883 = vsel %vm439, %v9417, 0
  %9885 = vmatpush.msra.mxu0 0.0
  %9886 = vmatpush.msra.mxu0 0.0
  %9887 = vmatpush.msra.mxu0 0.0
  %9888 = vmatpush.msra.mxu0 0.0
  %9889 = vmatpush.msra.mxu0 0.0
  %9890 = vmatpush.msra.mxu0 0.0
  %9891 = vmatpush.msra.mxu0 0.0
  %9892 = vmatpush.msra.mxu0 0.0
  %9893 = vmatpush.msra.mxu0 0.0
  %9894 = vmatpush.msra.mxu0 0.0
  %9895 = vmatpush.msra.mxu0 0.0
  %9896 = vmatpush.msra.mxu0 0.0
  %9897 = vmatpush.msra.mxu0 0.0
  %9898 = vmatpush.msra.mxu0 0.0
  %9899 = vmatpush.msra.mxu0 %v9881
  %9900 = vmatpush.msra.mxu0 %v9880
  %9901 = vmatmul.f32.gmra.mxu0 %v9883
  %v9902 = vpop.f32.mrf.mxu0
  %v9903 = vadd.f32 0.0, %v9902
  %9904 = vdwg.mxu0
  %v9905 = vadd.f32 %v9878, %v9903
  %s9906 = scalar_lea.vmem %s5, 272
  %v9907 = vld [vmem:[%s9906] sm:$0xff]
  %v9908 = vld [vmem:[%s9906 + $0x8] sm:$0xff]
  %v9910 = vsel %vm439, %v9418, 0
  %9912 = vmatpush.msra.mxu0 0.0
  %9913 = vmatpush.msra.mxu0 0.0
  %9914 = vmatpush.msra.mxu0 0.0
  %9915 = vmatpush.msra.mxu0 0.0
  %9916 = vmatpush.msra.mxu0 0.0
  %9917 = vmatpush.msra.mxu0 0.0
  %9918 = vmatpush.msra.mxu0 0.0
  %9919 = vmatpush.msra.mxu0 0.0
  %9920 = vmatpush.msra.mxu0 0.0
  %9921 = vmatpush.msra.mxu0 0.0
  %9922 = vmatpush.msra.mxu0 0.0
  %9923 = vmatpush.msra.mxu0 0.0
  %9924 = vmatpush.msra.mxu0 0.0
  %9925 = vmatpush.msra.mxu0 0.0
  %9926 = vmatpush.msra.mxu0 %v9908
  %9927 = vmatpush.msra.mxu0 %v9907
  %9928 = vmatmul.f32.gmra.mxu0 %v9910
  %v9929 = vpop.f32.mrf.mxu0
  %v9930 = vadd.f32 0.0, %v9929
  %9931 = vdwg.mxu0
  %v9932 = vadd.f32 %v9905, %v9930
  %s9933 = scalar_lea.vmem %s5, 288
  %v9934 = vld [vmem:[%s9933] sm:$0xff]
  %v9935 = vld [vmem:[%s9933 + $0x8] sm:$0xff]
  %v9937 = vsel %vm439, %v9419, 0
  %9939 = vmatpush.msra.mxu0 0.0
  %9940 = vmatpush.msra.mxu0 0.0
  %9941 = vmatpush.msra.mxu0 0.0
  %9942 = vmatpush.msra.mxu0 0.0
  %9943 = vmatpush.msra.mxu0 0.0
  %9944 = vmatpush.msra.mxu0 0.0
  %9945 = vmatpush.msra.mxu0 0.0
  %9946 = vmatpush.msra.mxu0 0.0
  %9947 = vmatpush.msra.mxu0 0.0
  %9948 = vmatpush.msra.mxu0 0.0
  %9949 = vmatpush.msra.mxu0 0.0
  %9950 = vmatpush.msra.mxu0 0.0
  %9951 = vmatpush.msra.mxu0 0.0
  %9952 = vmatpush.msra.mxu0 0.0
  %9953 = vmatpush.msra.mxu0 %v9935
  %9954 = vmatpush.msra.mxu0 %v9934
  %9955 = vmatmul.f32.gmra.mxu0 %v9937
  %v9956 = vpop.f32.mrf.mxu0
  %v9957 = vadd.f32 0.0, %v9956
  %9958 = vdwg.mxu0
  %v9959 = vadd.f32 %v9932, %v9957
  %s9960 = scalar_lea.vmem %s5, 304
  %v9961 = vld [vmem:[%s9960] sm:$0xff]
  %v9962 = vld [vmem:[%s9960 + $0x8] sm:$0xff]
  %v9964 = vsel %vm439, %v9420, 0
  %9966 = vmatpush.msra.mxu0 0.0
  %9967 = vmatpush.msra.mxu0 0.0
  %9968 = vmatpush.msra.mxu0 0.0
  %9969 = vmatpush.msra.mxu0 0.0
  %9970 = vmatpush.msra.mxu0 0.0
  %9971 = vmatpush.msra.mxu0 0.0
  %9972 = vmatpush.msra.mxu0 0.0
  %9973 = vmatpush.msra.mxu0 0.0
  %9974 = vmatpush.msra.mxu0 0.0
  %9975 = vmatpush.msra.mxu0 0.0
  %9976 = vmatpush.msra.mxu0 0.0
  %9977 = vmatpush.msra.mxu0 0.0
  %9978 = vmatpush.msra.mxu0 0.0
  %9979 = vmatpush.msra.mxu0 0.0
  %9980 = vmatpush.msra.mxu0 %v9962
  %9981 = vmatpush.msra.mxu0 %v9961
  %9982 = vmatmul.f32.gmra.mxu0 %v9964
  %v9983 = vpop.f32.mrf.mxu0
  %v9984 = vadd.f32 0.0, %v9983
  %9985 = vdwg.mxu0
  %v9986 = vadd.f32 %v9959, %v9984
  %s9987 = scalar_lea.vmem %s5, 320
  %v9988 = vld [vmem:[%s9987] sm:$0xff]
  %v9989 = vld [vmem:[%s9987 + $0x8] sm:$0xff]
  %v9991 = vsel %vm439, %v9421, 0
  %9993 = vmatpush.msra.mxu0 0.0
  %9994 = vmatpush.msra.mxu0 0.0
  %9995 = vmatpush.msra.mxu0 0.0
  %9996 = vmatpush.msra.mxu0 0.0
  %9997 = vmatpush.msra.mxu0 0.0
  %9998 = vmatpush.msra.mxu0 0.0
  %9999 = vmatpush.msra.mxu0 0.0
  %10000 = vmatpush.msra.mxu0 0.0
  %10001 = vmatpush.msra.mxu0 0.0
  %10002 = vmatpush.msra.mxu0 0.0
  %10003 = vmatpush.msra.mxu0 0.0
  %10004 = vmatpush.msra.mxu0 0.0
  %10005 = vmatpush.msra.mxu0 0.0
  %10006 = vmatpush.msra.mxu0 0.0
  %10007 = vmatpush.msra.mxu0 %v9989
  %10008 = vmatpush.msra.mxu0 %v9988
  %10009 = vmatmul.f32.gmra.mxu0 %v9991
  %v10010 = vpop.f32.mrf.mxu0
  %v10011 = vadd.f32 0.0, %v10010
  %10012 = vdwg.mxu0
  %v10013 = vadd.f32 %v9986, %v10011
  %s10014 = scalar_lea.vmem %s5, 336
  %v10015 = vld [vmem:[%s10014] sm:$0xff]
  %v10016 = vld [vmem:[%s10014 + $0x8] sm:$0xff]
  %v10018 = vsel %vm439, %v9422, 0
  %10020 = vmatpush.msra.mxu0 0.0
  %10021 = vmatpush.msra.mxu0 0.0
  %10022 = vmatpush.msra.mxu0 0.0
  %10023 = vmatpush.msra.mxu0 0.0
  %10024 = vmatpush.msra.mxu0 0.0
  %10025 = vmatpush.msra.mxu0 0.0
  %10026 = vmatpush.msra.mxu0 0.0
  %10027 = vmatpush.msra.mxu0 0.0
  %10028 = vmatpush.msra.mxu0 0.0
  %10029 = vmatpush.msra.mxu0 0.0
  %10030 = vmatpush.msra.mxu0 0.0
  %10031 = vmatpush.msra.mxu0 0.0
  %10032 = vmatpush.msra.mxu0 0.0
  %10033 = vmatpush.msra.mxu0 0.0
  %10034 = vmatpush.msra.mxu0 %v10016
  %10035 = vmatpush.msra.mxu0 %v10015
  %10036 = vmatmul.f32.gmra.mxu0 %v10018
  %v10037 = vpop.f32.mrf.mxu0
  %v10038 = vadd.f32 0.0, %v10037
  %10039 = vdwg.mxu0
  %v10040 = vadd.f32 %v10013, %v10038
  %s10041 = scalar_lea.vmem %s5, 352
  %v10042 = vld [vmem:[%s10041] sm:$0xff]
  %v10043 = vld [vmem:[%s10041 + $0x8] sm:$0xff]
  %v10045 = vsel %vm439, %v9423, 0
  %10047 = vmatpush.msra.mxu0 0.0
  %10048 = vmatpush.msra.mxu0 0.0
  %10049 = vmatpush.msra.mxu0 0.0
  %10050 = vmatpush.msra.mxu0 0.0
  %10051 = vmatpush.msra.mxu0 0.0
  %10052 = vmatpush.msra.mxu0 0.0
  %10053 = vmatpush.msra.mxu0 0.0
  %10054 = vmatpush.msra.mxu0 0.0
  %10055 = vmatpush.msra.mxu0 0.0
  %10056 = vmatpush.msra.mxu0 0.0
  %10057 = vmatpush.msra.mxu0 0.0
  %10058 = vmatpush.msra.mxu0 0.0
  %10059 = vmatpush.msra.mxu0 0.0
  %10060 = vmatpush.msra.mxu0 0.0
  %10061 = vmatpush.msra.mxu0 %v10043
  %10062 = vmatpush.msra.mxu0 %v10042
  %10063 = vmatmul.f32.gmra.mxu0 %v10045
  %v10064 = vpop.f32.mrf.mxu0
  %v10065 = vadd.f32 0.0, %v10064
  %10066 = vdwg.mxu0
  %v10067 = vadd.f32 %v10040, %v10065
  %s10068 = scalar_lea.vmem %s5, 368
  %v10069 = vld [vmem:[%s10068] sm:$0xff]
  %v10070 = vld [vmem:[%s10068 + $0x8] sm:$0xff]
  %v10072 = vsel %vm439, %v9424, 0
  %10074 = vmatpush.msra.mxu0 0.0
  %10075 = vmatpush.msra.mxu0 0.0
  %10076 = vmatpush.msra.mxu0 0.0
  %10077 = vmatpush.msra.mxu0 0.0
  %10078 = vmatpush.msra.mxu0 0.0
  %10079 = vmatpush.msra.mxu0 0.0
  %10080 = vmatpush.msra.mxu0 0.0
  %10081 = vmatpush.msra.mxu0 0.0
  %10082 = vmatpush.msra.mxu0 0.0
  %10083 = vmatpush.msra.mxu0 0.0
  %10084 = vmatpush.msra.mxu0 0.0
  %10085 = vmatpush.msra.mxu0 0.0
  %10086 = vmatpush.msra.mxu0 0.0
  %10087 = vmatpush.msra.mxu0 0.0
  %10088 = vmatpush.msra.mxu0 %v10070
  %10089 = vmatpush.msra.mxu0 %v10069
  %10090 = vmatmul.f32.gmra.mxu0 %v10072
  %v10091 = vpop.f32.mrf.mxu0
  %v10092 = vadd.f32 0.0, %v10091
  %10093 = vdwg.mxu0
  %v10094 = vadd.f32 %v10067, %v10092
  %s10095 = scalar_lea.vmem %s5, 384
  %v10096 = vld [vmem:[%s10095] sm:$0xff]
  %v10097 = vld [vmem:[%s10095 + $0x8] sm:$0xff]
  %v10099 = vsel %vm439, %v9425, 0
  %10101 = vmatpush.msra.mxu0 0.0
  %10102 = vmatpush.msra.mxu0 0.0
  %10103 = vmatpush.msra.mxu0 0.0
  %10104 = vmatpush.msra.mxu0 0.0
  %10105 = vmatpush.msra.mxu0 0.0
  %10106 = vmatpush.msra.mxu0 0.0
  %10107 = vmatpush.msra.mxu0 0.0
  %10108 = vmatpush.msra.mxu0 0.0
  %10109 = vmatpush.msra.mxu0 0.0
  %10110 = vmatpush.msra.mxu0 0.0
  %10111 = vmatpush.msra.mxu0 0.0
  %10112 = vmatpush.msra.mxu0 0.0
  %10113 = vmatpush.msra.mxu0 0.0
  %10114 = vmatpush.msra.mxu0 0.0
  %10115 = vmatpush.msra.mxu0 %v10097
  %10116 = vmatpush.msra.mxu0 %v10096
  %10117 = vmatmul.f32.gmra.mxu0 %v10099
  %v10118 = vpop.f32.mrf.mxu0
  %v10119 = vadd.f32 0.0, %v10118
  %10120 = vdwg.mxu0
  %v10121 = vadd.f32 %v10094, %v10119
  %s10122 = scalar_lea.vmem %s5, 400
  %v10123 = vld [vmem:[%s10122] sm:$0xff]
  %v10124 = vld [vmem:[%s10122 + $0x8] sm:$0xff]
  %v10126 = vsel %vm439, %v9426, 0
  %10128 = vmatpush.msra.mxu0 0.0
  %10129 = vmatpush.msra.mxu0 0.0
  %10130 = vmatpush.msra.mxu0 0.0
  %10131 = vmatpush.msra.mxu0 0.0
  %10132 = vmatpush.msra.mxu0 0.0
  %10133 = vmatpush.msra.mxu0 0.0
  %10134 = vmatpush.msra.mxu0 0.0
  %10135 = vmatpush.msra.mxu0 0.0
  %10136 = vmatpush.msra.mxu0 0.0
  %10137 = vmatpush.msra.mxu0 0.0
  %10138 = vmatpush.msra.mxu0 0.0
  %10139 = vmatpush.msra.mxu0 0.0
  %10140 = vmatpush.msra.mxu0 0.0
  %10141 = vmatpush.msra.mxu0 0.0
  %10142 = vmatpush.msra.mxu0 %v10124
  %10143 = vmatpush.msra.mxu0 %v10123
  %10144 = vmatmul.f32.gmra.mxu0 %v10126
  %v10145 = vpop.f32.mrf.mxu0
  %v10146 = vadd.f32 0.0, %v10145
  %10147 = vdwg.mxu0
  %v10148 = vadd.f32 %v10121, %v10146
  %s10149 = scalar_lea.vmem %s5, 416
  %v10150 = vld [vmem:[%s10149] sm:$0xff]
  %v10151 = vld [vmem:[%s10149 + $0x8] sm:$0xff]
  %v10153 = vsel %vm439, %v9427, 0
  %10155 = vmatpush.msra.mxu0 0.0
  %10156 = vmatpush.msra.mxu0 0.0
  %10157 = vmatpush.msra.mxu0 0.0
  %10158 = vmatpush.msra.mxu0 0.0
  %10159 = vmatpush.msra.mxu0 0.0
  %10160 = vmatpush.msra.mxu0 0.0
  %10161 = vmatpush.msra.mxu0 0.0
  %10162 = vmatpush.msra.mxu0 0.0
  %10163 = vmatpush.msra.mxu0 0.0
  %10164 = vmatpush.msra.mxu0 0.0
  %10165 = vmatpush.msra.mxu0 0.0
  %10166 = vmatpush.msra.mxu0 0.0
  %10167 = vmatpush.msra.mxu0 0.0
  %10168 = vmatpush.msra.mxu0 0.0
  %10169 = vmatpush.msra.mxu0 %v10151
  %10170 = vmatpush.msra.mxu0 %v10150
  %10171 = vmatmul.f32.gmra.mxu0 %v10153
  %v10172 = vpop.f32.mrf.mxu0
  %v10173 = vadd.f32 0.0, %v10172
  %10174 = vdwg.mxu0
  %v10175 = vadd.f32 %v10148, %v10173
  %s10176 = scalar_lea.vmem %s5, 432
  %v10177 = vld [vmem:[%s10176] sm:$0xff]
  %v10178 = vld [vmem:[%s10176 + $0x8] sm:$0xff]
  %v10180 = vsel %vm439, %v9428, 0
  %10182 = vmatpush.msra.mxu0 0.0
  %10183 = vmatpush.msra.mxu0 0.0
  %10184 = vmatpush.msra.mxu0 0.0
  %10185 = vmatpush.msra.mxu0 0.0
  %10186 = vmatpush.msra.mxu0 0.0
  %10187 = vmatpush.msra.mxu0 0.0
  %10188 = vmatpush.msra.mxu0 0.0
  %10189 = vmatpush.msra.mxu0 0.0
  %10190 = vmatpush.msra.mxu0 0.0
  %10191 = vmatpush.msra.mxu0 0.0
  %10192 = vmatpush.msra.mxu0 0.0
  %10193 = vmatpush.msra.mxu0 0.0
  %10194 = vmatpush.msra.mxu0 0.0
  %10195 = vmatpush.msra.mxu0 0.0
  %10196 = vmatpush.msra.mxu0 %v10178
  %10197 = vmatpush.msra.mxu0 %v10177
  %10198 = vmatmul.f32.gmra.mxu0 %v10180
  %v10199 = vpop.f32.mrf.mxu0
  %v10200 = vadd.f32 0.0, %v10199
  %10201 = vdwg.mxu0
  %v10202 = vadd.f32 %v10175, %v10200
  %s10203 = scalar_lea.vmem %s5, 448
  %v10204 = vld [vmem:[%s10203] sm:$0xff]
  %v10205 = vld [vmem:[%s10203 + $0x8] sm:$0xff]
  %v10207 = vsel %vm439, %v9429, 0
  %10209 = vmatpush.msra.mxu0 0.0
  %10210 = vmatpush.msra.mxu0 0.0
  %10211 = vmatpush.msra.mxu0 0.0
  %10212 = vmatpush.msra.mxu0 0.0
  %10213 = vmatpush.msra.mxu0 0.0
  %10214 = vmatpush.msra.mxu0 0.0
  %10215 = vmatpush.msra.mxu0 0.0
  %10216 = vmatpush.msra.mxu0 0.0
  %10217 = vmatpush.msra.mxu0 0.0
  %10218 = vmatpush.msra.mxu0 0.0
  %10219 = vmatpush.msra.mxu0 0.0
  %10220 = vmatpush.msra.mxu0 0.0
  %10221 = vmatpush.msra.mxu0 0.0
  %10222 = vmatpush.msra.mxu0 0.0
  %10223 = vmatpush.msra.mxu0 %v10205
  %10224 = vmatpush.msra.mxu0 %v10204
  %10225 = vmatmul.f32.gmra.mxu0 %v10207
  %v10226 = vpop.f32.mrf.mxu0
  %v10227 = vadd.f32 0.0, %v10226
  %10228 = vdwg.mxu0
  %v10229 = vadd.f32 %v10202, %v10227
  %s10230 = scalar_lea.vmem %s5, 464
  %v10231 = vld [vmem:[%s10230] sm:$0xff]
  %v10232 = vld [vmem:[%s10230 + $0x8] sm:$0xff]
  %v10234 = vsel %vm439, %v9430, 0
  %10236 = vmatpush.msra.mxu0 0.0
  %10237 = vmatpush.msra.mxu0 0.0
  %10238 = vmatpush.msra.mxu0 0.0
  %10239 = vmatpush.msra.mxu0 0.0
  %10240 = vmatpush.msra.mxu0 0.0
  %10241 = vmatpush.msra.mxu0 0.0
  %10242 = vmatpush.msra.mxu0 0.0
  %10243 = vmatpush.msra.mxu0 0.0
  %10244 = vmatpush.msra.mxu0 0.0
  %10245 = vmatpush.msra.mxu0 0.0
  %10246 = vmatpush.msra.mxu0 0.0
  %10247 = vmatpush.msra.mxu0 0.0
  %10248 = vmatpush.msra.mxu0 0.0
  %10249 = vmatpush.msra.mxu0 0.0
  %10250 = vmatpush.msra.mxu0 %v10232
  %10251 = vmatpush.msra.mxu0 %v10231
  %10252 = vmatmul.f32.gmra.mxu0 %v10234
  %v10253 = vpop.f32.mrf.mxu0
  %v10254 = vadd.f32 0.0, %v10253
  %10255 = vdwg.mxu0
  %v10256 = vadd.f32 %v10229, %v10254
  %s10257 = scalar_lea.vmem %s5, 480
  %v10258 = vld [vmem:[%s10257] sm:$0xff]
  %v10259 = vld [vmem:[%s10257 + $0x8] sm:$0xff]
  %v10261 = vsel %vm439, %v9431, 0
  %10263 = vmatpush.msra.mxu0 0.0
  %10264 = vmatpush.msra.mxu0 0.0
  %10265 = vmatpush.msra.mxu0 0.0
  %10266 = vmatpush.msra.mxu0 0.0
  %10267 = vmatpush.msra.mxu0 0.0
  %10268 = vmatpush.msra.mxu0 0.0
  %10269 = vmatpush.msra.mxu0 0.0
  %10270 = vmatpush.msra.mxu0 0.0
  %10271 = vmatpush.msra.mxu0 0.0
  %10272 = vmatpush.msra.mxu0 0.0
  %10273 = vmatpush.msra.mxu0 0.0
  %10274 = vmatpush.msra.mxu0 0.0
  %10275 = vmatpush.msra.mxu0 0.0
  %10276 = vmatpush.msra.mxu0 0.0
  %10277 = vmatpush.msra.mxu0 %v10259
  %10278 = vmatpush.msra.mxu0 %v10258
  %10279 = vmatmul.f32.gmra.mxu0 %v10261
  %v10280 = vpop.f32.mrf.mxu0
  %v10281 = vadd.f32 0.0, %v10280
  %10282 = vdwg.mxu0
  %v10283 = vadd.f32 %v10256, %v10281
  %s10284 = scalar_lea.vmem %s5, 496
  %v10285 = vld [vmem:[%s10284] sm:$0xff]
  %v10286 = vld [vmem:[%s10284 + $0x8] sm:$0xff]
  %v10288 = vsel %vm439, %v9432, 0
  %10290 = vmatpush.msra.mxu0 0.0
  %10291 = vmatpush.msra.mxu0 0.0
  %10292 = vmatpush.msra.mxu0 0.0
  %10293 = vmatpush.msra.mxu0 0.0
  %10294 = vmatpush.msra.mxu0 0.0
  %10295 = vmatpush.msra.mxu0 0.0
  %10296 = vmatpush.msra.mxu0 0.0
  %10297 = vmatpush.msra.mxu0 0.0
  %10298 = vmatpush.msra.mxu0 0.0
  %10299 = vmatpush.msra.mxu0 0.0
  %10300 = vmatpush.msra.mxu0 0.0
  %10301 = vmatpush.msra.mxu0 0.0
  %10302 = vmatpush.msra.mxu0 0.0
  %10303 = vmatpush.msra.mxu0 0.0
  %10304 = vmatpush.msra.mxu0 %v10286
  %10305 = vmatpush.msra.mxu0 %v10285
  %10306 = vmatmul.f32.gmra.mxu0 %v10288
  %v10307 = vpop.f32.mrf.mxu0
  %v10308 = vadd.f32 0.0, %v10307
  %10309 = vdwg.mxu0
  %v10310 = vadd.f32 %v10283, %v10308
  %s10311 = scalar_lea.vmem %s5, 512
  %v10312 = vld [vmem:[%s10311] sm:$0xff]
  %v10313 = vld [vmem:[%s10311 + $0x8] sm:$0xff]
  %v10315 = vsel %vm439, %v9433, 0
  %10317 = vmatpush.msra.mxu0 0.0
  %10318 = vmatpush.msra.mxu0 0.0
  %10319 = vmatpush.msra.mxu0 0.0
  %10320 = vmatpush.msra.mxu0 0.0
  %10321 = vmatpush.msra.mxu0 0.0
  %10322 = vmatpush.msra.mxu0 0.0
  %10323 = vmatpush.msra.mxu0 0.0
  %10324 = vmatpush.msra.mxu0 0.0
  %10325 = vmatpush.msra.mxu0 0.0
  %10326 = vmatpush.msra.mxu0 0.0
  %10327 = vmatpush.msra.mxu0 0.0
  %10328 = vmatpush.msra.mxu0 0.0
  %10329 = vmatpush.msra.mxu0 0.0
  %10330 = vmatpush.msra.mxu0 0.0
  %10331 = vmatpush.msra.mxu0 %v10313
  %10332 = vmatpush.msra.mxu0 %v10312
  %10333 = vmatmul.f32.gmra.mxu0 %v10315
  %v10334 = vpop.f32.mrf.mxu0
  %v10335 = vadd.f32 0.0, %v10334
  %10336 = vdwg.mxu0
  %v10337 = vadd.f32 %v10310, %v10335
  %s10338 = scalar_lea.vmem %s5, 528
  %v10339 = vld [vmem:[%s10338] sm:$0xff]
  %v10340 = vld [vmem:[%s10338 + $0x8] sm:$0xff]
  %v10342 = vsel %vm439, %v9434, 0
  %10344 = vmatpush.msra.mxu0 0.0
  %10345 = vmatpush.msra.mxu0 0.0
  %10346 = vmatpush.msra.mxu0 0.0
  %10347 = vmatpush.msra.mxu0 0.0
  %10348 = vmatpush.msra.mxu0 0.0
  %10349 = vmatpush.msra.mxu0 0.0
  %10350 = vmatpush.msra.mxu0 0.0
  %10351 = vmatpush.msra.mxu0 0.0
  %10352 = vmatpush.msra.mxu0 0.0
  %10353 = vmatpush.msra.mxu0 0.0
  %10354 = vmatpush.msra.mxu0 0.0
  %10355 = vmatpush.msra.mxu0 0.0
  %10356 = vmatpush.msra.mxu0 0.0
  %10357 = vmatpush.msra.mxu0 0.0
  %10358 = vmatpush.msra.mxu0 %v10340
  %10359 = vmatpush.msra.mxu0 %v10339
  %10360 = vmatmul.f32.gmra.mxu0 %v10342
  %v10361 = vpop.f32.mrf.mxu0
  %v10362 = vadd.f32 0.0, %v10361
  %10363 = vdwg.mxu0
  %v10364 = vadd.f32 %v10337, %v10362
  %s10365 = scalar_lea.vmem %s5, 544
  %v10366 = vld [vmem:[%s10365] sm:$0xff]
  %v10367 = vld [vmem:[%s10365 + $0x8] sm:$0xff]
  %v10369 = vsel %vm439, %v9435, 0
  %10371 = vmatpush.msra.mxu0 0.0
  %10372 = vmatpush.msra.mxu0 0.0
  %10373 = vmatpush.msra.mxu0 0.0
  %10374 = vmatpush.msra.mxu0 0.0
  %10375 = vmatpush.msra.mxu0 0.0
  %10376 = vmatpush.msra.mxu0 0.0
  %10377 = vmatpush.msra.mxu0 0.0
  %10378 = vmatpush.msra.mxu0 0.0
  %10379 = vmatpush.msra.mxu0 0.0
  %10380 = vmatpush.msra.mxu0 0.0
  %10381 = vmatpush.msra.mxu0 0.0
  %10382 = vmatpush.msra.mxu0 0.0
  %10383 = vmatpush.msra.mxu0 0.0
  %10384 = vmatpush.msra.mxu0 0.0
  %10385 = vmatpush.msra.mxu0 %v10367
  %10386 = vmatpush.msra.mxu0 %v10366
  %10387 = vmatmul.f32.gmra.mxu0 %v10369
  %v10388 = vpop.f32.mrf.mxu0
  %v10389 = vadd.f32 0.0, %v10388
  %10390 = vdwg.mxu0
  %v10391 = vadd.f32 %v10364, %v10389
  %s10392 = scalar_lea.vmem %s5, 560
  %v10393 = vld [vmem:[%s10392] sm:$0xff]
  %v10394 = vld [vmem:[%s10392 + $0x8] sm:$0xff]
  %v10396 = vsel %vm439, %v9436, 0
  %10398 = vmatpush.msra.mxu0 0.0
  %10399 = vmatpush.msra.mxu0 0.0
  %10400 = vmatpush.msra.mxu0 0.0
  %10401 = vmatpush.msra.mxu0 0.0
  %10402 = vmatpush.msra.mxu0 0.0
  %10403 = vmatpush.msra.mxu0 0.0
  %10404 = vmatpush.msra.mxu0 0.0
  %10405 = vmatpush.msra.mxu0 0.0
  %10406 = vmatpush.msra.mxu0 0.0
  %10407 = vmatpush.msra.mxu0 0.0
  %10408 = vmatpush.msra.mxu0 0.0
  %10409 = vmatpush.msra.mxu0 0.0
  %10410 = vmatpush.msra.mxu0 0.0
  %10411 = vmatpush.msra.mxu0 0.0
  %10412 = vmatpush.msra.mxu0 %v10394
  %10413 = vmatpush.msra.mxu0 %v10393
  %10414 = vmatmul.f32.gmra.mxu0 %v10396
  %v10415 = vpop.f32.mrf.mxu0
  %v10416 = vadd.f32 0.0, %v10415
  %10417 = vdwg.mxu0
  %v10418 = vadd.f32 %v10391, %v10416
  %s10419 = scalar_lea.vmem %s5, 576
  %v10420 = vld [vmem:[%s10419] sm:$0xff]
  %v10421 = vld [vmem:[%s10419 + $0x8] sm:$0xff]
  %v10423 = vsel %vm439, %v9437, 0
  %10425 = vmatpush.msra.mxu0 0.0
  %10426 = vmatpush.msra.mxu0 0.0
  %10427 = vmatpush.msra.mxu0 0.0
  %10428 = vmatpush.msra.mxu0 0.0
  %10429 = vmatpush.msra.mxu0 0.0
  %10430 = vmatpush.msra.mxu0 0.0
  %10431 = vmatpush.msra.mxu0 0.0
  %10432 = vmatpush.msra.mxu0 0.0
  %10433 = vmatpush.msra.mxu0 0.0
  %10434 = vmatpush.msra.mxu0 0.0
  %10435 = vmatpush.msra.mxu0 0.0
  %10436 = vmatpush.msra.mxu0 0.0
  %10437 = vmatpush.msra.mxu0 0.0
  %10438 = vmatpush.msra.mxu0 0.0
  %10439 = vmatpush.msra.mxu0 %v10421
  %10440 = vmatpush.msra.mxu0 %v10420
  %10441 = vmatmul.f32.gmra.mxu0 %v10423
  %v10442 = vpop.f32.mrf.mxu0
  %v10443 = vadd.f32 0.0, %v10442
  %10444 = vdwg.mxu0
  %v10445 = vadd.f32 %v10418, %v10443
  %s10446 = scalar_lea.vmem %s5, 592
  %v10447 = vld [vmem:[%s10446] sm:$0xff]
  %v10448 = vld [vmem:[%s10446 + $0x8] sm:$0xff]
  %v10450 = vsel %vm439, %v9438, 0
  %10452 = vmatpush.msra.mxu0 0.0
  %10453 = vmatpush.msra.mxu0 0.0
  %10454 = vmatpush.msra.mxu0 0.0
  %10455 = vmatpush.msra.mxu0 0.0
  %10456 = vmatpush.msra.mxu0 0.0
  %10457 = vmatpush.msra.mxu0 0.0
  %10458 = vmatpush.msra.mxu0 0.0
  %10459 = vmatpush.msra.mxu0 0.0
  %10460 = vmatpush.msra.mxu0 0.0
  %10461 = vmatpush.msra.mxu0 0.0
  %10462 = vmatpush.msra.mxu0 0.0
  %10463 = vmatpush.msra.mxu0 0.0
  %10464 = vmatpush.msra.mxu0 0.0
  %10465 = vmatpush.msra.mxu0 0.0
  %10466 = vmatpush.msra.mxu0 %v10448
  %10467 = vmatpush.msra.mxu0 %v10447
  %10468 = vmatmul.f32.gmra.mxu0 %v10450
  %v10469 = vpop.f32.mrf.mxu0
  %v10470 = vadd.f32 0.0, %v10469
  %10471 = vdwg.mxu0
  %v10472 = vadd.f32 %v10445, %v10470
  %s10473 = scalar_lea.vmem %s5, 608
  %v10474 = vld [vmem:[%s10473] sm:$0xff]
  %v10475 = vld [vmem:[%s10473 + $0x8] sm:$0xff]
  %v10477 = vsel %vm439, %v9439, 0
  %10479 = vmatpush.msra.mxu0 0.0
  %10480 = vmatpush.msra.mxu0 0.0
  %10481 = vmatpush.msra.mxu0 0.0
  %10482 = vmatpush.msra.mxu0 0.0
  %10483 = vmatpush.msra.mxu0 0.0
  %10484 = vmatpush.msra.mxu0 0.0
  %10485 = vmatpush.msra.mxu0 0.0
  %10486 = vmatpush.msra.mxu0 0.0
  %10487 = vmatpush.msra.mxu0 0.0
  %10488 = vmatpush.msra.mxu0 0.0
  %10489 = vmatpush.msra.mxu0 0.0
  %10490 = vmatpush.msra.mxu0 0.0
  %10491 = vmatpush.msra.mxu0 0.0
  %10492 = vmatpush.msra.mxu0 0.0
  %10493 = vmatpush.msra.mxu0 %v10475
  %10494 = vmatpush.msra.mxu0 %v10474
  %10495 = vmatmul.f32.gmra.mxu0 %v10477
  %v10496 = vpop.f32.mrf.mxu0
  %v10497 = vadd.f32 0.0, %v10496
  %10498 = vdwg.mxu0
  %v10499 = vadd.f32 %v10472, %v10497
  %s10500 = scalar_lea.vmem %s5, 624
  %v10501 = vld [vmem:[%s10500] sm:$0xff]
  %v10502 = vld [vmem:[%s10500 + $0x8] sm:$0xff]
  %v10504 = vsel %vm439, %v9440, 0
  %10506 = vmatpush.msra.mxu0 0.0
  %10507 = vmatpush.msra.mxu0 0.0
  %10508 = vmatpush.msra.mxu0 0.0
  %10509 = vmatpush.msra.mxu0 0.0
  %10510 = vmatpush.msra.mxu0 0.0
  %10511 = vmatpush.msra.mxu0 0.0
  %10512 = vmatpush.msra.mxu0 0.0
  %10513 = vmatpush.msra.mxu0 0.0
  %10514 = vmatpush.msra.mxu0 0.0
  %10515 = vmatpush.msra.mxu0 0.0
  %10516 = vmatpush.msra.mxu0 0.0
  %10517 = vmatpush.msra.mxu0 0.0
  %10518 = vmatpush.msra.mxu0 0.0
  %10519 = vmatpush.msra.mxu0 0.0
  %10520 = vmatpush.msra.mxu0 %v10502
  %10521 = vmatpush.msra.mxu0 %v10501
  %10522 = vmatmul.f32.gmra.mxu0 %v10504
  %v10523 = vpop.f32.mrf.mxu0
  %v10524 = vadd.f32 0.0, %v10523
  %10525 = vdwg.mxu0
  %v10526 = vadd.f32 %v10499, %v10524
  %s10527 = scalar_lea.vmem %s5, 640
  %v10528 = vld [vmem:[%s10527] sm:$0xff]
  %v10529 = vld [vmem:[%s10527 + $0x8] sm:$0xff]
  %v10531 = vsel %vm439, %v9441, 0
  %10533 = vmatpush.msra.mxu0 0.0
  %10534 = vmatpush.msra.mxu0 0.0
  %10535 = vmatpush.msra.mxu0 0.0
  %10536 = vmatpush.msra.mxu0 0.0
  %10537 = vmatpush.msra.mxu0 0.0
  %10538 = vmatpush.msra.mxu0 0.0
  %10539 = vmatpush.msra.mxu0 0.0
  %10540 = vmatpush.msra.mxu0 0.0
  %10541 = vmatpush.msra.mxu0 0.0
  %10542 = vmatpush.msra.mxu0 0.0
  %10543 = vmatpush.msra.mxu0 0.0
  %10544 = vmatpush.msra.mxu0 0.0
  %10545 = vmatpush.msra.mxu0 0.0
  %10546 = vmatpush.msra.mxu0 0.0
  %10547 = vmatpush.msra.mxu0 %v10529
  %10548 = vmatpush.msra.mxu0 %v10528
  %10549 = vmatmul.f32.gmra.mxu0 %v10531
  %v10550 = vpop.f32.mrf.mxu0
  %v10551 = vadd.f32 0.0, %v10550
  %10552 = vdwg.mxu0
  %v10553 = vadd.f32 %v10526, %v10551
  %s10554 = scalar_lea.vmem %s5, 656
  %v10555 = vld [vmem:[%s10554] sm:$0xff]
  %v10556 = vld [vmem:[%s10554 + $0x8] sm:$0xff]
  %v10558 = vsel %vm439, %v9442, 0
  %10560 = vmatpush.msra.mxu0 0.0
  %10561 = vmatpush.msra.mxu0 0.0
  %10562 = vmatpush.msra.mxu0 0.0
  %10563 = vmatpush.msra.mxu0 0.0
  %10564 = vmatpush.msra.mxu0 0.0
  %10565 = vmatpush.msra.mxu0 0.0
  %10566 = vmatpush.msra.mxu0 0.0
  %10567 = vmatpush.msra.mxu0 0.0
  %10568 = vmatpush.msra.mxu0 0.0
  %10569 = vmatpush.msra.mxu0 0.0
  %10570 = vmatpush.msra.mxu0 0.0
  %10571 = vmatpush.msra.mxu0 0.0
  %10572 = vmatpush.msra.mxu0 0.0
  %10573 = vmatpush.msra.mxu0 0.0
  %10574 = vmatpush.msra.mxu0 %v10556
  %10575 = vmatpush.msra.mxu0 %v10555
  %10576 = vmatmul.f32.gmra.mxu0 %v10558
  %v10577 = vpop.f32.mrf.mxu0
  %v10578 = vadd.f32 0.0, %v10577
  %10579 = vdwg.mxu0
  %v10580 = vadd.f32 %v10553, %v10578
  %s10581 = scalar_lea.vmem %s5, 672
  %v10582 = vld [vmem:[%s10581] sm:$0xff]
  %v10583 = vld [vmem:[%s10581 + $0x8] sm:$0xff]
  %v10585 = vsel %vm439, %v9443, 0
  %10587 = vmatpush.msra.mxu0 0.0
  %10588 = vmatpush.msra.mxu0 0.0
  %10589 = vmatpush.msra.mxu0 0.0
  %10590 = vmatpush.msra.mxu0 0.0
  %10591 = vmatpush.msra.mxu0 0.0
  %10592 = vmatpush.msra.mxu0 0.0
  %10593 = vmatpush.msra.mxu0 0.0
  %10594 = vmatpush.msra.mxu0 0.0
  %10595 = vmatpush.msra.mxu0 0.0
  %10596 = vmatpush.msra.mxu0 0.0
  %10597 = vmatpush.msra.mxu0 0.0
  %10598 = vmatpush.msra.mxu0 0.0
  %10599 = vmatpush.msra.mxu0 0.0
  %10600 = vmatpush.msra.mxu0 0.0
  %10601 = vmatpush.msra.mxu0 %v10583
  %10602 = vmatpush.msra.mxu0 %v10582
  %10603 = vmatmul.f32.gmra.mxu0 %v10585
  %v10604 = vpop.f32.mrf.mxu0
  %v10605 = vadd.f32 0.0, %v10604
  %10606 = vdwg.mxu0
  %v10607 = vadd.f32 %v10580, %v10605
  %s10608 = scalar_lea.vmem %s5, 688
  %v10609 = vld [vmem:[%s10608] sm:$0xff]
  %v10610 = vld [vmem:[%s10608 + $0x8] sm:$0xff]
  %v10612 = vsel %vm439, %v9444, 0
  %10614 = vmatpush.msra.mxu0 0.0
  %10615 = vmatpush.msra.mxu0 0.0
  %10616 = vmatpush.msra.mxu0 0.0
  %10617 = vmatpush.msra.mxu0 0.0
  %10618 = vmatpush.msra.mxu0 0.0
  %10619 = vmatpush.msra.mxu0 0.0
  %10620 = vmatpush.msra.mxu0 0.0
  %10621 = vmatpush.msra.mxu0 0.0
  %10622 = vmatpush.msra.mxu0 0.0
  %10623 = vmatpush.msra.mxu0 0.0
  %10624 = vmatpush.msra.mxu0 0.0
  %10625 = vmatpush.msra.mxu0 0.0
  %10626 = vmatpush.msra.mxu0 0.0
  %10627 = vmatpush.msra.mxu0 0.0
  %10628 = vmatpush.msra.mxu0 %v10610
  %10629 = vmatpush.msra.mxu0 %v10609
  %10630 = vmatmul.f32.gmra.mxu0 %v10612
  %v10631 = vpop.f32.mrf.mxu0
  %v10632 = vadd.f32 0.0, %v10631
  %10633 = vdwg.mxu0
  %v10634 = vadd.f32 %v10607, %v10632
  %s10635 = scalar_lea.vmem %s5, 704
  %v10636 = vld [vmem:[%s10635] sm:$0xff]
  %v10637 = vld [vmem:[%s10635 + $0x8] sm:$0xff]
  %v10639 = vsel %vm439, %v9445, 0
  %10641 = vmatpush.msra.mxu0 0.0
  %10642 = vmatpush.msra.mxu0 0.0
  %10643 = vmatpush.msra.mxu0 0.0
  %10644 = vmatpush.msra.mxu0 0.0
  %10645 = vmatpush.msra.mxu0 0.0
  %10646 = vmatpush.msra.mxu0 0.0
  %10647 = vmatpush.msra.mxu0 0.0
  %10648 = vmatpush.msra.mxu0 0.0
  %10649 = vmatpush.msra.mxu0 0.0
  %10650 = vmatpush.msra.mxu0 0.0
  %10651 = vmatpush.msra.mxu0 0.0
  %10652 = vmatpush.msra.mxu0 0.0
  %10653 = vmatpush.msra.mxu0 0.0
  %10654 = vmatpush.msra.mxu0 0.0
  %10655 = vmatpush.msra.mxu0 %v10637
  %10656 = vmatpush.msra.mxu0 %v10636
  %10657 = vmatmul.f32.gmra.mxu0 %v10639
  %v10658 = vpop.f32.mrf.mxu0
  %v10659 = vadd.f32 0.0, %v10658
  %10660 = vdwg.mxu0
  %v10661 = vadd.f32 %v10634, %v10659
  %s10662 = scalar_lea.vmem %s5, 720
  %v10663 = vld [vmem:[%s10662] sm:$0xff]
  %v10664 = vld [vmem:[%s10662 + $0x8] sm:$0xff]
  %v10666 = vsel %vm439, %v9446, 0
  %10668 = vmatpush.msra.mxu0 0.0
  %10669 = vmatpush.msra.mxu0 0.0
  %10670 = vmatpush.msra.mxu0 0.0
  %10671 = vmatpush.msra.mxu0 0.0
  %10672 = vmatpush.msra.mxu0 0.0
  %10673 = vmatpush.msra.mxu0 0.0
  %10674 = vmatpush.msra.mxu0 0.0
  %10675 = vmatpush.msra.mxu0 0.0
  %10676 = vmatpush.msra.mxu0 0.0
  %10677 = vmatpush.msra.mxu0 0.0
  %10678 = vmatpush.msra.mxu0 0.0
  %10679 = vmatpush.msra.mxu0 0.0
  %10680 = vmatpush.msra.mxu0 0.0
  %10681 = vmatpush.msra.mxu0 0.0
  %10682 = vmatpush.msra.mxu0 %v10664
  %10683 = vmatpush.msra.mxu0 %v10663
  %10684 = vmatmul.f32.gmra.mxu0 %v10666
  %v10685 = vpop.f32.mrf.mxu0
  %v10686 = vadd.f32 0.0, %v10685
  %10687 = vdwg.mxu0
  %v10688 = vadd.f32 %v10661, %v10686
  %s10689 = scalar_lea.vmem %s5, 736
  %v10690 = vld [vmem:[%s10689] sm:$0xff]
  %v10691 = vld [vmem:[%s10689 + $0x8] sm:$0xff]
  %v10693 = vsel %vm439, %v9447, 0
  %10695 = vmatpush.msra.mxu0 0.0
  %10696 = vmatpush.msra.mxu0 0.0
  %10697 = vmatpush.msra.mxu0 0.0
  %10698 = vmatpush.msra.mxu0 0.0
  %10699 = vmatpush.msra.mxu0 0.0
  %10700 = vmatpush.msra.mxu0 0.0
  %10701 = vmatpush.msra.mxu0 0.0
  %10702 = vmatpush.msra.mxu0 0.0
  %10703 = vmatpush.msra.mxu0 0.0
  %10704 = vmatpush.msra.mxu0 0.0
  %10705 = vmatpush.msra.mxu0 0.0
  %10706 = vmatpush.msra.mxu0 0.0
  %10707 = vmatpush.msra.mxu0 0.0
  %10708 = vmatpush.msra.mxu0 0.0
  %10709 = vmatpush.msra.mxu0 %v10691
  %10710 = vmatpush.msra.mxu0 %v10690
  %10711 = vmatmul.f32.gmra.mxu0 %v10693
  %v10712 = vpop.f32.mrf.mxu0
  %v10713 = vadd.f32 0.0, %v10712
  %10714 = vdwg.mxu0
  %v10715 = vadd.f32 %v10688, %v10713
  %s10716 = scalar_lea.vmem %s5, 752
  %v10717 = vld [vmem:[%s10716] sm:$0xff]
  %v10718 = vld [vmem:[%s10716 + $0x8] sm:$0xff]
  %v10720 = vsel %vm439, %v9448, 0
  %10722 = vmatpush.msra.mxu0 0.0
  %10723 = vmatpush.msra.mxu0 0.0
  %10724 = vmatpush.msra.mxu0 0.0
  %10725 = vmatpush.msra.mxu0 0.0
  %10726 = vmatpush.msra.mxu0 0.0
  %10727 = vmatpush.msra.mxu0 0.0
  %10728 = vmatpush.msra.mxu0 0.0
  %10729 = vmatpush.msra.mxu0 0.0
  %10730 = vmatpush.msra.mxu0 0.0
  %10731 = vmatpush.msra.mxu0 0.0
  %10732 = vmatpush.msra.mxu0 0.0
  %10733 = vmatpush.msra.mxu0 0.0
  %10734 = vmatpush.msra.mxu0 0.0
  %10735 = vmatpush.msra.mxu0 0.0
  %10736 = vmatpush.msra.mxu0 %v10718
  %10737 = vmatpush.msra.mxu0 %v10717
  %10738 = vmatmul.f32.gmra.mxu0 %v10720
  %v10739 = vpop.f32.mrf.mxu0
  %v10740 = vadd.f32 0.0, %v10739
  %10741 = vdwg.mxu0
  %v10742 = vadd.f32 %v10715, %v10740
  %s10743 = scalar_lea.vmem %s5, 768
  %v10744 = vld [vmem:[%s10743] sm:$0xff]
  %v10745 = vld [vmem:[%s10743 + $0x8] sm:$0xff]
  %v10747 = vsel %vm439, %v9449, 0
  %10749 = vmatpush.msra.mxu0 0.0
  %10750 = vmatpush.msra.mxu0 0.0
  %10751 = vmatpush.msra.mxu0 0.0
  %10752 = vmatpush.msra.mxu0 0.0
  %10753 = vmatpush.msra.mxu0 0.0
  %10754 = vmatpush.msra.mxu0 0.0
  %10755 = vmatpush.msra.mxu0 0.0
  %10756 = vmatpush.msra.mxu0 0.0
  %10757 = vmatpush.msra.mxu0 0.0
  %10758 = vmatpush.msra.mxu0 0.0
  %10759 = vmatpush.msra.mxu0 0.0
  %10760 = vmatpush.msra.mxu0 0.0
  %10761 = vmatpush.msra.mxu0 0.0
  %10762 = vmatpush.msra.mxu0 0.0
  %10763 = vmatpush.msra.mxu0 %v10745
  %10764 = vmatpush.msra.mxu0 %v10744
  %10765 = vmatmul.f32.gmra.mxu0 %v10747
  %v10766 = vpop.f32.mrf.mxu0
  %v10767 = vadd.f32 0.0, %v10766
  %10768 = vdwg.mxu0
  %v10769 = vadd.f32 %v10742, %v10767
  %v10770 = vld [vmem:[%s6] sm:$0x1]
  %v10772 = vperm.slane %v10770, 0
  %v10774 = vadd.f32 %v10769, %v10772
  %v10775 = vmax.f32 %v10774, 0.0
  %v10776 = vld [vmem:[%s7] sm:$0xff]
  %v10777 = vld [vmem:[%s7 + $0x8] sm:$0xff]
  %v10778 = vld [vmem:[%s7 + $0x10] sm:$0xff]
  %v10779 = vld [vmem:[%s7 + $0x18] sm:$0xff]
  %v10780 = vld [vmem:[%s7 + $0x20] sm:$0xff]
  %v10781 = vld [vmem:[%s7 + $0x28] sm:$0xff]
  %v10782 = vld [vmem:[%s7 + $0x30] sm:$0xff]
  %v10783 = vld [vmem:[%s7 + $0x38] sm:$0xff]
  %v10784 = vld [vmem:[%s7 + $0x40] sm:$0xff]
  %v10785 = vld [vmem:[%s7 + $0x48] sm:$0xff]
  %v10786 = vld [vmem:[%s7 + $0x50] sm:$0xff]
  %v10787 = vld [vmem:[%s7 + $0x58] sm:$0xff]
  %v10788 = vld [vmem:[%s7 + $0x60] sm:$0xff]
  %v10789 = vld [vmem:[%s7 + $0x68] sm:$0xff]
  %v10790 = vld [vmem:[%s7 + $0x70] sm:$0xff]
  %v10791 = vld [vmem:[%s7 + $0x78] sm:$0xff]
  %v10792 = vld [vmem:[%s8] sm:$0x1]
  %v10794 = vperm.slane %v10792, 0
  %10796 = vmatpush.msra.mxu0 %v10791
  %10797 = vmatpush.msra.mxu0 %v10790
  %10798 = vmatpush.msra.mxu0 %v10789
  %10799 = vmatpush.msra.mxu0 %v10788
  %10800 = vmatpush.msra.mxu0 %v10787
  %10801 = vmatpush.msra.mxu0 %v10786
  %10802 = vmatpush.msra.mxu0 %v10785
  %10803 = vmatpush.msra.mxu0 %v10784
  %10804 = vmatpush.msra.mxu0 %v10783
  %10805 = vmatpush.msra.mxu0 %v10782
  %10806 = vmatpush.msra.mxu0 %v10781
  %10807 = vmatpush.msra.mxu0 %v10780
  %10808 = vmatpush.msra.mxu0 %v10779
  %10809 = vmatpush.msra.mxu0 %v10778
  %10810 = vmatpush.msra.mxu0 %v10777
  %10811 = vmatpush.msra.mxu0 %v10776
  %10812 = vmatmul.f32.gmra.mxu0 %v10775
  %v10813 = vpop.f32.mrf.mxu0
  %v10814 = vadd.f32 %v10794, %v10813
  %10815 = vdwg.mxu0
  %vm10816 = vcmask 48128
  %v10817 = vsel %vm10816, %v10814, -inf
  %10818 = vmax.xlane.f32.xlu0 %v10817
  %v10819 = vpop.xlane.xlu0 %10818
  %v10820 = vsub.f32 %v10814, %v10819
  %v10821 = vmul.f32 %v10820, 1.442695
  %v10822 = vpow.pop %v10821
  %v10823 = vsel %vm10816, %v10822, 0.0
  %10824 = vadd.xlane.f32.xlu0 %v10823
  %v10825 = vpop.xlane.xlu0 %10824
  %v10826 = vlog2.pop %v10825
  %v10827 = vmul.f32 %v10826, 0.6931472
  %v10828 = vadd.f32 %v10827, %v10819
  %v10829 = vlaneseq
  %v10830 = vand.u32 %v10829, 127
  %vm10831 = vcmp.eq.f32.partialorder %v10814, %v10819
  %v10832 = vsel %vm10831, %v10830, 2147483647
  %v10833 = vsel %vm10816, %v10832, 2147483647
  %v10834 = vand.u32 %v10833, 65535
  %v10835 = vshra.s32 %v10833, 16
  %v10836 = vcvt.s32.f32 %v10834
  %v10837 = vcvt.s32.f32 %v10835
  %10838 = vmin.xlane.f32.xlu0 %v10837
  %v10839 = vpop.xlane.xlu0 %10838
  %vm10840 = vcmp.eq.f32.partialorder %v10837, %v10839
  %v10841 = vsel %vm10840, %v10836, inf
  %10842 = vmin.xlane.f32.xlu0 %v10841
  %v10843 = vpop.xlane.xlu0 %10842
  %v10844 = vcvt.f32.s32 %v10843
  %v10845 = vcvt.f32.s32 %v10839
  %v10846 = vshll.u32 %v10845, 16
  %v10847 = vadd.s32 %v10846, %v10844
  %vm10848 = vcmask 7168
  %10849 = vst.msk [vmem:[%s9] sm:$0xff] %vm10848, %v10847
  %vm10850 = vcmp.eq.s32.totalorder %v10830, %v10847
  %v10851 = vsel %vm10850, 1, 0
  %v10852 = vcvt.s32.f32 %v10851
  %v10853 = vsub.f32 %v10814, %v10828
  %v10854 = vmul.f32 %v10852, %v10853
  %v10855 = vsel %vm10816, %v10854, 0.0
  %10856 = vadd.xlane.f32.xlu0 %v10855
  %v10857 = vpop.xlane.xlu0 %10856
  %10858 = vst.msk [vmem:[%s10] sm:$0xff] %vm10848, %v10857
  // Predicated region
  $region38: #{ppo_actor_forward.1} parent=0 // pred_check
    _
  $region39: #{ppo_actor_forward.1} parent=0 // pred_check_branch
    %10860 = sbr.rel (0) target = $region41
  $region40: #{ppo_actor_forward.1} parent=0 // pred_region
    _
  $region41: #{ppo_actor_forward.1} parent=0 // pred_fallthru
    _
  // Predicated region
  $region42: #{ppo_actor_forward.1} parent=0 // pred_check
    _
  $region43: #{ppo_actor_forward.1} parent=0 // pred_check_branch
    %10862 = sbr.rel (0) target = $region45
  $region44: #{ppo_actor_forward.1} parent=0 // pred_region
    _
  $region45: #{ppo_actor_forward.1} parent=0 // pred_fallthru
    _
  // Predicated region
  $region46: #{ppo_actor_forward.1} parent=0 // pred_check
    _
  $region47: #{ppo_actor_forward.1} parent=0 // pred_check_branch
    %10864 = sbr.rel (0) target = $region49
  $region48: #{ppo_actor_forward.1} parent=0 // pred_region
    _
  $region49: #{ppo_actor_forward.1} parent=0 // pred_fallthru
    _
  // Predicated region
  $region50: #{ppo_actor_forward.1} parent=0 // pred_check
    _
  $region51: #{ppo_actor_forward.1} parent=0 // pred_check_branch
    %10866 = sbr.rel (0) target = $region53
  $region52: #{ppo_actor_forward.1} parent=0 // pred_region
    _
  $region53: #{ppo_actor_forward.1} parent=0 // pred_fallthru
    _

</llo_original>
